<compile_context>
chip_gen: v7x
topology: tpu7x:2x2x1
jax: 0.10.0
libtpu: 0.0.40
codegen_flags: <defaults>
</compile_context>

<pallas_src>
import functools

import jax
import jax.numpy as jnp
from jax import lax
from jax.experimental import pallas as pl
from jax.experimental.pallas import tpu as pltpu


def _patch_embed_kernel(x_ref, w_ref, b_ref, o_ref, *, C, P, Wp, D, h_tile):
    # x_ref: (1, C, h_tile*P, W)  NCHW input rows covering h_tile patch rows
    # w_ref: (P, D, C*P)          weight[d, c, p1, p2] laid out as [p2, d, (c, p1)]
    # b_ref: (D, 1)
    # o_ref: (1, D, h_tile, Wp)   NCHW output tile
    for h in range(h_tile):
        xh = x_ref[0, :, h * P:(h + 1) * P, :]        # (C, P, W)
        x2 = xh.reshape(C * P, Wp * P)                # merge (c, p1) -> sublane axis (free)
        xT = x2.T                                     # (W, C*P)  single 2-D transpose
        x4 = xT.reshape(Wp, P, C * P)                 # split sublane dim W -> (Wp, P2) (free)
        acc = jnp.zeros((D, Wp), dtype=jnp.float32)
        for p2 in range(P):
            # acc[d, w] += sum_{c,p1} weight[d,c,p1,p2] * x[c, h*P+p1, w*P+p2]
            acc = acc + lax.dot_general(
                w_ref[p2],                            # (D, C*P)
                x4[:, p2, :],                         # (Wp, C*P)
                dimension_numbers=(((1,), (1,)), ((), ())),
                preferred_element_type=jnp.float32,
            )
        acc = acc + b_ref[...]                        # (D, 1) broadcast over lanes
        o_ref[0, :, h, :] = acc.astype(o_ref.dtype)


def _pick_h_tile(Hp, row_in_bytes, row_out_bytes, budget_bytes):
    """Largest h_tile that (a) divides Hp, (b) is Hp itself or a multiple of 8
    (keeps block sublane dims aligned), (c) keeps double-buffered in+out
    blocks under the VMEM budget."""
    cands = sorted({Hp, *[t for t in range(8, Hp, 8) if Hp % t == 0]}, reverse=True)
    for t in cands:
        if 2 * t * (row_in_bytes + row_out_bytes) <= budget_bytes:
            return t
    return cands[-1]


def patch_embed_pallas(x, weight, bias, patch_size):
    """PatchEmbed forward: (B, C, H, W) -> (B, D, H//P, W//P)."""
    B, C, H, W = x.shape
    D = weight.shape[0]
    P = int(patch_size)
    assert weight.shape == (D, C, P, P), (weight.shape, (D, C, P, P))
    assert H % P == 0 and W % P == 0, "image size must be a multiple of patch size"
    Hp, Wp = H // P, W // P

    # One-time, tiny weight/bias rearrange so the kernel's contraction order
    # matches the natural NCHW tile layout: w_r[p2, d, (c, p1)].
    w_r = jnp.transpose(weight, (3, 0, 1, 2)).reshape(P, D, C * P)
    b_r = bias.reshape(D, 1)

    ebytes = jnp.dtype(x.dtype).itemsize
    row_in_bytes = C * P * W * ebytes        # one patch row of input
    row_out_bytes = D * Wp * ebytes          # one patch row of output
    h_tile = _pick_h_tile(Hp, row_in_bytes, row_out_bytes,
                          budget_bytes=16 * 1024 * 1024)

    kernel = functools.partial(_patch_embed_kernel,
                               C=C, P=P, Wp=Wp, D=D, h_tile=h_tile)

    return pl.pallas_call(
        kernel,
        out_shape=jax.ShapeDtypeStruct((B, D, Hp, Wp), x.dtype),
        grid=(B, Hp // h_tile),
        in_specs=[
            pl.BlockSpec((1, C, h_tile * P, W), lambda b, hb: (b, 0, hb, 0)),
            pl.BlockSpec((P, D, C * P), lambda b, hb: (0, 0, 0)),
            pl.BlockSpec((D, 1), lambda b, hb: (0, 0)),
        ],
        out_specs=pl.BlockSpec((1, D, h_tile, Wp), lambda b, hb: (b, 0, hb, 0)),
        compiler_params=pltpu.CompilerParams(
            dimension_semantics=("parallel", "parallel"),
            vmem_limit_bytes=64 * 1024 * 1024,
        ),
    )(x, w_r, b_r)


if __name__ == "__main__":
    key = jax.random.PRNGKey(0)
    kx, kw, kb = jax.random.split(key, 3)

    # Small PatchEmbed config: 32x32 image, 8x8 patches, 4 input channels,
    # 64-dim embedding  ->  output (2, 64, 4, 4).
    B, C, H, W = 2, 4, 32, 32
    P, D = 8, 64

    x = jax.random.normal(kx, (B, C, H, W), dtype=jnp.float32)
    weight = jax.random.normal(kw, (D, C, P, P), dtype=jnp.float32) * 0.05
    bias = jax.random.normal(kb, (D,), dtype=jnp.float32)

    out = patch_embed_pallas(x, weight, bias, P)
    out = jax.block_until_ready(out)

    # Pure-JAX reference implementing the PyTorch forward exactly.
    Hp, Wp, K = H // P, W // P, C * P * P
    xp = x.reshape(B, C, Hp, P, Wp, P).transpose(0, 2, 4, 1, 3, 5).reshape(B, Hp, Wp, K)
    ref = jnp.einsum("bhwk,dk->bhwd", xp, weight.reshape(D, K),
                     precision=lax.Precision.HIGHEST) + bias
    ref = jnp.transpose(ref, (0, 3, 1, 2))

    assert out.shape == ref.shape == (B, D, Hp, Wp), (out.shape, ref.shape)
    assert out.dtype == ref.dtype
    max_err = float(jnp.max(jnp.abs(out - ref)))
    assert jnp.allclose(out, ref, rtol=1e-2, atol=1e-2), f"max abs err {max_err}"
    print("KERNEL_OK")
</pallas_src>

<mosaic_0001>
module attributes {stable_mosaic.version = 11 : i64} {
  func.func @_patch_embed_kernel(%arg0: i32, %arg1: i32, %arg2: memref<1x4x32x32xf32, #tpu.memory_space<vmem>>, %arg3: memref<8x64x32xf32, #tpu.memory_space<vmem>>, %arg4: memref<64x1xf32, #tpu.memory_space<vmem>>, %arg5: memref<1x64x4x4xf32, #tpu.memory_space<vmem>>) attributes {dimension_semantics = [#tpu.dimension_semantics<parallel>, #tpu.dimension_semantics<parallel>], iteration_bounds = array<i64: 2, 1>, scalar_prefetch = 0 : i64, scratch_operands = 0 : i64, tpu.core_type = #tpu.core_type<tc>, window_params = [{transform_indices = @transform_0, window_bounds = array<i64: 1, 4, 32, 32>}, {pipeline_mode = #tpu.pipeline_mode<synchronous>, transform_indices = @transform_1, window_bounds = array<i64: 8, 64, 32>}, {pipeline_mode = #tpu.pipeline_mode<synchronous>, transform_indices = @transform_2, window_bounds = array<i64: 64, 1>}, {transform_indices = @transform_3, window_bounds = array<i64: 1, 64, 4, 4>}]} {
    %c0 = arith.constant 0 : index
    %c0_0 = arith.constant 0 : index
    %c0_1 = arith.constant 0 : index
    %c0_2 = arith.constant 0 : index
    %0 = vector.load %arg2[%c0, %c0_0, %c0_1, %c0_2] : memref<1x4x32x32xf32, #tpu.memory_space<vmem>>, vector<1x4x8x32xf32>
    %1 = vector.shape_cast %0 : vector<1x4x8x32xf32> to vector<4x8x32xf32>
    %2 = vector.shape_cast %1 : vector<4x8x32xf32> to vector<32x32xf32>
    %3 = tpu.transpose %2, [1, 0] : vector<32x32xf32> -> vector<32x32xf32>
    %4 = vector.shape_cast %3 : vector<32x32xf32> to vector<4x8x32xf32>
    %cst = arith.constant 0.000000e+00 : f32
    %5 = vector.broadcast %cst : f32 to vector<64x4xf32>
    %c0_3 = arith.constant 0 : index
    %c0_4 = arith.constant 0 : index
    %c0_5 = arith.constant 0 : index
    %6 = vector.load %arg3[%c0_3, %c0_4, %c0_5] : memref<8x64x32xf32, #tpu.memory_space<vmem>>, vector<1x64x32xf32>
    %7 = vector.shape_cast %6 : vector<1x64x32xf32> to vector<64x32xf32>
    %8 = vector.extract_strided_slice %4 {offsets = [0, 0, 0], sizes = [4, 1, 32], strides = [1, 1, 1]} : vector<4x8x32xf32> to vector<4x1x32xf32>
    %9 = vector.shape_cast %8 : vector<4x1x32xf32> to vector<4x32xf32>
    %cst_6 = arith.constant dense<0.000000e+00> : vector<64x4xf32>
    %10 = tpu.matmul %7, %9, %cst_6 {dimension_numbers = #tpu.dot_dimension_numbers<[1], [1], [0], [0], [0, 0, 1, 0], [], []>} : vector<64x32xf32>, vector<4x32xf32>, vector<64x4xf32> -> vector<64x4xf32>
    %11 = arith.addf %5, %10 : vector<64x4xf32>
    %c1 = arith.constant 1 : index
    %c0_7 = arith.constant 0 : index
    %c0_8 = arith.constant 0 : index
    %12 = vector.load %arg3[%c1, %c0_7, %c0_8] : memref<8x64x32xf32, #tpu.memory_space<vmem>>, vector<1x64x32xf32>
    %13 = vector.shape_cast %12 : vector<1x64x32xf32> to vector<64x32xf32>
    %14 = vector.extract_strided_slice %4 {offsets = [0, 1, 0], sizes = [4, 1, 32], strides = [1, 1, 1]} : vector<4x8x32xf32> to vector<4x1x32xf32>
    %15 = vector.shape_cast %14 : vector<4x1x32xf32> to vector<4x32xf32>
    %cst_9 = arith.constant dense<0.000000e+00> : vector<64x4xf32>
    %16 = tpu.matmul %13, %15, %cst_9 {dimension_numbers = #tpu.dot_dimension_numbers<[1], [1], [0], [0], [0, 0, 1, 0], [], []>} : vector<64x32xf32>, vector<4x32xf32>, vector<64x4xf32> -> vector<64x4xf32>
    %17 = arith.addf %11, %16 : vector<64x4xf32>
    %c2 = arith.constant 2 : index
    %c0_10 = arith.constant 0 : index
    %c0_11 = arith.constant 0 : index
    %18 = vector.load %arg3[%c2, %c0_10, %c0_11] : memref<8x64x32xf32, #tpu.memory_space<vmem>>, vector<1x64x32xf32>
    %19 = vector.shape_cast %18 : vector<1x64x32xf32> to vector<64x32xf32>
    %20 = vector.extract_strided_slice %4 {offsets = [0, 2, 0], sizes = [4, 1, 32], strides = [1, 1, 1]} : vector<4x8x32xf32> to vector<4x1x32xf32>
    %21 = vector.shape_cast %20 : vector<4x1x32xf32> to vector<4x32xf32>
    %cst_12 = arith.constant dense<0.000000e+00> : vector<64x4xf32>
    %22 = tpu.matmul %19, %21, %cst_12 {dimension_numbers = #tpu.dot_dimension_numbers<[1], [1], [0], [0], [0, 0, 1, 0], [], []>} : vector<64x32xf32>, vector<4x32xf32>, vector<64x4xf32> -> vector<64x4xf32>
    %23 = arith.addf %17, %22 : vector<64x4xf32>
    %c3 = arith.constant 3 : index
    %c0_13 = arith.constant 0 : index
    %c0_14 = arith.constant 0 : index
    %24 = vector.load %arg3[%c3, %c0_13, %c0_14] : memref<8x64x32xf32, #tpu.memory_space<vmem>>, vector<1x64x32xf32>
    %25 = vector.shape_cast %24 : vector<1x64x32xf32> to vector<64x32xf32>
    %26 = vector.extract_strided_slice %4 {offsets = [0, 3, 0], sizes = [4, 1, 32], strides = [1, 1, 1]} : vector<4x8x32xf32> to vector<4x1x32xf32>
    %27 = vector.shape_cast %26 : vector<4x1x32xf32> to vector<4x32xf32>
    %cst_15 = arith.constant dense<0.000000e+00> : vector<64x4xf32>
    %28 = tpu.matmul %25, %27, %cst_15 {dimension_numbers = #tpu.dot_dimension_numbers<[1], [1], [0], [0], [0, 0, 1, 0], [], []>} : vector<64x32xf32>, vector<4x32xf32>, vector<64x4xf32> -> vector<64x4xf32>
    %29 = arith.addf %23, %28 : vector<64x4xf32>
    %c4 = arith.constant 4 : index
    %c0_16 = arith.constant 0 : index
    %c0_17 = arith.constant 0 : index
    %30 = vector.load %arg3[%c4, %c0_16, %c0_17] : memref<8x64x32xf32, #tpu.memory_space<vmem>>, vector<1x64x32xf32>
    %31 = vector.shape_cast %30 : vector<1x64x32xf32> to vector<64x32xf32>
    %32 = vector.extract_strided_slice %4 {offsets = [0, 4, 0], sizes = [4, 1, 32], strides = [1, 1, 1]} : vector<4x8x32xf32> to vector<4x1x32xf32>
    %33 = vector.shape_cast %32 : vector<4x1x32xf32> to vector<4x32xf32>
    %cst_18 = arith.constant dense<0.000000e+00> : vector<64x4xf32>
    %34 = tpu.matmul %31, %33, %cst_18 {dimension_numbers = #tpu.dot_dimension_numbers<[1], [1], [0], [0], [0, 0, 1, 0], [], []>} : vector<64x32xf32>, vector<4x32xf32>, vector<64x4xf32> -> vector<64x4xf32>
    %35 = arith.addf %29, %34 : vector<64x4xf32>
    %c5 = arith.constant 5 : index
    %c0_19 = arith.constant 0 : index
    %c0_20 = arith.constant 0 : index
    %36 = vector.load %arg3[%c5, %c0_19, %c0_20] : memref<8x64x32xf32, #tpu.memory_space<vmem>>, vector<1x64x32xf32>
    %37 = vector.shape_cast %36 : vector<1x64x32xf32> to vector<64x32xf32>
    %38 = vector.extract_strided_slice %4 {offsets = [0, 5, 0], sizes = [4, 1, 32], strides = [1, 1, 1]} : vector<4x8x32xf32> to vector<4x1x32xf32>
    %39 = vector.shape_cast %38 : vector<4x1x32xf32> to vector<4x32xf32>
    %cst_21 = arith.constant dense<0.000000e+00> : vector<64x4xf32>
    %40 = tpu.matmul %37, %39, %cst_21 {dimension_numbers = #tpu.dot_dimension_numbers<[1], [1], [0], [0], [0, 0, 1, 0], [], []>} : vector<64x32xf32>, vector<4x32xf32>, vector<64x4xf32> -> vector<64x4xf32>
    %41 = arith.addf %35, %40 : vector<64x4xf32>
    %c6 = arith.constant 6 : index
    %c0_22 = arith.constant 0 : index
    %c0_23 = arith.constant 0 : index
    %42 = vector.load %arg3[%c6, %c0_22, %c0_23] : memref<8x64x32xf32, #tpu.memory_space<vmem>>, vector<1x64x32xf32>
    %43 = vector.shape_cast %42 : vector<1x64x32xf32> to vector<64x32xf32>
    %44 = vector.extract_strided_slice %4 {offsets = [0, 6, 0], sizes = [4, 1, 32], strides = [1, 1, 1]} : vector<4x8x32xf32> to vector<4x1x32xf32>
    %45 = vector.shape_cast %44 : vector<4x1x32xf32> to vector<4x32xf32>
    %cst_24 = arith.constant dense<0.000000e+00> : vector<64x4xf32>
    %46 = tpu.matmul %43, %45, %cst_24 {dimension_numbers = #tpu.dot_dimension_numbers<[1], [1], [0], [0], [0, 0, 1, 0], [], []>} : vector<64x32xf32>, vector<4x32xf32>, vector<64x4xf32> -> vector<64x4xf32>
    %47 = arith.addf %41, %46 : vector<64x4xf32>
    %c7 = arith.constant 7 : index
    %c0_25 = arith.constant 0 : index
    %c0_26 = arith.constant 0 : index
    %48 = vector.load %arg3[%c7, %c0_25, %c0_26] : memref<8x64x32xf32, #tpu.memory_space<vmem>>, vector<1x64x32xf32>
    %49 = vector.shape_cast %48 : vector<1x64x32xf32> to vector<64x32xf32>
    %50 = vector.extract_strided_slice %4 {offsets = [0, 7, 0], sizes = [4, 1, 32], strides = [1, 1, 1]} : vector<4x8x32xf32> to vector<4x1x32xf32>
    %51 = vector.shape_cast %50 : vector<4x1x32xf32> to vector<4x32xf32>
    %cst_27 = arith.constant dense<0.000000e+00> : vector<64x4xf32>
    %52 = tpu.matmul %49, %51, %cst_27 {dimension_numbers = #tpu.dot_dimension_numbers<[1], [1], [0], [0], [0, 0, 1, 0], [], []>} : vector<64x32xf32>, vector<4x32xf32>, vector<64x4xf32> -> vector<64x4xf32>
    %53 = arith.addf %47, %52 : vector<64x4xf32>
    %c0_28 = arith.constant 0 : index
    %c0_29 = arith.constant 0 : index
    %54 = vector.load %arg4[%c0_28, %c0_29] : memref<64x1xf32, #tpu.memory_space<vmem>>, vector<64x1xf32>
    %55 = vector.broadcast %54 : vector<64x1xf32> to vector<64x4xf32>
    %56 = arith.addf %53, %55 : vector<64x4xf32>
    %c0_30 = arith.constant 0 : index
    %c0_31 = arith.constant 0 : index
    %c0_32 = arith.constant 0 : index
    %c0_33 = arith.constant 0 : index
    %57 = vector.load %arg5[%c0_30, %c0_31, %c0_32, %c0_33] : memref<1x64x4x4xf32, #tpu.memory_space<vmem>>, vector<1x64x1x4xf32>
    %58 = vector.shape_cast %57 : vector<1x64x1x4xf32> to vector<64x4xf32>
    %59 = vector.shape_cast %56 : vector<64x4xf32> to vector<1x64x1x4xf32>
    tpu.vector_store %arg5[%c0_30, %c0_31, %c0_32, %c0_33], %59 {strides = array<i32>} : memref<1x64x4x4xf32, #tpu.memory_space<vmem>>, vector<1x64x1x4xf32>,
    %c0_34 = arith.constant 0 : index
    %c0_35 = arith.constant 0 : index
    %c8 = arith.constant 8 : index
    %c0_36 = arith.constant 0 : index
    %60 = vector.load %arg2[%c0_34, %c0_35, %c8, %c0_36] : memref<1x4x32x32xf32, #tpu.memory_space<vmem>>, vector<1x4x8x32xf32>
    %61 = vector.shape_cast %60 : vector<1x4x8x32xf32> to vector<4x8x32xf32>
    %62 = vector.shape_cast %61 : vector<4x8x32xf32> to vector<32x32xf32>
    %63 = tpu.transpose %62, [1, 0] : vector<32x32xf32> -> vector<32x32xf32>
    %64 = vector.shape_cast %63 : vector<32x32xf32> to vector<4x8x32xf32>
    %cst_37 = arith.constant 0.000000e+00 : f32
    %65 = vector.broadcast %cst_37 : f32 to vector<64x4xf32>
    %c0_38 = arith.constant 0 : index
    %c0_39 = arith.constant 0 : index
    %c0_40 = arith.constant 0 : index
    %66 = vector.load %arg3[%c0_38, %c0_39, %c0_40] : memref<8x64x32xf32, #tpu.memory_space<vmem>>, vector<1x64x32xf32>
    %67 = vector.shape_cast %66 : vector<1x64x32xf32> to vector<64x32xf32>
    %68 = vector.extract_strided_slice %64 {offsets = [0, 0, 0], sizes = [4, 1, 32], strides = [1, 1, 1]} : vector<4x8x32xf32> to vector<4x1x32xf32>
    %69 = vector.shape_cast %68 : vector<4x1x32xf32> to vector<4x32xf32>
    %cst_41 = arith.constant dense<0.000000e+00> : vector<64x4xf32>
    %70 = tpu.matmul %67, %69, %cst_41 {dimension_numbers = #tpu.dot_dimension_numbers<[1], [1], [0], [0], [0, 0, 1, 0], [], []>} : vector<64x32xf32>, vector<4x32xf32>, vector<64x4xf32> -> vector<64x4xf32>
    %71 = arith.addf %65, %70 : vector<64x4xf32>
    %c1_42 = arith.constant 1 : index
    %c0_43 = arith.constant 0 : index
    %c0_44 = arith.constant 0 : index
    %72 = vector.load %arg3[%c1_42, %c0_43, %c0_44] : memref<8x64x32xf32, #tpu.memory_space<vmem>>, vector<1x64x32xf32>
    %73 = vector.shape_cast %72 : vector<1x64x32xf32> to vector<64x32xf32>
    %74 = vector.extract_strided_slice %64 {offsets = [0, 1, 0], sizes = [4, 1, 32], strides = [1, 1, 1]} : vector<4x8x32xf32> to vector<4x1x32xf32>
    %75 = vector.shape_cast %74 : vector<4x1x32xf32> to vector<4x32xf32>
    %cst_45 = arith.constant dense<0.000000e+00> : vector<64x4xf32>
    %76 = tpu.matmul %73, %75, %cst_45 {dimension_numbers = #tpu.dot_dimension_numbers<[1], [1], [0], [0], [0, 0, 1, 0], [], []>} : vector<64x32xf32>, vector<4x32xf32>, vector<64x4xf32> -> vector<64x4xf32>
    %77 = arith.addf %71, %76 : vector<64x4xf32>
    %c2_46 = arith.constant 2 : index
    %c0_47 = arith.constant 0 : index
    %c0_48 = arith.constant 0 : index
    %78 = vector.load %arg3[%c2_46, %c0_47, %c0_48] : memref<8x64x32xf32, #tpu.memory_space<vmem>>, vector<1x64x32xf32>
    %79 = vector.shape_cast %78 : vector<1x64x32xf32> to vector<64x32xf32>
    %80 = vector.extract_strided_slice %64 {offsets = [0, 2, 0], sizes = [4, 1, 32], strides = [1, 1, 1]} : vector<4x8x32xf32> to vector<4x1x32xf32>
    %81 = vector.shape_cast %80 : vector<4x1x32xf32> to vector<4x32xf32>
    %cst_49 = arith.constant dense<0.000000e+00> : vector<64x4xf32>
    %82 = tpu.matmul %79, %81, %cst_49 {dimension_numbers = #tpu.dot_dimension_numbers<[1], [1], [0], [0], [0, 0, 1, 0], [], []>} : vector<64x32xf32>, vector<4x32xf32>, vector<64x4xf32> -> vector<64x4xf32>
    %83 = arith.addf %77, %82 : vector<64x4xf32>
    %c3_50 = arith.constant 3 : index
    %c0_51 = arith.constant 0 : index
    %c0_52 = arith.constant 0 : index
    %84 = vector.load %arg3[%c3_50, %c0_51, %c0_52] : memref<8x64x32xf32, #tpu.memory_space<vmem>>, vector<1x64x32xf32>
    %85 = vector.shape_cast %84 : vector<1x64x32xf32> to vector<64x32xf32>
    %86 = vector.extract_strided_slice %64 {offsets = [0, 3, 0], sizes = [4, 1, 32], strides = [1, 1, 1]} : vector<4x8x32xf32> to vector<4x1x32xf32>
    %87 = vector.shape_cast %86 : vector<4x1x32xf32> to vector<4x32xf32>
    %cst_53 = arith.constant dense<0.000000e+00> : vector<64x4xf32>
    %88 = tpu.matmul %85, %87, %cst_53 {dimension_numbers = #tpu.dot_dimension_numbers<[1], [1], [0], [0], [0, 0, 1, 0], [], []>} : vector<64x32xf32>, vector<4x32xf32>, vector<64x4xf32> -> vector<64x4xf32>
    %89 = arith.addf %83, %88 : vector<64x4xf32>
    %c4_54 = arith.constant 4 : index
    %c0_55 = arith.constant 0 : index
    %c0_56 = arith.constant 0 : index
    %90 = vector.load %arg3[%c4_54, %c0_55, %c0_56] : memref<8x64x32xf32, #tpu.memory_space<vmem>>, vector<1x64x32xf32>
    %91 = vector.shape_cast %90 : vector<1x64x32xf32> to vector<64x32xf32>
    %92 = vector.extract_strided_slice %64 {offsets = [0, 4, 0], sizes = [4, 1, 32], strides = [1, 1, 1]} : vector<4x8x32xf32> to vector<4x1x32xf32>
    %93 = vector.shape_cast %92 : vector<4x1x32xf32> to vector<4x32xf32>
    %cst_57 = arith.constant dense<0.000000e+00> : vector<64x4xf32>
    %94 = tpu.matmul %91, %93, %cst_57 {dimension_numbers = #tpu.dot_dimension_numbers<[1], [1], [0], [0], [0, 0, 1, 0], [], []>} : vector<64x32xf32>, vector<4x32xf32>, vector<64x4xf32> -> vector<64x4xf32>
    %95 = arith.addf %89, %94 : vector<64x4xf32>
    %c5_58 = arith.constant 5 : index
    %c0_59 = arith.constant 0 : index
    %c0_60 = arith.constant 0 : index
    %96 = vector.load %arg3[%c5_58, %c0_59, %c0_60] : memref<8x64x32xf32, #tpu.memory_space<vmem>>, vector<1x64x32xf32>
    %97 = vector.shape_cast %96 : vector<1x64x32xf32> to vector<64x32xf32>
    %98 = vector.extract_strided_slice %64 {offsets = [0, 5, 0], sizes = [4, 1, 32], strides = [1, 1, 1]} : vector<4x8x32xf32> to vector<4x1x32xf32>
    %99 = vector.shape_cast %98 : vector<4x1x32xf32> to vector<4x32xf32>
    %cst_61 = arith.constant dense<0.000000e+00> : vector<64x4xf32>
    %100 = tpu.matmul %97, %99, %cst_61 {dimension_numbers = #tpu.dot_dimension_numbers<[1], [1], [0], [0], [0, 0, 1, 0], [], []>} : vector<64x32xf32>, vector<4x32xf32>, vector<64x4xf32> -> vector<64x4xf32>
    %101 = arith.addf %95, %100 : vector<64x4xf32>
    %c6_62 = arith.constant 6 : index
    %c0_63 = arith.constant 0 : index
    %c0_64 = arith.constant 0 : index
    %102 = vector.load %arg3[%c6_62, %c0_63, %c0_64] : memref<8x64x32xf32, #tpu.memory_space<vmem>>, vector<1x64x32xf32>
    %103 = vector.shape_cast %102 : vector<1x64x32xf32> to vector<64x32xf32>
    %104 = vector.extract_strided_slice %64 {offsets = [0, 6, 0], sizes = [4, 1, 32], strides = [1, 1, 1]} : vector<4x8x32xf32> to vector<4x1x32xf32>
    %105 = vector.shape_cast %104 : vector<4x1x32xf32> to vector<4x32xf32>
    %cst_65 = arith.constant dense<0.000000e+00> : vector<64x4xf32>
    %106 = tpu.matmul %103, %105, %cst_65 {dimension_numbers = #tpu.dot_dimension_numbers<[1], [1], [0], [0], [0, 0, 1, 0], [], []>} : vector<64x32xf32>, vector<4x32xf32>, vector<64x4xf32> -> vector<64x4xf32>
    %107 = arith.addf %101, %106 : vector<64x4xf32>
    %c7_66 = arith.constant 7 : index
    %c0_67 = arith.constant 0 : index
    %c0_68 = arith.constant 0 : index
    %108 = vector.load %arg3[%c7_66, %c0_67, %c0_68] : memref<8x64x32xf32, #tpu.memory_space<vmem>>, vector<1x64x32xf32>
    %109 = vector.shape_cast %108 : vector<1x64x32xf32> to vector<64x32xf32>
    %110 = vector.extract_strided_slice %64 {offsets = [0, 7, 0], sizes = [4, 1, 32], strides = [1, 1, 1]} : vector<4x8x32xf32> to vector<4x1x32xf32>
    %111 = vector.shape_cast %110 : vector<4x1x32xf32> to vector<4x32xf32>
    %cst_69 = arith.constant dense<0.000000e+00> : vector<64x4xf32>
    %112 = tpu.matmul %109, %111, %cst_69 {dimension_numbers = #tpu.dot_dimension_numbers<[1], [1], [0], [0], [0, 0, 1, 0], [], []>} : vector<64x32xf32>, vector<4x32xf32>, vector<64x4xf32> -> vector<64x4xf32>
    %113 = arith.addf %107, %112 : vector<64x4xf32>
    %c0_70 = arith.constant 0 : index
    %c0_71 = arith.constant 0 : index
    %114 = vector.load %arg4[%c0_70, %c0_71] : memref<64x1xf32, #tpu.memory_space<vmem>>, vector<64x1xf32>
    %115 = vector.broadcast %114 : vector<64x1xf32> to vector<64x4xf32>
    %116 = arith.addf %113, %115 : vector<64x4xf32>
    %c0_72 = arith.constant 0 : index
    %c0_73 = arith.constant 0 : index
    %c1_74 = arith.constant 1 : index
    %c0_75 = arith.constant 0 : index
    %117 = vector.load %arg5[%c0_72, %c0_73, %c1_74, %c0_75] : memref<1x64x4x4xf32, #tpu.memory_space<vmem>>, vector<1x64x1x4xf32>
    %118 = vector.shape_cast %117 : vector<1x64x1x4xf32> to vector<64x4xf32>
    %119 = vector.shape_cast %116 : vector<64x4xf32> to vector<1x64x1x4xf32>
    tpu.vector_store %arg5[%c0_72, %c0_73, %c1_74, %c0_75], %119 {strides = array<i32>} : memref<1x64x4x4xf32, #tpu.memory_space<vmem>>, vector<1x64x1x4xf32>,
    %c0_76 = arith.constant 0 : index
    %c0_77 = arith.constant 0 : index
    %c16 = arith.constant 16 : index
    %c0_78 = arith.constant 0 : index
    %120 = vector.load %arg2[%c0_76, %c0_77, %c16, %c0_78] : memref<1x4x32x32xf32, #tpu.memory_space<vmem>>, vector<1x4x8x32xf32>
    %121 = vector.shape_cast %120 : vector<1x4x8x32xf32> to vector<4x8x32xf32>
    %122 = vector.shape_cast %121 : vector<4x8x32xf32> to vector<32x32xf32>
    %123 = tpu.transpose %122, [1, 0] : vector<32x32xf32> -> vector<32x32xf32>
    %124 = vector.shape_cast %123 : vector<32x32xf32> to vector<4x8x32xf32>
    %cst_79 = arith.constant 0.000000e+00 : f32
    %125 = vector.broadcast %cst_79 : f32 to vector<64x4xf32>
    %c0_80 = arith.constant 0 : index
    %c0_81 = arith.constant 0 : index
    %c0_82 = arith.constant 0 : index
    %126 = vector.load %arg3[%c0_80, %c0_81, %c0_82] : memref<8x64x32xf32, #tpu.memory_space<vmem>>, vector<1x64x32xf32>
    %127 = vector.shape_cast %126 : vector<1x64x32xf32> to vector<64x32xf32>
    %128 = vector.extract_strided_slice %124 {offsets = [0, 0, 0], sizes = [4, 1, 32], strides = [1, 1, 1]} : vector<4x8x32xf32> to vector<4x1x32xf32>
    %129 = vector.shape_cast %128 : vector<4x1x32xf32> to vector<4x32xf32>
    %cst_83 = arith.constant dense<0.000000e+00> : vector<64x4xf32>
    %130 = tpu.matmul %127, %129, %cst_83 {dimension_numbers = #tpu.dot_dimension_numbers<[1], [1], [0], [0], [0, 0, 1, 0], [], []>} : vector<64x32xf32>, vector<4x32xf32>, vector<64x4xf32> -> vector<64x4xf32>
    %131 = arith.addf %125, %130 : vector<64x4xf32>
    %c1_84 = arith.constant 1 : index
    %c0_85 = arith.constant 0 : index
    %c0_86 = arith.constant 0 : index
    %132 = vector.load %arg3[%c1_84, %c0_85, %c0_86] : memref<8x64x32xf32, #tpu.memory_space<vmem>>, vector<1x64x32xf32>
    %133 = vector.shape_cast %132 : vector<1x64x32xf32> to vector<64x32xf32>
    %134 = vector.extract_strided_slice %124 {offsets = [0, 1, 0], sizes = [4, 1, 32], strides = [1, 1, 1]} : vector<4x8x32xf32> to vector<4x1x32xf32>
    %135 = vector.shape_cast %134 : vector<4x1x32xf32> to vector<4x32xf32>
    %cst_87 = arith.constant dense<0.000000e+00> : vector<64x4xf32>
    %136 = tpu.matmul %133, %135, %cst_87 {dimension_numbers = #tpu.dot_dimension_numbers<[1], [1], [0], [0], [0, 0, 1, 0], [], []>} : vector<64x32xf32>, vector<4x32xf32>, vector<64x4xf32> -> vector<64x4xf32>
    %137 = arith.addf %131, %136 : vector<64x4xf32>
    %c2_88 = arith.constant 2 : index
    %c0_89 = arith.constant 0 : index
    %c0_90 = arith.constant 0 : index
    %138 = vector.load %arg3[%c2_88, %c0_89, %c0_90] : memref<8x64x32xf32, #tpu.memory_space<vmem>>, vector<1x64x32xf32>
    %139 = vector.shape_cast %138 : vector<1x64x32xf32> to vector<64x32xf32>
    %140 = vector.extract_strided_slice %124 {offsets = [0, 2, 0], sizes = [4, 1, 32], strides = [1, 1, 1]} : vector<4x8x32xf32> to vector<4x1x32xf32>
    %141 = vector.shape_cast %140 : vector<4x1x32xf32> to vector<4x32xf32>
    %cst_91 = arith.constant dense<0.000000e+00> : vector<64x4xf32>
    %142 = tpu.matmul %139, %141, %cst_91 {dimension_numbers = #tpu.dot_dimension_numbers<[1], [1], [0], [0], [0, 0, 1, 0], [], []>} : vector<64x32xf32>, vector<4x32xf32>, vector<64x4xf32> -> vector<64x4xf32>
    %143 = arith.addf %137, %142 : vector<64x4xf32>
    %c3_92 = arith.constant 3 : index
    %c0_93 = arith.constant 0 : index
    %c0_94 = arith.constant 0 : index
    %144 = vector.load %arg3[%c3_92, %c0_93, %c0_94] : memref<8x64x32xf32, #tpu.memory_space<vmem>>, vector<1x64x32xf32>
    %145 = vector.shape_cast %144 : vector<1x64x32xf32> to vector<64x32xf32>
    %146 = vector.extract_strided_slice %124 {offsets = [0, 3, 0], sizes = [4, 1, 32], strides = [1, 1, 1]} : vector<4x8x32xf32> to vector<4x1x32xf32>
    %147 = vector.shape_cast %146 : vector<4x1x32xf32> to vector<4x32xf32>
    %cst_95 = arith.constant dense<0.000000e+00> : vector<64x4xf32>
    %148 = tpu.matmul %145, %147, %cst_95 {dimension_numbers = #tpu.dot_dimension_numbers<[1], [1], [0], [0], [0, 0, 1, 0], [], []>} : vector<64x32xf32>, vector<4x32xf32>, vector<64x4xf32> -> vector<64x4xf32>
    %149 = arith.addf %143, %148 : vector<64x4xf32>
    %c4_96 = arith.constant 4 : index
    %c0_97 = arith.constant 0 : index
    %c0_98 = arith.constant 0 : index
    %150 = vector.load %arg3[%c4_96, %c0_97, %c0_98] : memref<8x64x32xf32, #tpu.memory_space<vmem>>, vector<1x64x32xf32>
    %151 = vector.shape_cast %150 : vector<1x64x32xf32> to vector<64x32xf32>
    %152 = vector.extract_strided_slice %124 {offsets = [0, 4, 0], sizes = [4, 1, 32], strides = [1, 1, 1]} : vector<4x8x32xf32> to vector<4x1x32xf32>
    %153 = vector.shape_cast %152 : vector<4x1x32xf32> to vector<4x32xf32>
    %cst_99 = arith.constant dense<0.000000e+00> : vector<64x4xf32>
    %154 = tpu.matmul %151, %153, %cst_99 {dimension_numbers = #tpu.dot_dimension_numbers<[1], [1], [0], [0], [0, 0, 1, 0], [], []>} : vector<64x32xf32>, vector<4x32xf32>, vector<64x4xf32> -> vector<64x4xf32>
    %155 = arith.addf %149, %154 : vector<64x4xf32>
    %c5_100 = arith.constant 5 : index
    %c0_101 = arith.constant 0 : index
    %c0_102 = arith.constant 0 : index
    %156 = vector.load %arg3[%c5_100, %c0_101, %c0_102] : memref<8x64x32xf32, #tpu.memory_space<vmem>>, vector<1x64x32xf32>
    %157 = vector.shape_cast %156 : vector<1x64x32xf32> to vector<64x32xf32>
    %158 = vector.extract_strided_slice %124 {offsets = [0, 5, 0], sizes = [4, 1, 32], strides = [1, 1, 1]} : vector<4x8x32xf32> to vector<4x1x32xf32>
    %159 = vector.shape_cast %158 : vector<4x1x32xf32> to vector<4x32xf32>
    %cst_103 = arith.constant dense<0.000000e+00> : vector<64x4xf32>
    %160 = tpu.matmul %157, %159, %cst_103 {dimension_numbers = #tpu.dot_dimension_numbers<[1], [1], [0], [0], [0, 0, 1, 0], [], []>} : vector<64x32xf32>, vector<4x32xf32>, vector<64x4xf32> -> vector<64x4xf32>
    %161 = arith.addf %155, %160 : vector<64x4xf32>
    %c6_104 = arith.constant 6 : index
    %c0_105 = arith.constant 0 : index
    %c0_106 = arith.constant 0 : index
    %162 = vector.load %arg3[%c6_104, %c0_105, %c0_106] : memref<8x64x32xf32, #tpu.memory_space<vmem>>, vector<1x64x32xf32>
    %163 = vector.shape_cast %162 : vector<1x64x32xf32> to vector<64x32xf32>
    %164 = vector.extract_strided_slice %124 {offsets = [0, 6, 0], sizes = [4, 1, 32], strides = [1, 1, 1]} : vector<4x8x32xf32> to vector<4x1x32xf32>
    %165 = vector.shape_cast %164 : vector<4x1x32xf32> to vector<4x32xf32>
    %cst_107 = arith.constant dense<0.000000e+00> : vector<64x4xf32>
    %166 = tpu.matmul %163, %165, %cst_107 {dimension_numbers = #tpu.dot_dimension_numbers<[1], [1], [0], [0], [0, 0, 1, 0], [], []>} : vector<64x32xf32>, vector<4x32xf32>, vector<64x4xf32> -> vector<64x4xf32>
    %167 = arith.addf %161, %166 : vector<64x4xf32>
    %c7_108 = arith.constant 7 : index
    %c0_109 = arith.constant 0 : index
    %c0_110 = arith.constant 0 : index
    %168 = vector.load %arg3[%c7_108, %c0_109, %c0_110] : memref<8x64x32xf32, #tpu.memory_space<vmem>>, vector<1x64x32xf32>
    %169 = vector.shape_cast %168 : vector<1x64x32xf32> to vector<64x32xf32>
    %170 = vector.extract_strided_slice %124 {offsets = [0, 7, 0], sizes = [4, 1, 32], strides = [1, 1, 1]} : vector<4x8x32xf32> to vector<4x1x32xf32>
    %171 = vector.shape_cast %170 : vector<4x1x32xf32> to vector<4x32xf32>
    %cst_111 = arith.constant dense<0.000000e+00> : vector<64x4xf32>
    %172 = tpu.matmul %169, %171, %cst_111 {dimension_numbers = #tpu.dot_dimension_numbers<[1], [1], [0], [0], [0, 0, 1, 0], [], []>} : vector<64x32xf32>, vector<4x32xf32>, vector<64x4xf32> -> vector<64x4xf32>
    %173 = arith.addf %167, %172 : vector<64x4xf32>
    %c0_112 = arith.constant 0 : index
    %c0_113 = arith.constant 0 : index
    %174 = vector.load %arg4[%c0_112, %c0_113] : memref<64x1xf32, #tpu.memory_space<vmem>>, vector<64x1xf32>
    %175 = vector.broadcast %174 : vector<64x1xf32> to vector<64x4xf32>
    %176 = arith.addf %173, %175 : vector<64x4xf32>
    %c0_114 = arith.constant 0 : index
    %c0_115 = arith.constant 0 : index
    %c2_116 = arith.constant 2 : index
    %c0_117 = arith.constant 0 : index
    %177 = vector.load %arg5[%c0_114, %c0_115, %c2_116, %c0_117] : memref<1x64x4x4xf32, #tpu.memory_space<vmem>>, vector<1x64x1x4xf32>
    %178 = vector.shape_cast %177 : vector<1x64x1x4xf32> to vector<64x4xf32>
    %179 = vector.shape_cast %176 : vector<64x4xf32> to vector<1x64x1x4xf32>
    tpu.vector_store %arg5[%c0_114, %c0_115, %c2_116, %c0_117], %179 {strides = array<i32>} : memref<1x64x4x4xf32, #tpu.memory_space<vmem>>, vector<1x64x1x4xf32>,
    %c0_118 = arith.constant 0 : index
    %c0_119 = arith.constant 0 : index
    %c24 = arith.constant 24 : index
    %c0_120 = arith.constant 0 : index
    %180 = vector.load %arg2[%c0_118, %c0_119, %c24, %c0_120] : memref<1x4x32x32xf32, #tpu.memory_space<vmem>>, vector<1x4x8x32xf32>
    %181 = vector.shape_cast %180 : vector<1x4x8x32xf32> to vector<4x8x32xf32>
    %182 = vector.shape_cast %181 : vector<4x8x32xf32> to vector<32x32xf32>
    %183 = tpu.transpose %182, [1, 0] : vector<32x32xf32> -> vector<32x32xf32>
    %184 = vector.shape_cast %183 : vector<32x32xf32> to vector<4x8x32xf32>
    %cst_121 = arith.constant 0.000000e+00 : f32
    %185 = vector.broadcast %cst_121 : f32 to vector<64x4xf32>
    %c0_122 = arith.constant 0 : index
    %c0_123 = arith.constant 0 : index
    %c0_124 = arith.constant 0 : index
    %186 = vector.load %arg3[%c0_122, %c0_123, %c0_124] : memref<8x64x32xf32, #tpu.memory_space<vmem>>, vector<1x64x32xf32>
    %187 = vector.shape_cast %186 : vector<1x64x32xf32> to vector<64x32xf32>
    %188 = vector.extract_strided_slice %184 {offsets = [0, 0, 0], sizes = [4, 1, 32], strides = [1, 1, 1]} : vector<4x8x32xf32> to vector<4x1x32xf32>
    %189 = vector.shape_cast %188 : vector<4x1x32xf32> to vector<4x32xf32>
    %cst_125 = arith.constant dense<0.000000e+00> : vector<64x4xf32>
    %190 = tpu.matmul %187, %189, %cst_125 {dimension_numbers = #tpu.dot_dimension_numbers<[1], [1], [0], [0], [0, 0, 1, 0], [], []>} : vector<64x32xf32>, vector<4x32xf32>, vector<64x4xf32> -> vector<64x4xf32>
    %191 = arith.addf %185, %190 : vector<64x4xf32>
    %c1_126 = arith.constant 1 : index
    %c0_127 = arith.constant 0 : index
    %c0_128 = arith.constant 0 : index
    %192 = vector.load %arg3[%c1_126, %c0_127, %c0_128] : memref<8x64x32xf32, #tpu.memory_space<vmem>>, vector<1x64x32xf32>
    %193 = vector.shape_cast %192 : vector<1x64x32xf32> to vector<64x32xf32>
    %194 = vector.extract_strided_slice %184 {offsets = [0, 1, 0], sizes = [4, 1, 32], strides = [1, 1, 1]} : vector<4x8x32xf32> to vector<4x1x32xf32>
    %195 = vector.shape_cast %194 : vector<4x1x32xf32> to vector<4x32xf32>
    %cst_129 = arith.constant dense<0.000000e+00> : vector<64x4xf32>
    %196 = tpu.matmul %193, %195, %cst_129 {dimension_numbers = #tpu.dot_dimension_numbers<[1], [1], [0], [0], [0, 0, 1, 0], [], []>} : vector<64x32xf32>, vector<4x32xf32>, vector<64x4xf32> -> vector<64x4xf32>
    %197 = arith.addf %191, %196 : vector<64x4xf32>
    %c2_130 = arith.constant 2 : index
    %c0_131 = arith.constant 0 : index
    %c0_132 = arith.constant 0 : index
    %198 = vector.load %arg3[%c2_130, %c0_131, %c0_132] : memref<8x64x32xf32, #tpu.memory_space<vmem>>, vector<1x64x32xf32>
    %199 = vector.shape_cast %198 : vector<1x64x32xf32> to vector<64x32xf32>
    %200 = vector.extract_strided_slice %184 {offsets = [0, 2, 0], sizes = [4, 1, 32], strides = [1, 1, 1]} : vector<4x8x32xf32> to vector<4x1x32xf32>
    %201 = vector.shape_cast %200 : vector<4x1x32xf32> to vector<4x32xf32>
    %cst_133 = arith.constant dense<0.000000e+00> : vector<64x4xf32>
    %202 = tpu.matmul %199, %201, %cst_133 {dimension_numbers = #tpu.dot_dimension_numbers<[1], [1], [0], [0], [0, 0, 1, 0], [], []>} : vector<64x32xf32>, vector<4x32xf32>, vector<64x4xf32> -> vector<64x4xf32>
    %203 = arith.addf %197, %202 : vector<64x4xf32>
    %c3_134 = arith.constant 3 : index
    %c0_135 = arith.constant 0 : index
    %c0_136 = arith.constant 0 : index
    %204 = vector.load %arg3[%c3_134, %c0_135, %c0_136] : memref<8x64x32xf32, #tpu.memory_space<vmem>>, vector<1x64x32xf32>
    %205 = vector.shape_cast %204 : vector<1x64x32xf32> to vector<64x32xf32>
    %206 = vector.extract_strided_slice %184 {offsets = [0, 3, 0], sizes = [4, 1, 32], strides = [1, 1, 1]} : vector<4x8x32xf32> to vector<4x1x32xf32>
    %207 = vector.shape_cast %206 : vector<4x1x32xf32> to vector<4x32xf32>
    %cst_137 = arith.constant dense<0.000000e+00> : vector<64x4xf32>
    %208 = tpu.matmul %205, %207, %cst_137 {dimension_numbers = #tpu.dot_dimension_numbers<[1], [1], [0], [0], [0, 0, 1, 0], [], []>} : vector<64x32xf32>, vector<4x32xf32>, vector<64x4xf32> -> vector<64x4xf32>
    %209 = arith.addf %203, %208 : vector<64x4xf32>
    %c4_138 = arith.constant 4 : index
    %c0_139 = arith.constant 0 : index
    %c0_140 = arith.constant 0 : index
    %210 = vector.load %arg3[%c4_138, %c0_139, %c0_140] : memref<8x64x32xf32, #tpu.memory_space<vmem>>, vector<1x64x32xf32>
    %211 = vector.shape_cast %210 : vector<1x64x32xf32> to vector<64x32xf32>
    %212 = vector.extract_strided_slice %184 {offsets = [0, 4, 0], sizes = [4, 1, 32], strides = [1, 1, 1]} : vector<4x8x32xf32> to vector<4x1x32xf32>
    %213 = vector.shape_cast %212 : vector<4x1x32xf32> to vector<4x32xf32>
    %cst_141 = arith.constant dense<0.000000e+00> : vector<64x4xf32>
    %214 = tpu.matmul %211, %213, %cst_141 {dimension_numbers = #tpu.dot_dimension_numbers<[1], [1], [0], [0], [0, 0, 1, 0], [], []>} : vector<64x32xf32>, vector<4x32xf32>, vector<64x4xf32> -> vector<64x4xf32>
    %215 = arith.addf %209, %214 : vector<64x4xf32>
    %c5_142 = arith.constant 5 : index
    %c0_143 = arith.constant 0 : index
    %c0_144 = arith.constant 0 : index
    %216 = vector.load %arg3[%c5_142, %c0_143, %c0_144] : memref<8x64x32xf32, #tpu.memory_space<vmem>>, vector<1x64x32xf32>
    %217 = vector.shape_cast %216 : vector<1x64x32xf32> to vector<64x32xf32>
    %218 = vector.extract_strided_slice %184 {offsets = [0, 5, 0], sizes = [4, 1, 32], strides = [1, 1, 1]} : vector<4x8x32xf32> to vector<4x1x32xf32>
    %219 = vector.shape_cast %218 : vector<4x1x32xf32> to vector<4x32xf32>
    %cst_145 = arith.constant dense<0.000000e+00> : vector<64x4xf32>
    %220 = tpu.matmul %217, %219, %cst_145 {dimension_numbers = #tpu.dot_dimension_numbers<[1], [1], [0], [0], [0, 0, 1, 0], [], []>} : vector<64x32xf32>, vector<4x32xf32>, vector<64x4xf32> -> vector<64x4xf32>
    %221 = arith.addf %215, %220 : vector<64x4xf32>
    %c6_146 = arith.constant 6 : index
    %c0_147 = arith.constant 0 : index
    %c0_148 = arith.constant 0 : index
    %222 = vector.load %arg3[%c6_146, %c0_147, %c0_148] : memref<8x64x32xf32, #tpu.memory_space<vmem>>, vector<1x64x32xf32>
    %223 = vector.shape_cast %222 : vector<1x64x32xf32> to vector<64x32xf32>
    %224 = vector.extract_strided_slice %184 {offsets = [0, 6, 0], sizes = [4, 1, 32], strides = [1, 1, 1]} : vector<4x8x32xf32> to vector<4x1x32xf32>
    %225 = vector.shape_cast %224 : vector<4x1x32xf32> to vector<4x32xf32>
    %cst_149 = arith.constant dense<0.000000e+00> : vector<64x4xf32>
    %226 = tpu.matmul %223, %225, %cst_149 {dimension_numbers = #tpu.dot_dimension_numbers<[1], [1], [0], [0], [0, 0, 1, 0], [], []>} : vector<64x32xf32>, vector<4x32xf32>, vector<64x4xf32> -> vector<64x4xf32>
    %227 = arith.addf %221, %226 : vector<64x4xf32>
    %c7_150 = arith.constant 7 : index
    %c0_151 = arith.constant 0 : index
    %c0_152 = arith.constant 0 : index
    %228 = vector.load %arg3[%c7_150, %c0_151, %c0_152] : memref<8x64x32xf32, #tpu.memory_space<vmem>>, vector<1x64x32xf32>
    %229 = vector.shape_cast %228 : vector<1x64x32xf32> to vector<64x32xf32>
    %230 = vector.extract_strided_slice %184 {offsets = [0, 7, 0], sizes = [4, 1, 32], strides = [1, 1, 1]} : vector<4x8x32xf32> to vector<4x1x32xf32>
    %231 = vector.shape_cast %230 : vector<4x1x32xf32> to vector<4x32xf32>
    %cst_153 = arith.constant dense<0.000000e+00> : vector<64x4xf32>
    %232 = tpu.matmul %229, %231, %cst_153 {dimension_numbers = #tpu.dot_dimension_numbers<[1], [1], [0], [0], [0, 0, 1, 0], [], []>} : vector<64x32xf32>, vector<4x32xf32>, vector<64x4xf32> -> vector<64x4xf32>
    %233 = arith.addf %227, %232 : vector<64x4xf32>
    %c0_154 = arith.constant 0 : index
    %c0_155 = arith.constant 0 : index
    %234 = vector.load %arg4[%c0_154, %c0_155] : memref<64x1xf32, #tpu.memory_space<vmem>>, vector<64x1xf32>
    %235 = vector.broadcast %234 : vector<64x1xf32> to vector<64x4xf32>
    %236 = arith.addf %233, %235 : vector<64x4xf32>
    %c0_156 = arith.constant 0 : index
    %c0_157 = arith.constant 0 : index
    %c3_158 = arith.constant 3 : index
    %c0_159 = arith.constant 0 : index
    %237 = vector.load %arg5[%c0_156, %c0_157, %c3_158, %c0_159] : memref<1x64x4x4xf32, #tpu.memory_space<vmem>>, vector<1x64x1x4xf32>
    %238 = vector.shape_cast %237 : vector<1x64x1x4xf32> to vector<64x4xf32>
    %239 = vector.shape_cast %236 : vector<64x4xf32> to vector<1x64x1x4xf32>
    tpu.vector_store %arg5[%c0_156, %c0_157, %c3_158, %c0_159], %239 {strides = array<i32>} : memref<1x64x4x4xf32, #tpu.memory_space<vmem>>, vector<1x64x1x4xf32>,
    return
  }
  func.func @transform_0(%arg0: i32, %arg1: i32) -> (i32, i32, i32, i32) {
    %c0_i32 = arith.constant 0 : i32
    %c0_i32_0 = arith.constant 0 : i32
    %c0_i32_1 = arith.constant 0 : i32
    return %arg0, %c0_i32, %arg1, %c0_i32_0 : i32, i32, i32, i32
  }
  func.func @transform_1(%arg0: i32, %arg1: i32) -> (i32, i32, i32) {
    %c0_i32 = arith.constant 0 : i32
    %c0_i32_0 = arith.constant 0 : i32
    %c0_i32_1 = arith.constant 0 : i32
    %c0_i32_2 = arith.constant 0 : i32
    return %c0_i32, %c0_i32_0, %c0_i32_1 : i32, i32, i32
  }
  func.func @transform_2(%arg0: i32, %arg1: i32) -> (i32, i32) {
    %c0_i32 = arith.constant 0 : i32
    %c0_i32_0 = arith.constant 0 : i32
    %c0_i32_1 = arith.constant 0 : i32
    return %c0_i32, %c0_i32_0 : i32, i32
  }
  func.func @transform_3(%arg0: i32, %arg1: i32) -> (i32, i32, i32, i32) {
    %c0_i32 = arith.constant 0 : i32
    %c0_i32_0 = arith.constant 0 : i32
    %c0_i32_1 = arith.constant 0 : i32
    return %arg0, %c0_i32, %arg1, %c0_i32_0 : i32, i32, i32, i32
  }
}

</mosaic_0001>

<llo_original>
// kernel: tpu_custom_call.1
$region0: #{tpu_custom_call.1}
  #allocation0 [shape = 'u32[]', space=smem, size = 0x4, offset = 0x4, fixed_abs, tag = 'smem constant byte address 0x4 - core index']
  #allocation1 [shape = 'u32[144,128]{1,0:T(1,128)}', space=vmem, size = 0x12000, scoped, tag = 'internal scratch']
  %s0 = inlined_call_operand.hbm [shape: f32[2,4,32,32], index: 0, kind: input, shape index: {}]
  %s1 = inlined_call_operand.hbm [shape: f32[8,64,32], index: 1, kind: input, shape index: {}]
  %s2 = inlined_call_operand.hbm [shape: f32[64,1], index: 2, kind: input, shape index: {}]
  %s3 = inlined_call_operand.hbm [shape: f32[2,64,4,4], index: 3, kind: output, shape index: {}]
  %s4 = sld [smem:[#allocation0]]
  $region57: #{tpu_custom_call.1} parent=0
    _
  %s6 = ssub.s32 1, %s4
  %s7 = scalar_select 0, %s6, %s4
  $region1: #{tpu_custom_call.1} parent=0
    #allocation2 [shape = 'u8[131072]{0}', space=vmem, size = 0x20000, scoped, tag = 'input window, operand 0']
    #allocation3 [shape = 's32[2]{0}', space=sflag, size = 0x8, scoped, tag = 'scoped memory for tpu_custom_call.1']
    #allocation4 [shape = 's32[2]{0}', space=sflag, size = 0x8, scoped, tag = 'scoped memory for tpu_custom_call.1']
    #allocation5 [shape = 'u8[262144]{0}', space=vmem, size = 0x40000, scoped, tag = 'input window, operand 1, single buffered']
    #allocation6 [shape = 's32[1]{0}', space=sflag, size = 0x4, scoped, tag = 'scoped memory for tpu_custom_call.1']
    #allocation7 [shape = 'u8[32768]{0}', space=vmem, size = 0x8000, scoped, tag = 'input window, operand 2, single buffered']
    #allocation8 [shape = 'u8[262144]{0}', space=vmem, size = 0x40000, scoped, tag = 'output window, operand 0']
    %8 = vsyncpa [#allocation3], 0
    %s9 = scalar_lea.sflag [#allocation3], 1
    %10 = vsyncpa %s9, 0
    %11 = vsyncpa [#allocation6], 0
    %12 = vsyncpa [#allocation4], 0
    %s13 = scalar_lea.sflag [#allocation4], 1
    %14 = vsyncpa %s13, 0
    loop: start=0, step=1, limit=4
    $region2: #{tpu_custom_call.1} parent=1 // loop_pre_header
      _
    $region3: #{tpu_custom_call.1} parent=1 // loop_header
      %s16 = sphi 0, %s20
      %p17 = scmp.ge.s32.totalorder %s16, 4
      %s23 = sphi 0, %s35
      %s24 = sphi 0, %s31
      %s25 = sphi 0, %s23
      %s26 = sphi 0, %s24
      %s27 = sphi 0, %s25
      %s28 = sphi 0, %s26
      %s40 = sphi 0, %s42
      %s43 = sphi 0, %s40
      %s44 = sphi 0, %s43
      %s60 = sphi 0, %s44
      %s64 = sphi 0, %s64
      %s66 = sphi 0, %s64
      %s67 = sphi 0, %s66
      %s81 = sphi 0, %s67
      %s85 = sphi 0, %s85
      %s87 = sphi 0, %s85
      %s88 = sphi 0, %s87
      %s102 = sphi 0, %s88
      %s110 = sphi 0, %s112
      %s113 = sphi 0, %s110
      %s114 = sphi 0, %s113
      %s130 = sphi 0, %s114
    $region4: #{tpu_custom_call.1} parent=1 // loop_header_branch
      %19 = sbr.rel (%p17) target = $region8
    $region5: #{tpu_custom_call.1} parent=1 // loop_body
      %s21 = ssub.s32 %s16, 1
      %s22 = ssub.s32 %s16, 2
      %s29 = sadd.s32 1, %s24
      %p30 = scmp.ge.s32.totalorder %s29, 1
      %s31 = scalar_select %p30, 0, %s29
      %s32 = sadd.s32 1, %s23
      %s33 = scalar_select %p30, %s32, %s23
      %p34 = scmp.ge.s32.totalorder %s33, 2
      %s35 = scalar_select %p34, 0, %s33
      %s36 = ssub.s32 %s23, %s35
      %s37 = ssub.s32 %s24, %s31
      %s38 = sor.u32 %s36, %s37
      %p39 = scmp.eq.s32.totalorder %s38, 0
      %s41 = sadd.s32 %s40, 1
      %s42 = scalar_select %p39, %s40, %s41
      %p45 = pneg %p39
      %p46 = scmp.eq.s32.totalorder %s16, 1
      %p47 = por %p45, %p46
      %p48 = scmp.ne.s32.totalorder %s40, %s43
      %p49 = scmp.eq.s32.totalorder %s16, 0
      %p50 = por %p48, %p49
      %p51 = scmp.ne.s32.totalorder %s40, %s43
      %p52 = scmp.eq.s32.totalorder %s21, 1
      %p53 = por %p51, %p52
      %p54 = scmp.ne.s32.totalorder %s43, %s44
      %p55 = scmp.eq.s32.totalorder %s21, 0
      %p56 = por %p54, %p55
      %p57 = scmp.ne.s32.totalorder %s43, %s44
      %p58 = scmp.eq.s32.totalorder %s22, 1
      %p59 = por %p57, %p58
      %p61 = scmp.ne.s32.totalorder %s44, %s60
      %p62 = scmp.eq.s32.totalorder %s22, 0
      %p63 = por %p61, %p62
      %s65 = sadd.s32 %s64, 1
      %p68 = scmp.eq.s32.totalorder %s16, 1
      %p69 = scmp.ne.s32.totalorder %s64, %s66
      %p70 = scmp.eq.s32.totalorder %s16, 0
      %p71 = por %p69, %p70
      %p72 = scmp.ne.s32.totalorder %s64, %s66
      %p73 = scmp.eq.s32.totalorder %s21, 1
      %p74 = por %p72, %p73
      %p75 = scmp.ne.s32.totalorder %s66, %s67
      %p76 = scmp.eq.s32.totalorder %s21, 0
      %p77 = por %p75, %p76
      %p78 = scmp.ne.s32.totalorder %s66, %s67
      %p79 = scmp.eq.s32.totalorder %s22, 1
      %p80 = por %p78, %p79
      %p82 = scmp.ne.s32.totalorder %s67, %s81
      %p83 = scmp.eq.s32.totalorder %s22, 0
      %p84 = por %p82, %p83
      %s86 = sadd.s32 %s85, 1
      %p89 = scmp.eq.s32.totalorder %s16, 1
      %p90 = scmp.ne.s32.totalorder %s85, %s87
      %p91 = scmp.eq.s32.totalorder %s16, 0
      %p92 = por %p90, %p91
      %p93 = scmp.ne.s32.totalorder %s85, %s87
      %p94 = scmp.eq.s32.totalorder %s21, 1
      %p95 = por %p93, %p94
      %p96 = scmp.ne.s32.totalorder %s87, %s88
      %p97 = scmp.eq.s32.totalorder %s21, 0
      %p98 = por %p96, %p97
      %p99 = scmp.ne.s32.totalorder %s87, %s88
      %p100 = scmp.eq.s32.totalorder %s22, 1
      %p101 = por %p99, %p100
      %p103 = scmp.ne.s32.totalorder %s88, %s102
      %p104 = scmp.eq.s32.totalorder %s22, 0
      %p105 = por %p103, %p104
      %s106 = ssub.s32 %s23, %s35
      %s107 = ssub.s32 %s24, %s31
      %s108 = sor.u32 %s106, %s107
      %p109 = scmp.eq.s32.totalorder %s108, 0
      %s111 = sadd.s32 %s110, 1
      %s112 = scalar_select %p109, %s110, %s111
      %p115 = pneg %p109
      %p116 = scmp.eq.s32.totalorder %s16, 1
      %p117 = por %p115, %p116
      %p118 = scmp.ne.s32.totalorder %s110, %s113
      %p119 = scmp.eq.s32.totalorder %s16, 0
      %p120 = por %p118, %p119
      %p121 = scmp.ne.s32.totalorder %s110, %s113
      %p122 = scmp.eq.s32.totalorder %s21, 1
      %p123 = por %p121, %p122
      %p124 = scmp.ne.s32.totalorder %s113, %s114
      %p125 = scmp.eq.s32.totalorder %s21, 0
      %p126 = por %p124, %p125
      %p127 = scmp.ne.s32.totalorder %s113, %s114
      %p128 = scmp.eq.s32.totalorder %s22, 1
      %p129 = por %p127, %p128
      %p131 = scmp.ne.s32.totalorder %s114, %s130
      %p132 = scmp.eq.s32.totalorder %s22, 0
      %p133 = por %p131, %p132
      %p134 = scmp.le.s32.totalorder 1, %s16
      %p135 = scmp.lt.s32.totalorder %s16, 3
      %p136 = pnand %p134, %p135
      %p137 = pneg %p136
      // Predicated region
      $region9: #{tpu_custom_call.1} parent=5 // pred_check
        _
      $region10: #{tpu_custom_call.1} parent=5 // pred_check_branch
        %139 = sbr.rel (%p136) target = $region12
      $region11: #{tpu_custom_call.1} parent=5 // pred_region
        %s140 = ssub.s32 %s16, 1
        // Predicated region
        $region13: #{tpu_custom_call.1} parent=11 // pred_check
          %p141 = pneg %p77
        $region14: #{tpu_custom_call.1} parent=11 // pred_check_branch
          %143 = sbr.rel (%p141) target = $region16
        $region15: #{tpu_custom_call.1} parent=11 // pred_region
          %s145 = ssub.s32 8192, 8192
          %146 = vsyncadd [#allocation6], %s145
          %s147 = sshll.u32 [#allocation5], 4
          %s148 = int_to_ptr.vmem [resolvable:$true] %s147
          %153 = dma.hbm_to_vmem [thread:$0]  %s1, 8192, %s148, [#allocation6], 128, 128, 8
        $region16: #{tpu_custom_call.1} parent=11 // pred_fallthru
          _
        // Predicated region
        $region17: #{tpu_custom_call.1} parent=11 // pred_check
          %p154 = pneg %p98
        $region18: #{tpu_custom_call.1} parent=11 // pred_check_branch
          %156 = sbr.rel (%p154) target = $region20
        $region19: #{tpu_custom_call.1} parent=11 // pred_region
          %s158 = ssub.s32 1024, 1024
          %159 = vsyncadd [#allocation6], %s158
          %s160 = sshll.u32 [#allocation7], 4
          %s161 = int_to_ptr.vmem [resolvable:$true] %s160
          %166 = dma.hbm_to_vmem [thread:$0]  %s2, 1024, %s161, [#allocation6], 128, 128, 8
        $region20: #{tpu_custom_call.1} parent=11 // pred_fallthru
          _
      $region12: #{tpu_custom_call.1} parent=5 // pred_fallthru
        _
      %p167 = scmp.lt.s32.totalorder %s16, 2
      // Predicated region
      $region21: #{tpu_custom_call.1} parent=5 // pred_check
        %p168 = pneg %p167
      $region22: #{tpu_custom_call.1} parent=5 // pred_check_branch
        %170 = sbr.rel (%p168) target = $region24
      $region23: #{tpu_custom_call.1} parent=5 // pred_region
        // Predicated region
        $region25: #{tpu_custom_call.1} parent=23 // pred_check
          %p171 = pneg %p50
        $region26: #{tpu_custom_call.1} parent=23 // pred_check_branch
          %173 = sbr.rel (%p171) target = $region28
        $region27: #{tpu_custom_call.1} parent=23 // pred_region
          %s174 = sand.u32 %s40, 1
          %s175 = scalar_lea.sflag [#allocation3], %s174
          %s176 = sand.u32 %s40, 1
          %s177 = smul.addr %s176, 128
          %s178 = scalar_lea.vmem [#allocation2], %s177
          %s179 = smul.u32 4, %s24
          %s181 = ssub.s32 2048, 2048
          %182 = vsyncadd %s175, %s181
          %s183 = smul.addr %s23, 16
          %s184 = sadd.s32 %s179, %s183
          %s185 = smul.addr %s184, 128
          %s186 = scalar_lea.hbm %s0, %s185
          %s187 = sshll.u32 %s178, 4
          %s188 = int_to_ptr.vmem [resolvable:$true] %s187
          %193 = dma.hbm_to_vmem [thread:$0]  %s186, 2048, %s188, %s175, 128, 128, 8
        $region28: #{tpu_custom_call.1} parent=23 // pred_fallthru
          _
      $region24: #{tpu_custom_call.1} parent=5 // pred_fallthru
        _
      %p194 = scmp.le.s32.totalorder 1, %s16
      %p195 = scmp.lt.s32.totalorder %s16, 3
      %p196 = pnand %p194, %p195
      %p197 = pneg %p196
      // Predicated region
      $region29: #{tpu_custom_call.1} parent=5 // pred_check
        _
      $region30: #{tpu_custom_call.1} parent=5 // pred_check_branch
        %199 = sbr.rel (%p196) target = $region32
      $region31: #{tpu_custom_call.1} parent=5 // pred_region
        %s200 = ssub.s32 %s16, 1
        %s201 = sand.u32 %s43, 1
        %s202 = scalar_lea.sflag [#allocation3], %s201
        %s203 = sand.u32 %s43, 1
        %s204 = smul.addr %s203, 128
        %s205 = scalar_lea.vmem [#allocation2], %s204
        // Predicated region
        $region33: #{tpu_custom_call.1} parent=31 // pred_check
          %p206 = pneg %p56
        $region34: #{tpu_custom_call.1} parent=31 // pred_check_branch
          %208 = sbr.rel (%p206) target = $region36
        $region35: #{tpu_custom_call.1} parent=31 // pred_region
          %209 = dma.done %s202, 2048
        $region36: #{tpu_custom_call.1} parent=31 // pred_fallthru
          _
        // Predicated region
        $region37: #{tpu_custom_call.1} parent=31 // pred_check
          %p210 = pneg %p77
        $region38: #{tpu_custom_call.1} parent=31 // pred_check_branch
          %212 = sbr.rel (%p210) target = $region40
        $region39: #{tpu_custom_call.1} parent=31 // pred_region
          %213 = dma.done [#allocation6], 8192
        $region40: #{tpu_custom_call.1} parent=31 // pred_fallthru
          _
        // Predicated region
        $region41: #{tpu_custom_call.1} parent=31 // pred_check
          %p214 = pneg %p98
        $region42: #{tpu_custom_call.1} parent=31 // pred_check_branch
          %216 = sbr.rel (%p214) target = $region44
        $region43: #{tpu_custom_call.1} parent=31 // pred_region
          %217 = dma.done [#allocation6], 1024
        $region44: #{tpu_custom_call.1} parent=31 // pred_fallthru
          _
        %s218 = sand.u32 %s43, 1
        %s219 = scalar_lea.sflag [#allocation3], %s218
        %s220 = sand.u32 %s43, 1
        %s221 = smul.addr %s220, 128
        %s222 = scalar_lea.vmem [#allocation2], %s221
        %p223 = pneg %p56
        %p224 = pneg %p53
        %p225 = pneg %p77
        %p226 = pneg %p74
        %p227 = pneg %p98
        %p228 = pneg %p95
        %p229 = pneg %p126
        %p230 = pneg %p123
        %s231 = sand.u32 %s113, 1
        %s232 = scalar_lea.sflag [#allocation4], %s231
        %s233 = sand.u32 %s113, 1
        %s234 = smul.addr %s233, 256
        %s235 = scalar_lea.vmem [#allocation8], %s234
        %s236 = smul.u32 4, %s26
        %v237 = vld [vmem:[%s205] sm:$0xff]
        %v238 = vld [vmem:[%s205 + $0x20] sm:$0xff]
        %v239 = vld [vmem:[%s205 + $0x40] sm:$0xff]
        %v240 = vld [vmem:[%s205 + $0x60] sm:$0xff]
        %241 = vxpose.xlu0.b32.start [1/16] %v237, 128
        %242 = vxpose.xlu0.b32.cont [2/16] %v238, 128
        %243 = vxpose.xlu0.b32.cont [3/16] %v239, 128
        %244 = vxpose.xlu0.b32.cont [4/16] %v240, 128
        %245 = vxpose.xlu0.b32.cont [5/16] 0.0, 128
        %246 = vxpose.xlu0.b32.cont [6/16] 0.0, 128
        %247 = vxpose.xlu0.b32.cont [7/16] 0.0, 128
        %248 = vxpose.xlu0.b32.cont [8/16] 0.0, 128
        %249 = vxpose.xlu0.b32.cont [9/16] 0.0, 128
        %250 = vxpose.xlu0.b32.cont [10/16] 0.0, 128
        %251 = vxpose.xlu0.b32.cont [11/16] 0.0, 128
        %252 = vxpose.xlu0.b32.cont [12/16] 0.0, 128
        %253 = vxpose.xlu0.b32.cont [13/16] 0.0, 128
        %254 = vxpose.xlu0.b32.cont [14/16] 0.0, 128
        %255 = vxpose.xlu0.b32.cont [15/16] 0.0, 128
        %256 = vxpose.xlu0.b32.end [16/16] 0.0, 128
        %v257 = vpop.trf.xlu0
        %v258 = vpop.trf.xlu0
        %v259 = vpop.trf.xlu0
        %v260 = vpop.trf.xlu0
        %v261 = vpop.trf.xlu0
        %v262 = vpop.trf.xlu0
        %v263 = vpop.trf.xlu0
        %v264 = vpop.trf.xlu0
        %v265 = vpop.trf.xlu0
        %v266 = vpop.trf.xlu0
        %v267 = vpop.trf.xlu0
        %v268 = vpop.trf.xlu0
        %v269 = vpop.trf.xlu0
        %v270 = vpop.trf.xlu0
        %v271 = vpop.trf.xlu0
        %v272 = vpop.trf.xlu0
        %v273 = vld [vmem:[#allocation5] sm:$0xff]
        %v274 = vld [vmem:[#allocation5 + $0x8] sm:$0xff]
        %v275 = vld [vmem:[#allocation5 + $0x10] sm:$0xff]
        %v276 = vld [vmem:[#allocation5 + $0x18] sm:$0xff]
        %v277 = vld [vmem:[#allocation5 + $0x20] sm:$0xff]
        %v278 = vld [vmem:[#allocation5 + $0x28] sm:$0xff]
        %v279 = vld [vmem:[#allocation5 + $0x30] sm:$0xff]
        %v280 = vld [vmem:[#allocation5 + $0x38] sm:$0xff]
        %s281 = scalar_lea.vmem [#allocation5], 64
        %v282 = vld [vmem:[%s281] sm:$0xff]
        %v283 = vld [vmem:[%s281 + $0x8] sm:$0xff]
        %v284 = vld [vmem:[%s281 + $0x10] sm:$0xff]
        %v285 = vld [vmem:[%s281 + $0x18] sm:$0xff]
        %v286 = vld [vmem:[%s281 + $0x20] sm:$0xff]
        %v287 = vld [vmem:[%s281 + $0x28] sm:$0xff]
        %v288 = vld [vmem:[%s281 + $0x30] sm:$0xff]
        %v289 = vld [vmem:[%s281 + $0x38] sm:$0xff]
        %v294 = vrot.slane %v257, 1
        %vm295 = vcmask 1041409
        %v296 = vsel %vm295, %v258, %v294
        %v297 = vrot.slane %v259, 7
        %vm298 = vcmask 1042434
        %v299 = vsel %vm298, %v297, %v296
        %v300 = vrot.slane %v260, 6
        %vm301 = vcmask 1043459
        %v302 = vsel %vm301, %v300, %v299
        %vm303 = vcmask 261120
        %v305 = vsel %vm303, %v282, 0
        %v308 = vsel %vm303, %v283, 0
        %v311 = vsel %vm303, %v284, 0
        %v314 = vsel %vm303, %v285, 0
        %v317 = vsel %vm303, %v286, 0
        %v320 = vsel %vm303, %v287, 0
        %v323 = vsel %vm303, %v288, 0
        %v326 = vsel %vm303, %v289, 0
        %v328 = vsel %vm303, %v302, 0
        %330 = vmatprep.subr.mxu0 0.0
        %331 = vmatpush1.xpose.msra.mxu0 %v328
        %332 = vmatprep.subr.mxu0 0.0
        %333 = vmatpush1.xpose.msra.mxu0 0.0
        %334 = vmatprep.subr.mxu0 0.0
        %335 = vmatpush1.xpose.msra.mxu0 0.0
        %336 = vmatprep.subr.mxu0 0.0
        %337 = vmatpush1.xpose.msra.mxu0 0.0
        %338 = vmatprep.subr.mxu0 0.0
        %339 = vmatpush1.xpose.msra.mxu0 0.0
        %340 = vmatprep.subr.mxu0 0.0
        %341 = vmatpush1.xpose.msra.mxu0 0.0
        %342 = vmatprep.subr.mxu0 0.0
        %343 = vmatpush1.xpose.msra.mxu0 0.0
        %344 = vmatprep.subr.mxu0 0.0
        %345 = vmatpush1.xpose.msra.mxu0 0.0
        %346 = vmatprep.subr.mxu0 0.0
        %347 = vmatpush1.xpose.msra.mxu0 0.0
        %348 = vmatprep.subr.mxu0 0.0
        %349 = vmatpush1.xpose.msra.mxu0 0.0
        %350 = vmatprep.subr.mxu0 0.0
        %351 = vmatpush1.xpose.msra.mxu0 0.0
        %352 = vmatprep.subr.mxu0 0.0
        %353 = vmatpush1.xpose.msra.mxu0 0.0
        %354 = vmatprep.subr.mxu0 0.0
        %355 = vmatpush1.xpose.msra.mxu0 0.0
        %356 = vmatprep.subr.mxu0 0.0
        %357 = vmatpush1.xpose.msra.mxu0 0.0
        %358 = vmatprep.subr.mxu0 0.0
        %359 = vmatpush1.xpose.msra.mxu0 0.0
        %360 = vmatprep.subr.mxu0 0.0
        %361 = vmatpush1.xpose.msra.mxu0 0.0
        %362 = vmatprep.subr.mxu0 0.0
        %363 = vmatpush1.xpose.msra.mxu0 0.0
        %364 = vmatprep.subr.mxu0 0.0
        %365 = vmatpush1.xpose.msra.mxu0 0.0
        %366 = vmatprep.subr.mxu0 0.0
        %367 = vmatpush1.xpose.msra.mxu0 0.0
        %368 = vmatprep.subr.mxu0 0.0
        %369 = vmatpush1.xpose.msra.mxu0 0.0
        %370 = vmatprep.subr.mxu0 0.0
        %371 = vmatpush1.xpose.msra.mxu0 0.0
        %372 = vmatprep.subr.mxu0 0.0
        %373 = vmatpush1.xpose.msra.mxu0 0.0
        %374 = vmatprep.subr.mxu0 0.0
        %375 = vmatpush1.xpose.msra.mxu0 0.0
        %376 = vmatprep.subr.mxu0 0.0
        %377 = vmatpush1.xpose.msra.mxu0 0.0
        %378 = vmatprep.subr.mxu0 0.0
        %379 = vmatpush1.xpose.msra.mxu0 0.0
        %380 = vmatprep.subr.mxu0 0.0
        %381 = vmatpush1.xpose.msra.mxu0 0.0
        %382 = vmatprep.subr.mxu0 0.0
        %383 = vmatpush1.xpose.msra.mxu0 0.0
        %384 = vmatprep.subr.mxu0 0.0
        %385 = vmatpush1.xpose.msra.mxu0 0.0
        %386 = vmatprep.subr.mxu0 0.0
        %387 = vmatpush1.xpose.msra.mxu0 0.0
        %388 = vmatprep.subr.mxu0 0.0
        %389 = vmatpush1.xpose.msra.mxu0 0.0
        %390 = vmatprep.subr.mxu0 0.0
        %391 = vmatpush1.xpose.msra.mxu0 0.0
        %392 = vmatprep.subr.mxu0 0.0
        %393 = vmatpush1.xpose.msra.mxu0 0.0
        %394 = vmatprep.mubr.f32.mxu0 0.0
        %395 = vmatmul.mubr.f32.gmra.mrb[0].mxu0 %v305
        %v396 = vpop.f32.mrb[0].mxu0
        %v397 = vadd.f32 0.0, %v396
        %v398 = vpop.f32.mrb[0].mxu0
        %399 = vmatprep.mubr.f32.mxu0 0.0
        %400 = vmatmul.mubr.f32.gmra.mrb[0].mxu0 %v308
        %v401 = vpop.f32.mrb[0].mxu0
        %v402 = vadd.f32 0.0, %v401
        %v403 = vpop.f32.mrb[0].mxu0
        %404 = vmatprep.mubr.f32.mxu0 0.0
        %405 = vmatmul.mubr.f32.gmra.mrb[0].mxu0 %v311
        %v406 = vpop.f32.mrb[0].mxu0
        %v407 = vadd.f32 0.0, %v406
        %v408 = vpop.f32.mrb[0].mxu0
        %409 = vmatprep.mubr.f32.mxu0 0.0
        %410 = vmatmul.mubr.f32.gmra.mrb[0].mxu0 %v314
        %v411 = vpop.f32.mrb[0].mxu0
        %v412 = vadd.f32 0.0, %v411
        %v413 = vpop.f32.mrb[0].mxu0
        %414 = vmatprep.mubr.f32.mxu0 0.0
        %415 = vmatmul.mubr.f32.gmra.mrb[0].mxu0 %v317
        %v416 = vpop.f32.mrb[0].mxu0
        %v417 = vadd.f32 0.0, %v416
        %v418 = vpop.f32.mrb[0].mxu0
        %419 = vmatprep.mubr.f32.mxu0 0.0
        %420 = vmatmul.mubr.f32.gmra.mrb[0].mxu0 %v320
        %v421 = vpop.f32.mrb[0].mxu0
        %v422 = vadd.f32 0.0, %v421
        %v423 = vpop.f32.mrb[0].mxu0
        %424 = vmatprep.mubr.f32.mxu0 0.0
        %425 = vmatmul.mubr.f32.gmra.mrb[0].mxu0 %v323
        %v426 = vpop.f32.mrb[0].mxu0
        %v427 = vadd.f32 0.0, %v426
        %v428 = vpop.f32.mrb[0].mxu0
        %429 = vmatprep.mubr.f32.mxu0 0.0
        %430 = vmatmul.mubr.f32.gmra.mrb[0].mxu0 %v326
        %v431 = vpop.f32.mrb[0].mxu0
        %v432 = vadd.f32 0.0, %v431
        %v433 = vpop.f32.mrb[0].mxu0
        %434 = vdwg.mxu0
        %v435 = vrot.slane %v258, 7
        %v436 = vsel %vm295, %v435, %v257
        %v437 = vrot.slane %v259, 6
        %v438 = vsel %vm298, %v437, %v436
        %v439 = vrot.slane %v260, 5
        %v440 = vsel %vm301, %v439, %v438
        %v442 = vsel %vm303, %v273, 0
        %v445 = vsel %vm303, %v274, 0
        %v448 = vsel %vm303, %v275, 0
        %v451 = vsel %vm303, %v276, 0
        %v454 = vsel %vm303, %v277, 0
        %v457 = vsel %vm303, %v278, 0
        %v460 = vsel %vm303, %v279, 0
        %v463 = vsel %vm303, %v280, 0
        %v465 = vsel %vm303, %v440, 0
        %467 = vmatprep.subr.mxu0 0.0
        %468 = vmatpush1.xpose.msra.mxu0 %v465
        %469 = vmatprep.subr.mxu0 0.0
        %470 = vmatpush1.xpose.msra.mxu0 0.0
        %471 = vmatprep.subr.mxu0 0.0
        %472 = vmatpush1.xpose.msra.mxu0 0.0
        %473 = vmatprep.subr.mxu0 0.0
        %474 = vmatpush1.xpose.msra.mxu0 0.0
        %475 = vmatprep.subr.mxu0 0.0
        %476 = vmatpush1.xpose.msra.mxu0 0.0
        %477 = vmatprep.subr.mxu0 0.0
        %478 = vmatpush1.xpose.msra.mxu0 0.0
        %479 = vmatprep.subr.mxu0 0.0
        %480 = vmatpush1.xpose.msra.mxu0 0.0
        %481 = vmatprep.subr.mxu0 0.0
        %482 = vmatpush1.xpose.msra.mxu0 0.0
        %483 = vmatprep.subr.mxu0 0.0
        %484 = vmatpush1.xpose.msra.mxu0 0.0
        %485 = vmatprep.subr.mxu0 0.0
        %486 = vmatpush1.xpose.msra.mxu0 0.0
        %487 = vmatprep.subr.mxu0 0.0
        %488 = vmatpush1.xpose.msra.mxu0 0.0
        %489 = vmatprep.subr.mxu0 0.0
        %490 = vmatpush1.xpose.msra.mxu0 0.0
        %491 = vmatprep.subr.mxu0 0.0
        %492 = vmatpush1.xpose.msra.mxu0 0.0
        %493 = vmatprep.subr.mxu0 0.0
        %494 = vmatpush1.xpose.msra.mxu0 0.0
        %495 = vmatprep.subr.mxu0 0.0
        %496 = vmatpush1.xpose.msra.mxu0 0.0
        %497 = vmatprep.subr.mxu0 0.0
        %498 = vmatpush1.xpose.msra.mxu0 0.0
        %499 = vmatprep.subr.mxu0 0.0
        %500 = vmatpush1.xpose.msra.mxu0 0.0
        %501 = vmatprep.subr.mxu0 0.0
        %502 = vmatpush1.xpose.msra.mxu0 0.0
        %503 = vmatprep.subr.mxu0 0.0
        %504 = vmatpush1.xpose.msra.mxu0 0.0
        %505 = vmatprep.subr.mxu0 0.0
        %506 = vmatpush1.xpose.msra.mxu0 0.0
        %507 = vmatprep.subr.mxu0 0.0
        %508 = vmatpush1.xpose.msra.mxu0 0.0
        %509 = vmatprep.subr.mxu0 0.0
        %510 = vmatpush1.xpose.msra.mxu0 0.0
        %511 = vmatprep.subr.mxu0 0.0
        %512 = vmatpush1.xpose.msra.mxu0 0.0
        %513 = vmatprep.subr.mxu0 0.0
        %514 = vmatpush1.xpose.msra.mxu0 0.0
        %515 = vmatprep.subr.mxu0 0.0
        %516 = vmatpush1.xpose.msra.mxu0 0.0
        %517 = vmatprep.subr.mxu0 0.0
        %518 = vmatpush1.xpose.msra.mxu0 0.0
        %519 = vmatprep.subr.mxu0 0.0
        %520 = vmatpush1.xpose.msra.mxu0 0.0
        %521 = vmatprep.subr.mxu0 0.0
        %522 = vmatpush1.xpose.msra.mxu0 0.0
        %523 = vmatprep.subr.mxu0 0.0
        %524 = vmatpush1.xpose.msra.mxu0 0.0
        %525 = vmatprep.subr.mxu0 0.0
        %526 = vmatpush1.xpose.msra.mxu0 0.0
        %527 = vmatprep.subr.mxu0 0.0
        %528 = vmatpush1.xpose.msra.mxu0 0.0
        %529 = vmatprep.subr.mxu0 0.0
        %530 = vmatpush1.xpose.msra.mxu0 0.0
        %531 = vmatprep.mubr.f32.mxu0 0.0
        %532 = vmatmul.mubr.f32.gmra.mrb[0].mxu0 %v442
        %v533 = vpop.f32.mrb[0].mxu0
        %v534 = vadd.f32 %v397, %v533
        %v535 = vpop.f32.mrb[0].mxu0
        %536 = vmatprep.mubr.f32.mxu0 0.0
        %537 = vmatmul.mubr.f32.gmra.mrb[0].mxu0 %v445
        %v538 = vpop.f32.mrb[0].mxu0
        %v539 = vadd.f32 %v402, %v538
        %v540 = vpop.f32.mrb[0].mxu0
        %541 = vmatprep.mubr.f32.mxu0 0.0
        %542 = vmatmul.mubr.f32.gmra.mrb[0].mxu0 %v448
        %v543 = vpop.f32.mrb[0].mxu0
        %v544 = vadd.f32 %v407, %v543
        %v545 = vpop.f32.mrb[0].mxu0
        %546 = vmatprep.mubr.f32.mxu0 0.0
        %547 = vmatmul.mubr.f32.gmra.mrb[0].mxu0 %v451
        %v548 = vpop.f32.mrb[0].mxu0
        %v549 = vadd.f32 %v412, %v548
        %v550 = vpop.f32.mrb[0].mxu0
        %551 = vmatprep.mubr.f32.mxu0 0.0
        %552 = vmatmul.mubr.f32.gmra.mrb[0].mxu0 %v454
        %v553 = vpop.f32.mrb[0].mxu0
        %v554 = vadd.f32 %v417, %v553
        %v555 = vpop.f32.mrb[0].mxu0
        %556 = vmatprep.mubr.f32.mxu0 0.0
        %557 = vmatmul.mubr.f32.gmra.mrb[0].mxu0 %v457
        %v558 = vpop.f32.mrb[0].mxu0
        %v559 = vadd.f32 %v422, %v558
        %v560 = vpop.f32.mrb[0].mxu0
        %561 = vmatprep.mubr.f32.mxu0 0.0
        %562 = vmatmul.mubr.f32.gmra.mrb[0].mxu0 %v460
        %v563 = vpop.f32.mrb[0].mxu0
        %v564 = vadd.f32 %v427, %v563
        %v565 = vpop.f32.mrb[0].mxu0
        %566 = vmatprep.mubr.f32.mxu0 0.0
        %567 = vmatmul.mubr.f32.gmra.mrb[0].mxu0 %v463
        %v568 = vpop.f32.mrb[0].mxu0
        %v569 = vadd.f32 %v432, %v568
        %v570 = vpop.f32.mrb[0].mxu0
        %571 = vdwg.mxu0
        %s572 = scalar_lea.vmem [#allocation5], 128
        %v573 = vld [vmem:[%s572] sm:$0xff]
        %v574 = vld [vmem:[%s572 + $0x8] sm:$0xff]
        %v575 = vld [vmem:[%s572 + $0x10] sm:$0xff]
        %v576 = vld [vmem:[%s572 + $0x18] sm:$0xff]
        %v577 = vld [vmem:[%s572 + $0x20] sm:$0xff]
        %v578 = vld [vmem:[%s572 + $0x28] sm:$0xff]
        %v579 = vld [vmem:[%s572 + $0x30] sm:$0xff]
        %v580 = vld [vmem:[%s572 + $0x38] sm:$0xff]
        %v581 = vrot.slane %v257, 2
        %v582 = vrot.slane %v258, 1
        %v583 = vsel %vm295, %v582, %v581
        %v584 = vsel %vm298, %v259, %v583
        %v585 = vrot.slane %v260, 7
        %v586 = vsel %vm301, %v585, %v584
        %v588 = vsel %vm303, %v573, 0
        %v591 = vsel %vm303, %v574, 0
        %v594 = vsel %vm303, %v575, 0
        %v597 = vsel %vm303, %v576, 0
        %v600 = vsel %vm303, %v577, 0
        %v603 = vsel %vm303, %v578, 0
        %v606 = vsel %vm303, %v579, 0
        %v609 = vsel %vm303, %v580, 0
        %v611 = vsel %vm303, %v586, 0
        %613 = vmatprep.subr.mxu0 0.0
        %614 = vmatpush1.xpose.msra.mxu0 %v611
        %615 = vmatprep.subr.mxu0 0.0
        %616 = vmatpush1.xpose.msra.mxu0 0.0
        %617 = vmatprep.subr.mxu0 0.0
        %618 = vmatpush1.xpose.msra.mxu0 0.0
        %619 = vmatprep.subr.mxu0 0.0
        %620 = vmatpush1.xpose.msra.mxu0 0.0
        %621 = vmatprep.subr.mxu0 0.0
        %622 = vmatpush1.xpose.msra.mxu0 0.0
        %623 = vmatprep.subr.mxu0 0.0
        %624 = vmatpush1.xpose.msra.mxu0 0.0
        %625 = vmatprep.subr.mxu0 0.0
        %626 = vmatpush1.xpose.msra.mxu0 0.0
        %627 = vmatprep.subr.mxu0 0.0
        %628 = vmatpush1.xpose.msra.mxu0 0.0
        %629 = vmatprep.subr.mxu0 0.0
        %630 = vmatpush1.xpose.msra.mxu0 0.0
        %631 = vmatprep.subr.mxu0 0.0
        %632 = vmatpush1.xpose.msra.mxu0 0.0
        %633 = vmatprep.subr.mxu0 0.0
        %634 = vmatpush1.xpose.msra.mxu0 0.0
        %635 = vmatprep.subr.mxu0 0.0
        %636 = vmatpush1.xpose.msra.mxu0 0.0
        %637 = vmatprep.subr.mxu0 0.0
        %638 = vmatpush1.xpose.msra.mxu0 0.0
        %639 = vmatprep.subr.mxu0 0.0
        %640 = vmatpush1.xpose.msra.mxu0 0.0
        %641 = vmatprep.subr.mxu0 0.0
        %642 = vmatpush1.xpose.msra.mxu0 0.0
        %643 = vmatprep.subr.mxu0 0.0
        %644 = vmatpush1.xpose.msra.mxu0 0.0
        %645 = vmatprep.subr.mxu0 0.0
        %646 = vmatpush1.xpose.msra.mxu0 0.0
        %647 = vmatprep.subr.mxu0 0.0
        %648 = vmatpush1.xpose.msra.mxu0 0.0
        %649 = vmatprep.subr.mxu0 0.0
        %650 = vmatpush1.xpose.msra.mxu0 0.0
        %651 = vmatprep.subr.mxu0 0.0
        %652 = vmatpush1.xpose.msra.mxu0 0.0
        %653 = vmatprep.subr.mxu0 0.0
        %654 = vmatpush1.xpose.msra.mxu0 0.0
        %655 = vmatprep.subr.mxu0 0.0
        %656 = vmatpush1.xpose.msra.mxu0 0.0
        %657 = vmatprep.subr.mxu0 0.0
        %658 = vmatpush1.xpose.msra.mxu0 0.0
        %659 = vmatprep.subr.mxu0 0.0
        %660 = vmatpush1.xpose.msra.mxu0 0.0
        %661 = vmatprep.subr.mxu0 0.0
        %662 = vmatpush1.xpose.msra.mxu0 0.0
        %663 = vmatprep.subr.mxu0 0.0
        %664 = vmatpush1.xpose.msra.mxu0 0.0
        %665 = vmatprep.subr.mxu0 0.0
        %666 = vmatpush1.xpose.msra.mxu0 0.0
        %667 = vmatprep.subr.mxu0 0.0
        %668 = vmatpush1.xpose.msra.mxu0 0.0
        %669 = vmatprep.subr.mxu0 0.0
        %670 = vmatpush1.xpose.msra.mxu0 0.0
        %671 = vmatprep.subr.mxu0 0.0
        %672 = vmatpush1.xpose.msra.mxu0 0.0
        %673 = vmatprep.subr.mxu0 0.0
        %674 = vmatpush1.xpose.msra.mxu0 0.0
        %675 = vmatprep.subr.mxu0 0.0
        %676 = vmatpush1.xpose.msra.mxu0 0.0
        %677 = vmatprep.mubr.f32.mxu0 0.0
        %678 = vmatmul.mubr.f32.gmra.mrb[0].mxu0 %v588
        %v679 = vpop.f32.mrb[0].mxu0
        %v680 = vadd.f32 0.0, %v679
        %v681 = vpop.f32.mrb[0].mxu0
        %682 = vmatprep.mubr.f32.mxu0 0.0
        %683 = vmatmul.mubr.f32.gmra.mrb[0].mxu0 %v591
        %v684 = vpop.f32.mrb[0].mxu0
        %v685 = vadd.f32 0.0, %v684
        %v686 = vpop.f32.mrb[0].mxu0
        %687 = vmatprep.mubr.f32.mxu0 0.0
        %688 = vmatmul.mubr.f32.gmra.mrb[0].mxu0 %v594
        %v689 = vpop.f32.mrb[0].mxu0
        %v690 = vadd.f32 0.0, %v689
        %v691 = vpop.f32.mrb[0].mxu0
        %692 = vmatprep.mubr.f32.mxu0 0.0
        %693 = vmatmul.mubr.f32.gmra.mrb[0].mxu0 %v597
        %v694 = vpop.f32.mrb[0].mxu0
        %v695 = vadd.f32 0.0, %v694
        %v696 = vpop.f32.mrb[0].mxu0
        %697 = vmatprep.mubr.f32.mxu0 0.0
        %698 = vmatmul.mubr.f32.gmra.mrb[0].mxu0 %v600
        %v699 = vpop.f32.mrb[0].mxu0
        %v700 = vadd.f32 0.0, %v699
        %v701 = vpop.f32.mrb[0].mxu0
        %702 = vmatprep.mubr.f32.mxu0 0.0
        %703 = vmatmul.mubr.f32.gmra.mrb[0].mxu0 %v603
        %v704 = vpop.f32.mrb[0].mxu0
        %v705 = vadd.f32 0.0, %v704
        %v706 = vpop.f32.mrb[0].mxu0
        %707 = vmatprep.mubr.f32.mxu0 0.0
        %708 = vmatmul.mubr.f32.gmra.mrb[0].mxu0 %v606
        %v709 = vpop.f32.mrb[0].mxu0
        %v710 = vadd.f32 0.0, %v709
        %v711 = vpop.f32.mrb[0].mxu0
        %712 = vmatprep.mubr.f32.mxu0 0.0
        %713 = vmatmul.mubr.f32.gmra.mrb[0].mxu0 %v609
        %v714 = vpop.f32.mrb[0].mxu0
        %v715 = vadd.f32 0.0, %v714
        %v716 = vpop.f32.mrb[0].mxu0
        %717 = vdwg.mxu0
        %v718 = vadd.f32 %v534, %v680
        %v719 = vadd.f32 %v539, %v685
        %v720 = vadd.f32 %v544, %v690
        %v721 = vadd.f32 %v549, %v695
        %v722 = vadd.f32 %v554, %v700
        %v723 = vadd.f32 %v559, %v705
        %v724 = vadd.f32 %v564, %v710
        %v725 = vadd.f32 %v569, %v715
        %s726 = scalar_lea.vmem [#allocation5], 192
        %v727 = vld [vmem:[%s726] sm:$0xff]
        %v728 = vld [vmem:[%s726 + $0x8] sm:$0xff]
        %v729 = vld [vmem:[%s726 + $0x10] sm:$0xff]
        %v730 = vld [vmem:[%s726 + $0x18] sm:$0xff]
        %v731 = vld [vmem:[%s726 + $0x20] sm:$0xff]
        %v732 = vld [vmem:[%s726 + $0x28] sm:$0xff]
        %v733 = vld [vmem:[%s726 + $0x30] sm:$0xff]
        %v734 = vld [vmem:[%s726 + $0x38] sm:$0xff]
        %v735 = vrot.slane %v257, 3
        %v736 = vrot.slane %v258, 2
        %v737 = vsel %vm295, %v736, %v735
        %v738 = vrot.slane %v259, 1
        %v739 = vsel %vm298, %v738, %v737
        %v740 = vsel %vm301, %v260, %v739
        %v742 = vsel %vm303, %v727, 0
        %v745 = vsel %vm303, %v728, 0
        %v748 = vsel %vm303, %v729, 0
        %v751 = vsel %vm303, %v730, 0
        %v754 = vsel %vm303, %v731, 0
        %v757 = vsel %vm303, %v732, 0
        %v760 = vsel %vm303, %v733, 0
        %v763 = vsel %vm303, %v734, 0
        %v765 = vsel %vm303, %v740, 0
        %767 = vmatprep.subr.mxu0 0.0
        %768 = vmatpush1.xpose.msra.mxu0 %v765
        %769 = vmatprep.subr.mxu0 0.0
        %770 = vmatpush1.xpose.msra.mxu0 0.0
        %771 = vmatprep.subr.mxu0 0.0
        %772 = vmatpush1.xpose.msra.mxu0 0.0
        %773 = vmatprep.subr.mxu0 0.0
        %774 = vmatpush1.xpose.msra.mxu0 0.0
        %775 = vmatprep.subr.mxu0 0.0
        %776 = vmatpush1.xpose.msra.mxu0 0.0
        %777 = vmatprep.subr.mxu0 0.0
        %778 = vmatpush1.xpose.msra.mxu0 0.0
        %779 = vmatprep.subr.mxu0 0.0
        %780 = vmatpush1.xpose.msra.mxu0 0.0
        %781 = vmatprep.subr.mxu0 0.0
        %782 = vmatpush1.xpose.msra.mxu0 0.0
        %783 = vmatprep.subr.mxu0 0.0
        %784 = vmatpush1.xpose.msra.mxu0 0.0
        %785 = vmatprep.subr.mxu0 0.0
        %786 = vmatpush1.xpose.msra.mxu0 0.0
        %787 = vmatprep.subr.mxu0 0.0
        %788 = vmatpush1.xpose.msra.mxu0 0.0
        %789 = vmatprep.subr.mxu0 0.0
        %790 = vmatpush1.xpose.msra.mxu0 0.0
        %791 = vmatprep.subr.mxu0 0.0
        %792 = vmatpush1.xpose.msra.mxu0 0.0
        %793 = vmatprep.subr.mxu0 0.0
        %794 = vmatpush1.xpose.msra.mxu0 0.0
        %795 = vmatprep.subr.mxu0 0.0
        %796 = vmatpush1.xpose.msra.mxu0 0.0
        %797 = vmatprep.subr.mxu0 0.0
        %798 = vmatpush1.xpose.msra.mxu0 0.0
        %799 = vmatprep.subr.mxu0 0.0
        %800 = vmatpush1.xpose.msra.mxu0 0.0
        %801 = vmatprep.subr.mxu0 0.0
        %802 = vmatpush1.xpose.msra.mxu0 0.0
        %803 = vmatprep.subr.mxu0 0.0
        %804 = vmatpush1.xpose.msra.mxu0 0.0
        %805 = vmatprep.subr.mxu0 0.0
        %806 = vmatpush1.xpose.msra.mxu0 0.0
        %807 = vmatprep.subr.mxu0 0.0
        %808 = vmatpush1.xpose.msra.mxu0 0.0
        %809 = vmatprep.subr.mxu0 0.0
        %810 = vmatpush1.xpose.msra.mxu0 0.0
        %811 = vmatprep.subr.mxu0 0.0
        %812 = vmatpush1.xpose.msra.mxu0 0.0
        %813 = vmatprep.subr.mxu0 0.0
        %814 = vmatpush1.xpose.msra.mxu0 0.0
        %815 = vmatprep.subr.mxu0 0.0
        %816 = vmatpush1.xpose.msra.mxu0 0.0
        %817 = vmatprep.subr.mxu0 0.0
        %818 = vmatpush1.xpose.msra.mxu0 0.0
        %819 = vmatprep.subr.mxu0 0.0
        %820 = vmatpush1.xpose.msra.mxu0 0.0
        %821 = vmatprep.subr.mxu0 0.0
        %822 = vmatpush1.xpose.msra.mxu0 0.0
        %823 = vmatprep.subr.mxu0 0.0
        %824 = vmatpush1.xpose.msra.mxu0 0.0
        %825 = vmatprep.subr.mxu0 0.0
        %826 = vmatpush1.xpose.msra.mxu0 0.0
        %827 = vmatprep.subr.mxu0 0.0
        %828 = vmatpush1.xpose.msra.mxu0 0.0
        %829 = vmatprep.subr.mxu0 0.0
        %830 = vmatpush1.xpose.msra.mxu0 0.0
        %831 = vmatprep.mubr.f32.mxu0 0.0
        %832 = vmatmul.mubr.f32.gmra.mrb[0].mxu0 %v742
        %v833 = vpop.f32.mrb[0].mxu0
        %v834 = vadd.f32 0.0, %v833
        %v835 = vpop.f32.mrb[0].mxu0
        %836 = vmatprep.mubr.f32.mxu0 0.0
        %837 = vmatmul.mubr.f32.gmra.mrb[0].mxu0 %v745
        %v838 = vpop.f32.mrb[0].mxu0
        %v839 = vadd.f32 0.0, %v838
        %v840 = vpop.f32.mrb[0].mxu0
        %841 = vmatprep.mubr.f32.mxu0 0.0
        %842 = vmatmul.mubr.f32.gmra.mrb[0].mxu0 %v748
        %v843 = vpop.f32.mrb[0].mxu0
        %v844 = vadd.f32 0.0, %v843
        %v845 = vpop.f32.mrb[0].mxu0
        %846 = vmatprep.mubr.f32.mxu0 0.0
        %847 = vmatmul.mubr.f32.gmra.mrb[0].mxu0 %v751
        %v848 = vpop.f32.mrb[0].mxu0
        %v849 = vadd.f32 0.0, %v848
        %v850 = vpop.f32.mrb[0].mxu0
        %851 = vmatprep.mubr.f32.mxu0 0.0
        %852 = vmatmul.mubr.f32.gmra.mrb[0].mxu0 %v754
        %v853 = vpop.f32.mrb[0].mxu0
        %v854 = vadd.f32 0.0, %v853
        %v855 = vpop.f32.mrb[0].mxu0
        %856 = vmatprep.mubr.f32.mxu0 0.0
        %857 = vmatmul.mubr.f32.gmra.mrb[0].mxu0 %v757
        %v858 = vpop.f32.mrb[0].mxu0
        %v859 = vadd.f32 0.0, %v858
        %v860 = vpop.f32.mrb[0].mxu0
        %861 = vmatprep.mubr.f32.mxu0 0.0
        %862 = vmatmul.mubr.f32.gmra.mrb[0].mxu0 %v760
        %v863 = vpop.f32.mrb[0].mxu0
        %v864 = vadd.f32 0.0, %v863
        %v865 = vpop.f32.mrb[0].mxu0
        %866 = vmatprep.mubr.f32.mxu0 0.0
        %867 = vmatmul.mubr.f32.gmra.mrb[0].mxu0 %v763
        %v868 = vpop.f32.mrb[0].mxu0
        %v869 = vadd.f32 0.0, %v868
        %v870 = vpop.f32.mrb[0].mxu0
        %871 = vdwg.mxu0
        %v872 = vadd.f32 %v718, %v834
        %v873 = vadd.f32 %v719, %v839
        %v874 = vadd.f32 %v720, %v844
        %v875 = vadd.f32 %v721, %v849
        %v876 = vadd.f32 %v722, %v854
        %v877 = vadd.f32 %v723, %v859
        %v878 = vadd.f32 %v724, %v864
        %v879 = vadd.f32 %v725, %v869
        %s880 = scalar_lea.vmem [#allocation5], 256
        %v881 = vld [vmem:[%s880] sm:$0xff]
        %v882 = vld [vmem:[%s880 + $0x8] sm:$0xff]
        %v883 = vld [vmem:[%s880 + $0x10] sm:$0xff]
        %v884 = vld [vmem:[%s880 + $0x18] sm:$0xff]
        %v885 = vld [vmem:[%s880 + $0x20] sm:$0xff]
        %v886 = vld [vmem:[%s880 + $0x28] sm:$0xff]
        %v887 = vld [vmem:[%s880 + $0x30] sm:$0xff]
        %v888 = vld [vmem:[%s880 + $0x38] sm:$0xff]
        %v889 = vrot.slane %v257, 4
        %v890 = vrot.slane %v258, 3
        %v891 = vsel %vm295, %v890, %v889
        %v892 = vrot.slane %v259, 2
        %v893 = vsel %vm298, %v892, %v891
        %v894 = vrot.slane %v260, 1
        %v895 = vsel %vm301, %v894, %v893
        %v897 = vsel %vm303, %v881, 0
        %v900 = vsel %vm303, %v882, 0
        %v903 = vsel %vm303, %v883, 0
        %v906 = vsel %vm303, %v884, 0
        %v909 = vsel %vm303, %v885, 0
        %v912 = vsel %vm303, %v886, 0
        %v915 = vsel %vm303, %v887, 0
        %v918 = vsel %vm303, %v888, 0
        %v920 = vsel %vm303, %v895, 0
        %922 = vmatprep.subr.mxu0 0.0
        %923 = vmatpush1.xpose.msra.mxu0 %v920
        %924 = vmatprep.subr.mxu0 0.0
        %925 = vmatpush1.xpose.msra.mxu0 0.0
        %926 = vmatprep.subr.mxu0 0.0
        %927 = vmatpush1.xpose.msra.mxu0 0.0
        %928 = vmatprep.subr.mxu0 0.0
        %929 = vmatpush1.xpose.msra.mxu0 0.0
        %930 = vmatprep.subr.mxu0 0.0
        %931 = vmatpush1.xpose.msra.mxu0 0.0
        %932 = vmatprep.subr.mxu0 0.0
        %933 = vmatpush1.xpose.msra.mxu0 0.0
        %934 = vmatprep.subr.mxu0 0.0
        %935 = vmatpush1.xpose.msra.mxu0 0.0
        %936 = vmatprep.subr.mxu0 0.0
        %937 = vmatpush1.xpose.msra.mxu0 0.0
        %938 = vmatprep.subr.mxu0 0.0
        %939 = vmatpush1.xpose.msra.mxu0 0.0
        %940 = vmatprep.subr.mxu0 0.0
        %941 = vmatpush1.xpose.msra.mxu0 0.0
        %942 = vmatprep.subr.mxu0 0.0
        %943 = vmatpush1.xpose.msra.mxu0 0.0
        %944 = vmatprep.subr.mxu0 0.0
        %945 = vmatpush1.xpose.msra.mxu0 0.0
        %946 = vmatprep.subr.mxu0 0.0
        %947 = vmatpush1.xpose.msra.mxu0 0.0
        %948 = vmatprep.subr.mxu0 0.0
        %949 = vmatpush1.xpose.msra.mxu0 0.0
        %950 = vmatprep.subr.mxu0 0.0
        %951 = vmatpush1.xpose.msra.mxu0 0.0
        %952 = vmatprep.subr.mxu0 0.0
        %953 = vmatpush1.xpose.msra.mxu0 0.0
        %954 = vmatprep.subr.mxu0 0.0
        %955 = vmatpush1.xpose.msra.mxu0 0.0
        %956 = vmatprep.subr.mxu0 0.0
        %957 = vmatpush1.xpose.msra.mxu0 0.0
        %958 = vmatprep.subr.mxu0 0.0
        %959 = vmatpush1.xpose.msra.mxu0 0.0
        %960 = vmatprep.subr.mxu0 0.0
        %961 = vmatpush1.xpose.msra.mxu0 0.0
        %962 = vmatprep.subr.mxu0 0.0
        %963 = vmatpush1.xpose.msra.mxu0 0.0
        %964 = vmatprep.subr.mxu0 0.0
        %965 = vmatpush1.xpose.msra.mxu0 0.0
        %966 = vmatprep.subr.mxu0 0.0
        %967 = vmatpush1.xpose.msra.mxu0 0.0
        %968 = vmatprep.subr.mxu0 0.0
        %969 = vmatpush1.xpose.msra.mxu0 0.0
        %970 = vmatprep.subr.mxu0 0.0
        %971 = vmatpush1.xpose.msra.mxu0 0.0
        %972 = vmatprep.subr.mxu0 0.0
        %973 = vmatpush1.xpose.msra.mxu0 0.0
        %974 = vmatprep.subr.mxu0 0.0
        %975 = vmatpush1.xpose.msra.mxu0 0.0
        %976 = vmatprep.subr.mxu0 0.0
        %977 = vmatpush1.xpose.msra.mxu0 0.0
        %978 = vmatprep.subr.mxu0 0.0
        %979 = vmatpush1.xpose.msra.mxu0 0.0
        %980 = vmatprep.subr.mxu0 0.0
        %981 = vmatpush1.xpose.msra.mxu0 0.0
        %982 = vmatprep.subr.mxu0 0.0
        %983 = vmatpush1.xpose.msra.mxu0 0.0
        %984 = vmatprep.subr.mxu0 0.0
        %985 = vmatpush1.xpose.msra.mxu0 0.0
        %986 = vmatprep.mubr.f32.mxu0 0.0
        %987 = vmatmul.mubr.f32.gmra.mrb[0].mxu0 %v897
        %v988 = vpop.f32.mrb[0].mxu0
        %v989 = vadd.f32 0.0, %v988
        %v990 = vpop.f32.mrb[0].mxu0
        %991 = vmatprep.mubr.f32.mxu0 0.0
        %992 = vmatmul.mubr.f32.gmra.mrb[0].mxu0 %v900
        %v993 = vpop.f32.mrb[0].mxu0
        %v994 = vadd.f32 0.0, %v993
        %v995 = vpop.f32.mrb[0].mxu0
        %996 = vmatprep.mubr.f32.mxu0 0.0
        %997 = vmatmul.mubr.f32.gmra.mrb[0].mxu0 %v903
        %v998 = vpop.f32.mrb[0].mxu0
        %v999 = vadd.f32 0.0, %v998
        %v1000 = vpop.f32.mrb[0].mxu0
        %1001 = vmatprep.mubr.f32.mxu0 0.0
        %1002 = vmatmul.mubr.f32.gmra.mrb[0].mxu0 %v906
        %v1003 = vpop.f32.mrb[0].mxu0
        %v1004 = vadd.f32 0.0, %v1003
        %v1005 = vpop.f32.mrb[0].mxu0
        %1006 = vmatprep.mubr.f32.mxu0 0.0
        %1007 = vmatmul.mubr.f32.gmra.mrb[0].mxu0 %v909
        %v1008 = vpop.f32.mrb[0].mxu0
        %v1009 = vadd.f32 0.0, %v1008
        %v1010 = vpop.f32.mrb[0].mxu0
        %1011 = vmatprep.mubr.f32.mxu0 0.0
        %1012 = vmatmul.mubr.f32.gmra.mrb[0].mxu0 %v912
        %v1013 = vpop.f32.mrb[0].mxu0
        %v1014 = vadd.f32 0.0, %v1013
        %v1015 = vpop.f32.mrb[0].mxu0
        %1016 = vmatprep.mubr.f32.mxu0 0.0
        %1017 = vmatmul.mubr.f32.gmra.mrb[0].mxu0 %v915
        %v1018 = vpop.f32.mrb[0].mxu0
        %v1019 = vadd.f32 0.0, %v1018
        %v1020 = vpop.f32.mrb[0].mxu0
        %1021 = vmatprep.mubr.f32.mxu0 0.0
        %1022 = vmatmul.mubr.f32.gmra.mrb[0].mxu0 %v918
        %v1023 = vpop.f32.mrb[0].mxu0
        %v1024 = vadd.f32 0.0, %v1023
        %v1025 = vpop.f32.mrb[0].mxu0
        %1026 = vdwg.mxu0
        %v1027 = vadd.f32 %v872, %v989
        %v1028 = vadd.f32 %v873, %v994
        %v1029 = vadd.f32 %v874, %v999
        %v1030 = vadd.f32 %v875, %v1004
        %v1031 = vadd.f32 %v876, %v1009
        %v1032 = vadd.f32 %v877, %v1014
        %v1033 = vadd.f32 %v878, %v1019
        %v1034 = vadd.f32 %v879, %v1024
        %s1035 = scalar_lea.vmem [#allocation5], 320
        %v1036 = vld [vmem:[%s1035] sm:$0xff]
        %v1037 = vld [vmem:[%s1035 + $0x8] sm:$0xff]
        %v1038 = vld [vmem:[%s1035 + $0x10] sm:$0xff]
        %v1039 = vld [vmem:[%s1035 + $0x18] sm:$0xff]
        %v1040 = vld [vmem:[%s1035 + $0x20] sm:$0xff]
        %v1041 = vld [vmem:[%s1035 + $0x28] sm:$0xff]
        %v1042 = vld [vmem:[%s1035 + $0x30] sm:$0xff]
        %v1043 = vld [vmem:[%s1035 + $0x38] sm:$0xff]
        %v1044 = vrot.slane %v257, 5
        %v1045 = vrot.slane %v258, 4
        %v1046 = vsel %vm295, %v1045, %v1044
        %v1047 = vrot.slane %v259, 3
        %v1048 = vsel %vm298, %v1047, %v1046
        %v1049 = vrot.slane %v260, 2
        %v1050 = vsel %vm301, %v1049, %v1048
        %v1052 = vsel %vm303, %v1036, 0
        %v1055 = vsel %vm303, %v1037, 0
        %v1058 = vsel %vm303, %v1038, 0
        %v1061 = vsel %vm303, %v1039, 0
        %v1064 = vsel %vm303, %v1040, 0
        %v1067 = vsel %vm303, %v1041, 0
        %v1070 = vsel %vm303, %v1042, 0
        %v1073 = vsel %vm303, %v1043, 0
        %v1075 = vsel %vm303, %v1050, 0
        %1077 = vmatprep.subr.mxu0 0.0
        %1078 = vmatpush1.xpose.msra.mxu0 %v1075
        %1079 = vmatprep.subr.mxu0 0.0
        %1080 = vmatpush1.xpose.msra.mxu0 0.0
        %1081 = vmatprep.subr.mxu0 0.0
        %1082 = vmatpush1.xpose.msra.mxu0 0.0
        %1083 = vmatprep.subr.mxu0 0.0
        %1084 = vmatpush1.xpose.msra.mxu0 0.0
        %1085 = vmatprep.subr.mxu0 0.0
        %1086 = vmatpush1.xpose.msra.mxu0 0.0
        %1087 = vmatprep.subr.mxu0 0.0
        %1088 = vmatpush1.xpose.msra.mxu0 0.0
        %1089 = vmatprep.subr.mxu0 0.0
        %1090 = vmatpush1.xpose.msra.mxu0 0.0
        %1091 = vmatprep.subr.mxu0 0.0
        %1092 = vmatpush1.xpose.msra.mxu0 0.0
        %1093 = vmatprep.subr.mxu0 0.0
        %1094 = vmatpush1.xpose.msra.mxu0 0.0
        %1095 = vmatprep.subr.mxu0 0.0
        %1096 = vmatpush1.xpose.msra.mxu0 0.0
        %1097 = vmatprep.subr.mxu0 0.0
        %1098 = vmatpush1.xpose.msra.mxu0 0.0
        %1099 = vmatprep.subr.mxu0 0.0
        %1100 = vmatpush1.xpose.msra.mxu0 0.0
        %1101 = vmatprep.subr.mxu0 0.0
        %1102 = vmatpush1.xpose.msra.mxu0 0.0
        %1103 = vmatprep.subr.mxu0 0.0
        %1104 = vmatpush1.xpose.msra.mxu0 0.0
        %1105 = vmatprep.subr.mxu0 0.0
        %1106 = vmatpush1.xpose.msra.mxu0 0.0
        %1107 = vmatprep.subr.mxu0 0.0
        %1108 = vmatpush1.xpose.msra.mxu0 0.0
        %1109 = vmatprep.subr.mxu0 0.0
        %1110 = vmatpush1.xpose.msra.mxu0 0.0
        %1111 = vmatprep.subr.mxu0 0.0
        %1112 = vmatpush1.xpose.msra.mxu0 0.0
        %1113 = vmatprep.subr.mxu0 0.0
        %1114 = vmatpush1.xpose.msra.mxu0 0.0
        %1115 = vmatprep.subr.mxu0 0.0
        %1116 = vmatpush1.xpose.msra.mxu0 0.0
        %1117 = vmatprep.subr.mxu0 0.0
        %1118 = vmatpush1.xpose.msra.mxu0 0.0
        %1119 = vmatprep.subr.mxu0 0.0
        %1120 = vmatpush1.xpose.msra.mxu0 0.0
        %1121 = vmatprep.subr.mxu0 0.0
        %1122 = vmatpush1.xpose.msra.mxu0 0.0
        %1123 = vmatprep.subr.mxu0 0.0
        %1124 = vmatpush1.xpose.msra.mxu0 0.0
        %1125 = vmatprep.subr.mxu0 0.0
        %1126 = vmatpush1.xpose.msra.mxu0 0.0
        %1127 = vmatprep.subr.mxu0 0.0
        %1128 = vmatpush1.xpose.msra.mxu0 0.0
        %1129 = vmatprep.subr.mxu0 0.0
        %1130 = vmatpush1.xpose.msra.mxu0 0.0
        %1131 = vmatprep.subr.mxu0 0.0
        %1132 = vmatpush1.xpose.msra.mxu0 0.0
        %1133 = vmatprep.subr.mxu0 0.0
        %1134 = vmatpush1.xpose.msra.mxu0 0.0
        %1135 = vmatprep.subr.mxu0 0.0
        %1136 = vmatpush1.xpose.msra.mxu0 0.0
        %1137 = vmatprep.subr.mxu0 0.0
        %1138 = vmatpush1.xpose.msra.mxu0 0.0
        %1139 = vmatprep.subr.mxu0 0.0
        %1140 = vmatpush1.xpose.msra.mxu0 0.0
        %1141 = vmatprep.mubr.f32.mxu0 0.0
        %1142 = vmatmul.mubr.f32.gmra.mrb[0].mxu0 %v1052
        %v1143 = vpop.f32.mrb[0].mxu0
        %v1144 = vadd.f32 0.0, %v1143
        %v1145 = vpop.f32.mrb[0].mxu0
        %1146 = vmatprep.mubr.f32.mxu0 0.0
        %1147 = vmatmul.mubr.f32.gmra.mrb[0].mxu0 %v1055
        %v1148 = vpop.f32.mrb[0].mxu0
        %v1149 = vadd.f32 0.0, %v1148
        %v1150 = vpop.f32.mrb[0].mxu0
        %1151 = vmatprep.mubr.f32.mxu0 0.0
        %1152 = vmatmul.mubr.f32.gmra.mrb[0].mxu0 %v1058
        %v1153 = vpop.f32.mrb[0].mxu0
        %v1154 = vadd.f32 0.0, %v1153
        %v1155 = vpop.f32.mrb[0].mxu0
        %1156 = vmatprep.mubr.f32.mxu0 0.0
        %1157 = vmatmul.mubr.f32.gmra.mrb[0].mxu0 %v1061
        %v1158 = vpop.f32.mrb[0].mxu0
        %v1159 = vadd.f32 0.0, %v1158
        %v1160 = vpop.f32.mrb[0].mxu0
        %1161 = vmatprep.mubr.f32.mxu0 0.0
        %1162 = vmatmul.mubr.f32.gmra.mrb[0].mxu0 %v1064
        %v1163 = vpop.f32.mrb[0].mxu0
        %v1164 = vadd.f32 0.0, %v1163
        %v1165 = vpop.f32.mrb[0].mxu0
        %1166 = vmatprep.mubr.f32.mxu0 0.0
        %1167 = vmatmul.mubr.f32.gmra.mrb[0].mxu0 %v1067
        %v1168 = vpop.f32.mrb[0].mxu0
        %v1169 = vadd.f32 0.0, %v1168
        %v1170 = vpop.f32.mrb[0].mxu0
        %1171 = vmatprep.mubr.f32.mxu0 0.0
        %1172 = vmatmul.mubr.f32.gmra.mrb[0].mxu0 %v1070
        %v1173 = vpop.f32.mrb[0].mxu0
        %v1174 = vadd.f32 0.0, %v1173
        %v1175 = vpop.f32.mrb[0].mxu0
        %1176 = vmatprep.mubr.f32.mxu0 0.0
        %1177 = vmatmul.mubr.f32.gmra.mrb[0].mxu0 %v1073
        %v1178 = vpop.f32.mrb[0].mxu0
        %v1179 = vadd.f32 0.0, %v1178
        %v1180 = vpop.f32.mrb[0].mxu0
        %1181 = vdwg.mxu0
        %v1182 = vadd.f32 %v1027, %v1144
        %v1183 = vadd.f32 %v1028, %v1149
        %v1184 = vadd.f32 %v1029, %v1154
        %v1185 = vadd.f32 %v1030, %v1159
        %v1186 = vadd.f32 %v1031, %v1164
        %v1187 = vadd.f32 %v1032, %v1169
        %v1188 = vadd.f32 %v1033, %v1174
        %v1189 = vadd.f32 %v1034, %v1179
        %s1190 = scalar_lea.vmem [#allocation5], 384
        %v1191 = vld [vmem:[%s1190] sm:$0xff]
        %v1192 = vld [vmem:[%s1190 + $0x8] sm:$0xff]
        %v1193 = vld [vmem:[%s1190 + $0x10] sm:$0xff]
        %v1194 = vld [vmem:[%s1190 + $0x18] sm:$0xff]
        %v1195 = vld [vmem:[%s1190 + $0x20] sm:$0xff]
        %v1196 = vld [vmem:[%s1190 + $0x28] sm:$0xff]
        %v1197 = vld [vmem:[%s1190 + $0x30] sm:$0xff]
        %v1198 = vld [vmem:[%s1190 + $0x38] sm:$0xff]
        %v1199 = vrot.slane %v257, 6
        %v1200 = vrot.slane %v258, 5
        %v1201 = vsel %vm295, %v1200, %v1199
        %v1202 = vrot.slane %v259, 4
        %v1203 = vsel %vm298, %v1202, %v1201
        %v1204 = vrot.slane %v260, 3
        %v1205 = vsel %vm301, %v1204, %v1203
        %v1207 = vsel %vm303, %v1191, 0
        %v1210 = vsel %vm303, %v1192, 0
        %v1213 = vsel %vm303, %v1193, 0
        %v1216 = vsel %vm303, %v1194, 0
        %v1219 = vsel %vm303, %v1195, 0
        %v1222 = vsel %vm303, %v1196, 0
        %v1225 = vsel %vm303, %v1197, 0
        %v1228 = vsel %vm303, %v1198, 0
        %v1230 = vsel %vm303, %v1205, 0
        %1232 = vmatprep.subr.mxu0 0.0
        %1233 = vmatpush1.xpose.msra.mxu0 %v1230
        %1234 = vmatprep.subr.mxu0 0.0
        %1235 = vmatpush1.xpose.msra.mxu0 0.0
        %1236 = vmatprep.subr.mxu0 0.0
        %1237 = vmatpush1.xpose.msra.mxu0 0.0
        %1238 = vmatprep.subr.mxu0 0.0
        %1239 = vmatpush1.xpose.msra.mxu0 0.0
        %1240 = vmatprep.subr.mxu0 0.0
        %1241 = vmatpush1.xpose.msra.mxu0 0.0
        %1242 = vmatprep.subr.mxu0 0.0
        %1243 = vmatpush1.xpose.msra.mxu0 0.0
        %1244 = vmatprep.subr.mxu0 0.0
        %1245 = vmatpush1.xpose.msra.mxu0 0.0
        %1246 = vmatprep.subr.mxu0 0.0
        %1247 = vmatpush1.xpose.msra.mxu0 0.0
        %1248 = vmatprep.subr.mxu0 0.0
        %1249 = vmatpush1.xpose.msra.mxu0 0.0
        %1250 = vmatprep.subr.mxu0 0.0
        %1251 = vmatpush1.xpose.msra.mxu0 0.0
        %1252 = vmatprep.subr.mxu0 0.0
        %1253 = vmatpush1.xpose.msra.mxu0 0.0
        %1254 = vmatprep.subr.mxu0 0.0
        %1255 = vmatpush1.xpose.msra.mxu0 0.0
        %1256 = vmatprep.subr.mxu0 0.0
        %1257 = vmatpush1.xpose.msra.mxu0 0.0
        %1258 = vmatprep.subr.mxu0 0.0
        %1259 = vmatpush1.xpose.msra.mxu0 0.0
        %1260 = vmatprep.subr.mxu0 0.0
        %1261 = vmatpush1.xpose.msra.mxu0 0.0
        %1262 = vmatprep.subr.mxu0 0.0
        %1263 = vmatpush1.xpose.msra.mxu0 0.0
        %1264 = vmatprep.subr.mxu0 0.0
        %1265 = vmatpush1.xpose.msra.mxu0 0.0
        %1266 = vmatprep.subr.mxu0 0.0
        %1267 = vmatpush1.xpose.msra.mxu0 0.0
        %1268 = vmatprep.subr.mxu0 0.0
        %1269 = vmatpush1.xpose.msra.mxu0 0.0
        %1270 = vmatprep.subr.mxu0 0.0
        %1271 = vmatpush1.xpose.msra.mxu0 0.0
        %1272 = vmatprep.subr.mxu0 0.0
        %1273 = vmatpush1.xpose.msra.mxu0 0.0
        %1274 = vmatprep.subr.mxu0 0.0
        %1275 = vmatpush1.xpose.msra.mxu0 0.0
        %1276 = vmatprep.subr.mxu0 0.0
        %1277 = vmatpush1.xpose.msra.mxu0 0.0
        %1278 = vmatprep.subr.mxu0 0.0
        %1279 = vmatpush1.xpose.msra.mxu0 0.0
        %1280 = vmatprep.subr.mxu0 0.0
        %1281 = vmatpush1.xpose.msra.mxu0 0.0
        %1282 = vmatprep.subr.mxu0 0.0
        %1283 = vmatpush1.xpose.msra.mxu0 0.0
        %1284 = vmatprep.subr.mxu0 0.0
        %1285 = vmatpush1.xpose.msra.mxu0 0.0
        %1286 = vmatprep.subr.mxu0 0.0
        %1287 = vmatpush1.xpose.msra.mxu0 0.0
        %1288 = vmatprep.subr.mxu0 0.0
        %1289 = vmatpush1.xpose.msra.mxu0 0.0
        %1290 = vmatprep.subr.mxu0 0.0
        %1291 = vmatpush1.xpose.msra.mxu0 0.0
        %1292 = vmatprep.subr.mxu0 0.0
        %1293 = vmatpush1.xpose.msra.mxu0 0.0
        %1294 = vmatprep.subr.mxu0 0.0
        %1295 = vmatpush1.xpose.msra.mxu0 0.0
        %1296 = vmatprep.mubr.f32.mxu0 0.0
        %1297 = vmatmul.mubr.f32.gmra.mrb[0].mxu0 %v1207
        %v1298 = vpop.f32.mrb[0].mxu0
        %v1299 = vadd.f32 0.0, %v1298
        %v1300 = vpop.f32.mrb[0].mxu0
        %1301 = vmatprep.mubr.f32.mxu0 0.0
        %1302 = vmatmul.mubr.f32.gmra.mrb[0].mxu0 %v1210
        %v1303 = vpop.f32.mrb[0].mxu0
        %v1304 = vadd.f32 0.0, %v1303
        %v1305 = vpop.f32.mrb[0].mxu0
        %1306 = vmatprep.mubr.f32.mxu0 0.0
        %1307 = vmatmul.mubr.f32.gmra.mrb[0].mxu0 %v1213
        %v1308 = vpop.f32.mrb[0].mxu0
        %v1309 = vadd.f32 0.0, %v1308
        %v1310 = vpop.f32.mrb[0].mxu0
        %1311 = vmatprep.mubr.f32.mxu0 0.0
        %1312 = vmatmul.mubr.f32.gmra.mrb[0].mxu0 %v1216
        %v1313 = vpop.f32.mrb[0].mxu0
        %v1314 = vadd.f32 0.0, %v1313
        %v1315 = vpop.f32.mrb[0].mxu0
        %1316 = vmatprep.mubr.f32.mxu0 0.0
        %1317 = vmatmul.mubr.f32.gmra.mrb[0].mxu0 %v1219
        %v1318 = vpop.f32.mrb[0].mxu0
        %v1319 = vadd.f32 0.0, %v1318
        %v1320 = vpop.f32.mrb[0].mxu0
        %1321 = vmatprep.mubr.f32.mxu0 0.0
        %1322 = vmatmul.mubr.f32.gmra.mrb[0].mxu0 %v1222
        %v1323 = vpop.f32.mrb[0].mxu0
        %v1324 = vadd.f32 0.0, %v1323
        %v1325 = vpop.f32.mrb[0].mxu0
        %1326 = vmatprep.mubr.f32.mxu0 0.0
        %1327 = vmatmul.mubr.f32.gmra.mrb[0].mxu0 %v1225
        %v1328 = vpop.f32.mrb[0].mxu0
        %v1329 = vadd.f32 0.0, %v1328
        %v1330 = vpop.f32.mrb[0].mxu0
        %1331 = vmatprep.mubr.f32.mxu0 0.0
        %1332 = vmatmul.mubr.f32.gmra.mrb[0].mxu0 %v1228
        %v1333 = vpop.f32.mrb[0].mxu0
        %v1334 = vadd.f32 0.0, %v1333
        %v1335 = vpop.f32.mrb[0].mxu0
        %1336 = vdwg.mxu0
        %v1337 = vadd.f32 %v1182, %v1299
        %v1338 = vadd.f32 %v1183, %v1304
        %v1339 = vadd.f32 %v1184, %v1309
        %v1340 = vadd.f32 %v1185, %v1314
        %v1341 = vadd.f32 %v1186, %v1319
        %v1342 = vadd.f32 %v1187, %v1324
        %v1343 = vadd.f32 %v1188, %v1329
        %v1344 = vadd.f32 %v1189, %v1334
        %s1345 = scalar_lea.vmem [#allocation5], 448
        %v1346 = vld [vmem:[%s1345] sm:$0xff]
        %v1347 = vld [vmem:[%s1345 + $0x8] sm:$0xff]
        %v1348 = vld [vmem:[%s1345 + $0x10] sm:$0xff]
        %v1349 = vld [vmem:[%s1345 + $0x18] sm:$0xff]
        %v1350 = vld [vmem:[%s1345 + $0x20] sm:$0xff]
        %v1351 = vld [vmem:[%s1345 + $0x28] sm:$0xff]
        %v1352 = vld [vmem:[%s1345 + $0x30] sm:$0xff]
        %v1353 = vld [vmem:[%s1345 + $0x38] sm:$0xff]
        %v1354 = vrot.slane %v257, 7
        %v1355 = vrot.slane %v258, 6
        %v1356 = vsel %vm295, %v1355, %v1354
        %v1357 = vrot.slane %v259, 5
        %v1358 = vsel %vm298, %v1357, %v1356
        %v1359 = vrot.slane %v260, 4
        %v1360 = vsel %vm301, %v1359, %v1358
        %v1362 = vsel %vm303, %v1346, 0
        %v1365 = vsel %vm303, %v1347, 0
        %v1368 = vsel %vm303, %v1348, 0
        %v1371 = vsel %vm303, %v1349, 0
        %v1374 = vsel %vm303, %v1350, 0
        %v1377 = vsel %vm303, %v1351, 0
        %v1380 = vsel %vm303, %v1352, 0
        %v1383 = vsel %vm303, %v1353, 0
        %v1385 = vsel %vm303, %v1360, 0
        %1387 = vmatprep.subr.mxu0 0.0
        %1388 = vmatpush1.xpose.msra.mxu0 %v1385
        %1389 = vmatprep.subr.mxu0 0.0
        %1390 = vmatpush1.xpose.msra.mxu0 0.0
        %1391 = vmatprep.subr.mxu0 0.0
        %1392 = vmatpush1.xpose.msra.mxu0 0.0
        %1393 = vmatprep.subr.mxu0 0.0
        %1394 = vmatpush1.xpose.msra.mxu0 0.0
        %1395 = vmatprep.subr.mxu0 0.0
        %1396 = vmatpush1.xpose.msra.mxu0 0.0
        %1397 = vmatprep.subr.mxu0 0.0
        %1398 = vmatpush1.xpose.msra.mxu0 0.0
        %1399 = vmatprep.subr.mxu0 0.0
        %1400 = vmatpush1.xpose.msra.mxu0 0.0
        %1401 = vmatprep.subr.mxu0 0.0
        %1402 = vmatpush1.xpose.msra.mxu0 0.0
        %1403 = vmatprep.subr.mxu0 0.0
        %1404 = vmatpush1.xpose.msra.mxu0 0.0
        %1405 = vmatprep.subr.mxu0 0.0
        %1406 = vmatpush1.xpose.msra.mxu0 0.0
        %1407 = vmatprep.subr.mxu0 0.0
        %1408 = vmatpush1.xpose.msra.mxu0 0.0
        %1409 = vmatprep.subr.mxu0 0.0
        %1410 = vmatpush1.xpose.msra.mxu0 0.0
        %1411 = vmatprep.subr.mxu0 0.0
        %1412 = vmatpush1.xpose.msra.mxu0 0.0
        %1413 = vmatprep.subr.mxu0 0.0
        %1414 = vmatpush1.xpose.msra.mxu0 0.0
        %1415 = vmatprep.subr.mxu0 0.0
        %1416 = vmatpush1.xpose.msra.mxu0 0.0
        %1417 = vmatprep.subr.mxu0 0.0
        %1418 = vmatpush1.xpose.msra.mxu0 0.0
        %1419 = vmatprep.subr.mxu0 0.0
        %1420 = vmatpush1.xpose.msra.mxu0 0.0
        %1421 = vmatprep.subr.mxu0 0.0
        %1422 = vmatpush1.xpose.msra.mxu0 0.0
        %1423 = vmatprep.subr.mxu0 0.0
        %1424 = vmatpush1.xpose.msra.mxu0 0.0
        %1425 = vmatprep.subr.mxu0 0.0
        %1426 = vmatpush1.xpose.msra.mxu0 0.0
        %1427 = vmatprep.subr.mxu0 0.0
        %1428 = vmatpush1.xpose.msra.mxu0 0.0
        %1429 = vmatprep.subr.mxu0 0.0
        %1430 = vmatpush1.xpose.msra.mxu0 0.0
        %1431 = vmatprep.subr.mxu0 0.0
        %1432 = vmatpush1.xpose.msra.mxu0 0.0
        %1433 = vmatprep.subr.mxu0 0.0
        %1434 = vmatpush1.xpose.msra.mxu0 0.0
        %1435 = vmatprep.subr.mxu0 0.0
        %1436 = vmatpush1.xpose.msra.mxu0 0.0
        %1437 = vmatprep.subr.mxu0 0.0
        %1438 = vmatpush1.xpose.msra.mxu0 0.0
        %1439 = vmatprep.subr.mxu0 0.0
        %1440 = vmatpush1.xpose.msra.mxu0 0.0
        %1441 = vmatprep.subr.mxu0 0.0
        %1442 = vmatpush1.xpose.msra.mxu0 0.0
        %1443 = vmatprep.subr.mxu0 0.0
        %1444 = vmatpush1.xpose.msra.mxu0 0.0
        %1445 = vmatprep.subr.mxu0 0.0
        %1446 = vmatpush1.xpose.msra.mxu0 0.0
        %1447 = vmatprep.subr.mxu0 0.0
        %1448 = vmatpush1.xpose.msra.mxu0 0.0
        %1449 = vmatprep.subr.mxu0 0.0
        %1450 = vmatpush1.xpose.msra.mxu0 0.0
        %1451 = vmatprep.mubr.f32.mxu0 0.0
        %1452 = vmatmul.mubr.f32.gmra.mrb[0].mxu0 %v1362
        %v1453 = vpop.f32.mrb[0].mxu0
        %v1454 = vadd.f32 0.0, %v1453
        %v1455 = vpop.f32.mrb[0].mxu0
        %1456 = vmatprep.mubr.f32.mxu0 0.0
        %1457 = vmatmul.mubr.f32.gmra.mrb[0].mxu0 %v1365
        %v1458 = vpop.f32.mrb[0].mxu0
        %v1459 = vadd.f32 0.0, %v1458
        %v1460 = vpop.f32.mrb[0].mxu0
        %1461 = vmatprep.mubr.f32.mxu0 0.0
        %1462 = vmatmul.mubr.f32.gmra.mrb[0].mxu0 %v1368
        %v1463 = vpop.f32.mrb[0].mxu0
        %v1464 = vadd.f32 0.0, %v1463
        %v1465 = vpop.f32.mrb[0].mxu0
        %1466 = vmatprep.mubr.f32.mxu0 0.0
        %1467 = vmatmul.mubr.f32.gmra.mrb[0].mxu0 %v1371
        %v1468 = vpop.f32.mrb[0].mxu0
        %v1469 = vadd.f32 0.0, %v1468
        %v1470 = vpop.f32.mrb[0].mxu0
        %1471 = vmatprep.mubr.f32.mxu0 0.0
        %1472 = vmatmul.mubr.f32.gmra.mrb[0].mxu0 %v1374
        %v1473 = vpop.f32.mrb[0].mxu0
        %v1474 = vadd.f32 0.0, %v1473
        %v1475 = vpop.f32.mrb[0].mxu0
        %1476 = vmatprep.mubr.f32.mxu0 0.0
        %1477 = vmatmul.mubr.f32.gmra.mrb[0].mxu0 %v1377
        %v1478 = vpop.f32.mrb[0].mxu0
        %v1479 = vadd.f32 0.0, %v1478
        %v1480 = vpop.f32.mrb[0].mxu0
        %1481 = vmatprep.mubr.f32.mxu0 0.0
        %1482 = vmatmul.mubr.f32.gmra.mrb[0].mxu0 %v1380
        %v1483 = vpop.f32.mrb[0].mxu0
        %v1484 = vadd.f32 0.0, %v1483
        %v1485 = vpop.f32.mrb[0].mxu0
        %1486 = vmatprep.mubr.f32.mxu0 0.0
        %1487 = vmatmul.mubr.f32.gmra.mrb[0].mxu0 %v1383
        %v1488 = vpop.f32.mrb[0].mxu0
        %v1489 = vadd.f32 0.0, %v1488
        %v1490 = vpop.f32.mrb[0].mxu0
        %1491 = vdwg.mxu0
        %v1492 = vadd.f32 %v1337, %v1454
        %v1493 = vadd.f32 %v1338, %v1459
        %v1494 = vadd.f32 %v1339, %v1464
        %v1495 = vadd.f32 %v1340, %v1469
        %v1496 = vadd.f32 %v1341, %v1474
        %v1497 = vadd.f32 %v1342, %v1479
        %v1498 = vadd.f32 %v1343, %v1484
        %v1499 = vadd.f32 %v1344, %v1489
        %v1500 = vld [vmem:[#allocation7] sm:$0xff]
        %v1501 = vld [vmem:[#allocation7 + $0x8] sm:$0xff]
        %v1502 = vld [vmem:[#allocation7 + $0x10] sm:$0xff]
        %v1503 = vld [vmem:[#allocation7 + $0x18] sm:$0xff]
        %v1504 = vld [vmem:[#allocation7 + $0x20] sm:$0xff]
        %v1505 = vld [vmem:[#allocation7 + $0x28] sm:$0xff]
        %v1506 = vld [vmem:[#allocation7 + $0x30] sm:$0xff]
        %v1507 = vld [vmem:[#allocation7 + $0x38] sm:$0xff]
        %1509 = vset.pattern.permute.xlu0 0
        %1510 = vperm.xlu0 %1509, %v1500
        %v1511 = vpop.permute.xlu0 %1510
        %1514 = vset.pattern.permute.xlu0 0
        %1515 = vperm.xlu0 %1514, %v1501
        %v1516 = vpop.permute.xlu0 %1515
        %1519 = vset.pattern.permute.xlu0 0
        %1520 = vperm.xlu0 %1519, %v1502
        %v1521 = vpop.permute.xlu0 %1520
        %1524 = vset.pattern.permute.xlu0 0
        %1525 = vperm.xlu0 %1524, %v1503
        %v1526 = vpop.permute.xlu0 %1525
        %1529 = vset.pattern.permute.xlu0 0
        %1530 = vperm.xlu0 %1529, %v1504
        %v1531 = vpop.permute.xlu0 %1530
        %1534 = vset.pattern.permute.xlu0 0
        %1535 = vperm.xlu0 %1534, %v1505
        %v1536 = vpop.permute.xlu0 %1535
        %1539 = vset.pattern.permute.xlu0 0
        %1540 = vperm.xlu0 %1539, %v1506
        %v1541 = vpop.permute.xlu0 %1540
        %1544 = vset.pattern.permute.xlu0 0
        %1545 = vperm.xlu0 %1544, %v1507
        %v1546 = vpop.permute.xlu0 %1545
        %v1548 = vadd.f32 %v1492, %v1511
        %v1549 = vadd.f32 %v1493, %v1516
        %v1550 = vadd.f32 %v1494, %v1521
        %v1551 = vadd.f32 %v1495, %v1526
        %v1552 = vadd.f32 %v1496, %v1531
        %v1553 = vadd.f32 %v1497, %v1536
        %v1554 = vadd.f32 %v1498, %v1541
        %v1555 = vadd.f32 %v1499, %v1546
        %v1564 = vcombine.high %v1548, %v1548
        %v1566 = vunpack.c.l.s4 1966171168
        %v1567 = vunpack.c.0.s8 %v1566
        %v1568 = vlaneseq
        %v1569 = vshrl.u32 %v1568, 7
        %v1570 = vsub.s32 %v1567, %v1569
        %v1571 = vrot.slane %v1548, %v1570
        %v1573 = vunpack.c.l.s4 1966171168
        %v1574 = vunpack.c.0.s8 %v1573
        %v1575 = vlaneseq
        %v1576 = vshrl.u32 %v1575, 7
        %v1577 = vsub.s32 %v1574, %v1576
        %v1578 = vrot.slane %v1564, %v1577
        %v1579 = vcombine.high %v1571, %v1571
        %v1580 = vcombine.high %v1578, %v1578
        %v1582 = vunpack.c.l.s4 1966171168
        %v1583 = vunpack.c.0.s8 %v1582
        %v1584 = vlaneseq
        %v1585 = vshrl.u32 %v1584, 7
        %v1586 = vsub.s32 %v1583, %v1585
        %v1587 = vrot.slane %v1571, %v1586
        %v1589 = vunpack.c.l.s4 1966171168
        %v1590 = vunpack.c.0.s8 %v1589
        %v1591 = vlaneseq
        %v1592 = vshrl.u32 %v1591, 7
        %v1593 = vsub.s32 %v1590, %v1592
        %v1594 = vrot.slane %v1578, %v1593
        %v1596 = vunpack.c.l.s4 1966171168
        %v1597 = vunpack.c.0.s8 %v1596
        %v1598 = vlaneseq
        %v1599 = vshrl.u32 %v1598, 7
        %v1600 = vsub.s32 %v1597, %v1599
        %v1601 = vrot.slane %v1579, %v1600
        %v1603 = vunpack.c.l.s4 1966171168
        %v1604 = vunpack.c.0.s8 %v1603
        %v1605 = vlaneseq
        %v1606 = vshrl.u32 %v1605, 7
        %v1607 = vsub.s32 %v1604, %v1606
        %v1608 = vrot.slane %v1580, %v1607
        %v1609 = vcombine.high %v1587, %v1587
        %v1610 = vcombine.high %v1594, %v1594
        %v1611 = vcombine.high %v1601, %v1601
        %v1612 = vcombine.high %v1608, %v1608
        %v1613 = vcombine.high %v1549, %v1549
        %v1615 = vunpack.c.l.s4 1966171168
        %v1616 = vunpack.c.0.s8 %v1615
        %v1617 = vlaneseq
        %v1618 = vshrl.u32 %v1617, 7
        %v1619 = vsub.s32 %v1616, %v1618
        %v1620 = vrot.slane %v1549, %v1619
        %v1622 = vunpack.c.l.s4 1966171168
        %v1623 = vunpack.c.0.s8 %v1622
        %v1624 = vlaneseq
        %v1625 = vshrl.u32 %v1624, 7
        %v1626 = vsub.s32 %v1623, %v1625
        %v1627 = vrot.slane %v1613, %v1626
        %v1628 = vcombine.high %v1620, %v1620
        %v1629 = vcombine.high %v1627, %v1627
        %v1631 = vunpack.c.l.s4 1966171168
        %v1632 = vunpack.c.0.s8 %v1631
        %v1633 = vlaneseq
        %v1634 = vshrl.u32 %v1633, 7
        %v1635 = vsub.s32 %v1632, %v1634
        %v1636 = vrot.slane %v1620, %v1635
        %v1638 = vunpack.c.l.s4 1966171168
        %v1639 = vunpack.c.0.s8 %v1638
        %v1640 = vlaneseq
        %v1641 = vshrl.u32 %v1640, 7
        %v1642 = vsub.s32 %v1639, %v1641
        %v1643 = vrot.slane %v1627, %v1642
        %v1645 = vunpack.c.l.s4 1966171168
        %v1646 = vunpack.c.0.s8 %v1645
        %v1647 = vlaneseq
        %v1648 = vshrl.u32 %v1647, 7
        %v1649 = vsub.s32 %v1646, %v1648
        %v1650 = vrot.slane %v1628, %v1649
        %v1652 = vunpack.c.l.s4 1966171168
        %v1653 = vunpack.c.0.s8 %v1652
        %v1654 = vlaneseq
        %v1655 = vshrl.u32 %v1654, 7
        %v1656 = vsub.s32 %v1653, %v1655
        %v1657 = vrot.slane %v1629, %v1656
        %v1658 = vcombine.high %v1636, %v1636
        %v1659 = vcombine.high %v1643, %v1643
        %v1660 = vcombine.high %v1650, %v1650
        %v1661 = vcombine.high %v1657, %v1657
        %v1662 = vcombine.high %v1550, %v1550
        %v1664 = vunpack.c.l.s4 1966171168
        %v1665 = vunpack.c.0.s8 %v1664
        %v1666 = vlaneseq
        %v1667 = vshrl.u32 %v1666, 7
        %v1668 = vsub.s32 %v1665, %v1667
        %v1669 = vrot.slane %v1550, %v1668
        %v1671 = vunpack.c.l.s4 1966171168
        %v1672 = vunpack.c.0.s8 %v1671
        %v1673 = vlaneseq
        %v1674 = vshrl.u32 %v1673, 7
        %v1675 = vsub.s32 %v1672, %v1674
        %v1676 = vrot.slane %v1662, %v1675
        %v1677 = vcombine.high %v1669, %v1669
        %v1678 = vcombine.high %v1676, %v1676
        %v1680 = vunpack.c.l.s4 1966171168
        %v1681 = vunpack.c.0.s8 %v1680
        %v1682 = vlaneseq
        %v1683 = vshrl.u32 %v1682, 7
        %v1684 = vsub.s32 %v1681, %v1683
        %v1685 = vrot.slane %v1669, %v1684
        %v1687 = vunpack.c.l.s4 1966171168
        %v1688 = vunpack.c.0.s8 %v1687
        %v1689 = vlaneseq
        %v1690 = vshrl.u32 %v1689, 7
        %v1691 = vsub.s32 %v1688, %v1690
        %v1692 = vrot.slane %v1676, %v1691
        %v1694 = vunpack.c.l.s4 1966171168
        %v1695 = vunpack.c.0.s8 %v1694
        %v1696 = vlaneseq
        %v1697 = vshrl.u32 %v1696, 7
        %v1698 = vsub.s32 %v1695, %v1697
        %v1699 = vrot.slane %v1677, %v1698
        %v1701 = vunpack.c.l.s4 1966171168
        %v1702 = vunpack.c.0.s8 %v1701
        %v1703 = vlaneseq
        %v1704 = vshrl.u32 %v1703, 7
        %v1705 = vsub.s32 %v1702, %v1704
        %v1706 = vrot.slane %v1678, %v1705
        %v1707 = vcombine.high %v1685, %v1685
        %v1708 = vcombine.high %v1692, %v1692
        %v1709 = vcombine.high %v1699, %v1699
        %v1710 = vcombine.high %v1706, %v1706
        %v1711 = vcombine.high %v1551, %v1551
        %v1713 = vunpack.c.l.s4 1966171168
        %v1714 = vunpack.c.0.s8 %v1713
        %v1715 = vlaneseq
        %v1716 = vshrl.u32 %v1715, 7
        %v1717 = vsub.s32 %v1714, %v1716
        %v1718 = vrot.slane %v1551, %v1717
        %v1720 = vunpack.c.l.s4 1966171168
        %v1721 = vunpack.c.0.s8 %v1720
        %v1722 = vlaneseq
        %v1723 = vshrl.u32 %v1722, 7
        %v1724 = vsub.s32 %v1721, %v1723
        %v1725 = vrot.slane %v1711, %v1724
        %v1726 = vcombine.high %v1718, %v1718
        %v1727 = vcombine.high %v1725, %v1725
        %v1729 = vunpack.c.l.s4 1966171168
        %v1730 = vunpack.c.0.s8 %v1729
        %v1731 = vlaneseq
        %v1732 = vshrl.u32 %v1731, 7
        %v1733 = vsub.s32 %v1730, %v1732
        %v1734 = vrot.slane %v1718, %v1733
        %v1736 = vunpack.c.l.s4 1966171168
        %v1737 = vunpack.c.0.s8 %v1736
        %v1738 = vlaneseq
        %v1739 = vshrl.u32 %v1738, 7
        %v1740 = vsub.s32 %v1737, %v1739
        %v1741 = vrot.slane %v1725, %v1740
        %v1743 = vunpack.c.l.s4 1966171168
        %v1744 = vunpack.c.0.s8 %v1743
        %v1745 = vlaneseq
        %v1746 = vshrl.u32 %v1745, 7
        %v1747 = vsub.s32 %v1744, %v1746
        %v1748 = vrot.slane %v1726, %v1747
        %v1750 = vunpack.c.l.s4 1966171168
        %v1751 = vunpack.c.0.s8 %v1750
        %v1752 = vlaneseq
        %v1753 = vshrl.u32 %v1752, 7
        %v1754 = vsub.s32 %v1751, %v1753
        %v1755 = vrot.slane %v1727, %v1754
        %v1756 = vcombine.high %v1734, %v1734
        %v1757 = vcombine.high %v1741, %v1741
        %v1758 = vcombine.high %v1748, %v1748
        %v1759 = vcombine.high %v1755, %v1755
        %v1760 = vcombine.high %v1552, %v1552
        %v1762 = vunpack.c.l.s4 1966171168
        %v1763 = vunpack.c.0.s8 %v1762
        %v1764 = vlaneseq
        %v1765 = vshrl.u32 %v1764, 7
        %v1766 = vsub.s32 %v1763, %v1765
        %v1767 = vrot.slane %v1552, %v1766
        %v1769 = vunpack.c.l.s4 1966171168
        %v1770 = vunpack.c.0.s8 %v1769
        %v1771 = vlaneseq
        %v1772 = vshrl.u32 %v1771, 7
        %v1773 = vsub.s32 %v1770, %v1772
        %v1774 = vrot.slane %v1760, %v1773
        %v1775 = vcombine.high %v1767, %v1767
        %v1776 = vcombine.high %v1774, %v1774
        %v1778 = vunpack.c.l.s4 1966171168
        %v1779 = vunpack.c.0.s8 %v1778
        %v1780 = vlaneseq
        %v1781 = vshrl.u32 %v1780, 7
        %v1782 = vsub.s32 %v1779, %v1781
        %v1783 = vrot.slane %v1767, %v1782
        %v1785 = vunpack.c.l.s4 1966171168
        %v1786 = vunpack.c.0.s8 %v1785
        %v1787 = vlaneseq
        %v1788 = vshrl.u32 %v1787, 7
        %v1789 = vsub.s32 %v1786, %v1788
        %v1790 = vrot.slane %v1774, %v1789
        %v1792 = vunpack.c.l.s4 1966171168
        %v1793 = vunpack.c.0.s8 %v1792
        %v1794 = vlaneseq
        %v1795 = vshrl.u32 %v1794, 7
        %v1796 = vsub.s32 %v1793, %v1795
        %v1797 = vrot.slane %v1775, %v1796
        %v1799 = vunpack.c.l.s4 1966171168
        %v1800 = vunpack.c.0.s8 %v1799
        %v1801 = vlaneseq
        %v1802 = vshrl.u32 %v1801, 7
        %v1803 = vsub.s32 %v1800, %v1802
        %v1804 = vrot.slane %v1776, %v1803
        %v1805 = vcombine.high %v1783, %v1783
        %v1806 = vcombine.high %v1790, %v1790
        %v1807 = vcombine.high %v1797, %v1797
        %v1808 = vcombine.high %v1804, %v1804
        %v1809 = vcombine.high %v1553, %v1553
        %v1811 = vunpack.c.l.s4 1966171168
        %v1812 = vunpack.c.0.s8 %v1811
        %v1813 = vlaneseq
        %v1814 = vshrl.u32 %v1813, 7
        %v1815 = vsub.s32 %v1812, %v1814
        %v1816 = vrot.slane %v1553, %v1815
        %v1818 = vunpack.c.l.s4 1966171168
        %v1819 = vunpack.c.0.s8 %v1818
        %v1820 = vlaneseq
        %v1821 = vshrl.u32 %v1820, 7
        %v1822 = vsub.s32 %v1819, %v1821
        %v1823 = vrot.slane %v1809, %v1822
        %v1824 = vcombine.high %v1816, %v1816
        %v1825 = vcombine.high %v1823, %v1823
        %v1827 = vunpack.c.l.s4 1966171168
        %v1828 = vunpack.c.0.s8 %v1827
        %v1829 = vlaneseq
        %v1830 = vshrl.u32 %v1829, 7
        %v1831 = vsub.s32 %v1828, %v1830
        %v1832 = vrot.slane %v1816, %v1831
        %v1834 = vunpack.c.l.s4 1966171168
        %v1835 = vunpack.c.0.s8 %v1834
        %v1836 = vlaneseq
        %v1837 = vshrl.u32 %v1836, 7
        %v1838 = vsub.s32 %v1835, %v1837
        %v1839 = vrot.slane %v1823, %v1838
        %v1841 = vunpack.c.l.s4 1966171168
        %v1842 = vunpack.c.0.s8 %v1841
        %v1843 = vlaneseq
        %v1844 = vshrl.u32 %v1843, 7
        %v1845 = vsub.s32 %v1842, %v1844
        %v1846 = vrot.slane %v1824, %v1845
        %v1848 = vunpack.c.l.s4 1966171168
        %v1849 = vunpack.c.0.s8 %v1848
        %v1850 = vlaneseq
        %v1851 = vshrl.u32 %v1850, 7
        %v1852 = vsub.s32 %v1849, %v1851
        %v1853 = vrot.slane %v1825, %v1852
        %v1854 = vcombine.high %v1832, %v1832
        %v1855 = vcombine.high %v1839, %v1839
        %v1856 = vcombine.high %v1846, %v1846
        %v1857 = vcombine.high %v1853, %v1853
        %v1858 = vcombine.high %v1554, %v1554
        %v1860 = vunpack.c.l.s4 1966171168
        %v1861 = vunpack.c.0.s8 %v1860
        %v1862 = vlaneseq
        %v1863 = vshrl.u32 %v1862, 7
        %v1864 = vsub.s32 %v1861, %v1863
        %v1865 = vrot.slane %v1554, %v1864
        %v1867 = vunpack.c.l.s4 1966171168
        %v1868 = vunpack.c.0.s8 %v1867
        %v1869 = vlaneseq
        %v1870 = vshrl.u32 %v1869, 7
        %v1871 = vsub.s32 %v1868, %v1870
        %v1872 = vrot.slane %v1858, %v1871
        %v1873 = vcombine.high %v1865, %v1865
        %v1874 = vcombine.high %v1872, %v1872
        %v1876 = vunpack.c.l.s4 1966171168
        %v1877 = vunpack.c.0.s8 %v1876
        %v1878 = vlaneseq
        %v1879 = vshrl.u32 %v1878, 7
        %v1880 = vsub.s32 %v1877, %v1879
        %v1881 = vrot.slane %v1865, %v1880
        %v1883 = vunpack.c.l.s4 1966171168
        %v1884 = vunpack.c.0.s8 %v1883
        %v1885 = vlaneseq
        %v1886 = vshrl.u32 %v1885, 7
        %v1887 = vsub.s32 %v1884, %v1886
        %v1888 = vrot.slane %v1872, %v1887
        %v1890 = vunpack.c.l.s4 1966171168
        %v1891 = vunpack.c.0.s8 %v1890
        %v1892 = vlaneseq
        %v1893 = vshrl.u32 %v1892, 7
        %v1894 = vsub.s32 %v1891, %v1893
        %v1895 = vrot.slane %v1873, %v1894
        %v1897 = vunpack.c.l.s4 1966171168
        %v1898 = vunpack.c.0.s8 %v1897
        %v1899 = vlaneseq
        %v1900 = vshrl.u32 %v1899, 7
        %v1901 = vsub.s32 %v1898, %v1900
        %v1902 = vrot.slane %v1874, %v1901
        %v1903 = vcombine.high %v1881, %v1881
        %v1904 = vcombine.high %v1888, %v1888
        %v1905 = vcombine.high %v1895, %v1895
        %v1906 = vcombine.high %v1902, %v1902
        %v1907 = vcombine.high %v1555, %v1555
        %v1909 = vunpack.c.l.s4 1966171168
        %v1910 = vunpack.c.0.s8 %v1909
        %v1911 = vlaneseq
        %v1912 = vshrl.u32 %v1911, 7
        %v1913 = vsub.s32 %v1910, %v1912
        %v1914 = vrot.slane %v1555, %v1913
        %v1916 = vunpack.c.l.s4 1966171168
        %v1917 = vunpack.c.0.s8 %v1916
        %v1918 = vlaneseq
        %v1919 = vshrl.u32 %v1918, 7
        %v1920 = vsub.s32 %v1917, %v1919
        %v1921 = vrot.slane %v1907, %v1920
        %v1922 = vcombine.high %v1914, %v1914
        %v1923 = vcombine.high %v1921, %v1921
        %v1925 = vunpack.c.l.s4 1966171168
        %v1926 = vunpack.c.0.s8 %v1925
        %v1927 = vlaneseq
        %v1928 = vshrl.u32 %v1927, 7
        %v1929 = vsub.s32 %v1926, %v1928
        %v1930 = vrot.slane %v1914, %v1929
        %v1932 = vunpack.c.l.s4 1966171168
        %v1933 = vunpack.c.0.s8 %v1932
        %v1934 = vlaneseq
        %v1935 = vshrl.u32 %v1934, 7
        %v1936 = vsub.s32 %v1933, %v1935
        %v1937 = vrot.slane %v1921, %v1936
        %v1939 = vunpack.c.l.s4 1966171168
        %v1940 = vunpack.c.0.s8 %v1939
        %v1941 = vlaneseq
        %v1942 = vshrl.u32 %v1941, 7
        %v1943 = vsub.s32 %v1940, %v1942
        %v1944 = vrot.slane %v1922, %v1943
        %v1946 = vunpack.c.l.s4 1966171168
        %v1947 = vunpack.c.0.s8 %v1946
        %v1948 = vlaneseq
        %v1949 = vshrl.u32 %v1948, 7
        %v1950 = vsub.s32 %v1947, %v1949
        %v1951 = vrot.slane %v1923, %v1950
        %v1952 = vcombine.high %v1930, %v1930
        %v1953 = vcombine.high %v1937, %v1937
        %v1954 = vcombine.high %v1944, %v1944
        %v1955 = vcombine.high %v1951, %v1951
        %vm2020 = vcmask 24576
        %2021 = vst.msk [vmem:[%s235] sm:$0x1] %vm2020, %v1587
        %2022 = vst.msk [vmem:[%s235 + $0x4] sm:$0x1] %vm2020, %v1601
        %2023 = vst.msk [vmem:[%s235 + $0x8] sm:$0x1] %vm2020, %v1609
        %2024 = vst.msk [vmem:[%s235 + $0xc] sm:$0x1] %vm2020, %v1611
        %2025 = vst.msk [vmem:[%s235 + $0x10] sm:$0x1] %vm2020, %v1594
        %2026 = vst.msk [vmem:[%s235 + $0x14] sm:$0x1] %vm2020, %v1608
        %2027 = vst.msk [vmem:[%s235 + $0x18] sm:$0x1] %vm2020, %v1610
        %2028 = vst.msk [vmem:[%s235 + $0x1c] sm:$0x1] %vm2020, %v1612
        %2029 = vst.msk [vmem:[%s235 + $0x20] sm:$0x1] %vm2020, %v1636
        %2030 = vst.msk [vmem:[%s235 + $0x24] sm:$0x1] %vm2020, %v1650
        %2031 = vst.msk [vmem:[%s235 + $0x28] sm:$0x1] %vm2020, %v1658
        %2032 = vst.msk [vmem:[%s235 + $0x2c] sm:$0x1] %vm2020, %v1660
        %2033 = vst.msk [vmem:[%s235 + $0x30] sm:$0x1] %vm2020, %v1643
        %2034 = vst.msk [vmem:[%s235 + $0x34] sm:$0x1] %vm2020, %v1657
        %2035 = vst.msk [vmem:[%s235 + $0x38] sm:$0x1] %vm2020, %v1659
        %2036 = vst.msk [vmem:[%s235 + $0x3c] sm:$0x1] %vm2020, %v1661
        %2037 = vst.msk [vmem:[%s235 + $0x40] sm:$0x1] %vm2020, %v1685
        %2038 = vst.msk [vmem:[%s235 + $0x44] sm:$0x1] %vm2020, %v1699
        %2039 = vst.msk [vmem:[%s235 + $0x48] sm:$0x1] %vm2020, %v1707
        %2040 = vst.msk [vmem:[%s235 + $0x4c] sm:$0x1] %vm2020, %v1709
        %2041 = vst.msk [vmem:[%s235 + $0x50] sm:$0x1] %vm2020, %v1692
        %2042 = vst.msk [vmem:[%s235 + $0x54] sm:$0x1] %vm2020, %v1706
        %2043 = vst.msk [vmem:[%s235 + $0x58] sm:$0x1] %vm2020, %v1708
        %2044 = vst.msk [vmem:[%s235 + $0x5c] sm:$0x1] %vm2020, %v1710
        %2045 = vst.msk [vmem:[%s235 + $0x60] sm:$0x1] %vm2020, %v1734
        %2046 = vst.msk [vmem:[%s235 + $0x64] sm:$0x1] %vm2020, %v1748
        %2047 = vst.msk [vmem:[%s235 + $0x68] sm:$0x1] %vm2020, %v1756
        %2048 = vst.msk [vmem:[%s235 + $0x6c] sm:$0x1] %vm2020, %v1758
        %2049 = vst.msk [vmem:[%s235 + $0x70] sm:$0x1] %vm2020, %v1741
        %2050 = vst.msk [vmem:[%s235 + $0x74] sm:$0x1] %vm2020, %v1755
        %2051 = vst.msk [vmem:[%s235 + $0x78] sm:$0x1] %vm2020, %v1757
        %2052 = vst.msk [vmem:[%s235 + $0x7c] sm:$0x1] %vm2020, %v1759
        %2053 = vst.msk [vmem:[%s235 + $0x80] sm:$0x1] %vm2020, %v1783
        %2054 = vst.msk [vmem:[%s235 + $0x84] sm:$0x1] %vm2020, %v1797
        %2055 = vst.msk [vmem:[%s235 + $0x88] sm:$0x1] %vm2020, %v1805
        %2056 = vst.msk [vmem:[%s235 + $0x8c] sm:$0x1] %vm2020, %v1807
        %2057 = vst.msk [vmem:[%s235 + $0x90] sm:$0x1] %vm2020, %v1790
        %2058 = vst.msk [vmem:[%s235 + $0x94] sm:$0x1] %vm2020, %v1804
        %2059 = vst.msk [vmem:[%s235 + $0x98] sm:$0x1] %vm2020, %v1806
        %2060 = vst.msk [vmem:[%s235 + $0x9c] sm:$0x1] %vm2020, %v1808
        %2061 = vst.msk [vmem:[%s235 + $0xa0] sm:$0x1] %vm2020, %v1832
        %2062 = vst.msk [vmem:[%s235 + $0xa4] sm:$0x1] %vm2020, %v1846
        %2063 = vst.msk [vmem:[%s235 + $0xa8] sm:$0x1] %vm2020, %v1854
        %2064 = vst.msk [vmem:[%s235 + $0xac] sm:$0x1] %vm2020, %v1856
        %2065 = vst.msk [vmem:[%s235 + $0xb0] sm:$0x1] %vm2020, %v1839
        %2066 = vst.msk [vmem:[%s235 + $0xb4] sm:$0x1] %vm2020, %v1853
        %2067 = vst.msk [vmem:[%s235 + $0xb8] sm:$0x1] %vm2020, %v1855
        %2068 = vst.msk [vmem:[%s235 + $0xbc] sm:$0x1] %vm2020, %v1857
        %2069 = vst.msk [vmem:[%s235 + $0xc0] sm:$0x1] %vm2020, %v1881
        %2070 = vst.msk [vmem:[%s235 + $0xc4] sm:$0x1] %vm2020, %v1895
        %2071 = vst.msk [vmem:[%s235 + $0xc8] sm:$0x1] %vm2020, %v1903
        %2072 = vst.msk [vmem:[%s235 + $0xcc] sm:$0x1] %vm2020, %v1905
        %2073 = vst.msk [vmem:[%s235 + $0xd0] sm:$0x1] %vm2020, %v1888
        %2074 = vst.msk [vmem:[%s235 + $0xd4] sm:$0x1] %vm2020, %v1902
        %2075 = vst.msk [vmem:[%s235 + $0xd8] sm:$0x1] %vm2020, %v1904
        %2076 = vst.msk [vmem:[%s235 + $0xdc] sm:$0x1] %vm2020, %v1906
        %2077 = vst.msk [vmem:[%s235 + $0xe0] sm:$0x1] %vm2020, %v1930
        %2078 = vst.msk [vmem:[%s235 + $0xe4] sm:$0x1] %vm2020, %v1944
        %2079 = vst.msk [vmem:[%s235 + $0xe8] sm:$0x1] %vm2020, %v1952
        %2080 = vst.msk [vmem:[%s235 + $0xec] sm:$0x1] %vm2020, %v1954
        %2081 = vst.msk [vmem:[%s235 + $0xf0] sm:$0x1] %vm2020, %v1937
        %2082 = vst.msk [vmem:[%s235 + $0xf4] sm:$0x1] %vm2020, %v1951
        %2083 = vst.msk [vmem:[%s235 + $0xf8] sm:$0x1] %vm2020, %v1953
        %2084 = vst.msk [vmem:[%s235 + $0xfc] sm:$0x1] %vm2020, %v1955
        %v2085 = vld [vmem:[%s205 + $0x8] sm:$0xff]
        %v2086 = vld [vmem:[%s205 + $0x28] sm:$0xff]
        %v2087 = vld [vmem:[%s205 + $0x48] sm:$0xff]
        %v2088 = vld [vmem:[%s205 + $0x68] sm:$0xff]
        %2089 = vxpose.xlu0.b32.start [1/16] %v2085, 128
        %2090 = vxpose.xlu0.b32.cont [2/16] %v2086, 128
        %2091 = vxpose.xlu0.b32.cont [3/16] %v2087, 128
        %2092 = vxpose.xlu0.b32.cont [4/16] %v2088, 128
        %2093 = vxpose.xlu0.b32.cont [5/16] 0.0, 128
        %2094 = vxpose.xlu0.b32.cont [6/16] 0.0, 128
        %2095 = vxpose.xlu0.b32.cont [7/16] 0.0, 128
        %2096 = vxpose.xlu0.b32.cont [8/16] 0.0, 128
        %2097 = vxpose.xlu0.b32.cont [9/16] 0.0, 128
        %2098 = vxpose.xlu0.b32.cont [10/16] 0.0, 128
        %2099 = vxpose.xlu0.b32.cont [11/16] 0.0, 128
        %2100 = vxpose.xlu0.b32.cont [12/16] 0.0, 128
        %2101 = vxpose.xlu0.b32.cont [13/16] 0.0, 128
        %2102 = vxpose.xlu0.b32.cont [14/16] 0.0, 128
        %2103 = vxpose.xlu0.b32.cont [15/16] 0.0, 128
        %2104 = vxpose.xlu0.b32.end [16/16] 0.0, 128
        %v2105 = vpop.trf.xlu0
        %v2106 = vpop.trf.xlu0
        %v2107 = vpop.trf.xlu0
        %v2108 = vpop.trf.xlu0
        %v2109 = vpop.trf.xlu0
        %v2110 = vpop.trf.xlu0
        %v2111 = vpop.trf.xlu0
        %v2112 = vpop.trf.xlu0
        %v2113 = vpop.trf.xlu0
        %v2114 = vpop.trf.xlu0
        %v2115 = vpop.trf.xlu0
        %v2116 = vpop.trf.xlu0
        %v2117 = vpop.trf.xlu0
        %v2118 = vpop.trf.xlu0
        %v2119 = vpop.trf.xlu0
        %v2120 = vpop.trf.xlu0
        %v2121 = vld [vmem:[#allocation5] sm:$0xff]
        %v2122 = vld [vmem:[#allocation5 + $0x8] sm:$0xff]
        %v2123 = vld [vmem:[#allocation5 + $0x10] sm:$0xff]
        %v2124 = vld [vmem:[#allocation5 + $0x18] sm:$0xff]
        %v2125 = vld [vmem:[#allocation5 + $0x20] sm:$0xff]
        %v2126 = vld [vmem:[#allocation5 + $0x28] sm:$0xff]
        %v2127 = vld [vmem:[#allocation5 + $0x30] sm:$0xff]
        %v2128 = vld [vmem:[#allocation5 + $0x38] sm:$0xff]
        %v2129 = vld [vmem:[%s281] sm:$0xff]
        %v2130 = vld [vmem:[%s281 + $0x8] sm:$0xff]
        %v2131 = vld [vmem:[%s281 + $0x10] sm:$0xff]
        %v2132 = vld [vmem:[%s281 + $0x18] sm:$0xff]
        %v2133 = vld [vmem:[%s281 + $0x20] sm:$0xff]
        %v2134 = vld [vmem:[%s281 + $0x28] sm:$0xff]
        %v2135 = vld [vmem:[%s281 + $0x30] sm:$0xff]
        %v2136 = vld [vmem:[%s281 + $0x38] sm:$0xff]
        %v2141 = vrot.slane %v2105, 1
        %v2142 = vsel %vm295, %v2106, %v2141
        %v2143 = vrot.slane %v2107, 7
        %v2144 = vsel %vm298, %v2143, %v2142
        %v2145 = vrot.slane %v2108, 6
        %v2146 = vsel %vm301, %v2145, %v2144
        %v2148 = vsel %vm303, %v2129, 0
        %v2151 = vsel %vm303, %v2130, 0
        %v2154 = vsel %vm303, %v2131, 0
        %v2157 = vsel %vm303, %v2132, 0
        %v2160 = vsel %vm303, %v2133, 0
        %v2163 = vsel %vm303, %v2134, 0
        %v2166 = vsel %vm303, %v2135, 0
        %v2169 = vsel %vm303, %v2136, 0
        %v2171 = vsel %vm303, %v2146, 0
        %2173 = vmatprep.subr.mxu0 0.0
        %2174 = vmatpush1.xpose.msra.mxu0 %v2171
        %2175 = vmatprep.subr.mxu0 0.0
        %2176 = vmatpush1.xpose.msra.mxu0 0.0
        %2177 = vmatprep.subr.mxu0 0.0
        %2178 = vmatpush1.xpose.msra.mxu0 0.0
        %2179 = vmatprep.subr.mxu0 0.0
        %2180 = vmatpush1.xpose.msra.mxu0 0.0
        %2181 = vmatprep.subr.mxu0 0.0
        %2182 = vmatpush1.xpose.msra.mxu0 0.0
        %2183 = vmatprep.subr.mxu0 0.0
        %2184 = vmatpush1.xpose.msra.mxu0 0.0
        %2185 = vmatprep.subr.mxu0 0.0
        %2186 = vmatpush1.xpose.msra.mxu0 0.0
        %2187 = vmatprep.subr.mxu0 0.0
        %2188 = vmatpush1.xpose.msra.mxu0 0.0
        %2189 = vmatprep.subr.mxu0 0.0
        %2190 = vmatpush1.xpose.msra.mxu0 0.0
        %2191 = vmatprep.subr.mxu0 0.0
        %2192 = vmatpush1.xpose.msra.mxu0 0.0
        %2193 = vmatprep.subr.mxu0 0.0
        %2194 = vmatpush1.xpose.msra.mxu0 0.0
        %2195 = vmatprep.subr.mxu0 0.0
        %2196 = vmatpush1.xpose.msra.mxu0 0.0
        %2197 = vmatprep.subr.mxu0 0.0
        %2198 = vmatpush1.xpose.msra.mxu0 0.0
        %2199 = vmatprep.subr.mxu0 0.0
        %2200 = vmatpush1.xpose.msra.mxu0 0.0
        %2201 = vmatprep.subr.mxu0 0.0
        %2202 = vmatpush1.xpose.msra.mxu0 0.0
        %2203 = vmatprep.subr.mxu0 0.0
        %2204 = vmatpush1.xpose.msra.mxu0 0.0
        %2205 = vmatprep.subr.mxu0 0.0
        %2206 = vmatpush1.xpose.msra.mxu0 0.0
        %2207 = vmatprep.subr.mxu0 0.0
        %2208 = vmatpush1.xpose.msra.mxu0 0.0
        %2209 = vmatprep.subr.mxu0 0.0
        %2210 = vmatpush1.xpose.msra.mxu0 0.0
        %2211 = vmatprep.subr.mxu0 0.0
        %2212 = vmatpush1.xpose.msra.mxu0 0.0
        %2213 = vmatprep.subr.mxu0 0.0
        %2214 = vmatpush1.xpose.msra.mxu0 0.0
        %2215 = vmatprep.subr.mxu0 0.0
        %2216 = vmatpush1.xpose.msra.mxu0 0.0
        %2217 = vmatprep.subr.mxu0 0.0
        %2218 = vmatpush1.xpose.msra.mxu0 0.0
        %2219 = vmatprep.subr.mxu0 0.0
        %2220 = vmatpush1.xpose.msra.mxu0 0.0
        %2221 = vmatprep.subr.mxu0 0.0
        %2222 = vmatpush1.xpose.msra.mxu0 0.0
        %2223 = vmatprep.subr.mxu0 0.0
        %2224 = vmatpush1.xpose.msra.mxu0 0.0
        %2225 = vmatprep.subr.mxu0 0.0
        %2226 = vmatpush1.xpose.msra.mxu0 0.0
        %2227 = vmatprep.subr.mxu0 0.0
        %2228 = vmatpush1.xpose.msra.mxu0 0.0
        %2229 = vmatprep.subr.mxu0 0.0
        %2230 = vmatpush1.xpose.msra.mxu0 0.0
        %2231 = vmatprep.subr.mxu0 0.0
        %2232 = vmatpush1.xpose.msra.mxu0 0.0
        %2233 = vmatprep.subr.mxu0 0.0
        %2234 = vmatpush1.xpose.msra.mxu0 0.0
        %2235 = vmatprep.subr.mxu0 0.0
        %2236 = vmatpush1.xpose.msra.mxu0 0.0
        %2237 = vmatprep.mubr.f32.mxu0 0.0
        %2238 = vmatmul.mubr.f32.gmra.mrb[0].mxu0 %v2148
        %v2239 = vpop.f32.mrb[0].mxu0
        %v2240 = vadd.f32 0.0, %v2239
        %v2241 = vpop.f32.mrb[0].mxu0
        %2242 = vmatprep.mubr.f32.mxu0 0.0
        %2243 = vmatmul.mubr.f32.gmra.mrb[0].mxu0 %v2151
        %v2244 = vpop.f32.mrb[0].mxu0
        %v2245 = vadd.f32 0.0, %v2244
        %v2246 = vpop.f32.mrb[0].mxu0
        %2247 = vmatprep.mubr.f32.mxu0 0.0
        %2248 = vmatmul.mubr.f32.gmra.mrb[0].mxu0 %v2154
        %v2249 = vpop.f32.mrb[0].mxu0
        %v2250 = vadd.f32 0.0, %v2249
        %v2251 = vpop.f32.mrb[0].mxu0
        %2252 = vmatprep.mubr.f32.mxu0 0.0
        %2253 = vmatmul.mubr.f32.gmra.mrb[0].mxu0 %v2157
        %v2254 = vpop.f32.mrb[0].mxu0
        %v2255 = vadd.f32 0.0, %v2254
        %v2256 = vpop.f32.mrb[0].mxu0
        %2257 = vmatprep.mubr.f32.mxu0 0.0
        %2258 = vmatmul.mubr.f32.gmra.mrb[0].mxu0 %v2160
        %v2259 = vpop.f32.mrb[0].mxu0
        %v2260 = vadd.f32 0.0, %v2259
        %v2261 = vpop.f32.mrb[0].mxu0
        %2262 = vmatprep.mubr.f32.mxu0 0.0
        %2263 = vmatmul.mubr.f32.gmra.mrb[0].mxu0 %v2163
        %v2264 = vpop.f32.mrb[0].mxu0
        %v2265 = vadd.f32 0.0, %v2264
        %v2266 = vpop.f32.mrb[0].mxu0
        %2267 = vmatprep.mubr.f32.mxu0 0.0
        %2268 = vmatmul.mubr.f32.gmra.mrb[0].mxu0 %v2166
        %v2269 = vpop.f32.mrb[0].mxu0
        %v2270 = vadd.f32 0.0, %v2269
        %v2271 = vpop.f32.mrb[0].mxu0
        %2272 = vmatprep.mubr.f32.mxu0 0.0
        %2273 = vmatmul.mubr.f32.gmra.mrb[0].mxu0 %v2169
        %v2274 = vpop.f32.mrb[0].mxu0
        %v2275 = vadd.f32 0.0, %v2274
        %v2276 = vpop.f32.mrb[0].mxu0
        %2277 = vdwg.mxu0
        %v2278 = vrot.slane %v2106, 7
        %v2279 = vsel %vm295, %v2278, %v2105
        %v2280 = vrot.slane %v2107, 6
        %v2281 = vsel %vm298, %v2280, %v2279
        %v2282 = vrot.slane %v2108, 5
        %v2283 = vsel %vm301, %v2282, %v2281
        %v2285 = vsel %vm303, %v2121, 0
        %v2288 = vsel %vm303, %v2122, 0
        %v2291 = vsel %vm303, %v2123, 0
        %v2294 = vsel %vm303, %v2124, 0
        %v2297 = vsel %vm303, %v2125, 0
        %v2300 = vsel %vm303, %v2126, 0
        %v2303 = vsel %vm303, %v2127, 0
        %v2306 = vsel %vm303, %v2128, 0
        %v2308 = vsel %vm303, %v2283, 0
        %2310 = vmatprep.subr.mxu0 0.0
        %2311 = vmatpush1.xpose.msra.mxu0 %v2308
        %2312 = vmatprep.subr.mxu0 0.0
        %2313 = vmatpush1.xpose.msra.mxu0 0.0
        %2314 = vmatprep.subr.mxu0 0.0
        %2315 = vmatpush1.xpose.msra.mxu0 0.0
        %2316 = vmatprep.subr.mxu0 0.0
        %2317 = vmatpush1.xpose.msra.mxu0 0.0
        %2318 = vmatprep.subr.mxu0 0.0
        %2319 = vmatpush1.xpose.msra.mxu0 0.0
        %2320 = vmatprep.subr.mxu0 0.0
        %2321 = vmatpush1.xpose.msra.mxu0 0.0
        %2322 = vmatprep.subr.mxu0 0.0
        %2323 = vmatpush1.xpose.msra.mxu0 0.0
        %2324 = vmatprep.subr.mxu0 0.0
        %2325 = vmatpush1.xpose.msra.mxu0 0.0
        %2326 = vmatprep.subr.mxu0 0.0
        %2327 = vmatpush1.xpose.msra.mxu0 0.0
        %2328 = vmatprep.subr.mxu0 0.0
        %2329 = vmatpush1.xpose.msra.mxu0 0.0
        %2330 = vmatprep.subr.mxu0 0.0
        %2331 = vmatpush1.xpose.msra.mxu0 0.0
        %2332 = vmatprep.subr.mxu0 0.0
        %2333 = vmatpush1.xpose.msra.mxu0 0.0
        %2334 = vmatprep.subr.mxu0 0.0
        %2335 = vmatpush1.xpose.msra.mxu0 0.0
        %2336 = vmatprep.subr.mxu0 0.0
        %2337 = vmatpush1.xpose.msra.mxu0 0.0
        %2338 = vmatprep.subr.mxu0 0.0
        %2339 = vmatpush1.xpose.msra.mxu0 0.0
        %2340 = vmatprep.subr.mxu0 0.0
        %2341 = vmatpush1.xpose.msra.mxu0 0.0
        %2342 = vmatprep.subr.mxu0 0.0
        %2343 = vmatpush1.xpose.msra.mxu0 0.0
        %2344 = vmatprep.subr.mxu0 0.0
        %2345 = vmatpush1.xpose.msra.mxu0 0.0
        %2346 = vmatprep.subr.mxu0 0.0
        %2347 = vmatpush1.xpose.msra.mxu0 0.0
        %2348 = vmatprep.subr.mxu0 0.0
        %2349 = vmatpush1.xpose.msra.mxu0 0.0
        %2350 = vmatprep.subr.mxu0 0.0
        %2351 = vmatpush1.xpose.msra.mxu0 0.0
        %2352 = vmatprep.subr.mxu0 0.0
        %2353 = vmatpush1.xpose.msra.mxu0 0.0
        %2354 = vmatprep.subr.mxu0 0.0
        %2355 = vmatpush1.xpose.msra.mxu0 0.0
        %2356 = vmatprep.subr.mxu0 0.0
        %2357 = vmatpush1.xpose.msra.mxu0 0.0
        %2358 = vmatprep.subr.mxu0 0.0
        %2359 = vmatpush1.xpose.msra.mxu0 0.0
        %2360 = vmatprep.subr.mxu0 0.0
        %2361 = vmatpush1.xpose.msra.mxu0 0.0
        %2362 = vmatprep.subr.mxu0 0.0
        %2363 = vmatpush1.xpose.msra.mxu0 0.0
        %2364 = vmatprep.subr.mxu0 0.0
        %2365 = vmatpush1.xpose.msra.mxu0 0.0
        %2366 = vmatprep.subr.mxu0 0.0
        %2367 = vmatpush1.xpose.msra.mxu0 0.0
        %2368 = vmatprep.subr.mxu0 0.0
        %2369 = vmatpush1.xpose.msra.mxu0 0.0
        %2370 = vmatprep.subr.mxu0 0.0
        %2371 = vmatpush1.xpose.msra.mxu0 0.0
        %2372 = vmatprep.subr.mxu0 0.0
        %2373 = vmatpush1.xpose.msra.mxu0 0.0
        %2374 = vmatprep.mubr.f32.mxu0 0.0
        %2375 = vmatmul.mubr.f32.gmra.mrb[0].mxu0 %v2285
        %v2376 = vpop.f32.mrb[0].mxu0
        %v2377 = vadd.f32 %v2240, %v2376
        %v2378 = vpop.f32.mrb[0].mxu0
        %2379 = vmatprep.mubr.f32.mxu0 0.0
        %2380 = vmatmul.mubr.f32.gmra.mrb[0].mxu0 %v2288
        %v2381 = vpop.f32.mrb[0].mxu0
        %v2382 = vadd.f32 %v2245, %v2381
        %v2383 = vpop.f32.mrb[0].mxu0
        %2384 = vmatprep.mubr.f32.mxu0 0.0
        %2385 = vmatmul.mubr.f32.gmra.mrb[0].mxu0 %v2291
        %v2386 = vpop.f32.mrb[0].mxu0
        %v2387 = vadd.f32 %v2250, %v2386
        %v2388 = vpop.f32.mrb[0].mxu0
        %2389 = vmatprep.mubr.f32.mxu0 0.0
        %2390 = vmatmul.mubr.f32.gmra.mrb[0].mxu0 %v2294
        %v2391 = vpop.f32.mrb[0].mxu0
        %v2392 = vadd.f32 %v2255, %v2391
        %v2393 = vpop.f32.mrb[0].mxu0
        %2394 = vmatprep.mubr.f32.mxu0 0.0
        %2395 = vmatmul.mubr.f32.gmra.mrb[0].mxu0 %v2297
        %v2396 = vpop.f32.mrb[0].mxu0
        %v2397 = vadd.f32 %v2260, %v2396
        %v2398 = vpop.f32.mrb[0].mxu0
        %2399 = vmatprep.mubr.f32.mxu0 0.0
        %2400 = vmatmul.mubr.f32.gmra.mrb[0].mxu0 %v2300
        %v2401 = vpop.f32.mrb[0].mxu0
        %v2402 = vadd.f32 %v2265, %v2401
        %v2403 = vpop.f32.mrb[0].mxu0
        %2404 = vmatprep.mubr.f32.mxu0 0.0
        %2405 = vmatmul.mubr.f32.gmra.mrb[0].mxu0 %v2303
        %v2406 = vpop.f32.mrb[0].mxu0
        %v2407 = vadd.f32 %v2270, %v2406
        %v2408 = vpop.f32.mrb[0].mxu0
        %2409 = vmatprep.mubr.f32.mxu0 0.0
        %2410 = vmatmul.mubr.f32.gmra.mrb[0].mxu0 %v2306
        %v2411 = vpop.f32.mrb[0].mxu0
        %v2412 = vadd.f32 %v2275, %v2411
        %v2413 = vpop.f32.mrb[0].mxu0
        %2414 = vdwg.mxu0
        %v2415 = vld [vmem:[%s572] sm:$0xff]
        %v2416 = vld [vmem:[%s572 + $0x8] sm:$0xff]
        %v2417 = vld [vmem:[%s572 + $0x10] sm:$0xff]
        %v2418 = vld [vmem:[%s572 + $0x18] sm:$0xff]
        %v2419 = vld [vmem:[%s572 + $0x20] sm:$0xff]
        %v2420 = vld [vmem:[%s572 + $0x28] sm:$0xff]
        %v2421 = vld [vmem:[%s572 + $0x30] sm:$0xff]
        %v2422 = vld [vmem:[%s572 + $0x38] sm:$0xff]
        %v2423 = vrot.slane %v2105, 2
        %v2424 = vrot.slane %v2106, 1
        %v2425 = vsel %vm295, %v2424, %v2423
        %v2426 = vsel %vm298, %v2107, %v2425
        %v2427 = vrot.slane %v2108, 7
        %v2428 = vsel %vm301, %v2427, %v2426
        %v2430 = vsel %vm303, %v2415, 0
        %v2433 = vsel %vm303, %v2416, 0
        %v2436 = vsel %vm303, %v2417, 0
        %v2439 = vsel %vm303, %v2418, 0
        %v2442 = vsel %vm303, %v2419, 0
        %v2445 = vsel %vm303, %v2420, 0
        %v2448 = vsel %vm303, %v2421, 0
        %v2451 = vsel %vm303, %v2422, 0
        %v2453 = vsel %vm303, %v2428, 0
        %2455 = vmatprep.subr.mxu0 0.0
        %2456 = vmatpush1.xpose.msra.mxu0 %v2453
        %2457 = vmatprep.subr.mxu0 0.0
        %2458 = vmatpush1.xpose.msra.mxu0 0.0
        %2459 = vmatprep.subr.mxu0 0.0
        %2460 = vmatpush1.xpose.msra.mxu0 0.0
        %2461 = vmatprep.subr.mxu0 0.0
        %2462 = vmatpush1.xpose.msra.mxu0 0.0
        %2463 = vmatprep.subr.mxu0 0.0
        %2464 = vmatpush1.xpose.msra.mxu0 0.0
        %2465 = vmatprep.subr.mxu0 0.0
        %2466 = vmatpush1.xpose.msra.mxu0 0.0
        %2467 = vmatprep.subr.mxu0 0.0
        %2468 = vmatpush1.xpose.msra.mxu0 0.0
        %2469 = vmatprep.subr.mxu0 0.0
        %2470 = vmatpush1.xpose.msra.mxu0 0.0
        %2471 = vmatprep.subr.mxu0 0.0
        %2472 = vmatpush1.xpose.msra.mxu0 0.0
        %2473 = vmatprep.subr.mxu0 0.0
        %2474 = vmatpush1.xpose.msra.mxu0 0.0
        %2475 = vmatprep.subr.mxu0 0.0
        %2476 = vmatpush1.xpose.msra.mxu0 0.0
        %2477 = vmatprep.subr.mxu0 0.0
        %2478 = vmatpush1.xpose.msra.mxu0 0.0
        %2479 = vmatprep.subr.mxu0 0.0
        %2480 = vmatpush1.xpose.msra.mxu0 0.0
        %2481 = vmatprep.subr.mxu0 0.0
        %2482 = vmatpush1.xpose.msra.mxu0 0.0
        %2483 = vmatprep.subr.mxu0 0.0
        %2484 = vmatpush1.xpose.msra.mxu0 0.0
        %2485 = vmatprep.subr.mxu0 0.0
        %2486 = vmatpush1.xpose.msra.mxu0 0.0
        %2487 = vmatprep.subr.mxu0 0.0
        %2488 = vmatpush1.xpose.msra.mxu0 0.0
        %2489 = vmatprep.subr.mxu0 0.0
        %2490 = vmatpush1.xpose.msra.mxu0 0.0
        %2491 = vmatprep.subr.mxu0 0.0
        %2492 = vmatpush1.xpose.msra.mxu0 0.0
        %2493 = vmatprep.subr.mxu0 0.0
        %2494 = vmatpush1.xpose.msra.mxu0 0.0
        %2495 = vmatprep.subr.mxu0 0.0
        %2496 = vmatpush1.xpose.msra.mxu0 0.0
        %2497 = vmatprep.subr.mxu0 0.0
        %2498 = vmatpush1.xpose.msra.mxu0 0.0
        %2499 = vmatprep.subr.mxu0 0.0
        %2500 = vmatpush1.xpose.msra.mxu0 0.0
        %2501 = vmatprep.subr.mxu0 0.0
        %2502 = vmatpush1.xpose.msra.mxu0 0.0
        %2503 = vmatprep.subr.mxu0 0.0
        %2504 = vmatpush1.xpose.msra.mxu0 0.0
        %2505 = vmatprep.subr.mxu0 0.0
        %2506 = vmatpush1.xpose.msra.mxu0 0.0
        %2507 = vmatprep.subr.mxu0 0.0
        %2508 = vmatpush1.xpose.msra.mxu0 0.0
        %2509 = vmatprep.subr.mxu0 0.0
        %2510 = vmatpush1.xpose.msra.mxu0 0.0
        %2511 = vmatprep.subr.mxu0 0.0
        %2512 = vmatpush1.xpose.msra.mxu0 0.0
        %2513 = vmatprep.subr.mxu0 0.0
        %2514 = vmatpush1.xpose.msra.mxu0 0.0
        %2515 = vmatprep.subr.mxu0 0.0
        %2516 = vmatpush1.xpose.msra.mxu0 0.0
        %2517 = vmatprep.subr.mxu0 0.0
        %2518 = vmatpush1.xpose.msra.mxu0 0.0
        %2519 = vmatprep.mubr.f32.mxu0 0.0
        %2520 = vmatmul.mubr.f32.gmra.mrb[0].mxu0 %v2430
        %v2521 = vpop.f32.mrb[0].mxu0
        %v2522 = vadd.f32 0.0, %v2521
        %v2523 = vpop.f32.mrb[0].mxu0
        %2524 = vmatprep.mubr.f32.mxu0 0.0
        %2525 = vmatmul.mubr.f32.gmra.mrb[0].mxu0 %v2433
        %v2526 = vpop.f32.mrb[0].mxu0
        %v2527 = vadd.f32 0.0, %v2526
        %v2528 = vpop.f32.mrb[0].mxu0
        %2529 = vmatprep.mubr.f32.mxu0 0.0
        %2530 = vmatmul.mubr.f32.gmra.mrb[0].mxu0 %v2436
        %v2531 = vpop.f32.mrb[0].mxu0
        %v2532 = vadd.f32 0.0, %v2531
        %v2533 = vpop.f32.mrb[0].mxu0
        %2534 = vmatprep.mubr.f32.mxu0 0.0
        %2535 = vmatmul.mubr.f32.gmra.mrb[0].mxu0 %v2439
        %v2536 = vpop.f32.mrb[0].mxu0
        %v2537 = vadd.f32 0.0, %v2536
        %v2538 = vpop.f32.mrb[0].mxu0
        %2539 = vmatprep.mubr.f32.mxu0 0.0
        %2540 = vmatmul.mubr.f32.gmra.mrb[0].mxu0 %v2442
        %v2541 = vpop.f32.mrb[0].mxu0
        %v2542 = vadd.f32 0.0, %v2541
        %v2543 = vpop.f32.mrb[0].mxu0
        %2544 = vmatprep.mubr.f32.mxu0 0.0
        %2545 = vmatmul.mubr.f32.gmra.mrb[0].mxu0 %v2445
        %v2546 = vpop.f32.mrb[0].mxu0
        %v2547 = vadd.f32 0.0, %v2546
        %v2548 = vpop.f32.mrb[0].mxu0
        %2549 = vmatprep.mubr.f32.mxu0 0.0
        %2550 = vmatmul.mubr.f32.gmra.mrb[0].mxu0 %v2448
        %v2551 = vpop.f32.mrb[0].mxu0
        %v2552 = vadd.f32 0.0, %v2551
        %v2553 = vpop.f32.mrb[0].mxu0
        %2554 = vmatprep.mubr.f32.mxu0 0.0
        %2555 = vmatmul.mubr.f32.gmra.mrb[0].mxu0 %v2451
        %v2556 = vpop.f32.mrb[0].mxu0
        %v2557 = vadd.f32 0.0, %v2556
        %v2558 = vpop.f32.mrb[0].mxu0
        %2559 = vdwg.mxu0
        %v2560 = vadd.f32 %v2377, %v2522
        %v2561 = vadd.f32 %v2382, %v2527
        %v2562 = vadd.f32 %v2387, %v2532
        %v2563 = vadd.f32 %v2392, %v2537
        %v2564 = vadd.f32 %v2397, %v2542
        %v2565 = vadd.f32 %v2402, %v2547
        %v2566 = vadd.f32 %v2407, %v2552
        %v2567 = vadd.f32 %v2412, %v2557
        %v2568 = vld [vmem:[%s726] sm:$0xff]
        %v2569 = vld [vmem:[%s726 + $0x8] sm:$0xff]
        %v2570 = vld [vmem:[%s726 + $0x10] sm:$0xff]
        %v2571 = vld [vmem:[%s726 + $0x18] sm:$0xff]
        %v2572 = vld [vmem:[%s726 + $0x20] sm:$0xff]
        %v2573 = vld [vmem:[%s726 + $0x28] sm:$0xff]
        %v2574 = vld [vmem:[%s726 + $0x30] sm:$0xff]
        %v2575 = vld [vmem:[%s726 + $0x38] sm:$0xff]
        %v2576 = vrot.slane %v2105, 3
        %v2577 = vrot.slane %v2106, 2
        %v2578 = vsel %vm295, %v2577, %v2576
        %v2579 = vrot.slane %v2107, 1
        %v2580 = vsel %vm298, %v2579, %v2578
        %v2581 = vsel %vm301, %v2108, %v2580
        %v2583 = vsel %vm303, %v2568, 0
        %v2586 = vsel %vm303, %v2569, 0
        %v2589 = vsel %vm303, %v2570, 0
        %v2592 = vsel %vm303, %v2571, 0
        %v2595 = vsel %vm303, %v2572, 0
        %v2598 = vsel %vm303, %v2573, 0
        %v2601 = vsel %vm303, %v2574, 0
        %v2604 = vsel %vm303, %v2575, 0
        %v2606 = vsel %vm303, %v2581, 0
        %2608 = vmatprep.subr.mxu0 0.0
        %2609 = vmatpush1.xpose.msra.mxu0 %v2606
        %2610 = vmatprep.subr.mxu0 0.0
        %2611 = vmatpush1.xpose.msra.mxu0 0.0
        %2612 = vmatprep.subr.mxu0 0.0
        %2613 = vmatpush1.xpose.msra.mxu0 0.0
        %2614 = vmatprep.subr.mxu0 0.0
        %2615 = vmatpush1.xpose.msra.mxu0 0.0
        %2616 = vmatprep.subr.mxu0 0.0
        %2617 = vmatpush1.xpose.msra.mxu0 0.0
        %2618 = vmatprep.subr.mxu0 0.0
        %2619 = vmatpush1.xpose.msra.mxu0 0.0
        %2620 = vmatprep.subr.mxu0 0.0
        %2621 = vmatpush1.xpose.msra.mxu0 0.0
        %2622 = vmatprep.subr.mxu0 0.0
        %2623 = vmatpush1.xpose.msra.mxu0 0.0
        %2624 = vmatprep.subr.mxu0 0.0
        %2625 = vmatpush1.xpose.msra.mxu0 0.0
        %2626 = vmatprep.subr.mxu0 0.0
        %2627 = vmatpush1.xpose.msra.mxu0 0.0
        %2628 = vmatprep.subr.mxu0 0.0
        %2629 = vmatpush1.xpose.msra.mxu0 0.0
        %2630 = vmatprep.subr.mxu0 0.0
        %2631 = vmatpush1.xpose.msra.mxu0 0.0
        %2632 = vmatprep.subr.mxu0 0.0
        %2633 = vmatpush1.xpose.msra.mxu0 0.0
        %2634 = vmatprep.subr.mxu0 0.0
        %2635 = vmatpush1.xpose.msra.mxu0 0.0
        %2636 = vmatprep.subr.mxu0 0.0
        %2637 = vmatpush1.xpose.msra.mxu0 0.0
        %2638 = vmatprep.subr.mxu0 0.0
        %2639 = vmatpush1.xpose.msra.mxu0 0.0
        %2640 = vmatprep.subr.mxu0 0.0
        %2641 = vmatpush1.xpose.msra.mxu0 0.0
        %2642 = vmatprep.subr.mxu0 0.0
        %2643 = vmatpush1.xpose.msra.mxu0 0.0
        %2644 = vmatprep.subr.mxu0 0.0
        %2645 = vmatpush1.xpose.msra.mxu0 0.0
        %2646 = vmatprep.subr.mxu0 0.0
        %2647 = vmatpush1.xpose.msra.mxu0 0.0
        %2648 = vmatprep.subr.mxu0 0.0
        %2649 = vmatpush1.xpose.msra.mxu0 0.0
        %2650 = vmatprep.subr.mxu0 0.0
        %2651 = vmatpush1.xpose.msra.mxu0 0.0
        %2652 = vmatprep.subr.mxu0 0.0
        %2653 = vmatpush1.xpose.msra.mxu0 0.0
        %2654 = vmatprep.subr.mxu0 0.0
        %2655 = vmatpush1.xpose.msra.mxu0 0.0
        %2656 = vmatprep.subr.mxu0 0.0
        %2657 = vmatpush1.xpose.msra.mxu0 0.0
        %2658 = vmatprep.subr.mxu0 0.0
        %2659 = vmatpush1.xpose.msra.mxu0 0.0
        %2660 = vmatprep.subr.mxu0 0.0
        %2661 = vmatpush1.xpose.msra.mxu0 0.0
        %2662 = vmatprep.subr.mxu0 0.0
        %2663 = vmatpush1.xpose.msra.mxu0 0.0
        %2664 = vmatprep.subr.mxu0 0.0
        %2665 = vmatpush1.xpose.msra.mxu0 0.0
        %2666 = vmatprep.subr.mxu0 0.0
        %2667 = vmatpush1.xpose.msra.mxu0 0.0
        %2668 = vmatprep.subr.mxu0 0.0
        %2669 = vmatpush1.xpose.msra.mxu0 0.0
        %2670 = vmatprep.subr.mxu0 0.0
        %2671 = vmatpush1.xpose.msra.mxu0 0.0
        %2672 = vmatprep.mubr.f32.mxu0 0.0
        %2673 = vmatmul.mubr.f32.gmra.mrb[0].mxu0 %v2583
        %v2674 = vpop.f32.mrb[0].mxu0
        %v2675 = vadd.f32 0.0, %v2674
        %v2676 = vpop.f32.mrb[0].mxu0
        %2677 = vmatprep.mubr.f32.mxu0 0.0
        %2678 = vmatmul.mubr.f32.gmra.mrb[0].mxu0 %v2586
        %v2679 = vpop.f32.mrb[0].mxu0
        %v2680 = vadd.f32 0.0, %v2679
        %v2681 = vpop.f32.mrb[0].mxu0
        %2682 = vmatprep.mubr.f32.mxu0 0.0
        %2683 = vmatmul.mubr.f32.gmra.mrb[0].mxu0 %v2589
        %v2684 = vpop.f32.mrb[0].mxu0
        %v2685 = vadd.f32 0.0, %v2684
        %v2686 = vpop.f32.mrb[0].mxu0
        %2687 = vmatprep.mubr.f32.mxu0 0.0
        %2688 = vmatmul.mubr.f32.gmra.mrb[0].mxu0 %v2592
        %v2689 = vpop.f32.mrb[0].mxu0
        %v2690 = vadd.f32 0.0, %v2689
        %v2691 = vpop.f32.mrb[0].mxu0
        %2692 = vmatprep.mubr.f32.mxu0 0.0
        %2693 = vmatmul.mubr.f32.gmra.mrb[0].mxu0 %v2595
        %v2694 = vpop.f32.mrb[0].mxu0
        %v2695 = vadd.f32 0.0, %v2694
        %v2696 = vpop.f32.mrb[0].mxu0
        %2697 = vmatprep.mubr.f32.mxu0 0.0
        %2698 = vmatmul.mubr.f32.gmra.mrb[0].mxu0 %v2598
        %v2699 = vpop.f32.mrb[0].mxu0
        %v2700 = vadd.f32 0.0, %v2699
        %v2701 = vpop.f32.mrb[0].mxu0
        %2702 = vmatprep.mubr.f32.mxu0 0.0
        %2703 = vmatmul.mubr.f32.gmra.mrb[0].mxu0 %v2601
        %v2704 = vpop.f32.mrb[0].mxu0
        %v2705 = vadd.f32 0.0, %v2704
        %v2706 = vpop.f32.mrb[0].mxu0
        %2707 = vmatprep.mubr.f32.mxu0 0.0
        %2708 = vmatmul.mubr.f32.gmra.mrb[0].mxu0 %v2604
        %v2709 = vpop.f32.mrb[0].mxu0
        %v2710 = vadd.f32 0.0, %v2709
        %v2711 = vpop.f32.mrb[0].mxu0
        %2712 = vdwg.mxu0
        %v2713 = vadd.f32 %v2560, %v2675
        %v2714 = vadd.f32 %v2561, %v2680
        %v2715 = vadd.f32 %v2562, %v2685
        %v2716 = vadd.f32 %v2563, %v2690
        %v2717 = vadd.f32 %v2564, %v2695
        %v2718 = vadd.f32 %v2565, %v2700
        %v2719 = vadd.f32 %v2566, %v2705
        %v2720 = vadd.f32 %v2567, %v2710
        %v2721 = vld [vmem:[%s880] sm:$0xff]
        %v2722 = vld [vmem:[%s880 + $0x8] sm:$0xff]
        %v2723 = vld [vmem:[%s880 + $0x10] sm:$0xff]
        %v2724 = vld [vmem:[%s880 + $0x18] sm:$0xff]
        %v2725 = vld [vmem:[%s880 + $0x20] sm:$0xff]
        %v2726 = vld [vmem:[%s880 + $0x28] sm:$0xff]
        %v2727 = vld [vmem:[%s880 + $0x30] sm:$0xff]
        %v2728 = vld [vmem:[%s880 + $0x38] sm:$0xff]
        %v2729 = vrot.slane %v2105, 4
        %v2730 = vrot.slane %v2106, 3
        %v2731 = vsel %vm295, %v2730, %v2729
        %v2732 = vrot.slane %v2107, 2
        %v2733 = vsel %vm298, %v2732, %v2731
        %v2734 = vrot.slane %v2108, 1
        %v2735 = vsel %vm301, %v2734, %v2733
        %v2737 = vsel %vm303, %v2721, 0
        %v2740 = vsel %vm303, %v2722, 0
        %v2743 = vsel %vm303, %v2723, 0
        %v2746 = vsel %vm303, %v2724, 0
        %v2749 = vsel %vm303, %v2725, 0
        %v2752 = vsel %vm303, %v2726, 0
        %v2755 = vsel %vm303, %v2727, 0
        %v2758 = vsel %vm303, %v2728, 0
        %v2760 = vsel %vm303, %v2735, 0
        %2762 = vmatprep.subr.mxu0 0.0
        %2763 = vmatpush1.xpose.msra.mxu0 %v2760
        %2764 = vmatprep.subr.mxu0 0.0
        %2765 = vmatpush1.xpose.msra.mxu0 0.0
        %2766 = vmatprep.subr.mxu0 0.0
        %2767 = vmatpush1.xpose.msra.mxu0 0.0
        %2768 = vmatprep.subr.mxu0 0.0
        %2769 = vmatpush1.xpose.msra.mxu0 0.0
        %2770 = vmatprep.subr.mxu0 0.0
        %2771 = vmatpush1.xpose.msra.mxu0 0.0
        %2772 = vmatprep.subr.mxu0 0.0
        %2773 = vmatpush1.xpose.msra.mxu0 0.0
        %2774 = vmatprep.subr.mxu0 0.0
        %2775 = vmatpush1.xpose.msra.mxu0 0.0
        %2776 = vmatprep.subr.mxu0 0.0
        %2777 = vmatpush1.xpose.msra.mxu0 0.0
        %2778 = vmatprep.subr.mxu0 0.0
        %2779 = vmatpush1.xpose.msra.mxu0 0.0
        %2780 = vmatprep.subr.mxu0 0.0
        %2781 = vmatpush1.xpose.msra.mxu0 0.0
        %2782 = vmatprep.subr.mxu0 0.0
        %2783 = vmatpush1.xpose.msra.mxu0 0.0
        %2784 = vmatprep.subr.mxu0 0.0
        %2785 = vmatpush1.xpose.msra.mxu0 0.0
        %2786 = vmatprep.subr.mxu0 0.0
        %2787 = vmatpush1.xpose.msra.mxu0 0.0
        %2788 = vmatprep.subr.mxu0 0.0
        %2789 = vmatpush1.xpose.msra.mxu0 0.0
        %2790 = vmatprep.subr.mxu0 0.0
        %2791 = vmatpush1.xpose.msra.mxu0 0.0
        %2792 = vmatprep.subr.mxu0 0.0
        %2793 = vmatpush1.xpose.msra.mxu0 0.0
        %2794 = vmatprep.subr.mxu0 0.0
        %2795 = vmatpush1.xpose.msra.mxu0 0.0
        %2796 = vmatprep.subr.mxu0 0.0
        %2797 = vmatpush1.xpose.msra.mxu0 0.0
        %2798 = vmatprep.subr.mxu0 0.0
        %2799 = vmatpush1.xpose.msra.mxu0 0.0
        %2800 = vmatprep.subr.mxu0 0.0
        %2801 = vmatpush1.xpose.msra.mxu0 0.0
        %2802 = vmatprep.subr.mxu0 0.0
        %2803 = vmatpush1.xpose.msra.mxu0 0.0
        %2804 = vmatprep.subr.mxu0 0.0
        %2805 = vmatpush1.xpose.msra.mxu0 0.0
        %2806 = vmatprep.subr.mxu0 0.0
        %2807 = vmatpush1.xpose.msra.mxu0 0.0
        %2808 = vmatprep.subr.mxu0 0.0
        %2809 = vmatpush1.xpose.msra.mxu0 0.0
        %2810 = vmatprep.subr.mxu0 0.0
        %2811 = vmatpush1.xpose.msra.mxu0 0.0
        %2812 = vmatprep.subr.mxu0 0.0
        %2813 = vmatpush1.xpose.msra.mxu0 0.0
        %2814 = vmatprep.subr.mxu0 0.0
        %2815 = vmatpush1.xpose.msra.mxu0 0.0
        %2816 = vmatprep.subr.mxu0 0.0
        %2817 = vmatpush1.xpose.msra.mxu0 0.0
        %2818 = vmatprep.subr.mxu0 0.0
        %2819 = vmatpush1.xpose.msra.mxu0 0.0
        %2820 = vmatprep.subr.mxu0 0.0
        %2821 = vmatpush1.xpose.msra.mxu0 0.0
        %2822 = vmatprep.subr.mxu0 0.0
        %2823 = vmatpush1.xpose.msra.mxu0 0.0
        %2824 = vmatprep.subr.mxu0 0.0
        %2825 = vmatpush1.xpose.msra.mxu0 0.0
        %2826 = vmatprep.mubr.f32.mxu0 0.0
        %2827 = vmatmul.mubr.f32.gmra.mrb[0].mxu0 %v2737
        %v2828 = vpop.f32.mrb[0].mxu0
        %v2829 = vadd.f32 0.0, %v2828
        %v2830 = vpop.f32.mrb[0].mxu0
        %2831 = vmatprep.mubr.f32.mxu0 0.0
        %2832 = vmatmul.mubr.f32.gmra.mrb[0].mxu0 %v2740
        %v2833 = vpop.f32.mrb[0].mxu0
        %v2834 = vadd.f32 0.0, %v2833
        %v2835 = vpop.f32.mrb[0].mxu0
        %2836 = vmatprep.mubr.f32.mxu0 0.0
        %2837 = vmatmul.mubr.f32.gmra.mrb[0].mxu0 %v2743
        %v2838 = vpop.f32.mrb[0].mxu0
        %v2839 = vadd.f32 0.0, %v2838
        %v2840 = vpop.f32.mrb[0].mxu0
        %2841 = vmatprep.mubr.f32.mxu0 0.0
        %2842 = vmatmul.mubr.f32.gmra.mrb[0].mxu0 %v2746
        %v2843 = vpop.f32.mrb[0].mxu0
        %v2844 = vadd.f32 0.0, %v2843
        %v2845 = vpop.f32.mrb[0].mxu0
        %2846 = vmatprep.mubr.f32.mxu0 0.0
        %2847 = vmatmul.mubr.f32.gmra.mrb[0].mxu0 %v2749
        %v2848 = vpop.f32.mrb[0].mxu0
        %v2849 = vadd.f32 0.0, %v2848
        %v2850 = vpop.f32.mrb[0].mxu0
        %2851 = vmatprep.mubr.f32.mxu0 0.0
        %2852 = vmatmul.mubr.f32.gmra.mrb[0].mxu0 %v2752
        %v2853 = vpop.f32.mrb[0].mxu0
        %v2854 = vadd.f32 0.0, %v2853
        %v2855 = vpop.f32.mrb[0].mxu0
        %2856 = vmatprep.mubr.f32.mxu0 0.0
        %2857 = vmatmul.mubr.f32.gmra.mrb[0].mxu0 %v2755
        %v2858 = vpop.f32.mrb[0].mxu0
        %v2859 = vadd.f32 0.0, %v2858
        %v2860 = vpop.f32.mrb[0].mxu0
        %2861 = vmatprep.mubr.f32.mxu0 0.0
        %2862 = vmatmul.mubr.f32.gmra.mrb[0].mxu0 %v2758
        %v2863 = vpop.f32.mrb[0].mxu0
        %v2864 = vadd.f32 0.0, %v2863
        %v2865 = vpop.f32.mrb[0].mxu0
        %2866 = vdwg.mxu0
        %v2867 = vadd.f32 %v2713, %v2829
        %v2868 = vadd.f32 %v2714, %v2834
        %v2869 = vadd.f32 %v2715, %v2839
        %v2870 = vadd.f32 %v2716, %v2844
        %v2871 = vadd.f32 %v2717, %v2849
        %v2872 = vadd.f32 %v2718, %v2854
        %v2873 = vadd.f32 %v2719, %v2859
        %v2874 = vadd.f32 %v2720, %v2864
        %v2875 = vld [vmem:[%s1035] sm:$0xff]
        %v2876 = vld [vmem:[%s1035 + $0x8] sm:$0xff]
        %v2877 = vld [vmem:[%s1035 + $0x10] sm:$0xff]
        %v2878 = vld [vmem:[%s1035 + $0x18] sm:$0xff]
        %v2879 = vld [vmem:[%s1035 + $0x20] sm:$0xff]
        %v2880 = vld [vmem:[%s1035 + $0x28] sm:$0xff]
        %v2881 = vld [vmem:[%s1035 + $0x30] sm:$0xff]
        %v2882 = vld [vmem:[%s1035 + $0x38] sm:$0xff]
        %v2883 = vrot.slane %v2105, 5
        %v2884 = vrot.slane %v2106, 4
        %v2885 = vsel %vm295, %v2884, %v2883
        %v2886 = vrot.slane %v2107, 3
        %v2887 = vsel %vm298, %v2886, %v2885
        %v2888 = vrot.slane %v2108, 2
        %v2889 = vsel %vm301, %v2888, %v2887
        %v2891 = vsel %vm303, %v2875, 0
        %v2894 = vsel %vm303, %v2876, 0
        %v2897 = vsel %vm303, %v2877, 0
        %v2900 = vsel %vm303, %v2878, 0
        %v2903 = vsel %vm303, %v2879, 0
        %v2906 = vsel %vm303, %v2880, 0
        %v2909 = vsel %vm303, %v2881, 0
        %v2912 = vsel %vm303, %v2882, 0
        %v2914 = vsel %vm303, %v2889, 0
        %2916 = vmatprep.subr.mxu0 0.0
        %2917 = vmatpush1.xpose.msra.mxu0 %v2914
        %2918 = vmatprep.subr.mxu0 0.0
        %2919 = vmatpush1.xpose.msra.mxu0 0.0
        %2920 = vmatprep.subr.mxu0 0.0
        %2921 = vmatpush1.xpose.msra.mxu0 0.0
        %2922 = vmatprep.subr.mxu0 0.0
        %2923 = vmatpush1.xpose.msra.mxu0 0.0
        %2924 = vmatprep.subr.mxu0 0.0
        %2925 = vmatpush1.xpose.msra.mxu0 0.0
        %2926 = vmatprep.subr.mxu0 0.0
        %2927 = vmatpush1.xpose.msra.mxu0 0.0
        %2928 = vmatprep.subr.mxu0 0.0
        %2929 = vmatpush1.xpose.msra.mxu0 0.0
        %2930 = vmatprep.subr.mxu0 0.0
        %2931 = vmatpush1.xpose.msra.mxu0 0.0
        %2932 = vmatprep.subr.mxu0 0.0
        %2933 = vmatpush1.xpose.msra.mxu0 0.0
        %2934 = vmatprep.subr.mxu0 0.0
        %2935 = vmatpush1.xpose.msra.mxu0 0.0
        %2936 = vmatprep.subr.mxu0 0.0
        %2937 = vmatpush1.xpose.msra.mxu0 0.0
        %2938 = vmatprep.subr.mxu0 0.0
        %2939 = vmatpush1.xpose.msra.mxu0 0.0
        %2940 = vmatprep.subr.mxu0 0.0
        %2941 = vmatpush1.xpose.msra.mxu0 0.0
        %2942 = vmatprep.subr.mxu0 0.0
        %2943 = vmatpush1.xpose.msra.mxu0 0.0
        %2944 = vmatprep.subr.mxu0 0.0
        %2945 = vmatpush1.xpose.msra.mxu0 0.0
        %2946 = vmatprep.subr.mxu0 0.0
        %2947 = vmatpush1.xpose.msra.mxu0 0.0
        %2948 = vmatprep.subr.mxu0 0.0
        %2949 = vmatpush1.xpose.msra.mxu0 0.0
        %2950 = vmatprep.subr.mxu0 0.0
        %2951 = vmatpush1.xpose.msra.mxu0 0.0
        %2952 = vmatprep.subr.mxu0 0.0
        %2953 = vmatpush1.xpose.msra.mxu0 0.0
        %2954 = vmatprep.subr.mxu0 0.0
        %2955 = vmatpush1.xpose.msra.mxu0 0.0
        %2956 = vmatprep.subr.mxu0 0.0
        %2957 = vmatpush1.xpose.msra.mxu0 0.0
        %2958 = vmatprep.subr.mxu0 0.0
        %2959 = vmatpush1.xpose.msra.mxu0 0.0
        %2960 = vmatprep.subr.mxu0 0.0
        %2961 = vmatpush1.xpose.msra.mxu0 0.0
        %2962 = vmatprep.subr.mxu0 0.0
        %2963 = vmatpush1.xpose.msra.mxu0 0.0
        %2964 = vmatprep.subr.mxu0 0.0
        %2965 = vmatpush1.xpose.msra.mxu0 0.0
        %2966 = vmatprep.subr.mxu0 0.0
        %2967 = vmatpush1.xpose.msra.mxu0 0.0
        %2968 = vmatprep.subr.mxu0 0.0
        %2969 = vmatpush1.xpose.msra.mxu0 0.0
        %2970 = vmatprep.subr.mxu0 0.0
        %2971 = vmatpush1.xpose.msra.mxu0 0.0
        %2972 = vmatprep.subr.mxu0 0.0
        %2973 = vmatpush1.xpose.msra.mxu0 0.0
        %2974 = vmatprep.subr.mxu0 0.0
        %2975 = vmatpush1.xpose.msra.mxu0 0.0
        %2976 = vmatprep.subr.mxu0 0.0
        %2977 = vmatpush1.xpose.msra.mxu0 0.0
        %2978 = vmatprep.subr.mxu0 0.0
        %2979 = vmatpush1.xpose.msra.mxu0 0.0
        %2980 = vmatprep.mubr.f32.mxu0 0.0
        %2981 = vmatmul.mubr.f32.gmra.mrb[0].mxu0 %v2891
        %v2982 = vpop.f32.mrb[0].mxu0
        %v2983 = vadd.f32 0.0, %v2982
        %v2984 = vpop.f32.mrb[0].mxu0
        %2985 = vmatprep.mubr.f32.mxu0 0.0
        %2986 = vmatmul.mubr.f32.gmra.mrb[0].mxu0 %v2894
        %v2987 = vpop.f32.mrb[0].mxu0
        %v2988 = vadd.f32 0.0, %v2987
        %v2989 = vpop.f32.mrb[0].mxu0
        %2990 = vmatprep.mubr.f32.mxu0 0.0
        %2991 = vmatmul.mubr.f32.gmra.mrb[0].mxu0 %v2897
        %v2992 = vpop.f32.mrb[0].mxu0
        %v2993 = vadd.f32 0.0, %v2992
        %v2994 = vpop.f32.mrb[0].mxu0
        %2995 = vmatprep.mubr.f32.mxu0 0.0
        %2996 = vmatmul.mubr.f32.gmra.mrb[0].mxu0 %v2900
        %v2997 = vpop.f32.mrb[0].mxu0
        %v2998 = vadd.f32 0.0, %v2997
        %v2999 = vpop.f32.mrb[0].mxu0
        %3000 = vmatprep.mubr.f32.mxu0 0.0
        %3001 = vmatmul.mubr.f32.gmra.mrb[0].mxu0 %v2903
        %v3002 = vpop.f32.mrb[0].mxu0
        %v3003 = vadd.f32 0.0, %v3002
        %v3004 = vpop.f32.mrb[0].mxu0
        %3005 = vmatprep.mubr.f32.mxu0 0.0
        %3006 = vmatmul.mubr.f32.gmra.mrb[0].mxu0 %v2906
        %v3007 = vpop.f32.mrb[0].mxu0
        %v3008 = vadd.f32 0.0, %v3007
        %v3009 = vpop.f32.mrb[0].mxu0
        %3010 = vmatprep.mubr.f32.mxu0 0.0
        %3011 = vmatmul.mubr.f32.gmra.mrb[0].mxu0 %v2909
        %v3012 = vpop.f32.mrb[0].mxu0
        %v3013 = vadd.f32 0.0, %v3012
        %v3014 = vpop.f32.mrb[0].mxu0
        %3015 = vmatprep.mubr.f32.mxu0 0.0
        %3016 = vmatmul.mubr.f32.gmra.mrb[0].mxu0 %v2912
        %v3017 = vpop.f32.mrb[0].mxu0
        %v3018 = vadd.f32 0.0, %v3017
        %v3019 = vpop.f32.mrb[0].mxu0
        %3020 = vdwg.mxu0
        %v3021 = vadd.f32 %v2867, %v2983
        %v3022 = vadd.f32 %v2868, %v2988
        %v3023 = vadd.f32 %v2869, %v2993
        %v3024 = vadd.f32 %v2870, %v2998
        %v3025 = vadd.f32 %v2871, %v3003
        %v3026 = vadd.f32 %v2872, %v3008
        %v3027 = vadd.f32 %v2873, %v3013
        %v3028 = vadd.f32 %v2874, %v3018
        %v3029 = vld [vmem:[%s1190] sm:$0xff]
        %v3030 = vld [vmem:[%s1190 + $0x8] sm:$0xff]
        %v3031 = vld [vmem:[%s1190 + $0x10] sm:$0xff]
        %v3032 = vld [vmem:[%s1190 + $0x18] sm:$0xff]
        %v3033 = vld [vmem:[%s1190 + $0x20] sm:$0xff]
        %v3034 = vld [vmem:[%s1190 + $0x28] sm:$0xff]
        %v3035 = vld [vmem:[%s1190 + $0x30] sm:$0xff]
        %v3036 = vld [vmem:[%s1190 + $0x38] sm:$0xff]
        %v3037 = vrot.slane %v2105, 6
        %v3038 = vrot.slane %v2106, 5
        %v3039 = vsel %vm295, %v3038, %v3037
        %v3040 = vrot.slane %v2107, 4
        %v3041 = vsel %vm298, %v3040, %v3039
        %v3042 = vrot.slane %v2108, 3
        %v3043 = vsel %vm301, %v3042, %v3041
        %v3045 = vsel %vm303, %v3029, 0
        %v3048 = vsel %vm303, %v3030, 0
        %v3051 = vsel %vm303, %v3031, 0
        %v3054 = vsel %vm303, %v3032, 0
        %v3057 = vsel %vm303, %v3033, 0
        %v3060 = vsel %vm303, %v3034, 0
        %v3063 = vsel %vm303, %v3035, 0
        %v3066 = vsel %vm303, %v3036, 0
        %v3068 = vsel %vm303, %v3043, 0
        %3070 = vmatprep.subr.mxu0 0.0
        %3071 = vmatpush1.xpose.msra.mxu0 %v3068
        %3072 = vmatprep.subr.mxu0 0.0
        %3073 = vmatpush1.xpose.msra.mxu0 0.0
        %3074 = vmatprep.subr.mxu0 0.0
        %3075 = vmatpush1.xpose.msra.mxu0 0.0
        %3076 = vmatprep.subr.mxu0 0.0
        %3077 = vmatpush1.xpose.msra.mxu0 0.0
        %3078 = vmatprep.subr.mxu0 0.0
        %3079 = vmatpush1.xpose.msra.mxu0 0.0
        %3080 = vmatprep.subr.mxu0 0.0
        %3081 = vmatpush1.xpose.msra.mxu0 0.0
        %3082 = vmatprep.subr.mxu0 0.0
        %3083 = vmatpush1.xpose.msra.mxu0 0.0
        %3084 = vmatprep.subr.mxu0 0.0
        %3085 = vmatpush1.xpose.msra.mxu0 0.0
        %3086 = vmatprep.subr.mxu0 0.0
        %3087 = vmatpush1.xpose.msra.mxu0 0.0
        %3088 = vmatprep.subr.mxu0 0.0
        %3089 = vmatpush1.xpose.msra.mxu0 0.0
        %3090 = vmatprep.subr.mxu0 0.0
        %3091 = vmatpush1.xpose.msra.mxu0 0.0
        %3092 = vmatprep.subr.mxu0 0.0
        %3093 = vmatpush1.xpose.msra.mxu0 0.0
        %3094 = vmatprep.subr.mxu0 0.0
        %3095 = vmatpush1.xpose.msra.mxu0 0.0
        %3096 = vmatprep.subr.mxu0 0.0
        %3097 = vmatpush1.xpose.msra.mxu0 0.0
        %3098 = vmatprep.subr.mxu0 0.0
        %3099 = vmatpush1.xpose.msra.mxu0 0.0
        %3100 = vmatprep.subr.mxu0 0.0
        %3101 = vmatpush1.xpose.msra.mxu0 0.0
        %3102 = vmatprep.subr.mxu0 0.0
        %3103 = vmatpush1.xpose.msra.mxu0 0.0
        %3104 = vmatprep.subr.mxu0 0.0
        %3105 = vmatpush1.xpose.msra.mxu0 0.0
        %3106 = vmatprep.subr.mxu0 0.0
        %3107 = vmatpush1.xpose.msra.mxu0 0.0
        %3108 = vmatprep.subr.mxu0 0.0
        %3109 = vmatpush1.xpose.msra.mxu0 0.0
        %3110 = vmatprep.subr.mxu0 0.0
        %3111 = vmatpush1.xpose.msra.mxu0 0.0
        %3112 = vmatprep.subr.mxu0 0.0
        %3113 = vmatpush1.xpose.msra.mxu0 0.0
        %3114 = vmatprep.subr.mxu0 0.0
        %3115 = vmatpush1.xpose.msra.mxu0 0.0
        %3116 = vmatprep.subr.mxu0 0.0
        %3117 = vmatpush1.xpose.msra.mxu0 0.0
        %3118 = vmatprep.subr.mxu0 0.0
        %3119 = vmatpush1.xpose.msra.mxu0 0.0
        %3120 = vmatprep.subr.mxu0 0.0
        %3121 = vmatpush1.xpose.msra.mxu0 0.0
        %3122 = vmatprep.subr.mxu0 0.0
        %3123 = vmatpush1.xpose.msra.mxu0 0.0
        %3124 = vmatprep.subr.mxu0 0.0
        %3125 = vmatpush1.xpose.msra.mxu0 0.0
        %3126 = vmatprep.subr.mxu0 0.0
        %3127 = vmatpush1.xpose.msra.mxu0 0.0
        %3128 = vmatprep.subr.mxu0 0.0
        %3129 = vmatpush1.xpose.msra.mxu0 0.0
        %3130 = vmatprep.subr.mxu0 0.0
        %3131 = vmatpush1.xpose.msra.mxu0 0.0
        %3132 = vmatprep.subr.mxu0 0.0
        %3133 = vmatpush1.xpose.msra.mxu0 0.0
        %3134 = vmatprep.mubr.f32.mxu0 0.0
        %3135 = vmatmul.mubr.f32.gmra.mrb[0].mxu0 %v3045
        %v3136 = vpop.f32.mrb[0].mxu0
        %v3137 = vadd.f32 0.0, %v3136
        %v3138 = vpop.f32.mrb[0].mxu0
        %3139 = vmatprep.mubr.f32.mxu0 0.0
        %3140 = vmatmul.mubr.f32.gmra.mrb[0].mxu0 %v3048
        %v3141 = vpop.f32.mrb[0].mxu0
        %v3142 = vadd.f32 0.0, %v3141
        %v3143 = vpop.f32.mrb[0].mxu0
        %3144 = vmatprep.mubr.f32.mxu0 0.0
        %3145 = vmatmul.mubr.f32.gmra.mrb[0].mxu0 %v3051
        %v3146 = vpop.f32.mrb[0].mxu0
        %v3147 = vadd.f32 0.0, %v3146
        %v3148 = vpop.f32.mrb[0].mxu0
        %3149 = vmatprep.mubr.f32.mxu0 0.0
        %3150 = vmatmul.mubr.f32.gmra.mrb[0].mxu0 %v3054
        %v3151 = vpop.f32.mrb[0].mxu0
        %v3152 = vadd.f32 0.0, %v3151
        %v3153 = vpop.f32.mrb[0].mxu0
        %3154 = vmatprep.mubr.f32.mxu0 0.0
        %3155 = vmatmul.mubr.f32.gmra.mrb[0].mxu0 %v3057
        %v3156 = vpop.f32.mrb[0].mxu0
        %v3157 = vadd.f32 0.0, %v3156
        %v3158 = vpop.f32.mrb[0].mxu0
        %3159 = vmatprep.mubr.f32.mxu0 0.0
        %3160 = vmatmul.mubr.f32.gmra.mrb[0].mxu0 %v3060
        %v3161 = vpop.f32.mrb[0].mxu0
        %v3162 = vadd.f32 0.0, %v3161
        %v3163 = vpop.f32.mrb[0].mxu0
        %3164 = vmatprep.mubr.f32.mxu0 0.0
        %3165 = vmatmul.mubr.f32.gmra.mrb[0].mxu0 %v3063
        %v3166 = vpop.f32.mrb[0].mxu0
        %v3167 = vadd.f32 0.0, %v3166
        %v3168 = vpop.f32.mrb[0].mxu0
        %3169 = vmatprep.mubr.f32.mxu0 0.0
        %3170 = vmatmul.mubr.f32.gmra.mrb[0].mxu0 %v3066
        %v3171 = vpop.f32.mrb[0].mxu0
        %v3172 = vadd.f32 0.0, %v3171
        %v3173 = vpop.f32.mrb[0].mxu0
        %3174 = vdwg.mxu0
        %v3175 = vadd.f32 %v3021, %v3137
        %v3176 = vadd.f32 %v3022, %v3142
        %v3177 = vadd.f32 %v3023, %v3147
        %v3178 = vadd.f32 %v3024, %v3152
        %v3179 = vadd.f32 %v3025, %v3157
        %v3180 = vadd.f32 %v3026, %v3162
        %v3181 = vadd.f32 %v3027, %v3167
        %v3182 = vadd.f32 %v3028, %v3172
        %v3183 = vld [vmem:[%s1345] sm:$0xff]
        %v3184 = vld [vmem:[%s1345 + $0x8] sm:$0xff]
        %v3185 = vld [vmem:[%s1345 + $0x10] sm:$0xff]
        %v3186 = vld [vmem:[%s1345 + $0x18] sm:$0xff]
        %v3187 = vld [vmem:[%s1345 + $0x20] sm:$0xff]
        %v3188 = vld [vmem:[%s1345 + $0x28] sm:$0xff]
        %v3189 = vld [vmem:[%s1345 + $0x30] sm:$0xff]
        %v3190 = vld [vmem:[%s1345 + $0x38] sm:$0xff]
        %v3191 = vrot.slane %v2105, 7
        %v3192 = vrot.slane %v2106, 6
        %v3193 = vsel %vm295, %v3192, %v3191
        %v3194 = vrot.slane %v2107, 5
        %v3195 = vsel %vm298, %v3194, %v3193
        %v3196 = vrot.slane %v2108, 4
        %v3197 = vsel %vm301, %v3196, %v3195
        %v3199 = vsel %vm303, %v3183, 0
        %v3202 = vsel %vm303, %v3184, 0
        %v3205 = vsel %vm303, %v3185, 0
        %v3208 = vsel %vm303, %v3186, 0
        %v3211 = vsel %vm303, %v3187, 0
        %v3214 = vsel %vm303, %v3188, 0
        %v3217 = vsel %vm303, %v3189, 0
        %v3220 = vsel %vm303, %v3190, 0
        %v3222 = vsel %vm303, %v3197, 0
        %3224 = vmatprep.subr.mxu0 0.0
        %3225 = vmatpush1.xpose.msra.mxu0 %v3222
        %3226 = vmatprep.subr.mxu0 0.0
        %3227 = vmatpush1.xpose.msra.mxu0 0.0
        %3228 = vmatprep.subr.mxu0 0.0
        %3229 = vmatpush1.xpose.msra.mxu0 0.0
        %3230 = vmatprep.subr.mxu0 0.0
        %3231 = vmatpush1.xpose.msra.mxu0 0.0
        %3232 = vmatprep.subr.mxu0 0.0
        %3233 = vmatpush1.xpose.msra.mxu0 0.0
        %3234 = vmatprep.subr.mxu0 0.0
        %3235 = vmatpush1.xpose.msra.mxu0 0.0
        %3236 = vmatprep.subr.mxu0 0.0
        %3237 = vmatpush1.xpose.msra.mxu0 0.0
        %3238 = vmatprep.subr.mxu0 0.0
        %3239 = vmatpush1.xpose.msra.mxu0 0.0
        %3240 = vmatprep.subr.mxu0 0.0
        %3241 = vmatpush1.xpose.msra.mxu0 0.0
        %3242 = vmatprep.subr.mxu0 0.0
        %3243 = vmatpush1.xpose.msra.mxu0 0.0
        %3244 = vmatprep.subr.mxu0 0.0
        %3245 = vmatpush1.xpose.msra.mxu0 0.0
        %3246 = vmatprep.subr.mxu0 0.0
        %3247 = vmatpush1.xpose.msra.mxu0 0.0
        %3248 = vmatprep.subr.mxu0 0.0
        %3249 = vmatpush1.xpose.msra.mxu0 0.0
        %3250 = vmatprep.subr.mxu0 0.0
        %3251 = vmatpush1.xpose.msra.mxu0 0.0
        %3252 = vmatprep.subr.mxu0 0.0
        %3253 = vmatpush1.xpose.msra.mxu0 0.0
        %3254 = vmatprep.subr.mxu0 0.0
        %3255 = vmatpush1.xpose.msra.mxu0 0.0
        %3256 = vmatprep.subr.mxu0 0.0
        %3257 = vmatpush1.xpose.msra.mxu0 0.0
        %3258 = vmatprep.subr.mxu0 0.0
        %3259 = vmatpush1.xpose.msra.mxu0 0.0
        %3260 = vmatprep.subr.mxu0 0.0
        %3261 = vmatpush1.xpose.msra.mxu0 0.0
        %3262 = vmatprep.subr.mxu0 0.0
        %3263 = vmatpush1.xpose.msra.mxu0 0.0
        %3264 = vmatprep.subr.mxu0 0.0
        %3265 = vmatpush1.xpose.msra.mxu0 0.0
        %3266 = vmatprep.subr.mxu0 0.0
        %3267 = vmatpush1.xpose.msra.mxu0 0.0
        %3268 = vmatprep.subr.mxu0 0.0
        %3269 = vmatpush1.xpose.msra.mxu0 0.0
        %3270 = vmatprep.subr.mxu0 0.0
        %3271 = vmatpush1.xpose.msra.mxu0 0.0
        %3272 = vmatprep.subr.mxu0 0.0
        %3273 = vmatpush1.xpose.msra.mxu0 0.0
        %3274 = vmatprep.subr.mxu0 0.0
        %3275 = vmatpush1.xpose.msra.mxu0 0.0
        %3276 = vmatprep.subr.mxu0 0.0
        %3277 = vmatpush1.xpose.msra.mxu0 0.0
        %3278 = vmatprep.subr.mxu0 0.0
        %3279 = vmatpush1.xpose.msra.mxu0 0.0
        %3280 = vmatprep.subr.mxu0 0.0
        %3281 = vmatpush1.xpose.msra.mxu0 0.0
        %3282 = vmatprep.subr.mxu0 0.0
        %3283 = vmatpush1.xpose.msra.mxu0 0.0
        %3284 = vmatprep.subr.mxu0 0.0
        %3285 = vmatpush1.xpose.msra.mxu0 0.0
        %3286 = vmatprep.subr.mxu0 0.0
        %3287 = vmatpush1.xpose.msra.mxu0 0.0
        %3288 = vmatprep.mubr.f32.mxu0 0.0
        %3289 = vmatmul.mubr.f32.gmra.mrb[0].mxu0 %v3199
        %v3290 = vpop.f32.mrb[0].mxu0
        %v3291 = vadd.f32 0.0, %v3290
        %v3292 = vpop.f32.mrb[0].mxu0
        %3293 = vmatprep.mubr.f32.mxu0 0.0
        %3294 = vmatmul.mubr.f32.gmra.mrb[0].mxu0 %v3202
        %v3295 = vpop.f32.mrb[0].mxu0
        %v3296 = vadd.f32 0.0, %v3295
        %v3297 = vpop.f32.mrb[0].mxu0
        %3298 = vmatprep.mubr.f32.mxu0 0.0
        %3299 = vmatmul.mubr.f32.gmra.mrb[0].mxu0 %v3205
        %v3300 = vpop.f32.mrb[0].mxu0
        %v3301 = vadd.f32 0.0, %v3300
        %v3302 = vpop.f32.mrb[0].mxu0
        %3303 = vmatprep.mubr.f32.mxu0 0.0
        %3304 = vmatmul.mubr.f32.gmra.mrb[0].mxu0 %v3208
        %v3305 = vpop.f32.mrb[0].mxu0
        %v3306 = vadd.f32 0.0, %v3305
        %v3307 = vpop.f32.mrb[0].mxu0
        %3308 = vmatprep.mubr.f32.mxu0 0.0
        %3309 = vmatmul.mubr.f32.gmra.mrb[0].mxu0 %v3211
        %v3310 = vpop.f32.mrb[0].mxu0
        %v3311 = vadd.f32 0.0, %v3310
        %v3312 = vpop.f32.mrb[0].mxu0
        %3313 = vmatprep.mubr.f32.mxu0 0.0
        %3314 = vmatmul.mubr.f32.gmra.mrb[0].mxu0 %v3214
        %v3315 = vpop.f32.mrb[0].mxu0
        %v3316 = vadd.f32 0.0, %v3315
        %v3317 = vpop.f32.mrb[0].mxu0
        %3318 = vmatprep.mubr.f32.mxu0 0.0
        %3319 = vmatmul.mubr.f32.gmra.mrb[0].mxu0 %v3217
        %v3320 = vpop.f32.mrb[0].mxu0
        %v3321 = vadd.f32 0.0, %v3320
        %v3322 = vpop.f32.mrb[0].mxu0
        %3323 = vmatprep.mubr.f32.mxu0 0.0
        %3324 = vmatmul.mubr.f32.gmra.mrb[0].mxu0 %v3220
        %v3325 = vpop.f32.mrb[0].mxu0
        %v3326 = vadd.f32 0.0, %v3325
        %v3327 = vpop.f32.mrb[0].mxu0
        %3328 = vdwg.mxu0
        %v3329 = vadd.f32 %v3175, %v3291
        %v3330 = vadd.f32 %v3176, %v3296
        %v3331 = vadd.f32 %v3177, %v3301
        %v3332 = vadd.f32 %v3178, %v3306
        %v3333 = vadd.f32 %v3179, %v3311
        %v3334 = vadd.f32 %v3180, %v3316
        %v3335 = vadd.f32 %v3181, %v3321
        %v3336 = vadd.f32 %v3182, %v3326
        %v3337 = vld [vmem:[#allocation7] sm:$0xff]
        %v3338 = vld [vmem:[#allocation7 + $0x8] sm:$0xff]
        %v3339 = vld [vmem:[#allocation7 + $0x10] sm:$0xff]
        %v3340 = vld [vmem:[#allocation7 + $0x18] sm:$0xff]
        %v3341 = vld [vmem:[#allocation7 + $0x20] sm:$0xff]
        %v3342 = vld [vmem:[#allocation7 + $0x28] sm:$0xff]
        %v3343 = vld [vmem:[#allocation7 + $0x30] sm:$0xff]
        %v3344 = vld [vmem:[#allocation7 + $0x38] sm:$0xff]
        %3346 = vset.pattern.permute.xlu0 0
        %3347 = vperm.xlu0 %3346, %v3337
        %v3348 = vpop.permute.xlu0 %3347
        %3351 = vset.pattern.permute.xlu0 0
        %3352 = vperm.xlu0 %3351, %v3338
        %v3353 = vpop.permute.xlu0 %3352
        %3356 = vset.pattern.permute.xlu0 0
        %3357 = vperm.xlu0 %3356, %v3339
        %v3358 = vpop.permute.xlu0 %3357
        %3361 = vset.pattern.permute.xlu0 0
        %3362 = vperm.xlu0 %3361, %v3340
        %v3363 = vpop.permute.xlu0 %3362
        %3366 = vset.pattern.permute.xlu0 0
        %3367 = vperm.xlu0 %3366, %v3341
        %v3368 = vpop.permute.xlu0 %3367
        %3371 = vset.pattern.permute.xlu0 0
        %3372 = vperm.xlu0 %3371, %v3342
        %v3373 = vpop.permute.xlu0 %3372
        %3376 = vset.pattern.permute.xlu0 0
        %3377 = vperm.xlu0 %3376, %v3343
        %v3378 = vpop.permute.xlu0 %3377
        %3381 = vset.pattern.permute.xlu0 0
        %3382 = vperm.xlu0 %3381, %v3344
        %v3383 = vpop.permute.xlu0 %3382
        %v3385 = vadd.f32 %v3329, %v3348
        %v3386 = vadd.f32 %v3330, %v3353
        %v3387 = vadd.f32 %v3331, %v3358
        %v3388 = vadd.f32 %v3332, %v3363
        %v3389 = vadd.f32 %v3333, %v3368
        %v3390 = vadd.f32 %v3334, %v3373
        %v3391 = vadd.f32 %v3335, %v3378
        %v3392 = vadd.f32 %v3336, %v3383
        %v3401 = vcombine.high %v3385, %v3385
        %v3403 = vunpack.c.l.s4 1966171168
        %v3404 = vunpack.c.0.s8 %v3403
        %v3405 = vlaneseq
        %v3406 = vshrl.u32 %v3405, 7
        %v3407 = vsub.s32 %v3404, %v3406
        %v3408 = vrot.slane %v3385, %v3407
        %v3410 = vunpack.c.l.s4 1966171168
        %v3411 = vunpack.c.0.s8 %v3410
        %v3412 = vlaneseq
        %v3413 = vshrl.u32 %v3412, 7
        %v3414 = vsub.s32 %v3411, %v3413
        %v3415 = vrot.slane %v3401, %v3414
        %v3416 = vcombine.high %v3408, %v3408
        %v3417 = vcombine.high %v3415, %v3415
        %v3419 = vunpack.c.l.s4 1966171168
        %v3420 = vunpack.c.0.s8 %v3419
        %v3421 = vlaneseq
        %v3422 = vshrl.u32 %v3421, 7
        %v3423 = vsub.s32 %v3420, %v3422
        %v3424 = vrot.slane %v3408, %v3423
        %v3426 = vunpack.c.l.s4 1966171168
        %v3427 = vunpack.c.0.s8 %v3426
        %v3428 = vlaneseq
        %v3429 = vshrl.u32 %v3428, 7
        %v3430 = vsub.s32 %v3427, %v3429
        %v3431 = vrot.slane %v3415, %v3430
        %v3433 = vunpack.c.l.s4 1966171168
        %v3434 = vunpack.c.0.s8 %v3433
        %v3435 = vlaneseq
        %v3436 = vshrl.u32 %v3435, 7
        %v3437 = vsub.s32 %v3434, %v3436
        %v3438 = vrot.slane %v3416, %v3437
        %v3440 = vunpack.c.l.s4 1966171168
        %v3441 = vunpack.c.0.s8 %v3440
        %v3442 = vlaneseq
        %v3443 = vshrl.u32 %v3442, 7
        %v3444 = vsub.s32 %v3441, %v3443
        %v3445 = vrot.slane %v3417, %v3444
        %v3446 = vcombine.high %v3424, %v3424
        %v3447 = vcombine.high %v3431, %v3431
        %v3448 = vcombine.high %v3438, %v3438
        %v3449 = vcombine.high %v3445, %v3445
        %v3450 = vcombine.high %v3386, %v3386
        %v3452 = vunpack.c.l.s4 1966171168
        %v3453 = vunpack.c.0.s8 %v3452
        %v3454 = vlaneseq
        %v3455 = vshrl.u32 %v3454, 7
        %v3456 = vsub.s32 %v3453, %v3455
        %v3457 = vrot.slane %v3386, %v3456
        %v3459 = vunpack.c.l.s4 1966171168
        %v3460 = vunpack.c.0.s8 %v3459
        %v3461 = vlaneseq
        %v3462 = vshrl.u32 %v3461, 7
        %v3463 = vsub.s32 %v3460, %v3462
        %v3464 = vrot.slane %v3450, %v3463
        %v3465 = vcombine.high %v3457, %v3457
        %v3466 = vcombine.high %v3464, %v3464
        %v3468 = vunpack.c.l.s4 1966171168
        %v3469 = vunpack.c.0.s8 %v3468
        %v3470 = vlaneseq
        %v3471 = vshrl.u32 %v3470, 7
        %v3472 = vsub.s32 %v3469, %v3471
        %v3473 = vrot.slane %v3457, %v3472
        %v3475 = vunpack.c.l.s4 1966171168
        %v3476 = vunpack.c.0.s8 %v3475
        %v3477 = vlaneseq
        %v3478 = vshrl.u32 %v3477, 7
        %v3479 = vsub.s32 %v3476, %v3478
        %v3480 = vrot.slane %v3464, %v3479
        %v3482 = vunpack.c.l.s4 1966171168
        %v3483 = vunpack.c.0.s8 %v3482
        %v3484 = vlaneseq
        %v3485 = vshrl.u32 %v3484, 7
        %v3486 = vsub.s32 %v3483, %v3485
        %v3487 = vrot.slane %v3465, %v3486
        %v3489 = vunpack.c.l.s4 1966171168
        %v3490 = vunpack.c.0.s8 %v3489
        %v3491 = vlaneseq
        %v3492 = vshrl.u32 %v3491, 7
        %v3493 = vsub.s32 %v3490, %v3492
        %v3494 = vrot.slane %v3466, %v3493
        %v3495 = vcombine.high %v3473, %v3473
        %v3496 = vcombine.high %v3480, %v3480
        %v3497 = vcombine.high %v3487, %v3487
        %v3498 = vcombine.high %v3494, %v3494
        %v3499 = vcombine.high %v3387, %v3387
        %v3501 = vunpack.c.l.s4 1966171168
        %v3502 = vunpack.c.0.s8 %v3501
        %v3503 = vlaneseq
        %v3504 = vshrl.u32 %v3503, 7
        %v3505 = vsub.s32 %v3502, %v3504
        %v3506 = vrot.slane %v3387, %v3505
        %v3508 = vunpack.c.l.s4 1966171168
        %v3509 = vunpack.c.0.s8 %v3508
        %v3510 = vlaneseq
        %v3511 = vshrl.u32 %v3510, 7
        %v3512 = vsub.s32 %v3509, %v3511
        %v3513 = vrot.slane %v3499, %v3512
        %v3514 = vcombine.high %v3506, %v3506
        %v3515 = vcombine.high %v3513, %v3513
        %v3517 = vunpack.c.l.s4 1966171168
        %v3518 = vunpack.c.0.s8 %v3517
        %v3519 = vlaneseq
        %v3520 = vshrl.u32 %v3519, 7
        %v3521 = vsub.s32 %v3518, %v3520
        %v3522 = vrot.slane %v3506, %v3521
        %v3524 = vunpack.c.l.s4 1966171168
        %v3525 = vunpack.c.0.s8 %v3524
        %v3526 = vlaneseq
        %v3527 = vshrl.u32 %v3526, 7
        %v3528 = vsub.s32 %v3525, %v3527
        %v3529 = vrot.slane %v3513, %v3528
        %v3531 = vunpack.c.l.s4 1966171168
        %v3532 = vunpack.c.0.s8 %v3531
        %v3533 = vlaneseq
        %v3534 = vshrl.u32 %v3533, 7
        %v3535 = vsub.s32 %v3532, %v3534
        %v3536 = vrot.slane %v3514, %v3535
        %v3538 = vunpack.c.l.s4 1966171168
        %v3539 = vunpack.c.0.s8 %v3538
        %v3540 = vlaneseq
        %v3541 = vshrl.u32 %v3540, 7
        %v3542 = vsub.s32 %v3539, %v3541
        %v3543 = vrot.slane %v3515, %v3542
        %v3544 = vcombine.high %v3522, %v3522
        %v3545 = vcombine.high %v3529, %v3529
        %v3546 = vcombine.high %v3536, %v3536
        %v3547 = vcombine.high %v3543, %v3543
        %v3548 = vcombine.high %v3388, %v3388
        %v3550 = vunpack.c.l.s4 1966171168
        %v3551 = vunpack.c.0.s8 %v3550
        %v3552 = vlaneseq
        %v3553 = vshrl.u32 %v3552, 7
        %v3554 = vsub.s32 %v3551, %v3553
        %v3555 = vrot.slane %v3388, %v3554
        %v3557 = vunpack.c.l.s4 1966171168
        %v3558 = vunpack.c.0.s8 %v3557
        %v3559 = vlaneseq
        %v3560 = vshrl.u32 %v3559, 7
        %v3561 = vsub.s32 %v3558, %v3560
        %v3562 = vrot.slane %v3548, %v3561
        %v3563 = vcombine.high %v3555, %v3555
        %v3564 = vcombine.high %v3562, %v3562
        %v3566 = vunpack.c.l.s4 1966171168
        %v3567 = vunpack.c.0.s8 %v3566
        %v3568 = vlaneseq
        %v3569 = vshrl.u32 %v3568, 7
        %v3570 = vsub.s32 %v3567, %v3569
        %v3571 = vrot.slane %v3555, %v3570
        %v3573 = vunpack.c.l.s4 1966171168
        %v3574 = vunpack.c.0.s8 %v3573
        %v3575 = vlaneseq
        %v3576 = vshrl.u32 %v3575, 7
        %v3577 = vsub.s32 %v3574, %v3576
        %v3578 = vrot.slane %v3562, %v3577
        %v3580 = vunpack.c.l.s4 1966171168
        %v3581 = vunpack.c.0.s8 %v3580
        %v3582 = vlaneseq
        %v3583 = vshrl.u32 %v3582, 7
        %v3584 = vsub.s32 %v3581, %v3583
        %v3585 = vrot.slane %v3563, %v3584
        %v3587 = vunpack.c.l.s4 1966171168
        %v3588 = vunpack.c.0.s8 %v3587
        %v3589 = vlaneseq
        %v3590 = vshrl.u32 %v3589, 7
        %v3591 = vsub.s32 %v3588, %v3590
        %v3592 = vrot.slane %v3564, %v3591
        %v3593 = vcombine.high %v3571, %v3571
        %v3594 = vcombine.high %v3578, %v3578
        %v3595 = vcombine.high %v3585, %v3585
        %v3596 = vcombine.high %v3592, %v3592
        %v3597 = vcombine.high %v3389, %v3389
        %v3599 = vunpack.c.l.s4 1966171168
        %v3600 = vunpack.c.0.s8 %v3599
        %v3601 = vlaneseq
        %v3602 = vshrl.u32 %v3601, 7
        %v3603 = vsub.s32 %v3600, %v3602
        %v3604 = vrot.slane %v3389, %v3603
        %v3606 = vunpack.c.l.s4 1966171168
        %v3607 = vunpack.c.0.s8 %v3606
        %v3608 = vlaneseq
        %v3609 = vshrl.u32 %v3608, 7
        %v3610 = vsub.s32 %v3607, %v3609
        %v3611 = vrot.slane %v3597, %v3610
        %v3612 = vcombine.high %v3604, %v3604
        %v3613 = vcombine.high %v3611, %v3611
        %v3615 = vunpack.c.l.s4 1966171168
        %v3616 = vunpack.c.0.s8 %v3615
        %v3617 = vlaneseq
        %v3618 = vshrl.u32 %v3617, 7
        %v3619 = vsub.s32 %v3616, %v3618
        %v3620 = vrot.slane %v3604, %v3619
        %v3622 = vunpack.c.l.s4 1966171168
        %v3623 = vunpack.c.0.s8 %v3622
        %v3624 = vlaneseq
        %v3625 = vshrl.u32 %v3624, 7
        %v3626 = vsub.s32 %v3623, %v3625
        %v3627 = vrot.slane %v3611, %v3626
        %v3629 = vunpack.c.l.s4 1966171168
        %v3630 = vunpack.c.0.s8 %v3629
        %v3631 = vlaneseq
        %v3632 = vshrl.u32 %v3631, 7
        %v3633 = vsub.s32 %v3630, %v3632
        %v3634 = vrot.slane %v3612, %v3633
        %v3636 = vunpack.c.l.s4 1966171168
        %v3637 = vunpack.c.0.s8 %v3636
        %v3638 = vlaneseq
        %v3639 = vshrl.u32 %v3638, 7
        %v3640 = vsub.s32 %v3637, %v3639
        %v3641 = vrot.slane %v3613, %v3640
        %v3642 = vcombine.high %v3620, %v3620
        %v3643 = vcombine.high %v3627, %v3627
        %v3644 = vcombine.high %v3634, %v3634
        %v3645 = vcombine.high %v3641, %v3641
        %v3646 = vcombine.high %v3390, %v3390
        %v3648 = vunpack.c.l.s4 1966171168
        %v3649 = vunpack.c.0.s8 %v3648
        %v3650 = vlaneseq
        %v3651 = vshrl.u32 %v3650, 7
        %v3652 = vsub.s32 %v3649, %v3651
        %v3653 = vrot.slane %v3390, %v3652
        %v3655 = vunpack.c.l.s4 1966171168
        %v3656 = vunpack.c.0.s8 %v3655
        %v3657 = vlaneseq
        %v3658 = vshrl.u32 %v3657, 7
        %v3659 = vsub.s32 %v3656, %v3658
        %v3660 = vrot.slane %v3646, %v3659
        %v3661 = vcombine.high %v3653, %v3653
        %v3662 = vcombine.high %v3660, %v3660
        %v3664 = vunpack.c.l.s4 1966171168
        %v3665 = vunpack.c.0.s8 %v3664
        %v3666 = vlaneseq
        %v3667 = vshrl.u32 %v3666, 7
        %v3668 = vsub.s32 %v3665, %v3667
        %v3669 = vrot.slane %v3653, %v3668
        %v3671 = vunpack.c.l.s4 1966171168
        %v3672 = vunpack.c.0.s8 %v3671
        %v3673 = vlaneseq
        %v3674 = vshrl.u32 %v3673, 7
        %v3675 = vsub.s32 %v3672, %v3674
        %v3676 = vrot.slane %v3660, %v3675
        %v3678 = vunpack.c.l.s4 1966171168
        %v3679 = vunpack.c.0.s8 %v3678
        %v3680 = vlaneseq
        %v3681 = vshrl.u32 %v3680, 7
        %v3682 = vsub.s32 %v3679, %v3681
        %v3683 = vrot.slane %v3661, %v3682
        %v3685 = vunpack.c.l.s4 1966171168
        %v3686 = vunpack.c.0.s8 %v3685
        %v3687 = vlaneseq
        %v3688 = vshrl.u32 %v3687, 7
        %v3689 = vsub.s32 %v3686, %v3688
        %v3690 = vrot.slane %v3662, %v3689
        %v3691 = vcombine.high %v3669, %v3669
        %v3692 = vcombine.high %v3676, %v3676
        %v3693 = vcombine.high %v3683, %v3683
        %v3694 = vcombine.high %v3690, %v3690
        %v3695 = vcombine.high %v3391, %v3391
        %v3697 = vunpack.c.l.s4 1966171168
        %v3698 = vunpack.c.0.s8 %v3697
        %v3699 = vlaneseq
        %v3700 = vshrl.u32 %v3699, 7
        %v3701 = vsub.s32 %v3698, %v3700
        %v3702 = vrot.slane %v3391, %v3701
        %v3704 = vunpack.c.l.s4 1966171168
        %v3705 = vunpack.c.0.s8 %v3704
        %v3706 = vlaneseq
        %v3707 = vshrl.u32 %v3706, 7
        %v3708 = vsub.s32 %v3705, %v3707
        %v3709 = vrot.slane %v3695, %v3708
        %v3710 = vcombine.high %v3702, %v3702
        %v3711 = vcombine.high %v3709, %v3709
        %v3713 = vunpack.c.l.s4 1966171168
        %v3714 = vunpack.c.0.s8 %v3713
        %v3715 = vlaneseq
        %v3716 = vshrl.u32 %v3715, 7
        %v3717 = vsub.s32 %v3714, %v3716
        %v3718 = vrot.slane %v3702, %v3717
        %v3720 = vunpack.c.l.s4 1966171168
        %v3721 = vunpack.c.0.s8 %v3720
        %v3722 = vlaneseq
        %v3723 = vshrl.u32 %v3722, 7
        %v3724 = vsub.s32 %v3721, %v3723
        %v3725 = vrot.slane %v3709, %v3724
        %v3727 = vunpack.c.l.s4 1966171168
        %v3728 = vunpack.c.0.s8 %v3727
        %v3729 = vlaneseq
        %v3730 = vshrl.u32 %v3729, 7
        %v3731 = vsub.s32 %v3728, %v3730
        %v3732 = vrot.slane %v3710, %v3731
        %v3734 = vunpack.c.l.s4 1966171168
        %v3735 = vunpack.c.0.s8 %v3734
        %v3736 = vlaneseq
        %v3737 = vshrl.u32 %v3736, 7
        %v3738 = vsub.s32 %v3735, %v3737
        %v3739 = vrot.slane %v3711, %v3738
        %v3740 = vcombine.high %v3718, %v3718
        %v3741 = vcombine.high %v3725, %v3725
        %v3742 = vcombine.high %v3732, %v3732
        %v3743 = vcombine.high %v3739, %v3739
        %v3744 = vcombine.high %v3392, %v3392
        %v3746 = vunpack.c.l.s4 1966171168
        %v3747 = vunpack.c.0.s8 %v3746
        %v3748 = vlaneseq
        %v3749 = vshrl.u32 %v3748, 7
        %v3750 = vsub.s32 %v3747, %v3749
        %v3751 = vrot.slane %v3392, %v3750
        %v3753 = vunpack.c.l.s4 1966171168
        %v3754 = vunpack.c.0.s8 %v3753
        %v3755 = vlaneseq
        %v3756 = vshrl.u32 %v3755, 7
        %v3757 = vsub.s32 %v3754, %v3756
        %v3758 = vrot.slane %v3744, %v3757
        %v3759 = vcombine.high %v3751, %v3751
        %v3760 = vcombine.high %v3758, %v3758
        %v3762 = vunpack.c.l.s4 1966171168
        %v3763 = vunpack.c.0.s8 %v3762
        %v3764 = vlaneseq
        %v3765 = vshrl.u32 %v3764, 7
        %v3766 = vsub.s32 %v3763, %v3765
        %v3767 = vrot.slane %v3751, %v3766
        %v3769 = vunpack.c.l.s4 1966171168
        %v3770 = vunpack.c.0.s8 %v3769
        %v3771 = vlaneseq
        %v3772 = vshrl.u32 %v3771, 7
        %v3773 = vsub.s32 %v3770, %v3772
        %v3774 = vrot.slane %v3758, %v3773
        %v3776 = vunpack.c.l.s4 1966171168
        %v3777 = vunpack.c.0.s8 %v3776
        %v3778 = vlaneseq
        %v3779 = vshrl.u32 %v3778, 7
        %v3780 = vsub.s32 %v3777, %v3779
        %v3781 = vrot.slane %v3759, %v3780
        %v3783 = vunpack.c.l.s4 1966171168
        %v3784 = vunpack.c.0.s8 %v3783
        %v3785 = vlaneseq
        %v3786 = vshrl.u32 %v3785, 7
        %v3787 = vsub.s32 %v3784, %v3786
        %v3788 = vrot.slane %v3760, %v3787
        %v3789 = vcombine.high %v3767, %v3767
        %v3790 = vcombine.high %v3774, %v3774
        %v3791 = vcombine.high %v3781, %v3781
        %v3792 = vcombine.high %v3788, %v3788
        %3857 = vst.msk [vmem:[%s235 + $0x1] sm:$0x1] %vm2020, %v3424
        %3858 = vst.msk [vmem:[%s235 + $0x5] sm:$0x1] %vm2020, %v3438
        %3859 = vst.msk [vmem:[%s235 + $0x9] sm:$0x1] %vm2020, %v3446
        %3860 = vst.msk [vmem:[%s235 + $0xd] sm:$0x1] %vm2020, %v3448
        %3861 = vst.msk [vmem:[%s235 + $0x11] sm:$0x1] %vm2020, %v3431
        %3862 = vst.msk [vmem:[%s235 + $0x15] sm:$0x1] %vm2020, %v3445
        %3863 = vst.msk [vmem:[%s235 + $0x19] sm:$0x1] %vm2020, %v3447
        %3864 = vst.msk [vmem:[%s235 + $0x1d] sm:$0x1] %vm2020, %v3449
        %3865 = vst.msk [vmem:[%s235 + $0x21] sm:$0x1] %vm2020, %v3473
        %3866 = vst.msk [vmem:[%s235 + $0x25] sm:$0x1] %vm2020, %v3487
        %3867 = vst.msk [vmem:[%s235 + $0x29] sm:$0x1] %vm2020, %v3495
        %3868 = vst.msk [vmem:[%s235 + $0x2d] sm:$0x1] %vm2020, %v3497
        %3869 = vst.msk [vmem:[%s235 + $0x31] sm:$0x1] %vm2020, %v3480
        %3870 = vst.msk [vmem:[%s235 + $0x35] sm:$0x1] %vm2020, %v3494
        %3871 = vst.msk [vmem:[%s235 + $0x39] sm:$0x1] %vm2020, %v3496
        %3872 = vst.msk [vmem:[%s235 + $0x3d] sm:$0x1] %vm2020, %v3498
        %3873 = vst.msk [vmem:[%s235 + $0x41] sm:$0x1] %vm2020, %v3522
        %3874 = vst.msk [vmem:[%s235 + $0x45] sm:$0x1] %vm2020, %v3536
        %3875 = vst.msk [vmem:[%s235 + $0x49] sm:$0x1] %vm2020, %v3544
        %3876 = vst.msk [vmem:[%s235 + $0x4d] sm:$0x1] %vm2020, %v3546
        %3877 = vst.msk [vmem:[%s235 + $0x51] sm:$0x1] %vm2020, %v3529
        %3878 = vst.msk [vmem:[%s235 + $0x55] sm:$0x1] %vm2020, %v3543
        %3879 = vst.msk [vmem:[%s235 + $0x59] sm:$0x1] %vm2020, %v3545
        %3880 = vst.msk [vmem:[%s235 + $0x5d] sm:$0x1] %vm2020, %v3547
        %3881 = vst.msk [vmem:[%s235 + $0x61] sm:$0x1] %vm2020, %v3571
        %3882 = vst.msk [vmem:[%s235 + $0x65] sm:$0x1] %vm2020, %v3585
        %3883 = vst.msk [vmem:[%s235 + $0x69] sm:$0x1] %vm2020, %v3593
        %3884 = vst.msk [vmem:[%s235 + $0x6d] sm:$0x1] %vm2020, %v3595
        %3885 = vst.msk [vmem:[%s235 + $0x71] sm:$0x1] %vm2020, %v3578
        %3886 = vst.msk [vmem:[%s235 + $0x75] sm:$0x1] %vm2020, %v3592
        %3887 = vst.msk [vmem:[%s235 + $0x79] sm:$0x1] %vm2020, %v3594
        %3888 = vst.msk [vmem:[%s235 + $0x7d] sm:$0x1] %vm2020, %v3596
        %3889 = vst.msk [vmem:[%s235 + $0x81] sm:$0x1] %vm2020, %v3620
        %3890 = vst.msk [vmem:[%s235 + $0x85] sm:$0x1] %vm2020, %v3634
        %3891 = vst.msk [vmem:[%s235 + $0x89] sm:$0x1] %vm2020, %v3642
        %3892 = vst.msk [vmem:[%s235 + $0x8d] sm:$0x1] %vm2020, %v3644
        %3893 = vst.msk [vmem:[%s235 + $0x91] sm:$0x1] %vm2020, %v3627
        %3894 = vst.msk [vmem:[%s235 + $0x95] sm:$0x1] %vm2020, %v3641
        %3895 = vst.msk [vmem:[%s235 + $0x99] sm:$0x1] %vm2020, %v3643
        %3896 = vst.msk [vmem:[%s235 + $0x9d] sm:$0x1] %vm2020, %v3645
        %3897 = vst.msk [vmem:[%s235 + $0xa1] sm:$0x1] %vm2020, %v3669
        %3898 = vst.msk [vmem:[%s235 + $0xa5] sm:$0x1] %vm2020, %v3683
        %3899 = vst.msk [vmem:[%s235 + $0xa9] sm:$0x1] %vm2020, %v3691
        %3900 = vst.msk [vmem:[%s235 + $0xad] sm:$0x1] %vm2020, %v3693
        %3901 = vst.msk [vmem:[%s235 + $0xb1] sm:$0x1] %vm2020, %v3676
        %3902 = vst.msk [vmem:[%s235 + $0xb5] sm:$0x1] %vm2020, %v3690
        %3903 = vst.msk [vmem:[%s235 + $0xb9] sm:$0x1] %vm2020, %v3692
        %3904 = vst.msk [vmem:[%s235 + $0xbd] sm:$0x1] %vm2020, %v3694
        %3905 = vst.msk [vmem:[%s235 + $0xc1] sm:$0x1] %vm2020, %v3718
        %3906 = vst.msk [vmem:[%s235 + $0xc5] sm:$0x1] %vm2020, %v3732
        %3907 = vst.msk [vmem:[%s235 + $0xc9] sm:$0x1] %vm2020, %v3740
        %3908 = vst.msk [vmem:[%s235 + $0xcd] sm:$0x1] %vm2020, %v3742
        %3909 = vst.msk [vmem:[%s235 + $0xd1] sm:$0x1] %vm2020, %v3725
        %3910 = vst.msk [vmem:[%s235 + $0xd5] sm:$0x1] %vm2020, %v3739
        %3911 = vst.msk [vmem:[%s235 + $0xd9] sm:$0x1] %vm2020, %v3741
        %3912 = vst.msk [vmem:[%s235 + $0xdd] sm:$0x1] %vm2020, %v3743
        %3913 = vst.msk [vmem:[%s235 + $0xe1] sm:$0x1] %vm2020, %v3767
        %3914 = vst.msk [vmem:[%s235 + $0xe5] sm:$0x1] %vm2020, %v3781
        %3915 = vst.msk [vmem:[%s235 + $0xe9] sm:$0x1] %vm2020, %v3789
        %3916 = vst.msk [vmem:[%s235 + $0xed] sm:$0x1] %vm2020, %v3791
        %3917 = vst.msk [vmem:[%s235 + $0xf1] sm:$0x1] %vm2020, %v3774
        %3918 = vst.msk [vmem:[%s235 + $0xf5] sm:$0x1] %vm2020, %v3788
        %3919 = vst.msk [vmem:[%s235 + $0xf9] sm:$0x1] %vm2020, %v3790
        %3920 = vst.msk [vmem:[%s235 + $0xfd] sm:$0x1] %vm2020, %v3792
        %v3921 = vld [vmem:[%s205 + $0x10] sm:$0xff]
        %v3922 = vld [vmem:[%s205 + $0x30] sm:$0xff]
        %v3923 = vld [vmem:[%s205 + $0x50] sm:$0xff]
        %v3924 = vld [vmem:[%s205 + $0x70] sm:$0xff]
        %3925 = vxpose.xlu0.b32.start [1/16] %v3921, 128
        %3926 = vxpose.xlu0.b32.cont [2/16] %v3922, 128
        %3927 = vxpose.xlu0.b32.cont [3/16] %v3923, 128
        %3928 = vxpose.xlu0.b32.cont [4/16] %v3924, 128
        %3929 = vxpose.xlu0.b32.cont [5/16] 0.0, 128
        %3930 = vxpose.xlu0.b32.cont [6/16] 0.0, 128
        %3931 = vxpose.xlu0.b32.cont [7/16] 0.0, 128
        %3932 = vxpose.xlu0.b32.cont [8/16] 0.0, 128
        %3933 = vxpose.xlu0.b32.cont [9/16] 0.0, 128
        %3934 = vxpose.xlu0.b32.cont [10/16] 0.0, 128
        %3935 = vxpose.xlu0.b32.cont [11/16] 0.0, 128
        %3936 = vxpose.xlu0.b32.cont [12/16] 0.0, 128
        %3937 = vxpose.xlu0.b32.cont [13/16] 0.0, 128
        %3938 = vxpose.xlu0.b32.cont [14/16] 0.0, 128
        %3939 = vxpose.xlu0.b32.cont [15/16] 0.0, 128
        %3940 = vxpose.xlu0.b32.end [16/16] 0.0, 128
        %v3941 = vpop.trf.xlu0
        %v3942 = vpop.trf.xlu0
        %v3943 = vpop.trf.xlu0
        %v3944 = vpop.trf.xlu0
        %v3945 = vpop.trf.xlu0
        %v3946 = vpop.trf.xlu0
        %v3947 = vpop.trf.xlu0
        %v3948 = vpop.trf.xlu0
        %v3949 = vpop.trf.xlu0
        %v3950 = vpop.trf.xlu0
        %v3951 = vpop.trf.xlu0
        %v3952 = vpop.trf.xlu0
        %v3953 = vpop.trf.xlu0
        %v3954 = vpop.trf.xlu0
        %v3955 = vpop.trf.xlu0
        %v3956 = vpop.trf.xlu0
        %v3957 = vld [vmem:[#allocation5] sm:$0xff]
        %v3958 = vld [vmem:[#allocation5 + $0x8] sm:$0xff]
        %v3959 = vld [vmem:[#allocation5 + $0x10] sm:$0xff]
        %v3960 = vld [vmem:[#allocation5 + $0x18] sm:$0xff]
        %v3961 = vld [vmem:[#allocation5 + $0x20] sm:$0xff]
        %v3962 = vld [vmem:[#allocation5 + $0x28] sm:$0xff]
        %v3963 = vld [vmem:[#allocation5 + $0x30] sm:$0xff]
        %v3964 = vld [vmem:[#allocation5 + $0x38] sm:$0xff]
        %v3965 = vld [vmem:[%s281] sm:$0xff]
        %v3966 = vld [vmem:[%s281 + $0x8] sm:$0xff]
        %v3967 = vld [vmem:[%s281 + $0x10] sm:$0xff]
        %v3968 = vld [vmem:[%s281 + $0x18] sm:$0xff]
        %v3969 = vld [vmem:[%s281 + $0x20] sm:$0xff]
        %v3970 = vld [vmem:[%s281 + $0x28] sm:$0xff]
        %v3971 = vld [vmem:[%s281 + $0x30] sm:$0xff]
        %v3972 = vld [vmem:[%s281 + $0x38] sm:$0xff]
        %v3977 = vrot.slane %v3941, 1
        %v3978 = vsel %vm295, %v3942, %v3977
        %v3979 = vrot.slane %v3943, 7
        %v3980 = vsel %vm298, %v3979, %v3978
        %v3981 = vrot.slane %v3944, 6
        %v3982 = vsel %vm301, %v3981, %v3980
        %v3984 = vsel %vm303, %v3965, 0
        %v3987 = vsel %vm303, %v3966, 0
        %v3990 = vsel %vm303, %v3967, 0
        %v3993 = vsel %vm303, %v3968, 0
        %v3996 = vsel %vm303, %v3969, 0
        %v3999 = vsel %vm303, %v3970, 0
        %v4002 = vsel %vm303, %v3971, 0
        %v4005 = vsel %vm303, %v3972, 0
        %v4007 = vsel %vm303, %v3982, 0
        %4009 = vmatprep.subr.mxu0 0.0
        %4010 = vmatpush1.xpose.msra.mxu0 %v4007
        %4011 = vmatprep.subr.mxu0 0.0
        %4012 = vmatpush1.xpose.msra.mxu0 0.0
        %4013 = vmatprep.subr.mxu0 0.0
        %4014 = vmatpush1.xpose.msra.mxu0 0.0
        %4015 = vmatprep.subr.mxu0 0.0
        %4016 = vmatpush1.xpose.msra.mxu0 0.0
        %4017 = vmatprep.subr.mxu0 0.0
        %4018 = vmatpush1.xpose.msra.mxu0 0.0
        %4019 = vmatprep.subr.mxu0 0.0
        %4020 = vmatpush1.xpose.msra.mxu0 0.0
        %4021 = vmatprep.subr.mxu0 0.0
        %4022 = vmatpush1.xpose.msra.mxu0 0.0
        %4023 = vmatprep.subr.mxu0 0.0
        %4024 = vmatpush1.xpose.msra.mxu0 0.0
        %4025 = vmatprep.subr.mxu0 0.0
        %4026 = vmatpush1.xpose.msra.mxu0 0.0
        %4027 = vmatprep.subr.mxu0 0.0
        %4028 = vmatpush1.xpose.msra.mxu0 0.0
        %4029 = vmatprep.subr.mxu0 0.0
        %4030 = vmatpush1.xpose.msra.mxu0 0.0
        %4031 = vmatprep.subr.mxu0 0.0
        %4032 = vmatpush1.xpose.msra.mxu0 0.0
        %4033 = vmatprep.subr.mxu0 0.0
        %4034 = vmatpush1.xpose.msra.mxu0 0.0
        %4035 = vmatprep.subr.mxu0 0.0
        %4036 = vmatpush1.xpose.msra.mxu0 0.0
        %4037 = vmatprep.subr.mxu0 0.0
        %4038 = vmatpush1.xpose.msra.mxu0 0.0
        %4039 = vmatprep.subr.mxu0 0.0
        %4040 = vmatpush1.xpose.msra.mxu0 0.0
        %4041 = vmatprep.subr.mxu0 0.0
        %4042 = vmatpush1.xpose.msra.mxu0 0.0
        %4043 = vmatprep.subr.mxu0 0.0
        %4044 = vmatpush1.xpose.msra.mxu0 0.0
        %4045 = vmatprep.subr.mxu0 0.0
        %4046 = vmatpush1.xpose.msra.mxu0 0.0
        %4047 = vmatprep.subr.mxu0 0.0
        %4048 = vmatpush1.xpose.msra.mxu0 0.0
        %4049 = vmatprep.subr.mxu0 0.0
        %4050 = vmatpush1.xpose.msra.mxu0 0.0
        %4051 = vmatprep.subr.mxu0 0.0
        %4052 = vmatpush1.xpose.msra.mxu0 0.0
        %4053 = vmatprep.subr.mxu0 0.0
        %4054 = vmatpush1.xpose.msra.mxu0 0.0
        %4055 = vmatprep.subr.mxu0 0.0
        %4056 = vmatpush1.xpose.msra.mxu0 0.0
        %4057 = vmatprep.subr.mxu0 0.0
        %4058 = vmatpush1.xpose.msra.mxu0 0.0
        %4059 = vmatprep.subr.mxu0 0.0
        %4060 = vmatpush1.xpose.msra.mxu0 0.0
        %4061 = vmatprep.subr.mxu0 0.0
        %4062 = vmatpush1.xpose.msra.mxu0 0.0
        %4063 = vmatprep.subr.mxu0 0.0
        %4064 = vmatpush1.xpose.msra.mxu0 0.0
        %4065 = vmatprep.subr.mxu0 0.0
        %4066 = vmatpush1.xpose.msra.mxu0 0.0
        %4067 = vmatprep.subr.mxu0 0.0
        %4068 = vmatpush1.xpose.msra.mxu0 0.0
        %4069 = vmatprep.subr.mxu0 0.0
        %4070 = vmatpush1.xpose.msra.mxu0 0.0
        %4071 = vmatprep.subr.mxu0 0.0
        %4072 = vmatpush1.xpose.msra.mxu0 0.0
        %4073 = vmatprep.mubr.f32.mxu0 0.0
        %4074 = vmatmul.mubr.f32.gmra.mrb[0].mxu0 %v3984
        %v4075 = vpop.f32.mrb[0].mxu0
        %v4076 = vadd.f32 0.0, %v4075
        %v4077 = vpop.f32.mrb[0].mxu0
        %4078 = vmatprep.mubr.f32.mxu0 0.0
        %4079 = vmatmul.mubr.f32.gmra.mrb[0].mxu0 %v3987
        %v4080 = vpop.f32.mrb[0].mxu0
        %v4081 = vadd.f32 0.0, %v4080
        %v4082 = vpop.f32.mrb[0].mxu0
        %4083 = vmatprep.mubr.f32.mxu0 0.0
        %4084 = vmatmul.mubr.f32.gmra.mrb[0].mxu0 %v3990
        %v4085 = vpop.f32.mrb[0].mxu0
        %v4086 = vadd.f32 0.0, %v4085
        %v4087 = vpop.f32.mrb[0].mxu0
        %4088 = vmatprep.mubr.f32.mxu0 0.0
        %4089 = vmatmul.mubr.f32.gmra.mrb[0].mxu0 %v3993
        %v4090 = vpop.f32.mrb[0].mxu0
        %v4091 = vadd.f32 0.0, %v4090
        %v4092 = vpop.f32.mrb[0].mxu0
        %4093 = vmatprep.mubr.f32.mxu0 0.0
        %4094 = vmatmul.mubr.f32.gmra.mrb[0].mxu0 %v3996
        %v4095 = vpop.f32.mrb[0].mxu0
        %v4096 = vadd.f32 0.0, %v4095
        %v4097 = vpop.f32.mrb[0].mxu0
        %4098 = vmatprep.mubr.f32.mxu0 0.0
        %4099 = vmatmul.mubr.f32.gmra.mrb[0].mxu0 %v3999
        %v4100 = vpop.f32.mrb[0].mxu0
        %v4101 = vadd.f32 0.0, %v4100
        %v4102 = vpop.f32.mrb[0].mxu0
        %4103 = vmatprep.mubr.f32.mxu0 0.0
        %4104 = vmatmul.mubr.f32.gmra.mrb[0].mxu0 %v4002
        %v4105 = vpop.f32.mrb[0].mxu0
        %v4106 = vadd.f32 0.0, %v4105
        %v4107 = vpop.f32.mrb[0].mxu0
        %4108 = vmatprep.mubr.f32.mxu0 0.0
        %4109 = vmatmul.mubr.f32.gmra.mrb[0].mxu0 %v4005
        %v4110 = vpop.f32.mrb[0].mxu0
        %v4111 = vadd.f32 0.0, %v4110
        %v4112 = vpop.f32.mrb[0].mxu0
        %4113 = vdwg.mxu0
        %v4114 = vrot.slane %v3942, 7
        %v4115 = vsel %vm295, %v4114, %v3941
        %v4116 = vrot.slane %v3943, 6
        %v4117 = vsel %vm298, %v4116, %v4115
        %v4118 = vrot.slane %v3944, 5
        %v4119 = vsel %vm301, %v4118, %v4117
        %v4121 = vsel %vm303, %v3957, 0
        %v4124 = vsel %vm303, %v3958, 0
        %v4127 = vsel %vm303, %v3959, 0
        %v4130 = vsel %vm303, %v3960, 0
        %v4133 = vsel %vm303, %v3961, 0
        %v4136 = vsel %vm303, %v3962, 0
        %v4139 = vsel %vm303, %v3963, 0
        %v4142 = vsel %vm303, %v3964, 0
        %v4144 = vsel %vm303, %v4119, 0
        %4146 = vmatprep.subr.mxu0 0.0
        %4147 = vmatpush1.xpose.msra.mxu0 %v4144
        %4148 = vmatprep.subr.mxu0 0.0
        %4149 = vmatpush1.xpose.msra.mxu0 0.0
        %4150 = vmatprep.subr.mxu0 0.0
        %4151 = vmatpush1.xpose.msra.mxu0 0.0
        %4152 = vmatprep.subr.mxu0 0.0
        %4153 = vmatpush1.xpose.msra.mxu0 0.0
        %4154 = vmatprep.subr.mxu0 0.0
        %4155 = vmatpush1.xpose.msra.mxu0 0.0
        %4156 = vmatprep.subr.mxu0 0.0
        %4157 = vmatpush1.xpose.msra.mxu0 0.0
        %4158 = vmatprep.subr.mxu0 0.0
        %4159 = vmatpush1.xpose.msra.mxu0 0.0
        %4160 = vmatprep.subr.mxu0 0.0
        %4161 = vmatpush1.xpose.msra.mxu0 0.0
        %4162 = vmatprep.subr.mxu0 0.0
        %4163 = vmatpush1.xpose.msra.mxu0 0.0
        %4164 = vmatprep.subr.mxu0 0.0
        %4165 = vmatpush1.xpose.msra.mxu0 0.0
        %4166 = vmatprep.subr.mxu0 0.0
        %4167 = vmatpush1.xpose.msra.mxu0 0.0
        %4168 = vmatprep.subr.mxu0 0.0
        %4169 = vmatpush1.xpose.msra.mxu0 0.0
        %4170 = vmatprep.subr.mxu0 0.0
        %4171 = vmatpush1.xpose.msra.mxu0 0.0
        %4172 = vmatprep.subr.mxu0 0.0
        %4173 = vmatpush1.xpose.msra.mxu0 0.0
        %4174 = vmatprep.subr.mxu0 0.0
        %4175 = vmatpush1.xpose.msra.mxu0 0.0
        %4176 = vmatprep.subr.mxu0 0.0
        %4177 = vmatpush1.xpose.msra.mxu0 0.0
        %4178 = vmatprep.subr.mxu0 0.0
        %4179 = vmatpush1.xpose.msra.mxu0 0.0
        %4180 = vmatprep.subr.mxu0 0.0
        %4181 = vmatpush1.xpose.msra.mxu0 0.0
        %4182 = vmatprep.subr.mxu0 0.0
        %4183 = vmatpush1.xpose.msra.mxu0 0.0
        %4184 = vmatprep.subr.mxu0 0.0
        %4185 = vmatpush1.xpose.msra.mxu0 0.0
        %4186 = vmatprep.subr.mxu0 0.0
        %4187 = vmatpush1.xpose.msra.mxu0 0.0
        %4188 = vmatprep.subr.mxu0 0.0
        %4189 = vmatpush1.xpose.msra.mxu0 0.0
        %4190 = vmatprep.subr.mxu0 0.0
        %4191 = vmatpush1.xpose.msra.mxu0 0.0
        %4192 = vmatprep.subr.mxu0 0.0
        %4193 = vmatpush1.xpose.msra.mxu0 0.0
        %4194 = vmatprep.subr.mxu0 0.0
        %4195 = vmatpush1.xpose.msra.mxu0 0.0
        %4196 = vmatprep.subr.mxu0 0.0
        %4197 = vmatpush1.xpose.msra.mxu0 0.0
        %4198 = vmatprep.subr.mxu0 0.0
        %4199 = vmatpush1.xpose.msra.mxu0 0.0
        %4200 = vmatprep.subr.mxu0 0.0
        %4201 = vmatpush1.xpose.msra.mxu0 0.0
        %4202 = vmatprep.subr.mxu0 0.0
        %4203 = vmatpush1.xpose.msra.mxu0 0.0
        %4204 = vmatprep.subr.mxu0 0.0
        %4205 = vmatpush1.xpose.msra.mxu0 0.0
        %4206 = vmatprep.subr.mxu0 0.0
        %4207 = vmatpush1.xpose.msra.mxu0 0.0
        %4208 = vmatprep.subr.mxu0 0.0
        %4209 = vmatpush1.xpose.msra.mxu0 0.0
        %4210 = vmatprep.mubr.f32.mxu0 0.0
        %4211 = vmatmul.mubr.f32.gmra.mrb[0].mxu0 %v4121
        %v4212 = vpop.f32.mrb[0].mxu0
        %v4213 = vadd.f32 %v4076, %v4212
        %v4214 = vpop.f32.mrb[0].mxu0
        %4215 = vmatprep.mubr.f32.mxu0 0.0
        %4216 = vmatmul.mubr.f32.gmra.mrb[0].mxu0 %v4124
        %v4217 = vpop.f32.mrb[0].mxu0
        %v4218 = vadd.f32 %v4081, %v4217
        %v4219 = vpop.f32.mrb[0].mxu0
        %4220 = vmatprep.mubr.f32.mxu0 0.0
        %4221 = vmatmul.mubr.f32.gmra.mrb[0].mxu0 %v4127
        %v4222 = vpop.f32.mrb[0].mxu0
        %v4223 = vadd.f32 %v4086, %v4222
        %v4224 = vpop.f32.mrb[0].mxu0
        %4225 = vmatprep.mubr.f32.mxu0 0.0
        %4226 = vmatmul.mubr.f32.gmra.mrb[0].mxu0 %v4130
        %v4227 = vpop.f32.mrb[0].mxu0
        %v4228 = vadd.f32 %v4091, %v4227
        %v4229 = vpop.f32.mrb[0].mxu0
        %4230 = vmatprep.mubr.f32.mxu0 0.0
        %4231 = vmatmul.mubr.f32.gmra.mrb[0].mxu0 %v4133
        %v4232 = vpop.f32.mrb[0].mxu0
        %v4233 = vadd.f32 %v4096, %v4232
        %v4234 = vpop.f32.mrb[0].mxu0
        %4235 = vmatprep.mubr.f32.mxu0 0.0
        %4236 = vmatmul.mubr.f32.gmra.mrb[0].mxu0 %v4136
        %v4237 = vpop.f32.mrb[0].mxu0
        %v4238 = vadd.f32 %v4101, %v4237
        %v4239 = vpop.f32.mrb[0].mxu0
        %4240 = vmatprep.mubr.f32.mxu0 0.0
        %4241 = vmatmul.mubr.f32.gmra.mrb[0].mxu0 %v4139
        %v4242 = vpop.f32.mrb[0].mxu0
        %v4243 = vadd.f32 %v4106, %v4242
        %v4244 = vpop.f32.mrb[0].mxu0
        %4245 = vmatprep.mubr.f32.mxu0 0.0
        %4246 = vmatmul.mubr.f32.gmra.mrb[0].mxu0 %v4142
        %v4247 = vpop.f32.mrb[0].mxu0
        %v4248 = vadd.f32 %v4111, %v4247
        %v4249 = vpop.f32.mrb[0].mxu0
        %4250 = vdwg.mxu0
        %v4251 = vld [vmem:[%s572] sm:$0xff]
        %v4252 = vld [vmem:[%s572 + $0x8] sm:$0xff]
        %v4253 = vld [vmem:[%s572 + $0x10] sm:$0xff]
        %v4254 = vld [vmem:[%s572 + $0x18] sm:$0xff]
        %v4255 = vld [vmem:[%s572 + $0x20] sm:$0xff]
        %v4256 = vld [vmem:[%s572 + $0x28] sm:$0xff]
        %v4257 = vld [vmem:[%s572 + $0x30] sm:$0xff]
        %v4258 = vld [vmem:[%s572 + $0x38] sm:$0xff]
        %v4259 = vrot.slane %v3941, 2
        %v4260 = vrot.slane %v3942, 1
        %v4261 = vsel %vm295, %v4260, %v4259
        %v4262 = vsel %vm298, %v3943, %v4261
        %v4263 = vrot.slane %v3944, 7
        %v4264 = vsel %vm301, %v4263, %v4262
        %v4266 = vsel %vm303, %v4251, 0
        %v4269 = vsel %vm303, %v4252, 0
        %v4272 = vsel %vm303, %v4253, 0
        %v4275 = vsel %vm303, %v4254, 0
        %v4278 = vsel %vm303, %v4255, 0
        %v4281 = vsel %vm303, %v4256, 0
        %v4284 = vsel %vm303, %v4257, 0
        %v4287 = vsel %vm303, %v4258, 0
        %v4289 = vsel %vm303, %v4264, 0
        %4291 = vmatprep.subr.mxu0 0.0
        %4292 = vmatpush1.xpose.msra.mxu0 %v4289
        %4293 = vmatprep.subr.mxu0 0.0
        %4294 = vmatpush1.xpose.msra.mxu0 0.0
        %4295 = vmatprep.subr.mxu0 0.0
        %4296 = vmatpush1.xpose.msra.mxu0 0.0
        %4297 = vmatprep.subr.mxu0 0.0
        %4298 = vmatpush1.xpose.msra.mxu0 0.0
        %4299 = vmatprep.subr.mxu0 0.0
        %4300 = vmatpush1.xpose.msra.mxu0 0.0
        %4301 = vmatprep.subr.mxu0 0.0
        %4302 = vmatpush1.xpose.msra.mxu0 0.0
        %4303 = vmatprep.subr.mxu0 0.0
        %4304 = vmatpush1.xpose.msra.mxu0 0.0
        %4305 = vmatprep.subr.mxu0 0.0
        %4306 = vmatpush1.xpose.msra.mxu0 0.0
        %4307 = vmatprep.subr.mxu0 0.0
        %4308 = vmatpush1.xpose.msra.mxu0 0.0
        %4309 = vmatprep.subr.mxu0 0.0
        %4310 = vmatpush1.xpose.msra.mxu0 0.0
        %4311 = vmatprep.subr.mxu0 0.0
        %4312 = vmatpush1.xpose.msra.mxu0 0.0
        %4313 = vmatprep.subr.mxu0 0.0
        %4314 = vmatpush1.xpose.msra.mxu0 0.0
        %4315 = vmatprep.subr.mxu0 0.0
        %4316 = vmatpush1.xpose.msra.mxu0 0.0
        %4317 = vmatprep.subr.mxu0 0.0
        %4318 = vmatpush1.xpose.msra.mxu0 0.0
        %4319 = vmatprep.subr.mxu0 0.0
        %4320 = vmatpush1.xpose.msra.mxu0 0.0
        %4321 = vmatprep.subr.mxu0 0.0
        %4322 = vmatpush1.xpose.msra.mxu0 0.0
        %4323 = vmatprep.subr.mxu0 0.0
        %4324 = vmatpush1.xpose.msra.mxu0 0.0
        %4325 = vmatprep.subr.mxu0 0.0
        %4326 = vmatpush1.xpose.msra.mxu0 0.0
        %4327 = vmatprep.subr.mxu0 0.0
        %4328 = vmatpush1.xpose.msra.mxu0 0.0
        %4329 = vmatprep.subr.mxu0 0.0
        %4330 = vmatpush1.xpose.msra.mxu0 0.0
        %4331 = vmatprep.subr.mxu0 0.0
        %4332 = vmatpush1.xpose.msra.mxu0 0.0
        %4333 = vmatprep.subr.mxu0 0.0
        %4334 = vmatpush1.xpose.msra.mxu0 0.0
        %4335 = vmatprep.subr.mxu0 0.0
        %4336 = vmatpush1.xpose.msra.mxu0 0.0
        %4337 = vmatprep.subr.mxu0 0.0
        %4338 = vmatpush1.xpose.msra.mxu0 0.0
        %4339 = vmatprep.subr.mxu0 0.0
        %4340 = vmatpush1.xpose.msra.mxu0 0.0
        %4341 = vmatprep.subr.mxu0 0.0
        %4342 = vmatpush1.xpose.msra.mxu0 0.0
        %4343 = vmatprep.subr.mxu0 0.0
        %4344 = vmatpush1.xpose.msra.mxu0 0.0
        %4345 = vmatprep.subr.mxu0 0.0
        %4346 = vmatpush1.xpose.msra.mxu0 0.0
        %4347 = vmatprep.subr.mxu0 0.0
        %4348 = vmatpush1.xpose.msra.mxu0 0.0
        %4349 = vmatprep.subr.mxu0 0.0
        %4350 = vmatpush1.xpose.msra.mxu0 0.0
        %4351 = vmatprep.subr.mxu0 0.0
        %4352 = vmatpush1.xpose.msra.mxu0 0.0
        %4353 = vmatprep.subr.mxu0 0.0
        %4354 = vmatpush1.xpose.msra.mxu0 0.0
        %4355 = vmatprep.mubr.f32.mxu0 0.0
        %4356 = vmatmul.mubr.f32.gmra.mrb[0].mxu0 %v4266
        %v4357 = vpop.f32.mrb[0].mxu0
        %v4358 = vadd.f32 0.0, %v4357
        %v4359 = vpop.f32.mrb[0].mxu0
        %4360 = vmatprep.mubr.f32.mxu0 0.0
        %4361 = vmatmul.mubr.f32.gmra.mrb[0].mxu0 %v4269
        %v4362 = vpop.f32.mrb[0].mxu0
        %v4363 = vadd.f32 0.0, %v4362
        %v4364 = vpop.f32.mrb[0].mxu0
        %4365 = vmatprep.mubr.f32.mxu0 0.0
        %4366 = vmatmul.mubr.f32.gmra.mrb[0].mxu0 %v4272
        %v4367 = vpop.f32.mrb[0].mxu0
        %v4368 = vadd.f32 0.0, %v4367
        %v4369 = vpop.f32.mrb[0].mxu0
        %4370 = vmatprep.mubr.f32.mxu0 0.0
        %4371 = vmatmul.mubr.f32.gmra.mrb[0].mxu0 %v4275
        %v4372 = vpop.f32.mrb[0].mxu0
        %v4373 = vadd.f32 0.0, %v4372
        %v4374 = vpop.f32.mrb[0].mxu0
        %4375 = vmatprep.mubr.f32.mxu0 0.0
        %4376 = vmatmul.mubr.f32.gmra.mrb[0].mxu0 %v4278
        %v4377 = vpop.f32.mrb[0].mxu0
        %v4378 = vadd.f32 0.0, %v4377
        %v4379 = vpop.f32.mrb[0].mxu0
        %4380 = vmatprep.mubr.f32.mxu0 0.0
        %4381 = vmatmul.mubr.f32.gmra.mrb[0].mxu0 %v4281
        %v4382 = vpop.f32.mrb[0].mxu0
        %v4383 = vadd.f32 0.0, %v4382
        %v4384 = vpop.f32.mrb[0].mxu0
        %4385 = vmatprep.mubr.f32.mxu0 0.0
        %4386 = vmatmul.mubr.f32.gmra.mrb[0].mxu0 %v4284
        %v4387 = vpop.f32.mrb[0].mxu0
        %v4388 = vadd.f32 0.0, %v4387
        %v4389 = vpop.f32.mrb[0].mxu0
        %4390 = vmatprep.mubr.f32.mxu0 0.0
        %4391 = vmatmul.mubr.f32.gmra.mrb[0].mxu0 %v4287
        %v4392 = vpop.f32.mrb[0].mxu0
        %v4393 = vadd.f32 0.0, %v4392
        %v4394 = vpop.f32.mrb[0].mxu0
        %4395 = vdwg.mxu0
        %v4396 = vadd.f32 %v4213, %v4358
        %v4397 = vadd.f32 %v4218, %v4363
        %v4398 = vadd.f32 %v4223, %v4368
        %v4399 = vadd.f32 %v4228, %v4373
        %v4400 = vadd.f32 %v4233, %v4378
        %v4401 = vadd.f32 %v4238, %v4383
        %v4402 = vadd.f32 %v4243, %v4388
        %v4403 = vadd.f32 %v4248, %v4393
        %v4404 = vld [vmem:[%s726] sm:$0xff]
        %v4405 = vld [vmem:[%s726 + $0x8] sm:$0xff]
        %v4406 = vld [vmem:[%s726 + $0x10] sm:$0xff]
        %v4407 = vld [vmem:[%s726 + $0x18] sm:$0xff]
        %v4408 = vld [vmem:[%s726 + $0x20] sm:$0xff]
        %v4409 = vld [vmem:[%s726 + $0x28] sm:$0xff]
        %v4410 = vld [vmem:[%s726 + $0x30] sm:$0xff]
        %v4411 = vld [vmem:[%s726 + $0x38] sm:$0xff]
        %v4412 = vrot.slane %v3941, 3
        %v4413 = vrot.slane %v3942, 2
        %v4414 = vsel %vm295, %v4413, %v4412
        %v4415 = vrot.slane %v3943, 1
        %v4416 = vsel %vm298, %v4415, %v4414
        %v4417 = vsel %vm301, %v3944, %v4416
        %v4419 = vsel %vm303, %v4404, 0
        %v4422 = vsel %vm303, %v4405, 0
        %v4425 = vsel %vm303, %v4406, 0
        %v4428 = vsel %vm303, %v4407, 0
        %v4431 = vsel %vm303, %v4408, 0
        %v4434 = vsel %vm303, %v4409, 0
        %v4437 = vsel %vm303, %v4410, 0
        %v4440 = vsel %vm303, %v4411, 0
        %v4442 = vsel %vm303, %v4417, 0
        %4444 = vmatprep.subr.mxu0 0.0
        %4445 = vmatpush1.xpose.msra.mxu0 %v4442
        %4446 = vmatprep.subr.mxu0 0.0
        %4447 = vmatpush1.xpose.msra.mxu0 0.0
        %4448 = vmatprep.subr.mxu0 0.0
        %4449 = vmatpush1.xpose.msra.mxu0 0.0
        %4450 = vmatprep.subr.mxu0 0.0
        %4451 = vmatpush1.xpose.msra.mxu0 0.0
        %4452 = vmatprep.subr.mxu0 0.0
        %4453 = vmatpush1.xpose.msra.mxu0 0.0
        %4454 = vmatprep.subr.mxu0 0.0
        %4455 = vmatpush1.xpose.msra.mxu0 0.0
        %4456 = vmatprep.subr.mxu0 0.0
        %4457 = vmatpush1.xpose.msra.mxu0 0.0
        %4458 = vmatprep.subr.mxu0 0.0
        %4459 = vmatpush1.xpose.msra.mxu0 0.0
        %4460 = vmatprep.subr.mxu0 0.0
        %4461 = vmatpush1.xpose.msra.mxu0 0.0
        %4462 = vmatprep.subr.mxu0 0.0
        %4463 = vmatpush1.xpose.msra.mxu0 0.0
        %4464 = vmatprep.subr.mxu0 0.0
        %4465 = vmatpush1.xpose.msra.mxu0 0.0
        %4466 = vmatprep.subr.mxu0 0.0
        %4467 = vmatpush1.xpose.msra.mxu0 0.0
        %4468 = vmatprep.subr.mxu0 0.0
        %4469 = vmatpush1.xpose.msra.mxu0 0.0
        %4470 = vmatprep.subr.mxu0 0.0
        %4471 = vmatpush1.xpose.msra.mxu0 0.0
        %4472 = vmatprep.subr.mxu0 0.0
        %4473 = vmatpush1.xpose.msra.mxu0 0.0
        %4474 = vmatprep.subr.mxu0 0.0
        %4475 = vmatpush1.xpose.msra.mxu0 0.0
        %4476 = vmatprep.subr.mxu0 0.0
        %4477 = vmatpush1.xpose.msra.mxu0 0.0
        %4478 = vmatprep.subr.mxu0 0.0
        %4479 = vmatpush1.xpose.msra.mxu0 0.0
        %4480 = vmatprep.subr.mxu0 0.0
        %4481 = vmatpush1.xpose.msra.mxu0 0.0
        %4482 = vmatprep.subr.mxu0 0.0
        %4483 = vmatpush1.xpose.msra.mxu0 0.0
        %4484 = vmatprep.subr.mxu0 0.0
        %4485 = vmatpush1.xpose.msra.mxu0 0.0
        %4486 = vmatprep.subr.mxu0 0.0
        %4487 = vmatpush1.xpose.msra.mxu0 0.0
        %4488 = vmatprep.subr.mxu0 0.0
        %4489 = vmatpush1.xpose.msra.mxu0 0.0
        %4490 = vmatprep.subr.mxu0 0.0
        %4491 = vmatpush1.xpose.msra.mxu0 0.0
        %4492 = vmatprep.subr.mxu0 0.0
        %4493 = vmatpush1.xpose.msra.mxu0 0.0
        %4494 = vmatprep.subr.mxu0 0.0
        %4495 = vmatpush1.xpose.msra.mxu0 0.0
        %4496 = vmatprep.subr.mxu0 0.0
        %4497 = vmatpush1.xpose.msra.mxu0 0.0
        %4498 = vmatprep.subr.mxu0 0.0
        %4499 = vmatpush1.xpose.msra.mxu0 0.0
        %4500 = vmatprep.subr.mxu0 0.0
        %4501 = vmatpush1.xpose.msra.mxu0 0.0
        %4502 = vmatprep.subr.mxu0 0.0
        %4503 = vmatpush1.xpose.msra.mxu0 0.0
        %4504 = vmatprep.subr.mxu0 0.0
        %4505 = vmatpush1.xpose.msra.mxu0 0.0
        %4506 = vmatprep.subr.mxu0 0.0
        %4507 = vmatpush1.xpose.msra.mxu0 0.0
        %4508 = vmatprep.mubr.f32.mxu0 0.0
        %4509 = vmatmul.mubr.f32.gmra.mrb[0].mxu0 %v4419
        %v4510 = vpop.f32.mrb[0].mxu0
        %v4511 = vadd.f32 0.0, %v4510
        %v4512 = vpop.f32.mrb[0].mxu0
        %4513 = vmatprep.mubr.f32.mxu0 0.0
        %4514 = vmatmul.mubr.f32.gmra.mrb[0].mxu0 %v4422
        %v4515 = vpop.f32.mrb[0].mxu0
        %v4516 = vadd.f32 0.0, %v4515
        %v4517 = vpop.f32.mrb[0].mxu0
        %4518 = vmatprep.mubr.f32.mxu0 0.0
        %4519 = vmatmul.mubr.f32.gmra.mrb[0].mxu0 %v4425
        %v4520 = vpop.f32.mrb[0].mxu0
        %v4521 = vadd.f32 0.0, %v4520
        %v4522 = vpop.f32.mrb[0].mxu0
        %4523 = vmatprep.mubr.f32.mxu0 0.0
        %4524 = vmatmul.mubr.f32.gmra.mrb[0].mxu0 %v4428
        %v4525 = vpop.f32.mrb[0].mxu0
        %v4526 = vadd.f32 0.0, %v4525
        %v4527 = vpop.f32.mrb[0].mxu0
        %4528 = vmatprep.mubr.f32.mxu0 0.0
        %4529 = vmatmul.mubr.f32.gmra.mrb[0].mxu0 %v4431
        %v4530 = vpop.f32.mrb[0].mxu0
        %v4531 = vadd.f32 0.0, %v4530
        %v4532 = vpop.f32.mrb[0].mxu0
        %4533 = vmatprep.mubr.f32.mxu0 0.0
        %4534 = vmatmul.mubr.f32.gmra.mrb[0].mxu0 %v4434
        %v4535 = vpop.f32.mrb[0].mxu0
        %v4536 = vadd.f32 0.0, %v4535
        %v4537 = vpop.f32.mrb[0].mxu0
        %4538 = vmatprep.mubr.f32.mxu0 0.0
        %4539 = vmatmul.mubr.f32.gmra.mrb[0].mxu0 %v4437
        %v4540 = vpop.f32.mrb[0].mxu0
        %v4541 = vadd.f32 0.0, %v4540
        %v4542 = vpop.f32.mrb[0].mxu0
        %4543 = vmatprep.mubr.f32.mxu0 0.0
        %4544 = vmatmul.mubr.f32.gmra.mrb[0].mxu0 %v4440
        %v4545 = vpop.f32.mrb[0].mxu0
        %v4546 = vadd.f32 0.0, %v4545
        %v4547 = vpop.f32.mrb[0].mxu0
        %4548 = vdwg.mxu0
        %v4549 = vadd.f32 %v4396, %v4511
        %v4550 = vadd.f32 %v4397, %v4516
        %v4551 = vadd.f32 %v4398, %v4521
        %v4552 = vadd.f32 %v4399, %v4526
        %v4553 = vadd.f32 %v4400, %v4531
        %v4554 = vadd.f32 %v4401, %v4536
        %v4555 = vadd.f32 %v4402, %v4541
        %v4556 = vadd.f32 %v4403, %v4546
        %v4557 = vld [vmem:[%s880] sm:$0xff]
        %v4558 = vld [vmem:[%s880 + $0x8] sm:$0xff]
        %v4559 = vld [vmem:[%s880 + $0x10] sm:$0xff]
        %v4560 = vld [vmem:[%s880 + $0x18] sm:$0xff]
        %v4561 = vld [vmem:[%s880 + $0x20] sm:$0xff]
        %v4562 = vld [vmem:[%s880 + $0x28] sm:$0xff]
        %v4563 = vld [vmem:[%s880 + $0x30] sm:$0xff]
        %v4564 = vld [vmem:[%s880 + $0x38] sm:$0xff]
        %v4565 = vrot.slane %v3941, 4
        %v4566 = vrot.slane %v3942, 3
        %v4567 = vsel %vm295, %v4566, %v4565
        %v4568 = vrot.slane %v3943, 2
        %v4569 = vsel %vm298, %v4568, %v4567
        %v4570 = vrot.slane %v3944, 1
        %v4571 = vsel %vm301, %v4570, %v4569
        %v4573 = vsel %vm303, %v4557, 0
        %v4576 = vsel %vm303, %v4558, 0
        %v4579 = vsel %vm303, %v4559, 0
        %v4582 = vsel %vm303, %v4560, 0
        %v4585 = vsel %vm303, %v4561, 0
        %v4588 = vsel %vm303, %v4562, 0
        %v4591 = vsel %vm303, %v4563, 0
        %v4594 = vsel %vm303, %v4564, 0
        %v4596 = vsel %vm303, %v4571, 0
        %4598 = vmatprep.subr.mxu0 0.0
        %4599 = vmatpush1.xpose.msra.mxu0 %v4596
        %4600 = vmatprep.subr.mxu0 0.0
        %4601 = vmatpush1.xpose.msra.mxu0 0.0
        %4602 = vmatprep.subr.mxu0 0.0
        %4603 = vmatpush1.xpose.msra.mxu0 0.0
        %4604 = vmatprep.subr.mxu0 0.0
        %4605 = vmatpush1.xpose.msra.mxu0 0.0
        %4606 = vmatprep.subr.mxu0 0.0
        %4607 = vmatpush1.xpose.msra.mxu0 0.0
        %4608 = vmatprep.subr.mxu0 0.0
        %4609 = vmatpush1.xpose.msra.mxu0 0.0
        %4610 = vmatprep.subr.mxu0 0.0
        %4611 = vmatpush1.xpose.msra.mxu0 0.0
        %4612 = vmatprep.subr.mxu0 0.0
        %4613 = vmatpush1.xpose.msra.mxu0 0.0
        %4614 = vmatprep.subr.mxu0 0.0
        %4615 = vmatpush1.xpose.msra.mxu0 0.0
        %4616 = vmatprep.subr.mxu0 0.0
        %4617 = vmatpush1.xpose.msra.mxu0 0.0
        %4618 = vmatprep.subr.mxu0 0.0
        %4619 = vmatpush1.xpose.msra.mxu0 0.0
        %4620 = vmatprep.subr.mxu0 0.0
        %4621 = vmatpush1.xpose.msra.mxu0 0.0
        %4622 = vmatprep.subr.mxu0 0.0
        %4623 = vmatpush1.xpose.msra.mxu0 0.0
        %4624 = vmatprep.subr.mxu0 0.0
        %4625 = vmatpush1.xpose.msra.mxu0 0.0
        %4626 = vmatprep.subr.mxu0 0.0
        %4627 = vmatpush1.xpose.msra.mxu0 0.0
        %4628 = vmatprep.subr.mxu0 0.0
        %4629 = vmatpush1.xpose.msra.mxu0 0.0
        %4630 = vmatprep.subr.mxu0 0.0
        %4631 = vmatpush1.xpose.msra.mxu0 0.0
        %4632 = vmatprep.subr.mxu0 0.0
        %4633 = vmatpush1.xpose.msra.mxu0 0.0
        %4634 = vmatprep.subr.mxu0 0.0
        %4635 = vmatpush1.xpose.msra.mxu0 0.0
        %4636 = vmatprep.subr.mxu0 0.0
        %4637 = vmatpush1.xpose.msra.mxu0 0.0
        %4638 = vmatprep.subr.mxu0 0.0
        %4639 = vmatpush1.xpose.msra.mxu0 0.0
        %4640 = vmatprep.subr.mxu0 0.0
        %4641 = vmatpush1.xpose.msra.mxu0 0.0
        %4642 = vmatprep.subr.mxu0 0.0
        %4643 = vmatpush1.xpose.msra.mxu0 0.0
        %4644 = vmatprep.subr.mxu0 0.0
        %4645 = vmatpush1.xpose.msra.mxu0 0.0
        %4646 = vmatprep.subr.mxu0 0.0
        %4647 = vmatpush1.xpose.msra.mxu0 0.0
        %4648 = vmatprep.subr.mxu0 0.0
        %4649 = vmatpush1.xpose.msra.mxu0 0.0
        %4650 = vmatprep.subr.mxu0 0.0
        %4651 = vmatpush1.xpose.msra.mxu0 0.0
        %4652 = vmatprep.subr.mxu0 0.0
        %4653 = vmatpush1.xpose.msra.mxu0 0.0
        %4654 = vmatprep.subr.mxu0 0.0
        %4655 = vmatpush1.xpose.msra.mxu0 0.0
        %4656 = vmatprep.subr.mxu0 0.0
        %4657 = vmatpush1.xpose.msra.mxu0 0.0
        %4658 = vmatprep.subr.mxu0 0.0
        %4659 = vmatpush1.xpose.msra.mxu0 0.0
        %4660 = vmatprep.subr.mxu0 0.0
        %4661 = vmatpush1.xpose.msra.mxu0 0.0
        %4662 = vmatprep.mubr.f32.mxu0 0.0
        %4663 = vmatmul.mubr.f32.gmra.mrb[0].mxu0 %v4573
        %v4664 = vpop.f32.mrb[0].mxu0
        %v4665 = vadd.f32 0.0, %v4664
        %v4666 = vpop.f32.mrb[0].mxu0
        %4667 = vmatprep.mubr.f32.mxu0 0.0
        %4668 = vmatmul.mubr.f32.gmra.mrb[0].mxu0 %v4576
        %v4669 = vpop.f32.mrb[0].mxu0
        %v4670 = vadd.f32 0.0, %v4669
        %v4671 = vpop.f32.mrb[0].mxu0
        %4672 = vmatprep.mubr.f32.mxu0 0.0
        %4673 = vmatmul.mubr.f32.gmra.mrb[0].mxu0 %v4579
        %v4674 = vpop.f32.mrb[0].mxu0
        %v4675 = vadd.f32 0.0, %v4674
        %v4676 = vpop.f32.mrb[0].mxu0
        %4677 = vmatprep.mubr.f32.mxu0 0.0
        %4678 = vmatmul.mubr.f32.gmra.mrb[0].mxu0 %v4582
        %v4679 = vpop.f32.mrb[0].mxu0
        %v4680 = vadd.f32 0.0, %v4679
        %v4681 = vpop.f32.mrb[0].mxu0
        %4682 = vmatprep.mubr.f32.mxu0 0.0
        %4683 = vmatmul.mubr.f32.gmra.mrb[0].mxu0 %v4585
        %v4684 = vpop.f32.mrb[0].mxu0
        %v4685 = vadd.f32 0.0, %v4684
        %v4686 = vpop.f32.mrb[0].mxu0
        %4687 = vmatprep.mubr.f32.mxu0 0.0
        %4688 = vmatmul.mubr.f32.gmra.mrb[0].mxu0 %v4588
        %v4689 = vpop.f32.mrb[0].mxu0
        %v4690 = vadd.f32 0.0, %v4689
        %v4691 = vpop.f32.mrb[0].mxu0
        %4692 = vmatprep.mubr.f32.mxu0 0.0
        %4693 = vmatmul.mubr.f32.gmra.mrb[0].mxu0 %v4591
        %v4694 = vpop.f32.mrb[0].mxu0
        %v4695 = vadd.f32 0.0, %v4694
        %v4696 = vpop.f32.mrb[0].mxu0
        %4697 = vmatprep.mubr.f32.mxu0 0.0
        %4698 = vmatmul.mubr.f32.gmra.mrb[0].mxu0 %v4594
        %v4699 = vpop.f32.mrb[0].mxu0
        %v4700 = vadd.f32 0.0, %v4699
        %v4701 = vpop.f32.mrb[0].mxu0
        %4702 = vdwg.mxu0
        %v4703 = vadd.f32 %v4549, %v4665
        %v4704 = vadd.f32 %v4550, %v4670
        %v4705 = vadd.f32 %v4551, %v4675
        %v4706 = vadd.f32 %v4552, %v4680
        %v4707 = vadd.f32 %v4553, %v4685
        %v4708 = vadd.f32 %v4554, %v4690
        %v4709 = vadd.f32 %v4555, %v4695
        %v4710 = vadd.f32 %v4556, %v4700
        %v4711 = vld [vmem:[%s1035] sm:$0xff]
        %v4712 = vld [vmem:[%s1035 + $0x8] sm:$0xff]
        %v4713 = vld [vmem:[%s1035 + $0x10] sm:$0xff]
        %v4714 = vld [vmem:[%s1035 + $0x18] sm:$0xff]
        %v4715 = vld [vmem:[%s1035 + $0x20] sm:$0xff]
        %v4716 = vld [vmem:[%s1035 + $0x28] sm:$0xff]
        %v4717 = vld [vmem:[%s1035 + $0x30] sm:$0xff]
        %v4718 = vld [vmem:[%s1035 + $0x38] sm:$0xff]
        %v4719 = vrot.slane %v3941, 5
        %v4720 = vrot.slane %v3942, 4
        %v4721 = vsel %vm295, %v4720, %v4719
        %v4722 = vrot.slane %v3943, 3
        %v4723 = vsel %vm298, %v4722, %v4721
        %v4724 = vrot.slane %v3944, 2
        %v4725 = vsel %vm301, %v4724, %v4723
        %v4727 = vsel %vm303, %v4711, 0
        %v4730 = vsel %vm303, %v4712, 0
        %v4733 = vsel %vm303, %v4713, 0
        %v4736 = vsel %vm303, %v4714, 0
        %v4739 = vsel %vm303, %v4715, 0
        %v4742 = vsel %vm303, %v4716, 0
        %v4745 = vsel %vm303, %v4717, 0
        %v4748 = vsel %vm303, %v4718, 0
        %v4750 = vsel %vm303, %v4725, 0
        %4752 = vmatprep.subr.mxu0 0.0
        %4753 = vmatpush1.xpose.msra.mxu0 %v4750
        %4754 = vmatprep.subr.mxu0 0.0
        %4755 = vmatpush1.xpose.msra.mxu0 0.0
        %4756 = vmatprep.subr.mxu0 0.0
        %4757 = vmatpush1.xpose.msra.mxu0 0.0
        %4758 = vmatprep.subr.mxu0 0.0
        %4759 = vmatpush1.xpose.msra.mxu0 0.0
        %4760 = vmatprep.subr.mxu0 0.0
        %4761 = vmatpush1.xpose.msra.mxu0 0.0
        %4762 = vmatprep.subr.mxu0 0.0
        %4763 = vmatpush1.xpose.msra.mxu0 0.0
        %4764 = vmatprep.subr.mxu0 0.0
        %4765 = vmatpush1.xpose.msra.mxu0 0.0
        %4766 = vmatprep.subr.mxu0 0.0
        %4767 = vmatpush1.xpose.msra.mxu0 0.0
        %4768 = vmatprep.subr.mxu0 0.0
        %4769 = vmatpush1.xpose.msra.mxu0 0.0
        %4770 = vmatprep.subr.mxu0 0.0
        %4771 = vmatpush1.xpose.msra.mxu0 0.0
        %4772 = vmatprep.subr.mxu0 0.0
        %4773 = vmatpush1.xpose.msra.mxu0 0.0
        %4774 = vmatprep.subr.mxu0 0.0
        %4775 = vmatpush1.xpose.msra.mxu0 0.0
        %4776 = vmatprep.subr.mxu0 0.0
        %4777 = vmatpush1.xpose.msra.mxu0 0.0
        %4778 = vmatprep.subr.mxu0 0.0
        %4779 = vmatpush1.xpose.msra.mxu0 0.0
        %4780 = vmatprep.subr.mxu0 0.0
        %4781 = vmatpush1.xpose.msra.mxu0 0.0
        %4782 = vmatprep.subr.mxu0 0.0
        %4783 = vmatpush1.xpose.msra.mxu0 0.0
        %4784 = vmatprep.subr.mxu0 0.0
        %4785 = vmatpush1.xpose.msra.mxu0 0.0
        %4786 = vmatprep.subr.mxu0 0.0
        %4787 = vmatpush1.xpose.msra.mxu0 0.0
        %4788 = vmatprep.subr.mxu0 0.0
        %4789 = vmatpush1.xpose.msra.mxu0 0.0
        %4790 = vmatprep.subr.mxu0 0.0
        %4791 = vmatpush1.xpose.msra.mxu0 0.0
        %4792 = vmatprep.subr.mxu0 0.0
        %4793 = vmatpush1.xpose.msra.mxu0 0.0
        %4794 = vmatprep.subr.mxu0 0.0
        %4795 = vmatpush1.xpose.msra.mxu0 0.0
        %4796 = vmatprep.subr.mxu0 0.0
        %4797 = vmatpush1.xpose.msra.mxu0 0.0
        %4798 = vmatprep.subr.mxu0 0.0
        %4799 = vmatpush1.xpose.msra.mxu0 0.0
        %4800 = vmatprep.subr.mxu0 0.0
        %4801 = vmatpush1.xpose.msra.mxu0 0.0
        %4802 = vmatprep.subr.mxu0 0.0
        %4803 = vmatpush1.xpose.msra.mxu0 0.0
        %4804 = vmatprep.subr.mxu0 0.0
        %4805 = vmatpush1.xpose.msra.mxu0 0.0
        %4806 = vmatprep.subr.mxu0 0.0
        %4807 = vmatpush1.xpose.msra.mxu0 0.0
        %4808 = vmatprep.subr.mxu0 0.0
        %4809 = vmatpush1.xpose.msra.mxu0 0.0
        %4810 = vmatprep.subr.mxu0 0.0
        %4811 = vmatpush1.xpose.msra.mxu0 0.0
        %4812 = vmatprep.subr.mxu0 0.0
        %4813 = vmatpush1.xpose.msra.mxu0 0.0
        %4814 = vmatprep.subr.mxu0 0.0
        %4815 = vmatpush1.xpose.msra.mxu0 0.0
        %4816 = vmatprep.mubr.f32.mxu0 0.0
        %4817 = vmatmul.mubr.f32.gmra.mrb[0].mxu0 %v4727
        %v4818 = vpop.f32.mrb[0].mxu0
        %v4819 = vadd.f32 0.0, %v4818
        %v4820 = vpop.f32.mrb[0].mxu0
        %4821 = vmatprep.mubr.f32.mxu0 0.0
        %4822 = vmatmul.mubr.f32.gmra.mrb[0].mxu0 %v4730
        %v4823 = vpop.f32.mrb[0].mxu0
        %v4824 = vadd.f32 0.0, %v4823
        %v4825 = vpop.f32.mrb[0].mxu0
        %4826 = vmatprep.mubr.f32.mxu0 0.0
        %4827 = vmatmul.mubr.f32.gmra.mrb[0].mxu0 %v4733
        %v4828 = vpop.f32.mrb[0].mxu0
        %v4829 = vadd.f32 0.0, %v4828
        %v4830 = vpop.f32.mrb[0].mxu0
        %4831 = vmatprep.mubr.f32.mxu0 0.0
        %4832 = vmatmul.mubr.f32.gmra.mrb[0].mxu0 %v4736
        %v4833 = vpop.f32.mrb[0].mxu0
        %v4834 = vadd.f32 0.0, %v4833
        %v4835 = vpop.f32.mrb[0].mxu0
        %4836 = vmatprep.mubr.f32.mxu0 0.0
        %4837 = vmatmul.mubr.f32.gmra.mrb[0].mxu0 %v4739
        %v4838 = vpop.f32.mrb[0].mxu0
        %v4839 = vadd.f32 0.0, %v4838
        %v4840 = vpop.f32.mrb[0].mxu0
        %4841 = vmatprep.mubr.f32.mxu0 0.0
        %4842 = vmatmul.mubr.f32.gmra.mrb[0].mxu0 %v4742
        %v4843 = vpop.f32.mrb[0].mxu0
        %v4844 = vadd.f32 0.0, %v4843
        %v4845 = vpop.f32.mrb[0].mxu0
        %4846 = vmatprep.mubr.f32.mxu0 0.0
        %4847 = vmatmul.mubr.f32.gmra.mrb[0].mxu0 %v4745
        %v4848 = vpop.f32.mrb[0].mxu0
        %v4849 = vadd.f32 0.0, %v4848
        %v4850 = vpop.f32.mrb[0].mxu0
        %4851 = vmatprep.mubr.f32.mxu0 0.0
        %4852 = vmatmul.mubr.f32.gmra.mrb[0].mxu0 %v4748
        %v4853 = vpop.f32.mrb[0].mxu0
        %v4854 = vadd.f32 0.0, %v4853
        %v4855 = vpop.f32.mrb[0].mxu0
        %4856 = vdwg.mxu0
        %v4857 = vadd.f32 %v4703, %v4819
        %v4858 = vadd.f32 %v4704, %v4824
        %v4859 = vadd.f32 %v4705, %v4829
        %v4860 = vadd.f32 %v4706, %v4834
        %v4861 = vadd.f32 %v4707, %v4839
        %v4862 = vadd.f32 %v4708, %v4844
        %v4863 = vadd.f32 %v4709, %v4849
        %v4864 = vadd.f32 %v4710, %v4854
        %v4865 = vld [vmem:[%s1190] sm:$0xff]
        %v4866 = vld [vmem:[%s1190 + $0x8] sm:$0xff]
        %v4867 = vld [vmem:[%s1190 + $0x10] sm:$0xff]
        %v4868 = vld [vmem:[%s1190 + $0x18] sm:$0xff]
        %v4869 = vld [vmem:[%s1190 + $0x20] sm:$0xff]
        %v4870 = vld [vmem:[%s1190 + $0x28] sm:$0xff]
        %v4871 = vld [vmem:[%s1190 + $0x30] sm:$0xff]
        %v4872 = vld [vmem:[%s1190 + $0x38] sm:$0xff]
        %v4873 = vrot.slane %v3941, 6
        %v4874 = vrot.slane %v3942, 5
        %v4875 = vsel %vm295, %v4874, %v4873
        %v4876 = vrot.slane %v3943, 4
        %v4877 = vsel %vm298, %v4876, %v4875
        %v4878 = vrot.slane %v3944, 3
        %v4879 = vsel %vm301, %v4878, %v4877
        %v4881 = vsel %vm303, %v4865, 0
        %v4884 = vsel %vm303, %v4866, 0
        %v4887 = vsel %vm303, %v4867, 0
        %v4890 = vsel %vm303, %v4868, 0
        %v4893 = vsel %vm303, %v4869, 0
        %v4896 = vsel %vm303, %v4870, 0
        %v4899 = vsel %vm303, %v4871, 0
        %v4902 = vsel %vm303, %v4872, 0
        %v4904 = vsel %vm303, %v4879, 0
        %4906 = vmatprep.subr.mxu0 0.0
        %4907 = vmatpush1.xpose.msra.mxu0 %v4904
        %4908 = vmatprep.subr.mxu0 0.0
        %4909 = vmatpush1.xpose.msra.mxu0 0.0
        %4910 = vmatprep.subr.mxu0 0.0
        %4911 = vmatpush1.xpose.msra.mxu0 0.0
        %4912 = vmatprep.subr.mxu0 0.0
        %4913 = vmatpush1.xpose.msra.mxu0 0.0
        %4914 = vmatprep.subr.mxu0 0.0
        %4915 = vmatpush1.xpose.msra.mxu0 0.0
        %4916 = vmatprep.subr.mxu0 0.0
        %4917 = vmatpush1.xpose.msra.mxu0 0.0
        %4918 = vmatprep.subr.mxu0 0.0
        %4919 = vmatpush1.xpose.msra.mxu0 0.0
        %4920 = vmatprep.subr.mxu0 0.0
        %4921 = vmatpush1.xpose.msra.mxu0 0.0
        %4922 = vmatprep.subr.mxu0 0.0
        %4923 = vmatpush1.xpose.msra.mxu0 0.0
        %4924 = vmatprep.subr.mxu0 0.0
        %4925 = vmatpush1.xpose.msra.mxu0 0.0
        %4926 = vmatprep.subr.mxu0 0.0
        %4927 = vmatpush1.xpose.msra.mxu0 0.0
        %4928 = vmatprep.subr.mxu0 0.0
        %4929 = vmatpush1.xpose.msra.mxu0 0.0
        %4930 = vmatprep.subr.mxu0 0.0
        %4931 = vmatpush1.xpose.msra.mxu0 0.0
        %4932 = vmatprep.subr.mxu0 0.0
        %4933 = vmatpush1.xpose.msra.mxu0 0.0
        %4934 = vmatprep.subr.mxu0 0.0
        %4935 = vmatpush1.xpose.msra.mxu0 0.0
        %4936 = vmatprep.subr.mxu0 0.0
        %4937 = vmatpush1.xpose.msra.mxu0 0.0
        %4938 = vmatprep.subr.mxu0 0.0
        %4939 = vmatpush1.xpose.msra.mxu0 0.0
        %4940 = vmatprep.subr.mxu0 0.0
        %4941 = vmatpush1.xpose.msra.mxu0 0.0
        %4942 = vmatprep.subr.mxu0 0.0
        %4943 = vmatpush1.xpose.msra.mxu0 0.0
        %4944 = vmatprep.subr.mxu0 0.0
        %4945 = vmatpush1.xpose.msra.mxu0 0.0
        %4946 = vmatprep.subr.mxu0 0.0
        %4947 = vmatpush1.xpose.msra.mxu0 0.0
        %4948 = vmatprep.subr.mxu0 0.0
        %4949 = vmatpush1.xpose.msra.mxu0 0.0
        %4950 = vmatprep.subr.mxu0 0.0
        %4951 = vmatpush1.xpose.msra.mxu0 0.0
        %4952 = vmatprep.subr.mxu0 0.0
        %4953 = vmatpush1.xpose.msra.mxu0 0.0
        %4954 = vmatprep.subr.mxu0 0.0
        %4955 = vmatpush1.xpose.msra.mxu0 0.0
        %4956 = vmatprep.subr.mxu0 0.0
        %4957 = vmatpush1.xpose.msra.mxu0 0.0
        %4958 = vmatprep.subr.mxu0 0.0
        %4959 = vmatpush1.xpose.msra.mxu0 0.0
        %4960 = vmatprep.subr.mxu0 0.0
        %4961 = vmatpush1.xpose.msra.mxu0 0.0
        %4962 = vmatprep.subr.mxu0 0.0
        %4963 = vmatpush1.xpose.msra.mxu0 0.0
        %4964 = vmatprep.subr.mxu0 0.0
        %4965 = vmatpush1.xpose.msra.mxu0 0.0
        %4966 = vmatprep.subr.mxu0 0.0
        %4967 = vmatpush1.xpose.msra.mxu0 0.0
        %4968 = vmatprep.subr.mxu0 0.0
        %4969 = vmatpush1.xpose.msra.mxu0 0.0
        %4970 = vmatprep.mubr.f32.mxu0 0.0
        %4971 = vmatmul.mubr.f32.gmra.mrb[0].mxu0 %v4881
        %v4972 = vpop.f32.mrb[0].mxu0
        %v4973 = vadd.f32 0.0, %v4972
        %v4974 = vpop.f32.mrb[0].mxu0
        %4975 = vmatprep.mubr.f32.mxu0 0.0
        %4976 = vmatmul.mubr.f32.gmra.mrb[0].mxu0 %v4884
        %v4977 = vpop.f32.mrb[0].mxu0
        %v4978 = vadd.f32 0.0, %v4977
        %v4979 = vpop.f32.mrb[0].mxu0
        %4980 = vmatprep.mubr.f32.mxu0 0.0
        %4981 = vmatmul.mubr.f32.gmra.mrb[0].mxu0 %v4887
        %v4982 = vpop.f32.mrb[0].mxu0
        %v4983 = vadd.f32 0.0, %v4982
        %v4984 = vpop.f32.mrb[0].mxu0
        %4985 = vmatprep.mubr.f32.mxu0 0.0
        %4986 = vmatmul.mubr.f32.gmra.mrb[0].mxu0 %v4890
        %v4987 = vpop.f32.mrb[0].mxu0
        %v4988 = vadd.f32 0.0, %v4987
        %v4989 = vpop.f32.mrb[0].mxu0
        %4990 = vmatprep.mubr.f32.mxu0 0.0
        %4991 = vmatmul.mubr.f32.gmra.mrb[0].mxu0 %v4893
        %v4992 = vpop.f32.mrb[0].mxu0
        %v4993 = vadd.f32 0.0, %v4992
        %v4994 = vpop.f32.mrb[0].mxu0
        %4995 = vmatprep.mubr.f32.mxu0 0.0
        %4996 = vmatmul.mubr.f32.gmra.mrb[0].mxu0 %v4896
        %v4997 = vpop.f32.mrb[0].mxu0
        %v4998 = vadd.f32 0.0, %v4997
        %v4999 = vpop.f32.mrb[0].mxu0
        %5000 = vmatprep.mubr.f32.mxu0 0.0
        %5001 = vmatmul.mubr.f32.gmra.mrb[0].mxu0 %v4899
        %v5002 = vpop.f32.mrb[0].mxu0
        %v5003 = vadd.f32 0.0, %v5002
        %v5004 = vpop.f32.mrb[0].mxu0
        %5005 = vmatprep.mubr.f32.mxu0 0.0
        %5006 = vmatmul.mubr.f32.gmra.mrb[0].mxu0 %v4902
        %v5007 = vpop.f32.mrb[0].mxu0
        %v5008 = vadd.f32 0.0, %v5007
        %v5009 = vpop.f32.mrb[0].mxu0
        %5010 = vdwg.mxu0
        %v5011 = vadd.f32 %v4857, %v4973
        %v5012 = vadd.f32 %v4858, %v4978
        %v5013 = vadd.f32 %v4859, %v4983
        %v5014 = vadd.f32 %v4860, %v4988
        %v5015 = vadd.f32 %v4861, %v4993
        %v5016 = vadd.f32 %v4862, %v4998
        %v5017 = vadd.f32 %v4863, %v5003
        %v5018 = vadd.f32 %v4864, %v5008
        %v5019 = vld [vmem:[%s1345] sm:$0xff]
        %v5020 = vld [vmem:[%s1345 + $0x8] sm:$0xff]
        %v5021 = vld [vmem:[%s1345 + $0x10] sm:$0xff]
        %v5022 = vld [vmem:[%s1345 + $0x18] sm:$0xff]
        %v5023 = vld [vmem:[%s1345 + $0x20] sm:$0xff]
        %v5024 = vld [vmem:[%s1345 + $0x28] sm:$0xff]
        %v5025 = vld [vmem:[%s1345 + $0x30] sm:$0xff]
        %v5026 = vld [vmem:[%s1345 + $0x38] sm:$0xff]
        %v5027 = vrot.slane %v3941, 7
        %v5028 = vrot.slane %v3942, 6
        %v5029 = vsel %vm295, %v5028, %v5027
        %v5030 = vrot.slane %v3943, 5
        %v5031 = vsel %vm298, %v5030, %v5029
        %v5032 = vrot.slane %v3944, 4
        %v5033 = vsel %vm301, %v5032, %v5031
        %v5035 = vsel %vm303, %v5019, 0
        %v5038 = vsel %vm303, %v5020, 0
        %v5041 = vsel %vm303, %v5021, 0
        %v5044 = vsel %vm303, %v5022, 0
        %v5047 = vsel %vm303, %v5023, 0
        %v5050 = vsel %vm303, %v5024, 0
        %v5053 = vsel %vm303, %v5025, 0
        %v5056 = vsel %vm303, %v5026, 0
        %v5058 = vsel %vm303, %v5033, 0
        %5060 = vmatprep.subr.mxu0 0.0
        %5061 = vmatpush1.xpose.msra.mxu0 %v5058
        %5062 = vmatprep.subr.mxu0 0.0
        %5063 = vmatpush1.xpose.msra.mxu0 0.0
        %5064 = vmatprep.subr.mxu0 0.0
        %5065 = vmatpush1.xpose.msra.mxu0 0.0
        %5066 = vmatprep.subr.mxu0 0.0
        %5067 = vmatpush1.xpose.msra.mxu0 0.0
        %5068 = vmatprep.subr.mxu0 0.0
        %5069 = vmatpush1.xpose.msra.mxu0 0.0
        %5070 = vmatprep.subr.mxu0 0.0
        %5071 = vmatpush1.xpose.msra.mxu0 0.0
        %5072 = vmatprep.subr.mxu0 0.0
        %5073 = vmatpush1.xpose.msra.mxu0 0.0
        %5074 = vmatprep.subr.mxu0 0.0
        %5075 = vmatpush1.xpose.msra.mxu0 0.0
        %5076 = vmatprep.subr.mxu0 0.0
        %5077 = vmatpush1.xpose.msra.mxu0 0.0
        %5078 = vmatprep.subr.mxu0 0.0
        %5079 = vmatpush1.xpose.msra.mxu0 0.0
        %5080 = vmatprep.subr.mxu0 0.0
        %5081 = vmatpush1.xpose.msra.mxu0 0.0
        %5082 = vmatprep.subr.mxu0 0.0
        %5083 = vmatpush1.xpose.msra.mxu0 0.0
        %5084 = vmatprep.subr.mxu0 0.0
        %5085 = vmatpush1.xpose.msra.mxu0 0.0
        %5086 = vmatprep.subr.mxu0 0.0
        %5087 = vmatpush1.xpose.msra.mxu0 0.0
        %5088 = vmatprep.subr.mxu0 0.0
        %5089 = vmatpush1.xpose.msra.mxu0 0.0
        %5090 = vmatprep.subr.mxu0 0.0
        %5091 = vmatpush1.xpose.msra.mxu0 0.0
        %5092 = vmatprep.subr.mxu0 0.0
        %5093 = vmatpush1.xpose.msra.mxu0 0.0
        %5094 = vmatprep.subr.mxu0 0.0
        %5095 = vmatpush1.xpose.msra.mxu0 0.0
        %5096 = vmatprep.subr.mxu0 0.0
        %5097 = vmatpush1.xpose.msra.mxu0 0.0
        %5098 = vmatprep.subr.mxu0 0.0
        %5099 = vmatpush1.xpose.msra.mxu0 0.0
        %5100 = vmatprep.subr.mxu0 0.0
        %5101 = vmatpush1.xpose.msra.mxu0 0.0
        %5102 = vmatprep.subr.mxu0 0.0
        %5103 = vmatpush1.xpose.msra.mxu0 0.0
        %5104 = vmatprep.subr.mxu0 0.0
        %5105 = vmatpush1.xpose.msra.mxu0 0.0
        %5106 = vmatprep.subr.mxu0 0.0
        %5107 = vmatpush1.xpose.msra.mxu0 0.0
        %5108 = vmatprep.subr.mxu0 0.0
        %5109 = vmatpush1.xpose.msra.mxu0 0.0
        %5110 = vmatprep.subr.mxu0 0.0
        %5111 = vmatpush1.xpose.msra.mxu0 0.0
        %5112 = vmatprep.subr.mxu0 0.0
        %5113 = vmatpush1.xpose.msra.mxu0 0.0
        %5114 = vmatprep.subr.mxu0 0.0
        %5115 = vmatpush1.xpose.msra.mxu0 0.0
        %5116 = vmatprep.subr.mxu0 0.0
        %5117 = vmatpush1.xpose.msra.mxu0 0.0
        %5118 = vmatprep.subr.mxu0 0.0
        %5119 = vmatpush1.xpose.msra.mxu0 0.0
        %5120 = vmatprep.subr.mxu0 0.0
        %5121 = vmatpush1.xpose.msra.mxu0 0.0
        %5122 = vmatprep.subr.mxu0 0.0
        %5123 = vmatpush1.xpose.msra.mxu0 0.0
        %5124 = vmatprep.mubr.f32.mxu0 0.0
        %5125 = vmatmul.mubr.f32.gmra.mrb[0].mxu0 %v5035
        %v5126 = vpop.f32.mrb[0].mxu0
        %v5127 = vadd.f32 0.0, %v5126
        %v5128 = vpop.f32.mrb[0].mxu0
        %5129 = vmatprep.mubr.f32.mxu0 0.0
        %5130 = vmatmul.mubr.f32.gmra.mrb[0].mxu0 %v5038
        %v5131 = vpop.f32.mrb[0].mxu0
        %v5132 = vadd.f32 0.0, %v5131
        %v5133 = vpop.f32.mrb[0].mxu0
        %5134 = vmatprep.mubr.f32.mxu0 0.0
        %5135 = vmatmul.mubr.f32.gmra.mrb[0].mxu0 %v5041
        %v5136 = vpop.f32.mrb[0].mxu0
        %v5137 = vadd.f32 0.0, %v5136
        %v5138 = vpop.f32.mrb[0].mxu0
        %5139 = vmatprep.mubr.f32.mxu0 0.0
        %5140 = vmatmul.mubr.f32.gmra.mrb[0].mxu0 %v5044
        %v5141 = vpop.f32.mrb[0].mxu0
        %v5142 = vadd.f32 0.0, %v5141
        %v5143 = vpop.f32.mrb[0].mxu0
        %5144 = vmatprep.mubr.f32.mxu0 0.0
        %5145 = vmatmul.mubr.f32.gmra.mrb[0].mxu0 %v5047
        %v5146 = vpop.f32.mrb[0].mxu0
        %v5147 = vadd.f32 0.0, %v5146
        %v5148 = vpop.f32.mrb[0].mxu0
        %5149 = vmatprep.mubr.f32.mxu0 0.0
        %5150 = vmatmul.mubr.f32.gmra.mrb[0].mxu0 %v5050
        %v5151 = vpop.f32.mrb[0].mxu0
        %v5152 = vadd.f32 0.0, %v5151
        %v5153 = vpop.f32.mrb[0].mxu0
        %5154 = vmatprep.mubr.f32.mxu0 0.0
        %5155 = vmatmul.mubr.f32.gmra.mrb[0].mxu0 %v5053
        %v5156 = vpop.f32.mrb[0].mxu0
        %v5157 = vadd.f32 0.0, %v5156
        %v5158 = vpop.f32.mrb[0].mxu0
        %5159 = vmatprep.mubr.f32.mxu0 0.0
        %5160 = vmatmul.mubr.f32.gmra.mrb[0].mxu0 %v5056
        %v5161 = vpop.f32.mrb[0].mxu0
        %v5162 = vadd.f32 0.0, %v5161
        %v5163 = vpop.f32.mrb[0].mxu0
        %5164 = vdwg.mxu0
        %v5165 = vadd.f32 %v5011, %v5127
        %v5166 = vadd.f32 %v5012, %v5132
        %v5167 = vadd.f32 %v5013, %v5137
        %v5168 = vadd.f32 %v5014, %v5142
        %v5169 = vadd.f32 %v5015, %v5147
        %v5170 = vadd.f32 %v5016, %v5152
        %v5171 = vadd.f32 %v5017, %v5157
        %v5172 = vadd.f32 %v5018, %v5162
        %v5173 = vld [vmem:[#allocation7] sm:$0xff]
        %v5174 = vld [vmem:[#allocation7 + $0x8] sm:$0xff]
        %v5175 = vld [vmem:[#allocation7 + $0x10] sm:$0xff]
        %v5176 = vld [vmem:[#allocation7 + $0x18] sm:$0xff]
        %v5177 = vld [vmem:[#allocation7 + $0x20] sm:$0xff]
        %v5178 = vld [vmem:[#allocation7 + $0x28] sm:$0xff]
        %v5179 = vld [vmem:[#allocation7 + $0x30] sm:$0xff]
        %v5180 = vld [vmem:[#allocation7 + $0x38] sm:$0xff]
        %5182 = vset.pattern.permute.xlu0 0
        %5183 = vperm.xlu0 %5182, %v5173
        %v5184 = vpop.permute.xlu0 %5183
        %5187 = vset.pattern.permute.xlu0 0
        %5188 = vperm.xlu0 %5187, %v5174
        %v5189 = vpop.permute.xlu0 %5188
        %5192 = vset.pattern.permute.xlu0 0
        %5193 = vperm.xlu0 %5192, %v5175
        %v5194 = vpop.permute.xlu0 %5193
        %5197 = vset.pattern.permute.xlu0 0
        %5198 = vperm.xlu0 %5197, %v5176
        %v5199 = vpop.permute.xlu0 %5198
        %5202 = vset.pattern.permute.xlu0 0
        %5203 = vperm.xlu0 %5202, %v5177
        %v5204 = vpop.permute.xlu0 %5203
        %5207 = vset.pattern.permute.xlu0 0
        %5208 = vperm.xlu0 %5207, %v5178
        %v5209 = vpop.permute.xlu0 %5208
        %5212 = vset.pattern.permute.xlu0 0
        %5213 = vperm.xlu0 %5212, %v5179
        %v5214 = vpop.permute.xlu0 %5213
        %5217 = vset.pattern.permute.xlu0 0
        %5218 = vperm.xlu0 %5217, %v5180
        %v5219 = vpop.permute.xlu0 %5218
        %v5221 = vadd.f32 %v5165, %v5184
        %v5222 = vadd.f32 %v5166, %v5189
        %v5223 = vadd.f32 %v5167, %v5194
        %v5224 = vadd.f32 %v5168, %v5199
        %v5225 = vadd.f32 %v5169, %v5204
        %v5226 = vadd.f32 %v5170, %v5209
        %v5227 = vadd.f32 %v5171, %v5214
        %v5228 = vadd.f32 %v5172, %v5219
        %v5237 = vcombine.high %v5221, %v5221
        %v5239 = vunpack.c.l.s4 1966171168
        %v5240 = vunpack.c.0.s8 %v5239
        %v5241 = vlaneseq
        %v5242 = vshrl.u32 %v5241, 7
        %v5243 = vsub.s32 %v5240, %v5242
        %v5244 = vrot.slane %v5221, %v5243
        %v5246 = vunpack.c.l.s4 1966171168
        %v5247 = vunpack.c.0.s8 %v5246
        %v5248 = vlaneseq
        %v5249 = vshrl.u32 %v5248, 7
        %v5250 = vsub.s32 %v5247, %v5249
        %v5251 = vrot.slane %v5237, %v5250
        %v5252 = vcombine.high %v5244, %v5244
        %v5253 = vcombine.high %v5251, %v5251
        %v5255 = vunpack.c.l.s4 1966171168
        %v5256 = vunpack.c.0.s8 %v5255
        %v5257 = vlaneseq
        %v5258 = vshrl.u32 %v5257, 7
        %v5259 = vsub.s32 %v5256, %v5258
        %v5260 = vrot.slane %v5244, %v5259
        %v5262 = vunpack.c.l.s4 1966171168
        %v5263 = vunpack.c.0.s8 %v5262
        %v5264 = vlaneseq
        %v5265 = vshrl.u32 %v5264, 7
        %v5266 = vsub.s32 %v5263, %v5265
        %v5267 = vrot.slane %v5251, %v5266
        %v5269 = vunpack.c.l.s4 1966171168
        %v5270 = vunpack.c.0.s8 %v5269
        %v5271 = vlaneseq
        %v5272 = vshrl.u32 %v5271, 7
        %v5273 = vsub.s32 %v5270, %v5272
        %v5274 = vrot.slane %v5252, %v5273
        %v5276 = vunpack.c.l.s4 1966171168
        %v5277 = vunpack.c.0.s8 %v5276
        %v5278 = vlaneseq
        %v5279 = vshrl.u32 %v5278, 7
        %v5280 = vsub.s32 %v5277, %v5279
        %v5281 = vrot.slane %v5253, %v5280
        %v5282 = vcombine.high %v5260, %v5260
        %v5283 = vcombine.high %v5267, %v5267
        %v5284 = vcombine.high %v5274, %v5274
        %v5285 = vcombine.high %v5281, %v5281
        %v5286 = vcombine.high %v5222, %v5222
        %v5288 = vunpack.c.l.s4 1966171168
        %v5289 = vunpack.c.0.s8 %v5288
        %v5290 = vlaneseq
        %v5291 = vshrl.u32 %v5290, 7
        %v5292 = vsub.s32 %v5289, %v5291
        %v5293 = vrot.slane %v5222, %v5292
        %v5295 = vunpack.c.l.s4 1966171168
        %v5296 = vunpack.c.0.s8 %v5295
        %v5297 = vlaneseq
        %v5298 = vshrl.u32 %v5297, 7
        %v5299 = vsub.s32 %v5296, %v5298
        %v5300 = vrot.slane %v5286, %v5299
        %v5301 = vcombine.high %v5293, %v5293
        %v5302 = vcombine.high %v5300, %v5300
        %v5304 = vunpack.c.l.s4 1966171168
        %v5305 = vunpack.c.0.s8 %v5304
        %v5306 = vlaneseq
        %v5307 = vshrl.u32 %v5306, 7
        %v5308 = vsub.s32 %v5305, %v5307
        %v5309 = vrot.slane %v5293, %v5308
        %v5311 = vunpack.c.l.s4 1966171168
        %v5312 = vunpack.c.0.s8 %v5311
        %v5313 = vlaneseq
        %v5314 = vshrl.u32 %v5313, 7
        %v5315 = vsub.s32 %v5312, %v5314
        %v5316 = vrot.slane %v5300, %v5315
        %v5318 = vunpack.c.l.s4 1966171168
        %v5319 = vunpack.c.0.s8 %v5318
        %v5320 = vlaneseq
        %v5321 = vshrl.u32 %v5320, 7
        %v5322 = vsub.s32 %v5319, %v5321
        %v5323 = vrot.slane %v5301, %v5322
        %v5325 = vunpack.c.l.s4 1966171168
        %v5326 = vunpack.c.0.s8 %v5325
        %v5327 = vlaneseq
        %v5328 = vshrl.u32 %v5327, 7
        %v5329 = vsub.s32 %v5326, %v5328
        %v5330 = vrot.slane %v5302, %v5329
        %v5331 = vcombine.high %v5309, %v5309
        %v5332 = vcombine.high %v5316, %v5316
        %v5333 = vcombine.high %v5323, %v5323
        %v5334 = vcombine.high %v5330, %v5330
        %v5335 = vcombine.high %v5223, %v5223
        %v5337 = vunpack.c.l.s4 1966171168
        %v5338 = vunpack.c.0.s8 %v5337
        %v5339 = vlaneseq
        %v5340 = vshrl.u32 %v5339, 7
        %v5341 = vsub.s32 %v5338, %v5340
        %v5342 = vrot.slane %v5223, %v5341
        %v5344 = vunpack.c.l.s4 1966171168
        %v5345 = vunpack.c.0.s8 %v5344
        %v5346 = vlaneseq
        %v5347 = vshrl.u32 %v5346, 7
        %v5348 = vsub.s32 %v5345, %v5347
        %v5349 = vrot.slane %v5335, %v5348
        %v5350 = vcombine.high %v5342, %v5342
        %v5351 = vcombine.high %v5349, %v5349
        %v5353 = vunpack.c.l.s4 1966171168
        %v5354 = vunpack.c.0.s8 %v5353
        %v5355 = vlaneseq
        %v5356 = vshrl.u32 %v5355, 7
        %v5357 = vsub.s32 %v5354, %v5356
        %v5358 = vrot.slane %v5342, %v5357
        %v5360 = vunpack.c.l.s4 1966171168
        %v5361 = vunpack.c.0.s8 %v5360
        %v5362 = vlaneseq
        %v5363 = vshrl.u32 %v5362, 7
        %v5364 = vsub.s32 %v5361, %v5363
        %v5365 = vrot.slane %v5349, %v5364
        %v5367 = vunpack.c.l.s4 1966171168
        %v5368 = vunpack.c.0.s8 %v5367
        %v5369 = vlaneseq
        %v5370 = vshrl.u32 %v5369, 7
        %v5371 = vsub.s32 %v5368, %v5370
        %v5372 = vrot.slane %v5350, %v5371
        %v5374 = vunpack.c.l.s4 1966171168
        %v5375 = vunpack.c.0.s8 %v5374
        %v5376 = vlaneseq
        %v5377 = vshrl.u32 %v5376, 7
        %v5378 = vsub.s32 %v5375, %v5377
        %v5379 = vrot.slane %v5351, %v5378
        %v5380 = vcombine.high %v5358, %v5358
        %v5381 = vcombine.high %v5365, %v5365
        %v5382 = vcombine.high %v5372, %v5372
        %v5383 = vcombine.high %v5379, %v5379
        %v5384 = vcombine.high %v5224, %v5224
        %v5386 = vunpack.c.l.s4 1966171168
        %v5387 = vunpack.c.0.s8 %v5386
        %v5388 = vlaneseq
        %v5389 = vshrl.u32 %v5388, 7
        %v5390 = vsub.s32 %v5387, %v5389
        %v5391 = vrot.slane %v5224, %v5390
        %v5393 = vunpack.c.l.s4 1966171168
        %v5394 = vunpack.c.0.s8 %v5393
        %v5395 = vlaneseq
        %v5396 = vshrl.u32 %v5395, 7
        %v5397 = vsub.s32 %v5394, %v5396
        %v5398 = vrot.slane %v5384, %v5397
        %v5399 = vcombine.high %v5391, %v5391
        %v5400 = vcombine.high %v5398, %v5398
        %v5402 = vunpack.c.l.s4 1966171168
        %v5403 = vunpack.c.0.s8 %v5402
        %v5404 = vlaneseq
        %v5405 = vshrl.u32 %v5404, 7
        %v5406 = vsub.s32 %v5403, %v5405
        %v5407 = vrot.slane %v5391, %v5406
        %v5409 = vunpack.c.l.s4 1966171168
        %v5410 = vunpack.c.0.s8 %v5409
        %v5411 = vlaneseq
        %v5412 = vshrl.u32 %v5411, 7
        %v5413 = vsub.s32 %v5410, %v5412
        %v5414 = vrot.slane %v5398, %v5413
        %v5416 = vunpack.c.l.s4 1966171168
        %v5417 = vunpack.c.0.s8 %v5416
        %v5418 = vlaneseq
        %v5419 = vshrl.u32 %v5418, 7
        %v5420 = vsub.s32 %v5417, %v5419
        %v5421 = vrot.slane %v5399, %v5420
        %v5423 = vunpack.c.l.s4 1966171168
        %v5424 = vunpack.c.0.s8 %v5423
        %v5425 = vlaneseq
        %v5426 = vshrl.u32 %v5425, 7
        %v5427 = vsub.s32 %v5424, %v5426
        %v5428 = vrot.slane %v5400, %v5427
        %v5429 = vcombine.high %v5407, %v5407
        %v5430 = vcombine.high %v5414, %v5414
        %v5431 = vcombine.high %v5421, %v5421
        %v5432 = vcombine.high %v5428, %v5428
        %v5433 = vcombine.high %v5225, %v5225
        %v5435 = vunpack.c.l.s4 1966171168
        %v5436 = vunpack.c.0.s8 %v5435
        %v5437 = vlaneseq
        %v5438 = vshrl.u32 %v5437, 7
        %v5439 = vsub.s32 %v5436, %v5438
        %v5440 = vrot.slane %v5225, %v5439
        %v5442 = vunpack.c.l.s4 1966171168
        %v5443 = vunpack.c.0.s8 %v5442
        %v5444 = vlaneseq
        %v5445 = vshrl.u32 %v5444, 7
        %v5446 = vsub.s32 %v5443, %v5445
        %v5447 = vrot.slane %v5433, %v5446
        %v5448 = vcombine.high %v5440, %v5440
        %v5449 = vcombine.high %v5447, %v5447
        %v5451 = vunpack.c.l.s4 1966171168
        %v5452 = vunpack.c.0.s8 %v5451
        %v5453 = vlaneseq
        %v5454 = vshrl.u32 %v5453, 7
        %v5455 = vsub.s32 %v5452, %v5454
        %v5456 = vrot.slane %v5440, %v5455
        %v5458 = vunpack.c.l.s4 1966171168
        %v5459 = vunpack.c.0.s8 %v5458
        %v5460 = vlaneseq
        %v5461 = vshrl.u32 %v5460, 7
        %v5462 = vsub.s32 %v5459, %v5461
        %v5463 = vrot.slane %v5447, %v5462
        %v5465 = vunpack.c.l.s4 1966171168
        %v5466 = vunpack.c.0.s8 %v5465
        %v5467 = vlaneseq
        %v5468 = vshrl.u32 %v5467, 7
        %v5469 = vsub.s32 %v5466, %v5468
        %v5470 = vrot.slane %v5448, %v5469
        %v5472 = vunpack.c.l.s4 1966171168
        %v5473 = vunpack.c.0.s8 %v5472
        %v5474 = vlaneseq
        %v5475 = vshrl.u32 %v5474, 7
        %v5476 = vsub.s32 %v5473, %v5475
        %v5477 = vrot.slane %v5449, %v5476
        %v5478 = vcombine.high %v5456, %v5456
        %v5479 = vcombine.high %v5463, %v5463
        %v5480 = vcombine.high %v5470, %v5470
        %v5481 = vcombine.high %v5477, %v5477
        %v5482 = vcombine.high %v5226, %v5226
        %v5484 = vunpack.c.l.s4 1966171168
        %v5485 = vunpack.c.0.s8 %v5484
        %v5486 = vlaneseq
        %v5487 = vshrl.u32 %v5486, 7
        %v5488 = vsub.s32 %v5485, %v5487
        %v5489 = vrot.slane %v5226, %v5488
        %v5491 = vunpack.c.l.s4 1966171168
        %v5492 = vunpack.c.0.s8 %v5491
        %v5493 = vlaneseq
        %v5494 = vshrl.u32 %v5493, 7
        %v5495 = vsub.s32 %v5492, %v5494
        %v5496 = vrot.slane %v5482, %v5495
        %v5497 = vcombine.high %v5489, %v5489
        %v5498 = vcombine.high %v5496, %v5496
        %v5500 = vunpack.c.l.s4 1966171168
        %v5501 = vunpack.c.0.s8 %v5500
        %v5502 = vlaneseq
        %v5503 = vshrl.u32 %v5502, 7
        %v5504 = vsub.s32 %v5501, %v5503
        %v5505 = vrot.slane %v5489, %v5504
        %v5507 = vunpack.c.l.s4 1966171168
        %v5508 = vunpack.c.0.s8 %v5507
        %v5509 = vlaneseq
        %v5510 = vshrl.u32 %v5509, 7
        %v5511 = vsub.s32 %v5508, %v5510
        %v5512 = vrot.slane %v5496, %v5511
        %v5514 = vunpack.c.l.s4 1966171168
        %v5515 = vunpack.c.0.s8 %v5514
        %v5516 = vlaneseq
        %v5517 = vshrl.u32 %v5516, 7
        %v5518 = vsub.s32 %v5515, %v5517
        %v5519 = vrot.slane %v5497, %v5518
        %v5521 = vunpack.c.l.s4 1966171168
        %v5522 = vunpack.c.0.s8 %v5521
        %v5523 = vlaneseq
        %v5524 = vshrl.u32 %v5523, 7
        %v5525 = vsub.s32 %v5522, %v5524
        %v5526 = vrot.slane %v5498, %v5525
        %v5527 = vcombine.high %v5505, %v5505
        %v5528 = vcombine.high %v5512, %v5512
        %v5529 = vcombine.high %v5519, %v5519
        %v5530 = vcombine.high %v5526, %v5526
        %v5531 = vcombine.high %v5227, %v5227
        %v5533 = vunpack.c.l.s4 1966171168
        %v5534 = vunpack.c.0.s8 %v5533
        %v5535 = vlaneseq
        %v5536 = vshrl.u32 %v5535, 7
        %v5537 = vsub.s32 %v5534, %v5536
        %v5538 = vrot.slane %v5227, %v5537
        %v5540 = vunpack.c.l.s4 1966171168
        %v5541 = vunpack.c.0.s8 %v5540
        %v5542 = vlaneseq
        %v5543 = vshrl.u32 %v5542, 7
        %v5544 = vsub.s32 %v5541, %v5543
        %v5545 = vrot.slane %v5531, %v5544
        %v5546 = vcombine.high %v5538, %v5538
        %v5547 = vcombine.high %v5545, %v5545
        %v5549 = vunpack.c.l.s4 1966171168
        %v5550 = vunpack.c.0.s8 %v5549
        %v5551 = vlaneseq
        %v5552 = vshrl.u32 %v5551, 7
        %v5553 = vsub.s32 %v5550, %v5552
        %v5554 = vrot.slane %v5538, %v5553
        %v5556 = vunpack.c.l.s4 1966171168
        %v5557 = vunpack.c.0.s8 %v5556
        %v5558 = vlaneseq
        %v5559 = vshrl.u32 %v5558, 7
        %v5560 = vsub.s32 %v5557, %v5559
        %v5561 = vrot.slane %v5545, %v5560
        %v5563 = vunpack.c.l.s4 1966171168
        %v5564 = vunpack.c.0.s8 %v5563
        %v5565 = vlaneseq
        %v5566 = vshrl.u32 %v5565, 7
        %v5567 = vsub.s32 %v5564, %v5566
        %v5568 = vrot.slane %v5546, %v5567
        %v5570 = vunpack.c.l.s4 1966171168
        %v5571 = vunpack.c.0.s8 %v5570
        %v5572 = vlaneseq
        %v5573 = vshrl.u32 %v5572, 7
        %v5574 = vsub.s32 %v5571, %v5573
        %v5575 = vrot.slane %v5547, %v5574
        %v5576 = vcombine.high %v5554, %v5554
        %v5577 = vcombine.high %v5561, %v5561
        %v5578 = vcombine.high %v5568, %v5568
        %v5579 = vcombine.high %v5575, %v5575
        %v5580 = vcombine.high %v5228, %v5228
        %v5582 = vunpack.c.l.s4 1966171168
        %v5583 = vunpack.c.0.s8 %v5582
        %v5584 = vlaneseq
        %v5585 = vshrl.u32 %v5584, 7
        %v5586 = vsub.s32 %v5583, %v5585
        %v5587 = vrot.slane %v5228, %v5586
        %v5589 = vunpack.c.l.s4 1966171168
        %v5590 = vunpack.c.0.s8 %v5589
        %v5591 = vlaneseq
        %v5592 = vshrl.u32 %v5591, 7
        %v5593 = vsub.s32 %v5590, %v5592
        %v5594 = vrot.slane %v5580, %v5593
        %v5595 = vcombine.high %v5587, %v5587
        %v5596 = vcombine.high %v5594, %v5594
        %v5598 = vunpack.c.l.s4 1966171168
        %v5599 = vunpack.c.0.s8 %v5598
        %v5600 = vlaneseq
        %v5601 = vshrl.u32 %v5600, 7
        %v5602 = vsub.s32 %v5599, %v5601
        %v5603 = vrot.slane %v5587, %v5602
        %v5605 = vunpack.c.l.s4 1966171168
        %v5606 = vunpack.c.0.s8 %v5605
        %v5607 = vlaneseq
        %v5608 = vshrl.u32 %v5607, 7
        %v5609 = vsub.s32 %v5606, %v5608
        %v5610 = vrot.slane %v5594, %v5609
        %v5612 = vunpack.c.l.s4 1966171168
        %v5613 = vunpack.c.0.s8 %v5612
        %v5614 = vlaneseq
        %v5615 = vshrl.u32 %v5614, 7
        %v5616 = vsub.s32 %v5613, %v5615
        %v5617 = vrot.slane %v5595, %v5616
        %v5619 = vunpack.c.l.s4 1966171168
        %v5620 = vunpack.c.0.s8 %v5619
        %v5621 = vlaneseq
        %v5622 = vshrl.u32 %v5621, 7
        %v5623 = vsub.s32 %v5620, %v5622
        %v5624 = vrot.slane %v5596, %v5623
        %v5625 = vcombine.high %v5603, %v5603
        %v5626 = vcombine.high %v5610, %v5610
        %v5627 = vcombine.high %v5617, %v5617
        %v5628 = vcombine.high %v5624, %v5624
        %5693 = vst.msk [vmem:[%s235 + $0x2] sm:$0x1] %vm2020, %v5260
        %5694 = vst.msk [vmem:[%s235 + $0x6] sm:$0x1] %vm2020, %v5274
        %5695 = vst.msk [vmem:[%s235 + $0xa] sm:$0x1] %vm2020, %v5282
        %5696 = vst.msk [vmem:[%s235 + $0xe] sm:$0x1] %vm2020, %v5284
        %5697 = vst.msk [vmem:[%s235 + $0x12] sm:$0x1] %vm2020, %v5267
        %5698 = vst.msk [vmem:[%s235 + $0x16] sm:$0x1] %vm2020, %v5281
        %5699 = vst.msk [vmem:[%s235 + $0x1a] sm:$0x1] %vm2020, %v5283
        %5700 = vst.msk [vmem:[%s235 + $0x1e] sm:$0x1] %vm2020, %v5285
        %5701 = vst.msk [vmem:[%s235 + $0x22] sm:$0x1] %vm2020, %v5309
        %5702 = vst.msk [vmem:[%s235 + $0x26] sm:$0x1] %vm2020, %v5323
        %5703 = vst.msk [vmem:[%s235 + $0x2a] sm:$0x1] %vm2020, %v5331
        %5704 = vst.msk [vmem:[%s235 + $0x2e] sm:$0x1] %vm2020, %v5333
        %5705 = vst.msk [vmem:[%s235 + $0x32] sm:$0x1] %vm2020, %v5316
        %5706 = vst.msk [vmem:[%s235 + $0x36] sm:$0x1] %vm2020, %v5330
        %5707 = vst.msk [vmem:[%s235 + $0x3a] sm:$0x1] %vm2020, %v5332
        %5708 = vst.msk [vmem:[%s235 + $0x3e] sm:$0x1] %vm2020, %v5334
        %5709 = vst.msk [vmem:[%s235 + $0x42] sm:$0x1] %vm2020, %v5358
        %5710 = vst.msk [vmem:[%s235 + $0x46] sm:$0x1] %vm2020, %v5372
        %5711 = vst.msk [vmem:[%s235 + $0x4a] sm:$0x1] %vm2020, %v5380
        %5712 = vst.msk [vmem:[%s235 + $0x4e] sm:$0x1] %vm2020, %v5382
        %5713 = vst.msk [vmem:[%s235 + $0x52] sm:$0x1] %vm2020, %v5365
        %5714 = vst.msk [vmem:[%s235 + $0x56] sm:$0x1] %vm2020, %v5379
        %5715 = vst.msk [vmem:[%s235 + $0x5a] sm:$0x1] %vm2020, %v5381
        %5716 = vst.msk [vmem:[%s235 + $0x5e] sm:$0x1] %vm2020, %v5383
        %5717 = vst.msk [vmem:[%s235 + $0x62] sm:$0x1] %vm2020, %v5407
        %5718 = vst.msk [vmem:[%s235 + $0x66] sm:$0x1] %vm2020, %v5421
        %5719 = vst.msk [vmem:[%s235 + $0x6a] sm:$0x1] %vm2020, %v5429
        %5720 = vst.msk [vmem:[%s235 + $0x6e] sm:$0x1] %vm2020, %v5431
        %5721 = vst.msk [vmem:[%s235 + $0x72] sm:$0x1] %vm2020, %v5414
        %5722 = vst.msk [vmem:[%s235 + $0x76] sm:$0x1] %vm2020, %v5428
        %5723 = vst.msk [vmem:[%s235 + $0x7a] sm:$0x1] %vm2020, %v5430
        %5724 = vst.msk [vmem:[%s235 + $0x7e] sm:$0x1] %vm2020, %v5432
        %5725 = vst.msk [vmem:[%s235 + $0x82] sm:$0x1] %vm2020, %v5456
        %5726 = vst.msk [vmem:[%s235 + $0x86] sm:$0x1] %vm2020, %v5470
        %5727 = vst.msk [vmem:[%s235 + $0x8a] sm:$0x1] %vm2020, %v5478
        %5728 = vst.msk [vmem:[%s235 + $0x8e] sm:$0x1] %vm2020, %v5480
        %5729 = vst.msk [vmem:[%s235 + $0x92] sm:$0x1] %vm2020, %v5463
        %5730 = vst.msk [vmem:[%s235 + $0x96] sm:$0x1] %vm2020, %v5477
        %5731 = vst.msk [vmem:[%s235 + $0x9a] sm:$0x1] %vm2020, %v5479
        %5732 = vst.msk [vmem:[%s235 + $0x9e] sm:$0x1] %vm2020, %v5481
        %5733 = vst.msk [vmem:[%s235 + $0xa2] sm:$0x1] %vm2020, %v5505
        %5734 = vst.msk [vmem:[%s235 + $0xa6] sm:$0x1] %vm2020, %v5519
        %5735 = vst.msk [vmem:[%s235 + $0xaa] sm:$0x1] %vm2020, %v5527
        %5736 = vst.msk [vmem:[%s235 + $0xae] sm:$0x1] %vm2020, %v5529
        %5737 = vst.msk [vmem:[%s235 + $0xb2] sm:$0x1] %vm2020, %v5512
        %5738 = vst.msk [vmem:[%s235 + $0xb6] sm:$0x1] %vm2020, %v5526
        %5739 = vst.msk [vmem:[%s235 + $0xba] sm:$0x1] %vm2020, %v5528
        %5740 = vst.msk [vmem:[%s235 + $0xbe] sm:$0x1] %vm2020, %v5530
        %5741 = vst.msk [vmem:[%s235 + $0xc2] sm:$0x1] %vm2020, %v5554
        %5742 = vst.msk [vmem:[%s235 + $0xc6] sm:$0x1] %vm2020, %v5568
        %5743 = vst.msk [vmem:[%s235 + $0xca] sm:$0x1] %vm2020, %v5576
        %5744 = vst.msk [vmem:[%s235 + $0xce] sm:$0x1] %vm2020, %v5578
        %5745 = vst.msk [vmem:[%s235 + $0xd2] sm:$0x1] %vm2020, %v5561
        %5746 = vst.msk [vmem:[%s235 + $0xd6] sm:$0x1] %vm2020, %v5575
        %5747 = vst.msk [vmem:[%s235 + $0xda] sm:$0x1] %vm2020, %v5577
        %5748 = vst.msk [vmem:[%s235 + $0xde] sm:$0x1] %vm2020, %v5579
        %5749 = vst.msk [vmem:[%s235 + $0xe2] sm:$0x1] %vm2020, %v5603
        %5750 = vst.msk [vmem:[%s235 + $0xe6] sm:$0x1] %vm2020, %v5617
        %5751 = vst.msk [vmem:[%s235 + $0xea] sm:$0x1] %vm2020, %v5625
        %5752 = vst.msk [vmem:[%s235 + $0xee] sm:$0x1] %vm2020, %v5627
        %5753 = vst.msk [vmem:[%s235 + $0xf2] sm:$0x1] %vm2020, %v5610
        %5754 = vst.msk [vmem:[%s235 + $0xf6] sm:$0x1] %vm2020, %v5624
        %5755 = vst.msk [vmem:[%s235 + $0xfa] sm:$0x1] %vm2020, %v5626
        %5756 = vst.msk [vmem:[%s235 + $0xfe] sm:$0x1] %vm2020, %v5628
        %v5757 = vld [vmem:[%s205 + $0x18] sm:$0xff]
        %v5758 = vld [vmem:[%s205 + $0x38] sm:$0xff]
        %v5759 = vld [vmem:[%s205 + $0x58] sm:$0xff]
        %v5760 = vld [vmem:[%s205 + $0x78] sm:$0xff]
        %5761 = vxpose.xlu0.b32.start [1/16] %v5757, 128
        %5762 = vxpose.xlu0.b32.cont [2/16] %v5758, 128
        %5763 = vxpose.xlu0.b32.cont [3/16] %v5759, 128
        %5764 = vxpose.xlu0.b32.cont [4/16] %v5760, 128
        %5765 = vxpose.xlu0.b32.cont [5/16] 0.0, 128
        %5766 = vxpose.xlu0.b32.cont [6/16] 0.0, 128
        %5767 = vxpose.xlu0.b32.cont [7/16] 0.0, 128
        %5768 = vxpose.xlu0.b32.cont [8/16] 0.0, 128
        %5769 = vxpose.xlu0.b32.cont [9/16] 0.0, 128
        %5770 = vxpose.xlu0.b32.cont [10/16] 0.0, 128
        %5771 = vxpose.xlu0.b32.cont [11/16] 0.0, 128
        %5772 = vxpose.xlu0.b32.cont [12/16] 0.0, 128
        %5773 = vxpose.xlu0.b32.cont [13/16] 0.0, 128
        %5774 = vxpose.xlu0.b32.cont [14/16] 0.0, 128
        %5775 = vxpose.xlu0.b32.cont [15/16] 0.0, 128
        %5776 = vxpose.xlu0.b32.end [16/16] 0.0, 128
        %v5777 = vpop.trf.xlu0
        %v5778 = vpop.trf.xlu0
        %v5779 = vpop.trf.xlu0
        %v5780 = vpop.trf.xlu0
        %v5781 = vpop.trf.xlu0
        %v5782 = vpop.trf.xlu0
        %v5783 = vpop.trf.xlu0
        %v5784 = vpop.trf.xlu0
        %v5785 = vpop.trf.xlu0
        %v5786 = vpop.trf.xlu0
        %v5787 = vpop.trf.xlu0
        %v5788 = vpop.trf.xlu0
        %v5789 = vpop.trf.xlu0
        %v5790 = vpop.trf.xlu0
        %v5791 = vpop.trf.xlu0
        %v5792 = vpop.trf.xlu0
        %v5793 = vld [vmem:[#allocation5] sm:$0xff]
        %v5794 = vld [vmem:[#allocation5 + $0x8] sm:$0xff]
        %v5795 = vld [vmem:[#allocation5 + $0x10] sm:$0xff]
        %v5796 = vld [vmem:[#allocation5 + $0x18] sm:$0xff]
        %v5797 = vld [vmem:[#allocation5 + $0x20] sm:$0xff]
        %v5798 = vld [vmem:[#allocation5 + $0x28] sm:$0xff]
        %v5799 = vld [vmem:[#allocation5 + $0x30] sm:$0xff]
        %v5800 = vld [vmem:[#allocation5 + $0x38] sm:$0xff]
        %v5801 = vld [vmem:[%s281] sm:$0xff]
        %v5802 = vld [vmem:[%s281 + $0x8] sm:$0xff]
        %v5803 = vld [vmem:[%s281 + $0x10] sm:$0xff]
        %v5804 = vld [vmem:[%s281 + $0x18] sm:$0xff]
        %v5805 = vld [vmem:[%s281 + $0x20] sm:$0xff]
        %v5806 = vld [vmem:[%s281 + $0x28] sm:$0xff]
        %v5807 = vld [vmem:[%s281 + $0x30] sm:$0xff]
        %v5808 = vld [vmem:[%s281 + $0x38] sm:$0xff]
        %v5813 = vrot.slane %v5777, 1
        %v5814 = vsel %vm295, %v5778, %v5813
        %v5815 = vrot.slane %v5779, 7
        %v5816 = vsel %vm298, %v5815, %v5814
        %v5817 = vrot.slane %v5780, 6
        %v5818 = vsel %vm301, %v5817, %v5816
        %v5820 = vsel %vm303, %v5801, 0
        %v5823 = vsel %vm303, %v5802, 0
        %v5826 = vsel %vm303, %v5803, 0
        %v5829 = vsel %vm303, %v5804, 0
        %v5832 = vsel %vm303, %v5805, 0
        %v5835 = vsel %vm303, %v5806, 0
        %v5838 = vsel %vm303, %v5807, 0
        %v5841 = vsel %vm303, %v5808, 0
        %v5843 = vsel %vm303, %v5818, 0
        %5845 = vmatprep.subr.mxu0 0.0
        %5846 = vmatpush1.xpose.msra.mxu0 %v5843
        %5847 = vmatprep.subr.mxu0 0.0
        %5848 = vmatpush1.xpose.msra.mxu0 0.0
        %5849 = vmatprep.subr.mxu0 0.0
        %5850 = vmatpush1.xpose.msra.mxu0 0.0
        %5851 = vmatprep.subr.mxu0 0.0
        %5852 = vmatpush1.xpose.msra.mxu0 0.0
        %5853 = vmatprep.subr.mxu0 0.0
        %5854 = vmatpush1.xpose.msra.mxu0 0.0
        %5855 = vmatprep.subr.mxu0 0.0
        %5856 = vmatpush1.xpose.msra.mxu0 0.0
        %5857 = vmatprep.subr.mxu0 0.0
        %5858 = vmatpush1.xpose.msra.mxu0 0.0
        %5859 = vmatprep.subr.mxu0 0.0
        %5860 = vmatpush1.xpose.msra.mxu0 0.0
        %5861 = vmatprep.subr.mxu0 0.0
        %5862 = vmatpush1.xpose.msra.mxu0 0.0
        %5863 = vmatprep.subr.mxu0 0.0
        %5864 = vmatpush1.xpose.msra.mxu0 0.0
        %5865 = vmatprep.subr.mxu0 0.0
        %5866 = vmatpush1.xpose.msra.mxu0 0.0
        %5867 = vmatprep.subr.mxu0 0.0
        %5868 = vmatpush1.xpose.msra.mxu0 0.0
        %5869 = vmatprep.subr.mxu0 0.0
        %5870 = vmatpush1.xpose.msra.mxu0 0.0
        %5871 = vmatprep.subr.mxu0 0.0
        %5872 = vmatpush1.xpose.msra.mxu0 0.0
        %5873 = vmatprep.subr.mxu0 0.0
        %5874 = vmatpush1.xpose.msra.mxu0 0.0
        %5875 = vmatprep.subr.mxu0 0.0
        %5876 = vmatpush1.xpose.msra.mxu0 0.0
        %5877 = vmatprep.subr.mxu0 0.0
        %5878 = vmatpush1.xpose.msra.mxu0 0.0
        %5879 = vmatprep.subr.mxu0 0.0
        %5880 = vmatpush1.xpose.msra.mxu0 0.0
        %5881 = vmatprep.subr.mxu0 0.0
        %5882 = vmatpush1.xpose.msra.mxu0 0.0
        %5883 = vmatprep.subr.mxu0 0.0
        %5884 = vmatpush1.xpose.msra.mxu0 0.0
        %5885 = vmatprep.subr.mxu0 0.0
        %5886 = vmatpush1.xpose.msra.mxu0 0.0
        %5887 = vmatprep.subr.mxu0 0.0
        %5888 = vmatpush1.xpose.msra.mxu0 0.0
        %5889 = vmatprep.subr.mxu0 0.0
        %5890 = vmatpush1.xpose.msra.mxu0 0.0
        %5891 = vmatprep.subr.mxu0 0.0
        %5892 = vmatpush1.xpose.msra.mxu0 0.0
        %5893 = vmatprep.subr.mxu0 0.0
        %5894 = vmatpush1.xpose.msra.mxu0 0.0
        %5895 = vmatprep.subr.mxu0 0.0
        %5896 = vmatpush1.xpose.msra.mxu0 0.0
        %5897 = vmatprep.subr.mxu0 0.0
        %5898 = vmatpush1.xpose.msra.mxu0 0.0
        %5899 = vmatprep.subr.mxu0 0.0
        %5900 = vmatpush1.xpose.msra.mxu0 0.0
        %5901 = vmatprep.subr.mxu0 0.0
        %5902 = vmatpush1.xpose.msra.mxu0 0.0
        %5903 = vmatprep.subr.mxu0 0.0
        %5904 = vmatpush1.xpose.msra.mxu0 0.0
        %5905 = vmatprep.subr.mxu0 0.0
        %5906 = vmatpush1.xpose.msra.mxu0 0.0
        %5907 = vmatprep.subr.mxu0 0.0
        %5908 = vmatpush1.xpose.msra.mxu0 0.0
        %5909 = vmatprep.mubr.f32.mxu0 0.0
        %5910 = vmatmul.mubr.f32.gmra.mrb[0].mxu0 %v5820
        %v5911 = vpop.f32.mrb[0].mxu0
        %v5912 = vadd.f32 0.0, %v5911
        %v5913 = vpop.f32.mrb[0].mxu0
        %5914 = vmatprep.mubr.f32.mxu0 0.0
        %5915 = vmatmul.mubr.f32.gmra.mrb[0].mxu0 %v5823
        %v5916 = vpop.f32.mrb[0].mxu0
        %v5917 = vadd.f32 0.0, %v5916
        %v5918 = vpop.f32.mrb[0].mxu0
        %5919 = vmatprep.mubr.f32.mxu0 0.0
        %5920 = vmatmul.mubr.f32.gmra.mrb[0].mxu0 %v5826
        %v5921 = vpop.f32.mrb[0].mxu0
        %v5922 = vadd.f32 0.0, %v5921
        %v5923 = vpop.f32.mrb[0].mxu0
        %5924 = vmatprep.mubr.f32.mxu0 0.0
        %5925 = vmatmul.mubr.f32.gmra.mrb[0].mxu0 %v5829
        %v5926 = vpop.f32.mrb[0].mxu0
        %v5927 = vadd.f32 0.0, %v5926
        %v5928 = vpop.f32.mrb[0].mxu0
        %5929 = vmatprep.mubr.f32.mxu0 0.0
        %5930 = vmatmul.mubr.f32.gmra.mrb[0].mxu0 %v5832
        %v5931 = vpop.f32.mrb[0].mxu0
        %v5932 = vadd.f32 0.0, %v5931
        %v5933 = vpop.f32.mrb[0].mxu0
        %5934 = vmatprep.mubr.f32.mxu0 0.0
        %5935 = vmatmul.mubr.f32.gmra.mrb[0].mxu0 %v5835
        %v5936 = vpop.f32.mrb[0].mxu0
        %v5937 = vadd.f32 0.0, %v5936
        %v5938 = vpop.f32.mrb[0].mxu0
        %5939 = vmatprep.mubr.f32.mxu0 0.0
        %5940 = vmatmul.mubr.f32.gmra.mrb[0].mxu0 %v5838
        %v5941 = vpop.f32.mrb[0].mxu0
        %v5942 = vadd.f32 0.0, %v5941
        %v5943 = vpop.f32.mrb[0].mxu0
        %5944 = vmatprep.mubr.f32.mxu0 0.0
        %5945 = vmatmul.mubr.f32.gmra.mrb[0].mxu0 %v5841
        %v5946 = vpop.f32.mrb[0].mxu0
        %v5947 = vadd.f32 0.0, %v5946
        %v5948 = vpop.f32.mrb[0].mxu0
        %5949 = vdwg.mxu0
        %v5950 = vrot.slane %v5778, 7
        %v5951 = vsel %vm295, %v5950, %v5777
        %v5952 = vrot.slane %v5779, 6
        %v5953 = vsel %vm298, %v5952, %v5951
        %v5954 = vrot.slane %v5780, 5
        %v5955 = vsel %vm301, %v5954, %v5953
        %v5957 = vsel %vm303, %v5793, 0
        %v5960 = vsel %vm303, %v5794, 0
        %v5963 = vsel %vm303, %v5795, 0
        %v5966 = vsel %vm303, %v5796, 0
        %v5969 = vsel %vm303, %v5797, 0
        %v5972 = vsel %vm303, %v5798, 0
        %v5975 = vsel %vm303, %v5799, 0
        %v5978 = vsel %vm303, %v5800, 0
        %v5980 = vsel %vm303, %v5955, 0
        %5982 = vmatprep.subr.mxu0 0.0
        %5983 = vmatpush1.xpose.msra.mxu0 %v5980
        %5984 = vmatprep.subr.mxu0 0.0
        %5985 = vmatpush1.xpose.msra.mxu0 0.0
        %5986 = vmatprep.subr.mxu0 0.0
        %5987 = vmatpush1.xpose.msra.mxu0 0.0
        %5988 = vmatprep.subr.mxu0 0.0
        %5989 = vmatpush1.xpose.msra.mxu0 0.0
        %5990 = vmatprep.subr.mxu0 0.0
        %5991 = vmatpush1.xpose.msra.mxu0 0.0
        %5992 = vmatprep.subr.mxu0 0.0
        %5993 = vmatpush1.xpose.msra.mxu0 0.0
        %5994 = vmatprep.subr.mxu0 0.0
        %5995 = vmatpush1.xpose.msra.mxu0 0.0
        %5996 = vmatprep.subr.mxu0 0.0
        %5997 = vmatpush1.xpose.msra.mxu0 0.0
        %5998 = vmatprep.subr.mxu0 0.0
        %5999 = vmatpush1.xpose.msra.mxu0 0.0
        %6000 = vmatprep.subr.mxu0 0.0
        %6001 = vmatpush1.xpose.msra.mxu0 0.0
        %6002 = vmatprep.subr.mxu0 0.0
        %6003 = vmatpush1.xpose.msra.mxu0 0.0
        %6004 = vmatprep.subr.mxu0 0.0
        %6005 = vmatpush1.xpose.msra.mxu0 0.0
        %6006 = vmatprep.subr.mxu0 0.0
        %6007 = vmatpush1.xpose.msra.mxu0 0.0
        %6008 = vmatprep.subr.mxu0 0.0
        %6009 = vmatpush1.xpose.msra.mxu0 0.0
        %6010 = vmatprep.subr.mxu0 0.0
        %6011 = vmatpush1.xpose.msra.mxu0 0.0
        %6012 = vmatprep.subr.mxu0 0.0
        %6013 = vmatpush1.xpose.msra.mxu0 0.0
        %6014 = vmatprep.subr.mxu0 0.0
        %6015 = vmatpush1.xpose.msra.mxu0 0.0
        %6016 = vmatprep.subr.mxu0 0.0
        %6017 = vmatpush1.xpose.msra.mxu0 0.0
        %6018 = vmatprep.subr.mxu0 0.0
        %6019 = vmatpush1.xpose.msra.mxu0 0.0
        %6020 = vmatprep.subr.mxu0 0.0
        %6021 = vmatpush1.xpose.msra.mxu0 0.0
        %6022 = vmatprep.subr.mxu0 0.0
        %6023 = vmatpush1.xpose.msra.mxu0 0.0
        %6024 = vmatprep.subr.mxu0 0.0
        %6025 = vmatpush1.xpose.msra.mxu0 0.0
        %6026 = vmatprep.subr.mxu0 0.0
        %6027 = vmatpush1.xpose.msra.mxu0 0.0
        %6028 = vmatprep.subr.mxu0 0.0
        %6029 = vmatpush1.xpose.msra.mxu0 0.0
        %6030 = vmatprep.subr.mxu0 0.0
        %6031 = vmatpush1.xpose.msra.mxu0 0.0
        %6032 = vmatprep.subr.mxu0 0.0
        %6033 = vmatpush1.xpose.msra.mxu0 0.0
        %6034 = vmatprep.subr.mxu0 0.0
        %6035 = vmatpush1.xpose.msra.mxu0 0.0
        %6036 = vmatprep.subr.mxu0 0.0
        %6037 = vmatpush1.xpose.msra.mxu0 0.0
        %6038 = vmatprep.subr.mxu0 0.0
        %6039 = vmatpush1.xpose.msra.mxu0 0.0
        %6040 = vmatprep.subr.mxu0 0.0
        %6041 = vmatpush1.xpose.msra.mxu0 0.0
        %6042 = vmatprep.subr.mxu0 0.0
        %6043 = vmatpush1.xpose.msra.mxu0 0.0
        %6044 = vmatprep.subr.mxu0 0.0
        %6045 = vmatpush1.xpose.msra.mxu0 0.0
        %6046 = vmatprep.mubr.f32.mxu0 0.0
        %6047 = vmatmul.mubr.f32.gmra.mrb[0].mxu0 %v5957
        %v6048 = vpop.f32.mrb[0].mxu0
        %v6049 = vadd.f32 %v5912, %v6048
        %v6050 = vpop.f32.mrb[0].mxu0
        %6051 = vmatprep.mubr.f32.mxu0 0.0
        %6052 = vmatmul.mubr.f32.gmra.mrb[0].mxu0 %v5960
        %v6053 = vpop.f32.mrb[0].mxu0
        %v6054 = vadd.f32 %v5917, %v6053
        %v6055 = vpop.f32.mrb[0].mxu0
        %6056 = vmatprep.mubr.f32.mxu0 0.0
        %6057 = vmatmul.mubr.f32.gmra.mrb[0].mxu0 %v5963
        %v6058 = vpop.f32.mrb[0].mxu0
        %v6059 = vadd.f32 %v5922, %v6058
        %v6060 = vpop.f32.mrb[0].mxu0
        %6061 = vmatprep.mubr.f32.mxu0 0.0
        %6062 = vmatmul.mubr.f32.gmra.mrb[0].mxu0 %v5966
        %v6063 = vpop.f32.mrb[0].mxu0
        %v6064 = vadd.f32 %v5927, %v6063
        %v6065 = vpop.f32.mrb[0].mxu0
        %6066 = vmatprep.mubr.f32.mxu0 0.0
        %6067 = vmatmul.mubr.f32.gmra.mrb[0].mxu0 %v5969
        %v6068 = vpop.f32.mrb[0].mxu0
        %v6069 = vadd.f32 %v5932, %v6068
        %v6070 = vpop.f32.mrb[0].mxu0
        %6071 = vmatprep.mubr.f32.mxu0 0.0
        %6072 = vmatmul.mubr.f32.gmra.mrb[0].mxu0 %v5972
        %v6073 = vpop.f32.mrb[0].mxu0
        %v6074 = vadd.f32 %v5937, %v6073
        %v6075 = vpop.f32.mrb[0].mxu0
        %6076 = vmatprep.mubr.f32.mxu0 0.0
        %6077 = vmatmul.mubr.f32.gmra.mrb[0].mxu0 %v5975
        %v6078 = vpop.f32.mrb[0].mxu0
        %v6079 = vadd.f32 %v5942, %v6078
        %v6080 = vpop.f32.mrb[0].mxu0
        %6081 = vmatprep.mubr.f32.mxu0 0.0
        %6082 = vmatmul.mubr.f32.gmra.mrb[0].mxu0 %v5978
        %v6083 = vpop.f32.mrb[0].mxu0
        %v6084 = vadd.f32 %v5947, %v6083
        %v6085 = vpop.f32.mrb[0].mxu0
        %6086 = vdwg.mxu0
        %v6087 = vld [vmem:[%s572] sm:$0xff]
        %v6088 = vld [vmem:[%s572 + $0x8] sm:$0xff]
        %v6089 = vld [vmem:[%s572 + $0x10] sm:$0xff]
        %v6090 = vld [vmem:[%s572 + $0x18] sm:$0xff]
        %v6091 = vld [vmem:[%s572 + $0x20] sm:$0xff]
        %v6092 = vld [vmem:[%s572 + $0x28] sm:$0xff]
        %v6093 = vld [vmem:[%s572 + $0x30] sm:$0xff]
        %v6094 = vld [vmem:[%s572 + $0x38] sm:$0xff]
        %v6095 = vrot.slane %v5777, 2
        %v6096 = vrot.slane %v5778, 1
        %v6097 = vsel %vm295, %v6096, %v6095
        %v6098 = vsel %vm298, %v5779, %v6097
        %v6099 = vrot.slane %v5780, 7
        %v6100 = vsel %vm301, %v6099, %v6098
        %v6102 = vsel %vm303, %v6087, 0
        %v6105 = vsel %vm303, %v6088, 0
        %v6108 = vsel %vm303, %v6089, 0
        %v6111 = vsel %vm303, %v6090, 0
        %v6114 = vsel %vm303, %v6091, 0
        %v6117 = vsel %vm303, %v6092, 0
        %v6120 = vsel %vm303, %v6093, 0
        %v6123 = vsel %vm303, %v6094, 0
        %v6125 = vsel %vm303, %v6100, 0
        %6127 = vmatprep.subr.mxu0 0.0
        %6128 = vmatpush1.xpose.msra.mxu0 %v6125
        %6129 = vmatprep.subr.mxu0 0.0
        %6130 = vmatpush1.xpose.msra.mxu0 0.0
        %6131 = vmatprep.subr.mxu0 0.0
        %6132 = vmatpush1.xpose.msra.mxu0 0.0
        %6133 = vmatprep.subr.mxu0 0.0
        %6134 = vmatpush1.xpose.msra.mxu0 0.0
        %6135 = vmatprep.subr.mxu0 0.0
        %6136 = vmatpush1.xpose.msra.mxu0 0.0
        %6137 = vmatprep.subr.mxu0 0.0
        %6138 = vmatpush1.xpose.msra.mxu0 0.0
        %6139 = vmatprep.subr.mxu0 0.0
        %6140 = vmatpush1.xpose.msra.mxu0 0.0
        %6141 = vmatprep.subr.mxu0 0.0
        %6142 = vmatpush1.xpose.msra.mxu0 0.0
        %6143 = vmatprep.subr.mxu0 0.0
        %6144 = vmatpush1.xpose.msra.mxu0 0.0
        %6145 = vmatprep.subr.mxu0 0.0
        %6146 = vmatpush1.xpose.msra.mxu0 0.0
        %6147 = vmatprep.subr.mxu0 0.0
        %6148 = vmatpush1.xpose.msra.mxu0 0.0
        %6149 = vmatprep.subr.mxu0 0.0
        %6150 = vmatpush1.xpose.msra.mxu0 0.0
        %6151 = vmatprep.subr.mxu0 0.0
        %6152 = vmatpush1.xpose.msra.mxu0 0.0
        %6153 = vmatprep.subr.mxu0 0.0
        %6154 = vmatpush1.xpose.msra.mxu0 0.0
        %6155 = vmatprep.subr.mxu0 0.0
        %6156 = vmatpush1.xpose.msra.mxu0 0.0
        %6157 = vmatprep.subr.mxu0 0.0
        %6158 = vmatpush1.xpose.msra.mxu0 0.0
        %6159 = vmatprep.subr.mxu0 0.0
        %6160 = vmatpush1.xpose.msra.mxu0 0.0
        %6161 = vmatprep.subr.mxu0 0.0
        %6162 = vmatpush1.xpose.msra.mxu0 0.0
        %6163 = vmatprep.subr.mxu0 0.0
        %6164 = vmatpush1.xpose.msra.mxu0 0.0
        %6165 = vmatprep.subr.mxu0 0.0
        %6166 = vmatpush1.xpose.msra.mxu0 0.0
        %6167 = vmatprep.subr.mxu0 0.0
        %6168 = vmatpush1.xpose.msra.mxu0 0.0
        %6169 = vmatprep.subr.mxu0 0.0
        %6170 = vmatpush1.xpose.msra.mxu0 0.0
        %6171 = vmatprep.subr.mxu0 0.0
        %6172 = vmatpush1.xpose.msra.mxu0 0.0
        %6173 = vmatprep.subr.mxu0 0.0
        %6174 = vmatpush1.xpose.msra.mxu0 0.0
        %6175 = vmatprep.subr.mxu0 0.0
        %6176 = vmatpush1.xpose.msra.mxu0 0.0
        %6177 = vmatprep.subr.mxu0 0.0
        %6178 = vmatpush1.xpose.msra.mxu0 0.0
        %6179 = vmatprep.subr.mxu0 0.0
        %6180 = vmatpush1.xpose.msra.mxu0 0.0
        %6181 = vmatprep.subr.mxu0 0.0
        %6182 = vmatpush1.xpose.msra.mxu0 0.0
        %6183 = vmatprep.subr.mxu0 0.0
        %6184 = vmatpush1.xpose.msra.mxu0 0.0
        %6185 = vmatprep.subr.mxu0 0.0
        %6186 = vmatpush1.xpose.msra.mxu0 0.0
        %6187 = vmatprep.subr.mxu0 0.0
        %6188 = vmatpush1.xpose.msra.mxu0 0.0
        %6189 = vmatprep.subr.mxu0 0.0
        %6190 = vmatpush1.xpose.msra.mxu0 0.0
        %6191 = vmatprep.mubr.f32.mxu0 0.0
        %6192 = vmatmul.mubr.f32.gmra.mrb[0].mxu0 %v6102
        %v6193 = vpop.f32.mrb[0].mxu0
        %v6194 = vadd.f32 0.0, %v6193
        %v6195 = vpop.f32.mrb[0].mxu0
        %6196 = vmatprep.mubr.f32.mxu0 0.0
        %6197 = vmatmul.mubr.f32.gmra.mrb[0].mxu0 %v6105
        %v6198 = vpop.f32.mrb[0].mxu0
        %v6199 = vadd.f32 0.0, %v6198
        %v6200 = vpop.f32.mrb[0].mxu0
        %6201 = vmatprep.mubr.f32.mxu0 0.0
        %6202 = vmatmul.mubr.f32.gmra.mrb[0].mxu0 %v6108
        %v6203 = vpop.f32.mrb[0].mxu0
        %v6204 = vadd.f32 0.0, %v6203
        %v6205 = vpop.f32.mrb[0].mxu0
        %6206 = vmatprep.mubr.f32.mxu0 0.0
        %6207 = vmatmul.mubr.f32.gmra.mrb[0].mxu0 %v6111
        %v6208 = vpop.f32.mrb[0].mxu0
        %v6209 = vadd.f32 0.0, %v6208
        %v6210 = vpop.f32.mrb[0].mxu0
        %6211 = vmatprep.mubr.f32.mxu0 0.0
        %6212 = vmatmul.mubr.f32.gmra.mrb[0].mxu0 %v6114
        %v6213 = vpop.f32.mrb[0].mxu0
        %v6214 = vadd.f32 0.0, %v6213
        %v6215 = vpop.f32.mrb[0].mxu0
        %6216 = vmatprep.mubr.f32.mxu0 0.0
        %6217 = vmatmul.mubr.f32.gmra.mrb[0].mxu0 %v6117
        %v6218 = vpop.f32.mrb[0].mxu0
        %v6219 = vadd.f32 0.0, %v6218
        %v6220 = vpop.f32.mrb[0].mxu0
        %6221 = vmatprep.mubr.f32.mxu0 0.0
        %6222 = vmatmul.mubr.f32.gmra.mrb[0].mxu0 %v6120
        %v6223 = vpop.f32.mrb[0].mxu0
        %v6224 = vadd.f32 0.0, %v6223
        %v6225 = vpop.f32.mrb[0].mxu0
        %6226 = vmatprep.mubr.f32.mxu0 0.0
        %6227 = vmatmul.mubr.f32.gmra.mrb[0].mxu0 %v6123
        %v6228 = vpop.f32.mrb[0].mxu0
        %v6229 = vadd.f32 0.0, %v6228
        %v6230 = vpop.f32.mrb[0].mxu0
        %6231 = vdwg.mxu0
        %v6232 = vadd.f32 %v6049, %v6194
        %v6233 = vadd.f32 %v6054, %v6199
        %v6234 = vadd.f32 %v6059, %v6204
        %v6235 = vadd.f32 %v6064, %v6209
        %v6236 = vadd.f32 %v6069, %v6214
        %v6237 = vadd.f32 %v6074, %v6219
        %v6238 = vadd.f32 %v6079, %v6224
        %v6239 = vadd.f32 %v6084, %v6229
        %v6240 = vld [vmem:[%s726] sm:$0xff]
        %v6241 = vld [vmem:[%s726 + $0x8] sm:$0xff]
        %v6242 = vld [vmem:[%s726 + $0x10] sm:$0xff]
        %v6243 = vld [vmem:[%s726 + $0x18] sm:$0xff]
        %v6244 = vld [vmem:[%s726 + $0x20] sm:$0xff]
        %v6245 = vld [vmem:[%s726 + $0x28] sm:$0xff]
        %v6246 = vld [vmem:[%s726 + $0x30] sm:$0xff]
        %v6247 = vld [vmem:[%s726 + $0x38] sm:$0xff]
        %v6248 = vrot.slane %v5777, 3
        %v6249 = vrot.slane %v5778, 2
        %v6250 = vsel %vm295, %v6249, %v6248
        %v6251 = vrot.slane %v5779, 1
        %v6252 = vsel %vm298, %v6251, %v6250
        %v6253 = vsel %vm301, %v5780, %v6252
        %v6255 = vsel %vm303, %v6240, 0
        %v6258 = vsel %vm303, %v6241, 0
        %v6261 = vsel %vm303, %v6242, 0
        %v6264 = vsel %vm303, %v6243, 0
        %v6267 = vsel %vm303, %v6244, 0
        %v6270 = vsel %vm303, %v6245, 0
        %v6273 = vsel %vm303, %v6246, 0
        %v6276 = vsel %vm303, %v6247, 0
        %v6278 = vsel %vm303, %v6253, 0
        %6280 = vmatprep.subr.mxu0 0.0
        %6281 = vmatpush1.xpose.msra.mxu0 %v6278
        %6282 = vmatprep.subr.mxu0 0.0
        %6283 = vmatpush1.xpose.msra.mxu0 0.0
        %6284 = vmatprep.subr.mxu0 0.0
        %6285 = vmatpush1.xpose.msra.mxu0 0.0
        %6286 = vmatprep.subr.mxu0 0.0
        %6287 = vmatpush1.xpose.msra.mxu0 0.0
        %6288 = vmatprep.subr.mxu0 0.0
        %6289 = vmatpush1.xpose.msra.mxu0 0.0
        %6290 = vmatprep.subr.mxu0 0.0
        %6291 = vmatpush1.xpose.msra.mxu0 0.0
        %6292 = vmatprep.subr.mxu0 0.0
        %6293 = vmatpush1.xpose.msra.mxu0 0.0
        %6294 = vmatprep.subr.mxu0 0.0
        %6295 = vmatpush1.xpose.msra.mxu0 0.0
        %6296 = vmatprep.subr.mxu0 0.0
        %6297 = vmatpush1.xpose.msra.mxu0 0.0
        %6298 = vmatprep.subr.mxu0 0.0
        %6299 = vmatpush1.xpose.msra.mxu0 0.0
        %6300 = vmatprep.subr.mxu0 0.0
        %6301 = vmatpush1.xpose.msra.mxu0 0.0
        %6302 = vmatprep.subr.mxu0 0.0
        %6303 = vmatpush1.xpose.msra.mxu0 0.0
        %6304 = vmatprep.subr.mxu0 0.0
        %6305 = vmatpush1.xpose.msra.mxu0 0.0
        %6306 = vmatprep.subr.mxu0 0.0
        %6307 = vmatpush1.xpose.msra.mxu0 0.0
        %6308 = vmatprep.subr.mxu0 0.0
        %6309 = vmatpush1.xpose.msra.mxu0 0.0
        %6310 = vmatprep.subr.mxu0 0.0
        %6311 = vmatpush1.xpose.msra.mxu0 0.0
        %6312 = vmatprep.subr.mxu0 0.0
        %6313 = vmatpush1.xpose.msra.mxu0 0.0
        %6314 = vmatprep.subr.mxu0 0.0
        %6315 = vmatpush1.xpose.msra.mxu0 0.0
        %6316 = vmatprep.subr.mxu0 0.0
        %6317 = vmatpush1.xpose.msra.mxu0 0.0
        %6318 = vmatprep.subr.mxu0 0.0
        %6319 = vmatpush1.xpose.msra.mxu0 0.0
        %6320 = vmatprep.subr.mxu0 0.0
        %6321 = vmatpush1.xpose.msra.mxu0 0.0
        %6322 = vmatprep.subr.mxu0 0.0
        %6323 = vmatpush1.xpose.msra.mxu0 0.0
        %6324 = vmatprep.subr.mxu0 0.0
        %6325 = vmatpush1.xpose.msra.mxu0 0.0
        %6326 = vmatprep.subr.mxu0 0.0
        %6327 = vmatpush1.xpose.msra.mxu0 0.0
        %6328 = vmatprep.subr.mxu0 0.0
        %6329 = vmatpush1.xpose.msra.mxu0 0.0
        %6330 = vmatprep.subr.mxu0 0.0
        %6331 = vmatpush1.xpose.msra.mxu0 0.0
        %6332 = vmatprep.subr.mxu0 0.0
        %6333 = vmatpush1.xpose.msra.mxu0 0.0
        %6334 = vmatprep.subr.mxu0 0.0
        %6335 = vmatpush1.xpose.msra.mxu0 0.0
        %6336 = vmatprep.subr.mxu0 0.0
        %6337 = vmatpush1.xpose.msra.mxu0 0.0
        %6338 = vmatprep.subr.mxu0 0.0
        %6339 = vmatpush1.xpose.msra.mxu0 0.0
        %6340 = vmatprep.subr.mxu0 0.0
        %6341 = vmatpush1.xpose.msra.mxu0 0.0
        %6342 = vmatprep.subr.mxu0 0.0
        %6343 = vmatpush1.xpose.msra.mxu0 0.0
        %6344 = vmatprep.mubr.f32.mxu0 0.0
        %6345 = vmatmul.mubr.f32.gmra.mrb[0].mxu0 %v6255
        %v6346 = vpop.f32.mrb[0].mxu0
        %v6347 = vadd.f32 0.0, %v6346
        %v6348 = vpop.f32.mrb[0].mxu0
        %6349 = vmatprep.mubr.f32.mxu0 0.0
        %6350 = vmatmul.mubr.f32.gmra.mrb[0].mxu0 %v6258
        %v6351 = vpop.f32.mrb[0].mxu0
        %v6352 = vadd.f32 0.0, %v6351
        %v6353 = vpop.f32.mrb[0].mxu0
        %6354 = vmatprep.mubr.f32.mxu0 0.0
        %6355 = vmatmul.mubr.f32.gmra.mrb[0].mxu0 %v6261
        %v6356 = vpop.f32.mrb[0].mxu0
        %v6357 = vadd.f32 0.0, %v6356
        %v6358 = vpop.f32.mrb[0].mxu0
        %6359 = vmatprep.mubr.f32.mxu0 0.0
        %6360 = vmatmul.mubr.f32.gmra.mrb[0].mxu0 %v6264
        %v6361 = vpop.f32.mrb[0].mxu0
        %v6362 = vadd.f32 0.0, %v6361
        %v6363 = vpop.f32.mrb[0].mxu0
        %6364 = vmatprep.mubr.f32.mxu0 0.0
        %6365 = vmatmul.mubr.f32.gmra.mrb[0].mxu0 %v6267
        %v6366 = vpop.f32.mrb[0].mxu0
        %v6367 = vadd.f32 0.0, %v6366
        %v6368 = vpop.f32.mrb[0].mxu0
        %6369 = vmatprep.mubr.f32.mxu0 0.0
        %6370 = vmatmul.mubr.f32.gmra.mrb[0].mxu0 %v6270
        %v6371 = vpop.f32.mrb[0].mxu0
        %v6372 = vadd.f32 0.0, %v6371
        %v6373 = vpop.f32.mrb[0].mxu0
        %6374 = vmatprep.mubr.f32.mxu0 0.0
        %6375 = vmatmul.mubr.f32.gmra.mrb[0].mxu0 %v6273
        %v6376 = vpop.f32.mrb[0].mxu0
        %v6377 = vadd.f32 0.0, %v6376
        %v6378 = vpop.f32.mrb[0].mxu0
        %6379 = vmatprep.mubr.f32.mxu0 0.0
        %6380 = vmatmul.mubr.f32.gmra.mrb[0].mxu0 %v6276
        %v6381 = vpop.f32.mrb[0].mxu0
        %v6382 = vadd.f32 0.0, %v6381
        %v6383 = vpop.f32.mrb[0].mxu0
        %6384 = vdwg.mxu0
        %v6385 = vadd.f32 %v6232, %v6347
        %v6386 = vadd.f32 %v6233, %v6352
        %v6387 = vadd.f32 %v6234, %v6357
        %v6388 = vadd.f32 %v6235, %v6362
        %v6389 = vadd.f32 %v6236, %v6367
        %v6390 = vadd.f32 %v6237, %v6372
        %v6391 = vadd.f32 %v6238, %v6377
        %v6392 = vadd.f32 %v6239, %v6382
        %v6393 = vld [vmem:[%s880] sm:$0xff]
        %v6394 = vld [vmem:[%s880 + $0x8] sm:$0xff]
        %v6395 = vld [vmem:[%s880 + $0x10] sm:$0xff]
        %v6396 = vld [vmem:[%s880 + $0x18] sm:$0xff]
        %v6397 = vld [vmem:[%s880 + $0x20] sm:$0xff]
        %v6398 = vld [vmem:[%s880 + $0x28] sm:$0xff]
        %v6399 = vld [vmem:[%s880 + $0x30] sm:$0xff]
        %v6400 = vld [vmem:[%s880 + $0x38] sm:$0xff]
        %v6401 = vrot.slane %v5777, 4
        %v6402 = vrot.slane %v5778, 3
        %v6403 = vsel %vm295, %v6402, %v6401
        %v6404 = vrot.slane %v5779, 2
        %v6405 = vsel %vm298, %v6404, %v6403
        %v6406 = vrot.slane %v5780, 1
        %v6407 = vsel %vm301, %v6406, %v6405
        %v6409 = vsel %vm303, %v6393, 0
        %v6412 = vsel %vm303, %v6394, 0
        %v6415 = vsel %vm303, %v6395, 0
        %v6418 = vsel %vm303, %v6396, 0
        %v6421 = vsel %vm303, %v6397, 0
        %v6424 = vsel %vm303, %v6398, 0
        %v6427 = vsel %vm303, %v6399, 0
        %v6430 = vsel %vm303, %v6400, 0
        %v6432 = vsel %vm303, %v6407, 0
        %6434 = vmatprep.subr.mxu0 0.0
        %6435 = vmatpush1.xpose.msra.mxu0 %v6432
        %6436 = vmatprep.subr.mxu0 0.0
        %6437 = vmatpush1.xpose.msra.mxu0 0.0
        %6438 = vmatprep.subr.mxu0 0.0
        %6439 = vmatpush1.xpose.msra.mxu0 0.0
        %6440 = vmatprep.subr.mxu0 0.0
        %6441 = vmatpush1.xpose.msra.mxu0 0.0
        %6442 = vmatprep.subr.mxu0 0.0
        %6443 = vmatpush1.xpose.msra.mxu0 0.0
        %6444 = vmatprep.subr.mxu0 0.0
        %6445 = vmatpush1.xpose.msra.mxu0 0.0
        %6446 = vmatprep.subr.mxu0 0.0
        %6447 = vmatpush1.xpose.msra.mxu0 0.0
        %6448 = vmatprep.subr.mxu0 0.0
        %6449 = vmatpush1.xpose.msra.mxu0 0.0
        %6450 = vmatprep.subr.mxu0 0.0
        %6451 = vmatpush1.xpose.msra.mxu0 0.0
        %6452 = vmatprep.subr.mxu0 0.0
        %6453 = vmatpush1.xpose.msra.mxu0 0.0
        %6454 = vmatprep.subr.mxu0 0.0
        %6455 = vmatpush1.xpose.msra.mxu0 0.0
        %6456 = vmatprep.subr.mxu0 0.0
        %6457 = vmatpush1.xpose.msra.mxu0 0.0
        %6458 = vmatprep.subr.mxu0 0.0
        %6459 = vmatpush1.xpose.msra.mxu0 0.0
        %6460 = vmatprep.subr.mxu0 0.0
        %6461 = vmatpush1.xpose.msra.mxu0 0.0
        %6462 = vmatprep.subr.mxu0 0.0
        %6463 = vmatpush1.xpose.msra.mxu0 0.0
        %6464 = vmatprep.subr.mxu0 0.0
        %6465 = vmatpush1.xpose.msra.mxu0 0.0
        %6466 = vmatprep.subr.mxu0 0.0
        %6467 = vmatpush1.xpose.msra.mxu0 0.0
        %6468 = vmatprep.subr.mxu0 0.0
        %6469 = vmatpush1.xpose.msra.mxu0 0.0
        %6470 = vmatprep.subr.mxu0 0.0
        %6471 = vmatpush1.xpose.msra.mxu0 0.0
        %6472 = vmatprep.subr.mxu0 0.0
        %6473 = vmatpush1.xpose.msra.mxu0 0.0
        %6474 = vmatprep.subr.mxu0 0.0
        %6475 = vmatpush1.xpose.msra.mxu0 0.0
        %6476 = vmatprep.subr.mxu0 0.0
        %6477 = vmatpush1.xpose.msra.mxu0 0.0
        %6478 = vmatprep.subr.mxu0 0.0
        %6479 = vmatpush1.xpose.msra.mxu0 0.0
        %6480 = vmatprep.subr.mxu0 0.0
        %6481 = vmatpush1.xpose.msra.mxu0 0.0
        %6482 = vmatprep.subr.mxu0 0.0
        %6483 = vmatpush1.xpose.msra.mxu0 0.0
        %6484 = vmatprep.subr.mxu0 0.0
        %6485 = vmatpush1.xpose.msra.mxu0 0.0
        %6486 = vmatprep.subr.mxu0 0.0
        %6487 = vmatpush1.xpose.msra.mxu0 0.0
        %6488 = vmatprep.subr.mxu0 0.0
        %6489 = vmatpush1.xpose.msra.mxu0 0.0
        %6490 = vmatprep.subr.mxu0 0.0
        %6491 = vmatpush1.xpose.msra.mxu0 0.0
        %6492 = vmatprep.subr.mxu0 0.0
        %6493 = vmatpush1.xpose.msra.mxu0 0.0
        %6494 = vmatprep.subr.mxu0 0.0
        %6495 = vmatpush1.xpose.msra.mxu0 0.0
        %6496 = vmatprep.subr.mxu0 0.0
        %6497 = vmatpush1.xpose.msra.mxu0 0.0
        %6498 = vmatprep.mubr.f32.mxu0 0.0
        %6499 = vmatmul.mubr.f32.gmra.mrb[0].mxu0 %v6409
        %v6500 = vpop.f32.mrb[0].mxu0
        %v6501 = vadd.f32 0.0, %v6500
        %v6502 = vpop.f32.mrb[0].mxu0
        %6503 = vmatprep.mubr.f32.mxu0 0.0
        %6504 = vmatmul.mubr.f32.gmra.mrb[0].mxu0 %v6412
        %v6505 = vpop.f32.mrb[0].mxu0
        %v6506 = vadd.f32 0.0, %v6505
        %v6507 = vpop.f32.mrb[0].mxu0
        %6508 = vmatprep.mubr.f32.mxu0 0.0
        %6509 = vmatmul.mubr.f32.gmra.mrb[0].mxu0 %v6415
        %v6510 = vpop.f32.mrb[0].mxu0
        %v6511 = vadd.f32 0.0, %v6510
        %v6512 = vpop.f32.mrb[0].mxu0
        %6513 = vmatprep.mubr.f32.mxu0 0.0
        %6514 = vmatmul.mubr.f32.gmra.mrb[0].mxu0 %v6418
        %v6515 = vpop.f32.mrb[0].mxu0
        %v6516 = vadd.f32 0.0, %v6515
        %v6517 = vpop.f32.mrb[0].mxu0
        %6518 = vmatprep.mubr.f32.mxu0 0.0
        %6519 = vmatmul.mubr.f32.gmra.mrb[0].mxu0 %v6421
        %v6520 = vpop.f32.mrb[0].mxu0
        %v6521 = vadd.f32 0.0, %v6520
        %v6522 = vpop.f32.mrb[0].mxu0
        %6523 = vmatprep.mubr.f32.mxu0 0.0
        %6524 = vmatmul.mubr.f32.gmra.mrb[0].mxu0 %v6424
        %v6525 = vpop.f32.mrb[0].mxu0
        %v6526 = vadd.f32 0.0, %v6525
        %v6527 = vpop.f32.mrb[0].mxu0
        %6528 = vmatprep.mubr.f32.mxu0 0.0
        %6529 = vmatmul.mubr.f32.gmra.mrb[0].mxu0 %v6427
        %v6530 = vpop.f32.mrb[0].mxu0
        %v6531 = vadd.f32 0.0, %v6530
        %v6532 = vpop.f32.mrb[0].mxu0
        %6533 = vmatprep.mubr.f32.mxu0 0.0
        %6534 = vmatmul.mubr.f32.gmra.mrb[0].mxu0 %v6430
        %v6535 = vpop.f32.mrb[0].mxu0
        %v6536 = vadd.f32 0.0, %v6535
        %v6537 = vpop.f32.mrb[0].mxu0
        %6538 = vdwg.mxu0
        %v6539 = vadd.f32 %v6385, %v6501
        %v6540 = vadd.f32 %v6386, %v6506
        %v6541 = vadd.f32 %v6387, %v6511
        %v6542 = vadd.f32 %v6388, %v6516
        %v6543 = vadd.f32 %v6389, %v6521
        %v6544 = vadd.f32 %v6390, %v6526
        %v6545 = vadd.f32 %v6391, %v6531
        %v6546 = vadd.f32 %v6392, %v6536
        %v6547 = vld [vmem:[%s1035] sm:$0xff]
        %v6548 = vld [vmem:[%s1035 + $0x8] sm:$0xff]
        %v6549 = vld [vmem:[%s1035 + $0x10] sm:$0xff]
        %v6550 = vld [vmem:[%s1035 + $0x18] sm:$0xff]
        %v6551 = vld [vmem:[%s1035 + $0x20] sm:$0xff]
        %v6552 = vld [vmem:[%s1035 + $0x28] sm:$0xff]
        %v6553 = vld [vmem:[%s1035 + $0x30] sm:$0xff]
        %v6554 = vld [vmem:[%s1035 + $0x38] sm:$0xff]
        %v6555 = vrot.slane %v5777, 5
        %v6556 = vrot.slane %v5778, 4
        %v6557 = vsel %vm295, %v6556, %v6555
        %v6558 = vrot.slane %v5779, 3
        %v6559 = vsel %vm298, %v6558, %v6557
        %v6560 = vrot.slane %v5780, 2
        %v6561 = vsel %vm301, %v6560, %v6559
        %v6563 = vsel %vm303, %v6547, 0
        %v6566 = vsel %vm303, %v6548, 0
        %v6569 = vsel %vm303, %v6549, 0
        %v6572 = vsel %vm303, %v6550, 0
        %v6575 = vsel %vm303, %v6551, 0
        %v6578 = vsel %vm303, %v6552, 0
        %v6581 = vsel %vm303, %v6553, 0
        %v6584 = vsel %vm303, %v6554, 0
        %v6586 = vsel %vm303, %v6561, 0
        %6588 = vmatprep.subr.mxu0 0.0
        %6589 = vmatpush1.xpose.msra.mxu0 %v6586
        %6590 = vmatprep.subr.mxu0 0.0
        %6591 = vmatpush1.xpose.msra.mxu0 0.0
        %6592 = vmatprep.subr.mxu0 0.0
        %6593 = vmatpush1.xpose.msra.mxu0 0.0
        %6594 = vmatprep.subr.mxu0 0.0
        %6595 = vmatpush1.xpose.msra.mxu0 0.0
        %6596 = vmatprep.subr.mxu0 0.0
        %6597 = vmatpush1.xpose.msra.mxu0 0.0
        %6598 = vmatprep.subr.mxu0 0.0
        %6599 = vmatpush1.xpose.msra.mxu0 0.0
        %6600 = vmatprep.subr.mxu0 0.0
        %6601 = vmatpush1.xpose.msra.mxu0 0.0
        %6602 = vmatprep.subr.mxu0 0.0
        %6603 = vmatpush1.xpose.msra.mxu0 0.0
        %6604 = vmatprep.subr.mxu0 0.0
        %6605 = vmatpush1.xpose.msra.mxu0 0.0
        %6606 = vmatprep.subr.mxu0 0.0
        %6607 = vmatpush1.xpose.msra.mxu0 0.0
        %6608 = vmatprep.subr.mxu0 0.0
        %6609 = vmatpush1.xpose.msra.mxu0 0.0
        %6610 = vmatprep.subr.mxu0 0.0
        %6611 = vmatpush1.xpose.msra.mxu0 0.0
        %6612 = vmatprep.subr.mxu0 0.0
        %6613 = vmatpush1.xpose.msra.mxu0 0.0
        %6614 = vmatprep.subr.mxu0 0.0
        %6615 = vmatpush1.xpose.msra.mxu0 0.0
        %6616 = vmatprep.subr.mxu0 0.0
        %6617 = vmatpush1.xpose.msra.mxu0 0.0
        %6618 = vmatprep.subr.mxu0 0.0
        %6619 = vmatpush1.xpose.msra.mxu0 0.0
        %6620 = vmatprep.subr.mxu0 0.0
        %6621 = vmatpush1.xpose.msra.mxu0 0.0
        %6622 = vmatprep.subr.mxu0 0.0
        %6623 = vmatpush1.xpose.msra.mxu0 0.0
        %6624 = vmatprep.subr.mxu0 0.0
        %6625 = vmatpush1.xpose.msra.mxu0 0.0
        %6626 = vmatprep.subr.mxu0 0.0
        %6627 = vmatpush1.xpose.msra.mxu0 0.0
        %6628 = vmatprep.subr.mxu0 0.0
        %6629 = vmatpush1.xpose.msra.mxu0 0.0
        %6630 = vmatprep.subr.mxu0 0.0
        %6631 = vmatpush1.xpose.msra.mxu0 0.0
        %6632 = vmatprep.subr.mxu0 0.0
        %6633 = vmatpush1.xpose.msra.mxu0 0.0
        %6634 = vmatprep.subr.mxu0 0.0
        %6635 = vmatpush1.xpose.msra.mxu0 0.0
        %6636 = vmatprep.subr.mxu0 0.0
        %6637 = vmatpush1.xpose.msra.mxu0 0.0
        %6638 = vmatprep.subr.mxu0 0.0
        %6639 = vmatpush1.xpose.msra.mxu0 0.0
        %6640 = vmatprep.subr.mxu0 0.0
        %6641 = vmatpush1.xpose.msra.mxu0 0.0
        %6642 = vmatprep.subr.mxu0 0.0
        %6643 = vmatpush1.xpose.msra.mxu0 0.0
        %6644 = vmatprep.subr.mxu0 0.0
        %6645 = vmatpush1.xpose.msra.mxu0 0.0
        %6646 = vmatprep.subr.mxu0 0.0
        %6647 = vmatpush1.xpose.msra.mxu0 0.0
        %6648 = vmatprep.subr.mxu0 0.0
        %6649 = vmatpush1.xpose.msra.mxu0 0.0
        %6650 = vmatprep.subr.mxu0 0.0
        %6651 = vmatpush1.xpose.msra.mxu0 0.0
        %6652 = vmatprep.mubr.f32.mxu0 0.0
        %6653 = vmatmul.mubr.f32.gmra.mrb[0].mxu0 %v6563
        %v6654 = vpop.f32.mrb[0].mxu0
        %v6655 = vadd.f32 0.0, %v6654
        %v6656 = vpop.f32.mrb[0].mxu0
        %6657 = vmatprep.mubr.f32.mxu0 0.0
        %6658 = vmatmul.mubr.f32.gmra.mrb[0].mxu0 %v6566
        %v6659 = vpop.f32.mrb[0].mxu0
        %v6660 = vadd.f32 0.0, %v6659
        %v6661 = vpop.f32.mrb[0].mxu0
        %6662 = vmatprep.mubr.f32.mxu0 0.0
        %6663 = vmatmul.mubr.f32.gmra.mrb[0].mxu0 %v6569
        %v6664 = vpop.f32.mrb[0].mxu0
        %v6665 = vadd.f32 0.0, %v6664
        %v6666 = vpop.f32.mrb[0].mxu0
        %6667 = vmatprep.mubr.f32.mxu0 0.0
        %6668 = vmatmul.mubr.f32.gmra.mrb[0].mxu0 %v6572
        %v6669 = vpop.f32.mrb[0].mxu0
        %v6670 = vadd.f32 0.0, %v6669
        %v6671 = vpop.f32.mrb[0].mxu0
        %6672 = vmatprep.mubr.f32.mxu0 0.0
        %6673 = vmatmul.mubr.f32.gmra.mrb[0].mxu0 %v6575
        %v6674 = vpop.f32.mrb[0].mxu0
        %v6675 = vadd.f32 0.0, %v6674
        %v6676 = vpop.f32.mrb[0].mxu0
        %6677 = vmatprep.mubr.f32.mxu0 0.0
        %6678 = vmatmul.mubr.f32.gmra.mrb[0].mxu0 %v6578
        %v6679 = vpop.f32.mrb[0].mxu0
        %v6680 = vadd.f32 0.0, %v6679
        %v6681 = vpop.f32.mrb[0].mxu0
        %6682 = vmatprep.mubr.f32.mxu0 0.0
        %6683 = vmatmul.mubr.f32.gmra.mrb[0].mxu0 %v6581
        %v6684 = vpop.f32.mrb[0].mxu0
        %v6685 = vadd.f32 0.0, %v6684
        %v6686 = vpop.f32.mrb[0].mxu0
        %6687 = vmatprep.mubr.f32.mxu0 0.0
        %6688 = vmatmul.mubr.f32.gmra.mrb[0].mxu0 %v6584
        %v6689 = vpop.f32.mrb[0].mxu0
        %v6690 = vadd.f32 0.0, %v6689
        %v6691 = vpop.f32.mrb[0].mxu0
        %6692 = vdwg.mxu0
        %v6693 = vadd.f32 %v6539, %v6655
        %v6694 = vadd.f32 %v6540, %v6660
        %v6695 = vadd.f32 %v6541, %v6665
        %v6696 = vadd.f32 %v6542, %v6670
        %v6697 = vadd.f32 %v6543, %v6675
        %v6698 = vadd.f32 %v6544, %v6680
        %v6699 = vadd.f32 %v6545, %v6685
        %v6700 = vadd.f32 %v6546, %v6690
        %v6701 = vld [vmem:[%s1190] sm:$0xff]
        %v6702 = vld [vmem:[%s1190 + $0x8] sm:$0xff]
        %v6703 = vld [vmem:[%s1190 + $0x10] sm:$0xff]
        %v6704 = vld [vmem:[%s1190 + $0x18] sm:$0xff]
        %v6705 = vld [vmem:[%s1190 + $0x20] sm:$0xff]
        %v6706 = vld [vmem:[%s1190 + $0x28] sm:$0xff]
        %v6707 = vld [vmem:[%s1190 + $0x30] sm:$0xff]
        %v6708 = vld [vmem:[%s1190 + $0x38] sm:$0xff]
        %v6709 = vrot.slane %v5777, 6
        %v6710 = vrot.slane %v5778, 5
        %v6711 = vsel %vm295, %v6710, %v6709
        %v6712 = vrot.slane %v5779, 4
        %v6713 = vsel %vm298, %v6712, %v6711
        %v6714 = vrot.slane %v5780, 3
        %v6715 = vsel %vm301, %v6714, %v6713
        %v6717 = vsel %vm303, %v6701, 0
        %v6720 = vsel %vm303, %v6702, 0
        %v6723 = vsel %vm303, %v6703, 0
        %v6726 = vsel %vm303, %v6704, 0
        %v6729 = vsel %vm303, %v6705, 0
        %v6732 = vsel %vm303, %v6706, 0
        %v6735 = vsel %vm303, %v6707, 0
        %v6738 = vsel %vm303, %v6708, 0
        %v6740 = vsel %vm303, %v6715, 0
        %6742 = vmatprep.subr.mxu0 0.0
        %6743 = vmatpush1.xpose.msra.mxu0 %v6740
        %6744 = vmatprep.subr.mxu0 0.0
        %6745 = vmatpush1.xpose.msra.mxu0 0.0
        %6746 = vmatprep.subr.mxu0 0.0
        %6747 = vmatpush1.xpose.msra.mxu0 0.0
        %6748 = vmatprep.subr.mxu0 0.0
        %6749 = vmatpush1.xpose.msra.mxu0 0.0
        %6750 = vmatprep.subr.mxu0 0.0
        %6751 = vmatpush1.xpose.msra.mxu0 0.0
        %6752 = vmatprep.subr.mxu0 0.0
        %6753 = vmatpush1.xpose.msra.mxu0 0.0
        %6754 = vmatprep.subr.mxu0 0.0
        %6755 = vmatpush1.xpose.msra.mxu0 0.0
        %6756 = vmatprep.subr.mxu0 0.0
        %6757 = vmatpush1.xpose.msra.mxu0 0.0
        %6758 = vmatprep.subr.mxu0 0.0
        %6759 = vmatpush1.xpose.msra.mxu0 0.0
        %6760 = vmatprep.subr.mxu0 0.0
        %6761 = vmatpush1.xpose.msra.mxu0 0.0
        %6762 = vmatprep.subr.mxu0 0.0
        %6763 = vmatpush1.xpose.msra.mxu0 0.0
        %6764 = vmatprep.subr.mxu0 0.0
        %6765 = vmatpush1.xpose.msra.mxu0 0.0
        %6766 = vmatprep.subr.mxu0 0.0
        %6767 = vmatpush1.xpose.msra.mxu0 0.0
        %6768 = vmatprep.subr.mxu0 0.0
        %6769 = vmatpush1.xpose.msra.mxu0 0.0
        %6770 = vmatprep.subr.mxu0 0.0
        %6771 = vmatpush1.xpose.msra.mxu0 0.0
        %6772 = vmatprep.subr.mxu0 0.0
        %6773 = vmatpush1.xpose.msra.mxu0 0.0
        %6774 = vmatprep.subr.mxu0 0.0
        %6775 = vmatpush1.xpose.msra.mxu0 0.0
        %6776 = vmatprep.subr.mxu0 0.0
        %6777 = vmatpush1.xpose.msra.mxu0 0.0
        %6778 = vmatprep.subr.mxu0 0.0
        %6779 = vmatpush1.xpose.msra.mxu0 0.0
        %6780 = vmatprep.subr.mxu0 0.0
        %6781 = vmatpush1.xpose.msra.mxu0 0.0
        %6782 = vmatprep.subr.mxu0 0.0
        %6783 = vmatpush1.xpose.msra.mxu0 0.0
        %6784 = vmatprep.subr.mxu0 0.0
        %6785 = vmatpush1.xpose.msra.mxu0 0.0
        %6786 = vmatprep.subr.mxu0 0.0
        %6787 = vmatpush1.xpose.msra.mxu0 0.0
        %6788 = vmatprep.subr.mxu0 0.0
        %6789 = vmatpush1.xpose.msra.mxu0 0.0
        %6790 = vmatprep.subr.mxu0 0.0
        %6791 = vmatpush1.xpose.msra.mxu0 0.0
        %6792 = vmatprep.subr.mxu0 0.0
        %6793 = vmatpush1.xpose.msra.mxu0 0.0
        %6794 = vmatprep.subr.mxu0 0.0
        %6795 = vmatpush1.xpose.msra.mxu0 0.0
        %6796 = vmatprep.subr.mxu0 0.0
        %6797 = vmatpush1.xpose.msra.mxu0 0.0
        %6798 = vmatprep.subr.mxu0 0.0
        %6799 = vmatpush1.xpose.msra.mxu0 0.0
        %6800 = vmatprep.subr.mxu0 0.0
        %6801 = vmatpush1.xpose.msra.mxu0 0.0
        %6802 = vmatprep.subr.mxu0 0.0
        %6803 = vmatpush1.xpose.msra.mxu0 0.0
        %6804 = vmatprep.subr.mxu0 0.0
        %6805 = vmatpush1.xpose.msra.mxu0 0.0
        %6806 = vmatprep.mubr.f32.mxu0 0.0
        %6807 = vmatmul.mubr.f32.gmra.mrb[0].mxu0 %v6717
        %v6808 = vpop.f32.mrb[0].mxu0
        %v6809 = vadd.f32 0.0, %v6808
        %v6810 = vpop.f32.mrb[0].mxu0
        %6811 = vmatprep.mubr.f32.mxu0 0.0
        %6812 = vmatmul.mubr.f32.gmra.mrb[0].mxu0 %v6720
        %v6813 = vpop.f32.mrb[0].mxu0
        %v6814 = vadd.f32 0.0, %v6813
        %v6815 = vpop.f32.mrb[0].mxu0
        %6816 = vmatprep.mubr.f32.mxu0 0.0
        %6817 = vmatmul.mubr.f32.gmra.mrb[0].mxu0 %v6723
        %v6818 = vpop.f32.mrb[0].mxu0
        %v6819 = vadd.f32 0.0, %v6818
        %v6820 = vpop.f32.mrb[0].mxu0
        %6821 = vmatprep.mubr.f32.mxu0 0.0
        %6822 = vmatmul.mubr.f32.gmra.mrb[0].mxu0 %v6726
        %v6823 = vpop.f32.mrb[0].mxu0
        %v6824 = vadd.f32 0.0, %v6823
        %v6825 = vpop.f32.mrb[0].mxu0
        %6826 = vmatprep.mubr.f32.mxu0 0.0
        %6827 = vmatmul.mubr.f32.gmra.mrb[0].mxu0 %v6729
        %v6828 = vpop.f32.mrb[0].mxu0
        %v6829 = vadd.f32 0.0, %v6828
        %v6830 = vpop.f32.mrb[0].mxu0
        %6831 = vmatprep.mubr.f32.mxu0 0.0
        %6832 = vmatmul.mubr.f32.gmra.mrb[0].mxu0 %v6732
        %v6833 = vpop.f32.mrb[0].mxu0
        %v6834 = vadd.f32 0.0, %v6833
        %v6835 = vpop.f32.mrb[0].mxu0
        %6836 = vmatprep.mubr.f32.mxu0 0.0
        %6837 = vmatmul.mubr.f32.gmra.mrb[0].mxu0 %v6735
        %v6838 = vpop.f32.mrb[0].mxu0
        %v6839 = vadd.f32 0.0, %v6838
        %v6840 = vpop.f32.mrb[0].mxu0
        %6841 = vmatprep.mubr.f32.mxu0 0.0
        %6842 = vmatmul.mubr.f32.gmra.mrb[0].mxu0 %v6738
        %v6843 = vpop.f32.mrb[0].mxu0
        %v6844 = vadd.f32 0.0, %v6843
        %v6845 = vpop.f32.mrb[0].mxu0
        %6846 = vdwg.mxu0
        %v6847 = vadd.f32 %v6693, %v6809
        %v6848 = vadd.f32 %v6694, %v6814
        %v6849 = vadd.f32 %v6695, %v6819
        %v6850 = vadd.f32 %v6696, %v6824
        %v6851 = vadd.f32 %v6697, %v6829
        %v6852 = vadd.f32 %v6698, %v6834
        %v6853 = vadd.f32 %v6699, %v6839
        %v6854 = vadd.f32 %v6700, %v6844
        %v6855 = vld [vmem:[%s1345] sm:$0xff]
        %v6856 = vld [vmem:[%s1345 + $0x8] sm:$0xff]
        %v6857 = vld [vmem:[%s1345 + $0x10] sm:$0xff]
        %v6858 = vld [vmem:[%s1345 + $0x18] sm:$0xff]
        %v6859 = vld [vmem:[%s1345 + $0x20] sm:$0xff]
        %v6860 = vld [vmem:[%s1345 + $0x28] sm:$0xff]
        %v6861 = vld [vmem:[%s1345 + $0x30] sm:$0xff]
        %v6862 = vld [vmem:[%s1345 + $0x38] sm:$0xff]
        %v6863 = vrot.slane %v5777, 7
        %v6864 = vrot.slane %v5778, 6
        %v6865 = vsel %vm295, %v6864, %v6863
        %v6866 = vrot.slane %v5779, 5
        %v6867 = vsel %vm298, %v6866, %v6865
        %v6868 = vrot.slane %v5780, 4
        %v6869 = vsel %vm301, %v6868, %v6867
        %v6871 = vsel %vm303, %v6855, 0
        %v6874 = vsel %vm303, %v6856, 0
        %v6877 = vsel %vm303, %v6857, 0
        %v6880 = vsel %vm303, %v6858, 0
        %v6883 = vsel %vm303, %v6859, 0
        %v6886 = vsel %vm303, %v6860, 0
        %v6889 = vsel %vm303, %v6861, 0
        %v6892 = vsel %vm303, %v6862, 0
        %v6894 = vsel %vm303, %v6869, 0
        %6896 = vmatprep.subr.mxu0 0.0
        %6897 = vmatpush1.xpose.msra.mxu0 %v6894
        %6898 = vmatprep.subr.mxu0 0.0
        %6899 = vmatpush1.xpose.msra.mxu0 0.0
        %6900 = vmatprep.subr.mxu0 0.0
        %6901 = vmatpush1.xpose.msra.mxu0 0.0
        %6902 = vmatprep.subr.mxu0 0.0
        %6903 = vmatpush1.xpose.msra.mxu0 0.0
        %6904 = vmatprep.subr.mxu0 0.0
        %6905 = vmatpush1.xpose.msra.mxu0 0.0
        %6906 = vmatprep.subr.mxu0 0.0
        %6907 = vmatpush1.xpose.msra.mxu0 0.0
        %6908 = vmatprep.subr.mxu0 0.0
        %6909 = vmatpush1.xpose.msra.mxu0 0.0
        %6910 = vmatprep.subr.mxu0 0.0
        %6911 = vmatpush1.xpose.msra.mxu0 0.0
        %6912 = vmatprep.subr.mxu0 0.0
        %6913 = vmatpush1.xpose.msra.mxu0 0.0
        %6914 = vmatprep.subr.mxu0 0.0
        %6915 = vmatpush1.xpose.msra.mxu0 0.0
        %6916 = vmatprep.subr.mxu0 0.0
        %6917 = vmatpush1.xpose.msra.mxu0 0.0
        %6918 = vmatprep.subr.mxu0 0.0
        %6919 = vmatpush1.xpose.msra.mxu0 0.0
        %6920 = vmatprep.subr.mxu0 0.0
        %6921 = vmatpush1.xpose.msra.mxu0 0.0
        %6922 = vmatprep.subr.mxu0 0.0
        %6923 = vmatpush1.xpose.msra.mxu0 0.0
        %6924 = vmatprep.subr.mxu0 0.0
        %6925 = vmatpush1.xpose.msra.mxu0 0.0
        %6926 = vmatprep.subr.mxu0 0.0
        %6927 = vmatpush1.xpose.msra.mxu0 0.0
        %6928 = vmatprep.subr.mxu0 0.0
        %6929 = vmatpush1.xpose.msra.mxu0 0.0
        %6930 = vmatprep.subr.mxu0 0.0
        %6931 = vmatpush1.xpose.msra.mxu0 0.0
        %6932 = vmatprep.subr.mxu0 0.0
        %6933 = vmatpush1.xpose.msra.mxu0 0.0
        %6934 = vmatprep.subr.mxu0 0.0
        %6935 = vmatpush1.xpose.msra.mxu0 0.0
        %6936 = vmatprep.subr.mxu0 0.0
        %6937 = vmatpush1.xpose.msra.mxu0 0.0
        %6938 = vmatprep.subr.mxu0 0.0
        %6939 = vmatpush1.xpose.msra.mxu0 0.0
        %6940 = vmatprep.subr.mxu0 0.0
        %6941 = vmatpush1.xpose.msra.mxu0 0.0
        %6942 = vmatprep.subr.mxu0 0.0
        %6943 = vmatpush1.xpose.msra.mxu0 0.0
        %6944 = vmatprep.subr.mxu0 0.0
        %6945 = vmatpush1.xpose.msra.mxu0 0.0
        %6946 = vmatprep.subr.mxu0 0.0
        %6947 = vmatpush1.xpose.msra.mxu0 0.0
        %6948 = vmatprep.subr.mxu0 0.0
        %6949 = vmatpush1.xpose.msra.mxu0 0.0
        %6950 = vmatprep.subr.mxu0 0.0
        %6951 = vmatpush1.xpose.msra.mxu0 0.0
        %6952 = vmatprep.subr.mxu0 0.0
        %6953 = vmatpush1.xpose.msra.mxu0 0.0
        %6954 = vmatprep.subr.mxu0 0.0
        %6955 = vmatpush1.xpose.msra.mxu0 0.0
        %6956 = vmatprep.subr.mxu0 0.0
        %6957 = vmatpush1.xpose.msra.mxu0 0.0
        %6958 = vmatprep.subr.mxu0 0.0
        %6959 = vmatpush1.xpose.msra.mxu0 0.0
        %6960 = vmatprep.mubr.f32.mxu0 0.0
        %6961 = vmatmul.mubr.f32.gmra.mrb[0].mxu0 %v6871
        %v6962 = vpop.f32.mrb[0].mxu0
        %v6963 = vadd.f32 0.0, %v6962
        %v6964 = vpop.f32.mrb[0].mxu0
        %6965 = vmatprep.mubr.f32.mxu0 0.0
        %6966 = vmatmul.mubr.f32.gmra.mrb[0].mxu0 %v6874
        %v6967 = vpop.f32.mrb[0].mxu0
        %v6968 = vadd.f32 0.0, %v6967
        %v6969 = vpop.f32.mrb[0].mxu0
        %6970 = vmatprep.mubr.f32.mxu0 0.0
        %6971 = vmatmul.mubr.f32.gmra.mrb[0].mxu0 %v6877
        %v6972 = vpop.f32.mrb[0].mxu0
        %v6973 = vadd.f32 0.0, %v6972
        %v6974 = vpop.f32.mrb[0].mxu0
        %6975 = vmatprep.mubr.f32.mxu0 0.0
        %6976 = vmatmul.mubr.f32.gmra.mrb[0].mxu0 %v6880
        %v6977 = vpop.f32.mrb[0].mxu0
        %v6978 = vadd.f32 0.0, %v6977
        %v6979 = vpop.f32.mrb[0].mxu0
        %6980 = vmatprep.mubr.f32.mxu0 0.0
        %6981 = vmatmul.mubr.f32.gmra.mrb[0].mxu0 %v6883
        %v6982 = vpop.f32.mrb[0].mxu0
        %v6983 = vadd.f32 0.0, %v6982
        %v6984 = vpop.f32.mrb[0].mxu0
        %6985 = vmatprep.mubr.f32.mxu0 0.0
        %6986 = vmatmul.mubr.f32.gmra.mrb[0].mxu0 %v6886
        %v6987 = vpop.f32.mrb[0].mxu0
        %v6988 = vadd.f32 0.0, %v6987
        %v6989 = vpop.f32.mrb[0].mxu0
        %6990 = vmatprep.mubr.f32.mxu0 0.0
        %6991 = vmatmul.mubr.f32.gmra.mrb[0].mxu0 %v6889
        %v6992 = vpop.f32.mrb[0].mxu0
        %v6993 = vadd.f32 0.0, %v6992
        %v6994 = vpop.f32.mrb[0].mxu0
        %6995 = vmatprep.mubr.f32.mxu0 0.0
        %6996 = vmatmul.mubr.f32.gmra.mrb[0].mxu0 %v6892
        %v6997 = vpop.f32.mrb[0].mxu0
        %v6998 = vadd.f32 0.0, %v6997
        %v6999 = vpop.f32.mrb[0].mxu0
        %7000 = vdwg.mxu0
        %v7001 = vadd.f32 %v6847, %v6963
        %v7002 = vadd.f32 %v6848, %v6968
        %v7003 = vadd.f32 %v6849, %v6973
        %v7004 = vadd.f32 %v6850, %v6978
        %v7005 = vadd.f32 %v6851, %v6983
        %v7006 = vadd.f32 %v6852, %v6988
        %v7007 = vadd.f32 %v6853, %v6993
        %v7008 = vadd.f32 %v6854, %v6998
        %v7009 = vld [vmem:[#allocation7] sm:$0xff]
        %v7010 = vld [vmem:[#allocation7 + $0x8] sm:$0xff]
        %v7011 = vld [vmem:[#allocation7 + $0x10] sm:$0xff]
        %v7012 = vld [vmem:[#allocation7 + $0x18] sm:$0xff]
        %v7013 = vld [vmem:[#allocation7 + $0x20] sm:$0xff]
        %v7014 = vld [vmem:[#allocation7 + $0x28] sm:$0xff]
        %v7015 = vld [vmem:[#allocation7 + $0x30] sm:$0xff]
        %v7016 = vld [vmem:[#allocation7 + $0x38] sm:$0xff]
        %7018 = vset.pattern.permute.xlu0 0
        %7019 = vperm.xlu0 %7018, %v7009
        %v7020 = vpop.permute.xlu0 %7019
        %7023 = vset.pattern.permute.xlu0 0
        %7024 = vperm.xlu0 %7023, %v7010
        %v7025 = vpop.permute.xlu0 %7024
        %7028 = vset.pattern.permute.xlu0 0
        %7029 = vperm.xlu0 %7028, %v7011
        %v7030 = vpop.permute.xlu0 %7029
        %7033 = vset.pattern.permute.xlu0 0
        %7034 = vperm.xlu0 %7033, %v7012
        %v7035 = vpop.permute.xlu0 %7034
        %7038 = vset.pattern.permute.xlu0 0
        %7039 = vperm.xlu0 %7038, %v7013
        %v7040 = vpop.permute.xlu0 %7039
        %7043 = vset.pattern.permute.xlu0 0
        %7044 = vperm.xlu0 %7043, %v7014
        %v7045 = vpop.permute.xlu0 %7044
        %7048 = vset.pattern.permute.xlu0 0
        %7049 = vperm.xlu0 %7048, %v7015
        %v7050 = vpop.permute.xlu0 %7049
        %7053 = vset.pattern.permute.xlu0 0
        %7054 = vperm.xlu0 %7053, %v7016
        %v7055 = vpop.permute.xlu0 %7054
        %v7057 = vadd.f32 %v7001, %v7020
        %v7058 = vadd.f32 %v7002, %v7025
        %v7059 = vadd.f32 %v7003, %v7030
        %v7060 = vadd.f32 %v7004, %v7035
        %v7061 = vadd.f32 %v7005, %v7040
        %v7062 = vadd.f32 %v7006, %v7045
        %v7063 = vadd.f32 %v7007, %v7050
        %v7064 = vadd.f32 %v7008, %v7055
        %v7073 = vcombine.high %v7057, %v7057
        %v7075 = vunpack.c.l.s4 1966171168
        %v7076 = vunpack.c.0.s8 %v7075
        %v7077 = vlaneseq
        %v7078 = vshrl.u32 %v7077, 7
        %v7079 = vsub.s32 %v7076, %v7078
        %v7080 = vrot.slane %v7057, %v7079
        %v7082 = vunpack.c.l.s4 1966171168
        %v7083 = vunpack.c.0.s8 %v7082
        %v7084 = vlaneseq
        %v7085 = vshrl.u32 %v7084, 7
        %v7086 = vsub.s32 %v7083, %v7085
        %v7087 = vrot.slane %v7073, %v7086
        %v7088 = vcombine.high %v7080, %v7080
        %v7089 = vcombine.high %v7087, %v7087
        %v7091 = vunpack.c.l.s4 1966171168
        %v7092 = vunpack.c.0.s8 %v7091
        %v7093 = vlaneseq
        %v7094 = vshrl.u32 %v7093, 7
        %v7095 = vsub.s32 %v7092, %v7094
        %v7096 = vrot.slane %v7080, %v7095
        %v7098 = vunpack.c.l.s4 1966171168
        %v7099 = vunpack.c.0.s8 %v7098
        %v7100 = vlaneseq
        %v7101 = vshrl.u32 %v7100, 7
        %v7102 = vsub.s32 %v7099, %v7101
        %v7103 = vrot.slane %v7087, %v7102
        %v7105 = vunpack.c.l.s4 1966171168
        %v7106 = vunpack.c.0.s8 %v7105
        %v7107 = vlaneseq
        %v7108 = vshrl.u32 %v7107, 7
        %v7109 = vsub.s32 %v7106, %v7108
        %v7110 = vrot.slane %v7088, %v7109
        %v7112 = vunpack.c.l.s4 1966171168
        %v7113 = vunpack.c.0.s8 %v7112
        %v7114 = vlaneseq
        %v7115 = vshrl.u32 %v7114, 7
        %v7116 = vsub.s32 %v7113, %v7115
        %v7117 = vrot.slane %v7089, %v7116
        %v7118 = vcombine.high %v7096, %v7096
        %v7119 = vcombine.high %v7103, %v7103
        %v7120 = vcombine.high %v7110, %v7110
        %v7121 = vcombine.high %v7117, %v7117
        %v7122 = vcombine.high %v7058, %v7058
        %v7124 = vunpack.c.l.s4 1966171168
        %v7125 = vunpack.c.0.s8 %v7124
        %v7126 = vlaneseq
        %v7127 = vshrl.u32 %v7126, 7
        %v7128 = vsub.s32 %v7125, %v7127
        %v7129 = vrot.slane %v7058, %v7128
        %v7131 = vunpack.c.l.s4 1966171168
        %v7132 = vunpack.c.0.s8 %v7131
        %v7133 = vlaneseq
        %v7134 = vshrl.u32 %v7133, 7
        %v7135 = vsub.s32 %v7132, %v7134
        %v7136 = vrot.slane %v7122, %v7135
        %v7137 = vcombine.high %v7129, %v7129
        %v7138 = vcombine.high %v7136, %v7136
        %v7140 = vunpack.c.l.s4 1966171168
        %v7141 = vunpack.c.0.s8 %v7140
        %v7142 = vlaneseq
        %v7143 = vshrl.u32 %v7142, 7
        %v7144 = vsub.s32 %v7141, %v7143
        %v7145 = vrot.slane %v7129, %v7144
        %v7147 = vunpack.c.l.s4 1966171168
        %v7148 = vunpack.c.0.s8 %v7147
        %v7149 = vlaneseq
        %v7150 = vshrl.u32 %v7149, 7
        %v7151 = vsub.s32 %v7148, %v7150
        %v7152 = vrot.slane %v7136, %v7151
        %v7154 = vunpack.c.l.s4 1966171168
        %v7155 = vunpack.c.0.s8 %v7154
        %v7156 = vlaneseq
        %v7157 = vshrl.u32 %v7156, 7
        %v7158 = vsub.s32 %v7155, %v7157
        %v7159 = vrot.slane %v7137, %v7158
        %v7161 = vunpack.c.l.s4 1966171168
        %v7162 = vunpack.c.0.s8 %v7161
        %v7163 = vlaneseq
        %v7164 = vshrl.u32 %v7163, 7
        %v7165 = vsub.s32 %v7162, %v7164
        %v7166 = vrot.slane %v7138, %v7165
        %v7167 = vcombine.high %v7145, %v7145
        %v7168 = vcombine.high %v7152, %v7152
        %v7169 = vcombine.high %v7159, %v7159
        %v7170 = vcombine.high %v7166, %v7166
        %v7171 = vcombine.high %v7059, %v7059
        %v7173 = vunpack.c.l.s4 1966171168
        %v7174 = vunpack.c.0.s8 %v7173
        %v7175 = vlaneseq
        %v7176 = vshrl.u32 %v7175, 7
        %v7177 = vsub.s32 %v7174, %v7176
        %v7178 = vrot.slane %v7059, %v7177
        %v7180 = vunpack.c.l.s4 1966171168
        %v7181 = vunpack.c.0.s8 %v7180
        %v7182 = vlaneseq
        %v7183 = vshrl.u32 %v7182, 7
        %v7184 = vsub.s32 %v7181, %v7183
        %v7185 = vrot.slane %v7171, %v7184
        %v7186 = vcombine.high %v7178, %v7178
        %v7187 = vcombine.high %v7185, %v7185
        %v7189 = vunpack.c.l.s4 1966171168
        %v7190 = vunpack.c.0.s8 %v7189
        %v7191 = vlaneseq
        %v7192 = vshrl.u32 %v7191, 7
        %v7193 = vsub.s32 %v7190, %v7192
        %v7194 = vrot.slane %v7178, %v7193
        %v7196 = vunpack.c.l.s4 1966171168
        %v7197 = vunpack.c.0.s8 %v7196
        %v7198 = vlaneseq
        %v7199 = vshrl.u32 %v7198, 7
        %v7200 = vsub.s32 %v7197, %v7199
        %v7201 = vrot.slane %v7185, %v7200
        %v7203 = vunpack.c.l.s4 1966171168
        %v7204 = vunpack.c.0.s8 %v7203
        %v7205 = vlaneseq
        %v7206 = vshrl.u32 %v7205, 7
        %v7207 = vsub.s32 %v7204, %v7206
        %v7208 = vrot.slane %v7186, %v7207
        %v7210 = vunpack.c.l.s4 1966171168
        %v7211 = vunpack.c.0.s8 %v7210
        %v7212 = vlaneseq
        %v7213 = vshrl.u32 %v7212, 7
        %v7214 = vsub.s32 %v7211, %v7213
        %v7215 = vrot.slane %v7187, %v7214
        %v7216 = vcombine.high %v7194, %v7194
        %v7217 = vcombine.high %v7201, %v7201
        %v7218 = vcombine.high %v7208, %v7208
        %v7219 = vcombine.high %v7215, %v7215
        %v7220 = vcombine.high %v7060, %v7060
        %v7222 = vunpack.c.l.s4 1966171168
        %v7223 = vunpack.c.0.s8 %v7222
        %v7224 = vlaneseq
        %v7225 = vshrl.u32 %v7224, 7
        %v7226 = vsub.s32 %v7223, %v7225
        %v7227 = vrot.slane %v7060, %v7226
        %v7229 = vunpack.c.l.s4 1966171168
        %v7230 = vunpack.c.0.s8 %v7229
        %v7231 = vlaneseq
        %v7232 = vshrl.u32 %v7231, 7
        %v7233 = vsub.s32 %v7230, %v7232
        %v7234 = vrot.slane %v7220, %v7233
        %v7235 = vcombine.high %v7227, %v7227
        %v7236 = vcombine.high %v7234, %v7234
        %v7238 = vunpack.c.l.s4 1966171168
        %v7239 = vunpack.c.0.s8 %v7238
        %v7240 = vlaneseq
        %v7241 = vshrl.u32 %v7240, 7
        %v7242 = vsub.s32 %v7239, %v7241
        %v7243 = vrot.slane %v7227, %v7242
        %v7245 = vunpack.c.l.s4 1966171168
        %v7246 = vunpack.c.0.s8 %v7245
        %v7247 = vlaneseq
        %v7248 = vshrl.u32 %v7247, 7
        %v7249 = vsub.s32 %v7246, %v7248
        %v7250 = vrot.slane %v7234, %v7249
        %v7252 = vunpack.c.l.s4 1966171168
        %v7253 = vunpack.c.0.s8 %v7252
        %v7254 = vlaneseq
        %v7255 = vshrl.u32 %v7254, 7
        %v7256 = vsub.s32 %v7253, %v7255
        %v7257 = vrot.slane %v7235, %v7256
        %v7259 = vunpack.c.l.s4 1966171168
        %v7260 = vunpack.c.0.s8 %v7259
        %v7261 = vlaneseq
        %v7262 = vshrl.u32 %v7261, 7
        %v7263 = vsub.s32 %v7260, %v7262
        %v7264 = vrot.slane %v7236, %v7263
        %v7265 = vcombine.high %v7243, %v7243
        %v7266 = vcombine.high %v7250, %v7250
        %v7267 = vcombine.high %v7257, %v7257
        %v7268 = vcombine.high %v7264, %v7264
        %v7269 = vcombine.high %v7061, %v7061
        %v7271 = vunpack.c.l.s4 1966171168
        %v7272 = vunpack.c.0.s8 %v7271
        %v7273 = vlaneseq
        %v7274 = vshrl.u32 %v7273, 7
        %v7275 = vsub.s32 %v7272, %v7274
        %v7276 = vrot.slane %v7061, %v7275
        %v7278 = vunpack.c.l.s4 1966171168
        %v7279 = vunpack.c.0.s8 %v7278
        %v7280 = vlaneseq
        %v7281 = vshrl.u32 %v7280, 7
        %v7282 = vsub.s32 %v7279, %v7281
        %v7283 = vrot.slane %v7269, %v7282
        %v7284 = vcombine.high %v7276, %v7276
        %v7285 = vcombine.high %v7283, %v7283
        %v7287 = vunpack.c.l.s4 1966171168
        %v7288 = vunpack.c.0.s8 %v7287
        %v7289 = vlaneseq
        %v7290 = vshrl.u32 %v7289, 7
        %v7291 = vsub.s32 %v7288, %v7290
        %v7292 = vrot.slane %v7276, %v7291
        %v7294 = vunpack.c.l.s4 1966171168
        %v7295 = vunpack.c.0.s8 %v7294
        %v7296 = vlaneseq
        %v7297 = vshrl.u32 %v7296, 7
        %v7298 = vsub.s32 %v7295, %v7297
        %v7299 = vrot.slane %v7283, %v7298
        %v7301 = vunpack.c.l.s4 1966171168
        %v7302 = vunpack.c.0.s8 %v7301
        %v7303 = vlaneseq
        %v7304 = vshrl.u32 %v7303, 7
        %v7305 = vsub.s32 %v7302, %v7304
        %v7306 = vrot.slane %v7284, %v7305
        %v7308 = vunpack.c.l.s4 1966171168
        %v7309 = vunpack.c.0.s8 %v7308
        %v7310 = vlaneseq
        %v7311 = vshrl.u32 %v7310, 7
        %v7312 = vsub.s32 %v7309, %v7311
        %v7313 = vrot.slane %v7285, %v7312
        %v7314 = vcombine.high %v7292, %v7292
        %v7315 = vcombine.high %v7299, %v7299
        %v7316 = vcombine.high %v7306, %v7306
        %v7317 = vcombine.high %v7313, %v7313
        %v7318 = vcombine.high %v7062, %v7062
        %v7320 = vunpack.c.l.s4 1966171168
        %v7321 = vunpack.c.0.s8 %v7320
        %v7322 = vlaneseq
        %v7323 = vshrl.u32 %v7322, 7
        %v7324 = vsub.s32 %v7321, %v7323
        %v7325 = vrot.slane %v7062, %v7324
        %v7327 = vunpack.c.l.s4 1966171168
        %v7328 = vunpack.c.0.s8 %v7327
        %v7329 = vlaneseq
        %v7330 = vshrl.u32 %v7329, 7
        %v7331 = vsub.s32 %v7328, %v7330
        %v7332 = vrot.slane %v7318, %v7331
        %v7333 = vcombine.high %v7325, %v7325
        %v7334 = vcombine.high %v7332, %v7332
        %v7336 = vunpack.c.l.s4 1966171168
        %v7337 = vunpack.c.0.s8 %v7336
        %v7338 = vlaneseq
        %v7339 = vshrl.u32 %v7338, 7
        %v7340 = vsub.s32 %v7337, %v7339
        %v7341 = vrot.slane %v7325, %v7340
        %v7343 = vunpack.c.l.s4 1966171168
        %v7344 = vunpack.c.0.s8 %v7343
        %v7345 = vlaneseq
        %v7346 = vshrl.u32 %v7345, 7
        %v7347 = vsub.s32 %v7344, %v7346
        %v7348 = vrot.slane %v7332, %v7347
        %v7350 = vunpack.c.l.s4 1966171168
        %v7351 = vunpack.c.0.s8 %v7350
        %v7352 = vlaneseq
        %v7353 = vshrl.u32 %v7352, 7
        %v7354 = vsub.s32 %v7351, %v7353
        %v7355 = vrot.slane %v7333, %v7354
        %v7357 = vunpack.c.l.s4 1966171168
        %v7358 = vunpack.c.0.s8 %v7357
        %v7359 = vlaneseq
        %v7360 = vshrl.u32 %v7359, 7
        %v7361 = vsub.s32 %v7358, %v7360
        %v7362 = vrot.slane %v7334, %v7361
        %v7363 = vcombine.high %v7341, %v7341
        %v7364 = vcombine.high %v7348, %v7348
        %v7365 = vcombine.high %v7355, %v7355
        %v7366 = vcombine.high %v7362, %v7362
        %v7367 = vcombine.high %v7063, %v7063
        %v7369 = vunpack.c.l.s4 1966171168
        %v7370 = vunpack.c.0.s8 %v7369
        %v7371 = vlaneseq
        %v7372 = vshrl.u32 %v7371, 7
        %v7373 = vsub.s32 %v7370, %v7372
        %v7374 = vrot.slane %v7063, %v7373
        %v7376 = vunpack.c.l.s4 1966171168
        %v7377 = vunpack.c.0.s8 %v7376
        %v7378 = vlaneseq
        %v7379 = vshrl.u32 %v7378, 7
        %v7380 = vsub.s32 %v7377, %v7379
        %v7381 = vrot.slane %v7367, %v7380
        %v7382 = vcombine.high %v7374, %v7374
        %v7383 = vcombine.high %v7381, %v7381
        %v7385 = vunpack.c.l.s4 1966171168
        %v7386 = vunpack.c.0.s8 %v7385
        %v7387 = vlaneseq
        %v7388 = vshrl.u32 %v7387, 7
        %v7389 = vsub.s32 %v7386, %v7388
        %v7390 = vrot.slane %v7374, %v7389
        %v7392 = vunpack.c.l.s4 1966171168
        %v7393 = vunpack.c.0.s8 %v7392
        %v7394 = vlaneseq
        %v7395 = vshrl.u32 %v7394, 7
        %v7396 = vsub.s32 %v7393, %v7395
        %v7397 = vrot.slane %v7381, %v7396
        %v7399 = vunpack.c.l.s4 1966171168
        %v7400 = vunpack.c.0.s8 %v7399
        %v7401 = vlaneseq
        %v7402 = vshrl.u32 %v7401, 7
        %v7403 = vsub.s32 %v7400, %v7402
        %v7404 = vrot.slane %v7382, %v7403
        %v7406 = vunpack.c.l.s4 1966171168
        %v7407 = vunpack.c.0.s8 %v7406
        %v7408 = vlaneseq
        %v7409 = vshrl.u32 %v7408, 7
        %v7410 = vsub.s32 %v7407, %v7409
        %v7411 = vrot.slane %v7383, %v7410
        %v7412 = vcombine.high %v7390, %v7390
        %v7413 = vcombine.high %v7397, %v7397
        %v7414 = vcombine.high %v7404, %v7404
        %v7415 = vcombine.high %v7411, %v7411
        %v7416 = vcombine.high %v7064, %v7064
        %v7418 = vunpack.c.l.s4 1966171168
        %v7419 = vunpack.c.0.s8 %v7418
        %v7420 = vlaneseq
        %v7421 = vshrl.u32 %v7420, 7
        %v7422 = vsub.s32 %v7419, %v7421
        %v7423 = vrot.slane %v7064, %v7422
        %v7425 = vunpack.c.l.s4 1966171168
        %v7426 = vunpack.c.0.s8 %v7425
        %v7427 = vlaneseq
        %v7428 = vshrl.u32 %v7427, 7
        %v7429 = vsub.s32 %v7426, %v7428
        %v7430 = vrot.slane %v7416, %v7429
        %v7431 = vcombine.high %v7423, %v7423
        %v7432 = vcombine.high %v7430, %v7430
        %v7434 = vunpack.c.l.s4 1966171168
        %v7435 = vunpack.c.0.s8 %v7434
        %v7436 = vlaneseq
        %v7437 = vshrl.u32 %v7436, 7
        %v7438 = vsub.s32 %v7435, %v7437
        %v7439 = vrot.slane %v7423, %v7438
        %v7441 = vunpack.c.l.s4 1966171168
        %v7442 = vunpack.c.0.s8 %v7441
        %v7443 = vlaneseq
        %v7444 = vshrl.u32 %v7443, 7
        %v7445 = vsub.s32 %v7442, %v7444
        %v7446 = vrot.slane %v7430, %v7445
        %v7448 = vunpack.c.l.s4 1966171168
        %v7449 = vunpack.c.0.s8 %v7448
        %v7450 = vlaneseq
        %v7451 = vshrl.u32 %v7450, 7
        %v7452 = vsub.s32 %v7449, %v7451
        %v7453 = vrot.slane %v7431, %v7452
        %v7455 = vunpack.c.l.s4 1966171168
        %v7456 = vunpack.c.0.s8 %v7455
        %v7457 = vlaneseq
        %v7458 = vshrl.u32 %v7457, 7
        %v7459 = vsub.s32 %v7456, %v7458
        %v7460 = vrot.slane %v7432, %v7459
        %v7461 = vcombine.high %v7439, %v7439
        %v7462 = vcombine.high %v7446, %v7446
        %v7463 = vcombine.high %v7453, %v7453
        %v7464 = vcombine.high %v7460, %v7460
        %7529 = vst.msk [vmem:[%s235 + $0x3] sm:$0x1] %vm2020, %v7096
        %7530 = vst.msk [vmem:[%s235 + $0x7] sm:$0x1] %vm2020, %v7110
        %7531 = vst.msk [vmem:[%s235 + $0xb] sm:$0x1] %vm2020, %v7118
        %7532 = vst.msk [vmem:[%s235 + $0xf] sm:$0x1] %vm2020, %v7120
        %7533 = vst.msk [vmem:[%s235 + $0x13] sm:$0x1] %vm2020, %v7103
        %7534 = vst.msk [vmem:[%s235 + $0x17] sm:$0x1] %vm2020, %v7117
        %7535 = vst.msk [vmem:[%s235 + $0x1b] sm:$0x1] %vm2020, %v7119
        %7536 = vst.msk [vmem:[%s235 + $0x1f] sm:$0x1] %vm2020, %v7121
        %7537 = vst.msk [vmem:[%s235 + $0x23] sm:$0x1] %vm2020, %v7145
        %7538 = vst.msk [vmem:[%s235 + $0x27] sm:$0x1] %vm2020, %v7159
        %7539 = vst.msk [vmem:[%s235 + $0x2b] sm:$0x1] %vm2020, %v7167
        %7540 = vst.msk [vmem:[%s235 + $0x2f] sm:$0x1] %vm2020, %v7169
        %7541 = vst.msk [vmem:[%s235 + $0x33] sm:$0x1] %vm2020, %v7152
        %7542 = vst.msk [vmem:[%s235 + $0x37] sm:$0x1] %vm2020, %v7166
        %7543 = vst.msk [vmem:[%s235 + $0x3b] sm:$0x1] %vm2020, %v7168
        %7544 = vst.msk [vmem:[%s235 + $0x3f] sm:$0x1] %vm2020, %v7170
        %7545 = vst.msk [vmem:[%s235 + $0x43] sm:$0x1] %vm2020, %v7194
        %7546 = vst.msk [vmem:[%s235 + $0x47] sm:$0x1] %vm2020, %v7208
        %7547 = vst.msk [vmem:[%s235 + $0x4b] sm:$0x1] %vm2020, %v7216
        %7548 = vst.msk [vmem:[%s235 + $0x4f] sm:$0x1] %vm2020, %v7218
        %7549 = vst.msk [vmem:[%s235 + $0x53] sm:$0x1] %vm2020, %v7201
        %7550 = vst.msk [vmem:[%s235 + $0x57] sm:$0x1] %vm2020, %v7215
        %7551 = vst.msk [vmem:[%s235 + $0x5b] sm:$0x1] %vm2020, %v7217
        %7552 = vst.msk [vmem:[%s235 + $0x5f] sm:$0x1] %vm2020, %v7219
        %7553 = vst.msk [vmem:[%s235 + $0x63] sm:$0x1] %vm2020, %v7243
        %7554 = vst.msk [vmem:[%s235 + $0x67] sm:$0x1] %vm2020, %v7257
        %7555 = vst.msk [vmem:[%s235 + $0x6b] sm:$0x1] %vm2020, %v7265
        %7556 = vst.msk [vmem:[%s235 + $0x6f] sm:$0x1] %vm2020, %v7267
        %7557 = vst.msk [vmem:[%s235 + $0x73] sm:$0x1] %vm2020, %v7250
        %7558 = vst.msk [vmem:[%s235 + $0x77] sm:$0x1] %vm2020, %v7264
        %7559 = vst.msk [vmem:[%s235 + $0x7b] sm:$0x1] %vm2020, %v7266
        %7560 = vst.msk [vmem:[%s235 + $0x7f] sm:$0x1] %vm2020, %v7268
        %7561 = vst.msk [vmem:[%s235 + $0x83] sm:$0x1] %vm2020, %v7292
        %7562 = vst.msk [vmem:[%s235 + $0x87] sm:$0x1] %vm2020, %v7306
        %7563 = vst.msk [vmem:[%s235 + $0x8b] sm:$0x1] %vm2020, %v7314
        %7564 = vst.msk [vmem:[%s235 + $0x8f] sm:$0x1] %vm2020, %v7316
        %7565 = vst.msk [vmem:[%s235 + $0x93] sm:$0x1] %vm2020, %v7299
        %7566 = vst.msk [vmem:[%s235 + $0x97] sm:$0x1] %vm2020, %v7313
        %7567 = vst.msk [vmem:[%s235 + $0x9b] sm:$0x1] %vm2020, %v7315
        %7568 = vst.msk [vmem:[%s235 + $0x9f] sm:$0x1] %vm2020, %v7317
        %7569 = vst.msk [vmem:[%s235 + $0xa3] sm:$0x1] %vm2020, %v7341
        %7570 = vst.msk [vmem:[%s235 + $0xa7] sm:$0x1] %vm2020, %v7355
        %7571 = vst.msk [vmem:[%s235 + $0xab] sm:$0x1] %vm2020, %v7363
        %7572 = vst.msk [vmem:[%s235 + $0xaf] sm:$0x1] %vm2020, %v7365
        %7573 = vst.msk [vmem:[%s235 + $0xb3] sm:$0x1] %vm2020, %v7348
        %7574 = vst.msk [vmem:[%s235 + $0xb7] sm:$0x1] %vm2020, %v7362
        %7575 = vst.msk [vmem:[%s235 + $0xbb] sm:$0x1] %vm2020, %v7364
        %7576 = vst.msk [vmem:[%s235 + $0xbf] sm:$0x1] %vm2020, %v7366
        %7577 = vst.msk [vmem:[%s235 + $0xc3] sm:$0x1] %vm2020, %v7390
        %7578 = vst.msk [vmem:[%s235 + $0xc7] sm:$0x1] %vm2020, %v7404
        %7579 = vst.msk [vmem:[%s235 + $0xcb] sm:$0x1] %vm2020, %v7412
        %7580 = vst.msk [vmem:[%s235 + $0xcf] sm:$0x1] %vm2020, %v7414
        %7581 = vst.msk [vmem:[%s235 + $0xd3] sm:$0x1] %vm2020, %v7397
        %7582 = vst.msk [vmem:[%s235 + $0xd7] sm:$0x1] %vm2020, %v7411
        %7583 = vst.msk [vmem:[%s235 + $0xdb] sm:$0x1] %vm2020, %v7413
        %7584 = vst.msk [vmem:[%s235 + $0xdf] sm:$0x1] %vm2020, %v7415
        %7585 = vst.msk [vmem:[%s235 + $0xe3] sm:$0x1] %vm2020, %v7439
        %7586 = vst.msk [vmem:[%s235 + $0xe7] sm:$0x1] %vm2020, %v7453
        %7587 = vst.msk [vmem:[%s235 + $0xeb] sm:$0x1] %vm2020, %v7461
        %7588 = vst.msk [vmem:[%s235 + $0xef] sm:$0x1] %vm2020, %v7463
        %7589 = vst.msk [vmem:[%s235 + $0xf3] sm:$0x1] %vm2020, %v7446
        %7590 = vst.msk [vmem:[%s235 + $0xf7] sm:$0x1] %vm2020, %v7460
        %7591 = vst.msk [vmem:[%s235 + $0xfb] sm:$0x1] %vm2020, %v7462
        %7592 = vst.msk [vmem:[%s235 + $0xff] sm:$0x1] %vm2020, %v7464
        %s7593 = sand.u32 %s113, 1
        %s7594 = scalar_lea.sflag [#allocation4], %s7593
        %s7595 = sand.u32 %s113, 1
        %s7596 = smul.addr %s7595, 256
        %s7597 = scalar_lea.vmem [#allocation8], %s7596
        // Predicated region
        $region45: #{tpu_custom_call.1} parent=31 // pred_check
          %p7598 = pneg %p123
        $region46: #{tpu_custom_call.1} parent=31 // pred_check_branch
          %7600 = sbr.rel (%p7598) target = $region48
        $region47: #{tpu_custom_call.1} parent=31 // pred_region
          %s7602 = ssub.s32 4096, 4096
          %7603 = vsyncadd %s7594, %s7602
          %s7604 = smul.addr %s25, 64
          %s7605 = sadd.s32 %s26, %s7604
          %s7606 = smul.addr %s7605, 64
          %s7607 = scalar_lea.hbm %s3, %s7606
          %s7608 = sshll.u32 %s7597, 4
          %s7609 = int_to_ptr.vmem [resolvable:$true] %s7608
          %7614 = dma.vmem_to_hbm [thread:$0]  %s7609, 4096, %s7607, %s7594, 64, 64, 4
        $region48: #{tpu_custom_call.1} parent=31 // pred_fallthru
          _
      $region32: #{tpu_custom_call.1} parent=5 // pred_fallthru
        _
      %p7615 = scmp.le.s32.totalorder 2, %s16
      // Predicated region
      $region49: #{tpu_custom_call.1} parent=5 // pred_check
        %p7616 = pneg %p7615
      $region50: #{tpu_custom_call.1} parent=5 // pred_check_branch
        %7618 = sbr.rel (%p7616) target = $region52
      $region51: #{tpu_custom_call.1} parent=5 // pred_region
        %s7619 = ssub.s32 %s16, 2
        // Predicated region
        $region53: #{tpu_custom_call.1} parent=51 // pred_check
          %p7620 = pneg %p129
        $region54: #{tpu_custom_call.1} parent=51 // pred_check_branch
          %7622 = sbr.rel (%p7620) target = $region56
        $region55: #{tpu_custom_call.1} parent=51 // pred_region
          %s7623 = sand.u32 %s114, 1
          %s7624 = scalar_lea.sflag [#allocation4], %s7623
          %s7625 = sand.u32 %s114, 1
          %s7626 = smul.addr %s7625, 256
          %s7627 = scalar_lea.vmem [#allocation8], %s7626
          %7628 = dma.done %s7624, 4096
        $region56: #{tpu_custom_call.1} parent=51 // pred_fallthru
          _
      $region52: #{tpu_custom_call.1} parent=5 // pred_fallthru
        _
    $region6: #{tpu_custom_call.1} parent=1 // loop_footer
      %s20 = sadd.s32 1, %s16
    $region7: #{tpu_custom_call.1} parent=1 // loop_footer_branch
      %15 = sbr.rel target = $region3
    $region8: #{tpu_custom_call.1} parent=1 // loop_exit
      _
    %7629 = vsyncpa [#allocation3], 1
    %s7630 = scalar_lea.sflag [#allocation3], 1
    %7631 = vsyncpa %s7630, 1
    %7632 = vsyncpa [#allocation6], 1
    %7633 = vsyncpa [#allocation4], 1
    %s7634 = scalar_lea.sflag [#allocation4], 1
    %7635 = vsyncpa %s7634, 1

</llo_original>
